<compile_context>
chip_gen: v6e
topology: v6e:2x2x1
jax: 0.10.0
libtpu: 0.0.40
codegen_flags: <defaults>
</compile_context>

<pallas_src>
import functools
import math

import jax
import jax.numpy as jnp
from jax.experimental import pallas as pl
from jax.experimental.pallas import tpu as pltpu


# ----------------------------------------------------------------------------
# Fused Pallas kernel: conv1(5x5)+ReLU -> conv2(3x3)+ReLU -> conv3(3x3)+ReLU
#                      -> conv4(3x3), all for one batch element per grid step.
# ----------------------------------------------------------------------------
def _fused_espcn_kernel(x_ref, w1_ref, b1_ref, w2_ref, b2_ref, w3_ref, b3_ref,
                        w4_ref, b4_ref, o_ref, pad0, pad1, pad2, pad3, *, H, W):
    # Zero the padded scratch buffers every step.  Only the halo actually needs
    # to be zero (the interior is overwritten below), but a full zero is ~75
    # vector stores per image — negligible next to the matmuls — and it stays
    # correct no matter how the "parallel" batch axis is split across cores.
    pad0[...] = jnp.zeros_like(pad0)
    pad1[...] = jnp.zeros_like(pad1)
    pad2[...] = jnp.zeros_like(pad2)
    pad3[...] = jnp.zeros_like(pad3)

    def conv_im2col(pad_ref, w_ref, b_ref, ksize, cin, relu):
        # Build the (H*W, ksize*ksize*cin) im2col matrix from shifted views of
        # the padded activation, then do a single large-K MXU matmul.  The
        # (H, W, cin) -> (H*W, cin) reshape of each tap is layout-compatible
        # (sublane-major merge), and concat pieces land on whole lane groups
        # for layer 2 (cin=128).
        taps = []
        for kh in range(ksize):
            for kw in range(ksize):
                taps.append(
                    pad_ref[kh:kh + H, kw:kw + W, :].reshape(H * W, cin))
        k_real = ksize * ksize * cin
        k_want = w_ref.shape[0]
        if k_want > k_real:  # zero-pad K (layer 1: 25 -> 32)
            taps.append(jnp.zeros((H * W, k_want - k_real), jnp.float32))
        patches = jnp.concatenate(taps, axis=1)            # (H*W, K)
        y = jnp.dot(patches, w_ref[...],
                    preferred_element_type=jnp.float32)    # (H*W, Cout)
        y = y + b_ref[...]                                  # (1, Cout) bcast
        if relu:
            y = jnp.maximum(y, 0.0)
        return y

    # ---- layer 1: 1 -> 128, 5x5, pad 2 ----
    pad0[2:2 + H, 2:2 + W, :] = x_ref[0]                    # (H, W, 1)
    a1 = conv_im2col(pad0, w1_ref, b1_ref, 5, 1, True)      # (H*W, 128)
    pad1[1:1 + H, 1:1 + W, :] = a1.reshape(H, W, -1)

    # ---- layer 2: 128 -> 64, 3x3, pad 1 ----
    a2 = conv_im2col(pad1, w2_ref, b2_ref, 3, 128, True)    # (H*W, 64)
    pad2[1:1 + H, 1:1 + W, :] = a2.reshape(H, W, -1)

    # ---- layer 3: 64 -> 32, 3x3, pad 1 ----
    a3 = conv_im2col(pad2, w3_ref, b3_ref, 3, 64, True)     # (H*W, 32)
    pad3[1:1 + H, 1:1 + W, :] = a3.reshape(H, W, -1)

    # ---- layer 4: 32 -> r^2, 3x3, pad 1 (no activation) ----
    a4 = conv_im2col(pad3, w4_ref, b4_ref, 3, 32, False)    # (H*W, r^2)
    o_ref[0] = a4.astype(o_ref.dtype)


# ----------------------------------------------------------------------------
# Wrapper: weight/bias re-layout, the fused pallas_call, pixel shuffle.
# ----------------------------------------------------------------------------
def pixel_shuffle_nhwc(x, r):
    # x: (N, H, W, r*r) with channel index c = i*r + j  (PyTorch convention)
    N, H, W, C = x.shape
    assert C == r * r
    x = x.reshape(N, H, W, r, r)               # (N, H, W, i, j)
    x = jnp.transpose(x, (0, 1, 3, 2, 4))      # (N, H, i, W, j)
    return x.reshape(N, H * r, W * r, 1)


def net_forward(x_nchw, params, upscale_factor):
    N, C, H, W = x_nchw.shape
    assert C == 1
    r = upscale_factor
    r2 = r * r

    # NCHW (C=1) -> NHWC is a pure reshape.
    x = x_nchw.reshape(N, H, W, 1)

    # HWIO weights -> im2col form (KH*KW*Cin, Cout); biases -> (1, Cout).
    def im2col_w(w, k_pad=None):
        kh, kw, cin, cout = w.shape
        w = w.reshape(kh * kw * cin, cout)
        if k_pad is not None and k_pad > kh * kw * cin:
            w = jnp.concatenate(
                [w, jnp.zeros((k_pad - kh * kw * cin, cout), w.dtype)], axis=0)
        return w

    w1 = im2col_w(params["w1"], k_pad=32)      # (32, 128), K padded 25 -> 32
    w2 = im2col_w(params["w2"])                # (1152, 64)
    w3 = im2col_w(params["w3"])                # (576, 32)
    w4 = im2col_w(params["w4"])                # (288, r2)
    b1 = params["b1"].reshape(1, -1)
    b2 = params["b2"].reshape(1, -1)
    b3 = params["b3"].reshape(1, -1)
    b4 = params["b4"].reshape(1, -1)

    def full_spec(shape):
        return pl.BlockSpec(shape, lambda n: (0,) * len(shape))

    kernel = functools.partial(_fused_espcn_kernel, H=H, W=W)

    # Advisory cost hint for XLA's scheduler around the fused custom call.
    flops = 2 * N * H * W * (
        5 * 5 * 1 * 128 + 3 * 3 * 128 * 64 + 3 * 3 * 64 * 32 + 3 * 3 * 32 * r2)
    bytes_accessed = 4 * (x.size + w1.size + b1.size + w2.size + b2.size
                          + w3.size + b3.size + w4.size + b4.size
                          + N * H * W * r2)

    out = pl.pallas_call(
        kernel,
        out_shape=jax.ShapeDtypeStruct((N, H * W, r2), jnp.float32),
        grid=(N,),
        in_specs=[
            pl.BlockSpec((1, H, W, 1), lambda n: (n, 0, 0, 0)),
            full_spec(w1.shape), full_spec(b1.shape),
            full_spec(w2.shape), full_spec(b2.shape),
            full_spec(w3.shape), full_spec(b3.shape),
            full_spec(w4.shape), full_spec(b4.shape),
        ],
        out_specs=pl.BlockSpec((1, H * W, r2), lambda n: (n, 0, 0)),
        scratch_shapes=[
            pltpu.VMEM((H + 4, W + 4, 1), jnp.float32),    # padded input
            pltpu.VMEM((H + 2, W + 2, 128), jnp.float32),  # padded act1
            pltpu.VMEM((H + 2, W + 2, 64), jnp.float32),   # padded act2
            pltpu.VMEM((H + 2, W + 2, 32), jnp.float32),   # padded act3
        ],
        compiler_params=pltpu.CompilerParams(
            dimension_semantics=("parallel",)),
        cost_estimate=pl.CostEstimate(
            flops=flops, transcendentals=0, bytes_accessed=bytes_accessed),
    )(x, w1, b1, w2, b2, w3, b3, w4, b4)

    # Pixel shuffle (pure layout) + NHWC -> NCHW (C=1 -> reshape).
    y = pixel_shuffle_nhwc(out.reshape(N, H, W, r2), r)
    return y.reshape(N, 1, H * r, W * r)


# ----------------------------------------------------------------------------
# Deterministic parameter init (orthogonal, like torch.nn.init.orthogonal_).
# Weights are kept in HWIO; the wrapper reshapes them to im2col form.
# ----------------------------------------------------------------------------
def _orthogonal_conv(key, oihw_shape, gain=1.0):
    cout, cin, kh, kw = oihw_shape
    rows, cols = cout, cin * kh * kw
    a = jax.random.normal(key, (max(rows, cols), min(rows, cols)), jnp.float32)
    q, r = jnp.linalg.qr(a)
    q = q * jnp.sign(jnp.diagonal(r))
    if rows < cols:
        q = q.T
    w = (gain * q[:rows, :cols]).reshape(cout, cin, kh, kw)
    return jnp.transpose(w, (2, 3, 1, 0))        # OIHW -> HWIO


def init_params(key, upscale_factor):
    gain_relu = math.sqrt(2.0)  # init.calculate_gain('relu')
    r2 = upscale_factor ** 2
    keys = jax.random.split(key, 8)
    return {
        "w1": _orthogonal_conv(keys[0], (128, 1, 5, 5), gain_relu),
        "b1": 0.01 * jax.random.normal(keys[1], (128,), jnp.float32),
        "w2": _orthogonal_conv(keys[2], (64, 128, 3, 3), gain_relu),
        "b2": 0.01 * jax.random.normal(keys[3], (64,), jnp.float32),
        "w3": _orthogonal_conv(keys[4], (32, 64, 3, 3), gain_relu),
        "b3": 0.01 * jax.random.normal(keys[5], (32,), jnp.float32),
        "w4": _orthogonal_conv(keys[6], (r2, 32, 3, 3), 1.0),
        "b4": 0.01 * jax.random.normal(keys[7], (r2,), jnp.float32),
    }


# ----------------------------------------------------------------------------
# Pure-JAX reference (lax.conv) used for a correctness check.
# ----------------------------------------------------------------------------
def ref_forward(x_nchw, params, upscale_factor):
    def conv(x, w, b, relu):
        y = jax.lax.conv_general_dilated(
            x, w, window_strides=(1, 1), padding="SAME",
            dimension_numbers=("NHWC", "HWIO", "NHWC"))
        y = y + b
        return jnp.maximum(y, 0.0) if relu else y

    x = jnp.transpose(x_nchw, (0, 2, 3, 1))
    x = conv(x, params["w1"], params["b1"], True)
    x = conv(x, params["w2"], params["b2"], True)
    x = conv(x, params["w3"], params["b3"], True)
    x = conv(x, params["w4"], params["b4"], False)
    x = pixel_shuffle_nhwc(x, upscale_factor)
    return jnp.transpose(x, (0, 3, 1, 2))


if __name__ == "__main__":
    upscale_factor = 2
    key = jax.random.PRNGKey(0)
    k_param, k_x = jax.random.split(key)

    params = init_params(k_param, upscale_factor)
    x = jax.random.normal(k_x, (2, 1, 16, 16), jnp.float32)  # NCHW input

    fwd = jax.jit(functools.partial(net_forward, upscale_factor=upscale_factor))
    out = jax.block_until_ready(fwd(x, params))

    assert out.shape == (2, 1, 16 * upscale_factor, 16 * upscale_factor), out.shape

    ref = jax.block_until_ready(ref_forward(x, params, upscale_factor))
    assert jnp.allclose(out, ref, atol=2e-3, rtol=2e-3), float(
        jnp.max(jnp.abs(out - ref)))

    print("KERNEL_OK")
</pallas_src>

<mosaic_0001>
module attributes {stable_mosaic.version = 11 : i64} {
  func.func @_fused_espcn_kernel(%arg0: i32, %arg1: memref<1x16x16x1xf32, #tpu.memory_space<vmem>>, %arg2: memref<32x128xf32, #tpu.memory_space<vmem>>, %arg3: memref<1x128xf32, #tpu.memory_space<vmem>>, %arg4: memref<1152x64xf32, #tpu.memory_space<vmem>>, %arg5: memref<1x64xf32, #tpu.memory_space<vmem>>, %arg6: memref<576x32xf32, #tpu.memory_space<vmem>>, %arg7: memref<1x32xf32, #tpu.memory_space<vmem>>, %arg8: memref<288x4xf32, #tpu.memory_space<vmem>>, %arg9: memref<1x4xf32, #tpu.memory_space<vmem>>, %arg10: memref<1x256x4xf32, #tpu.memory_space<vmem>>, %arg11: memref<20x20x1xf32, #tpu.memory_space<vmem>>, %arg12: memref<18x18x128xf32, #tpu.memory_space<vmem>>, %arg13: memref<18x18x64xf32, #tpu.memory_space<vmem>>, %arg14: memref<18x18x32xf32, #tpu.memory_space<vmem>>) attributes {dimension_semantics = [#tpu.dimension_semantics<parallel>], iteration_bounds = array<i64: 2>, scalar_prefetch = 0 : i64, scratch_operands = 4 : i64, tpu.core_type = #tpu.core_type<tc>, window_params = [{transform_indices = @transform_0, window_bounds = array<i64: 1, 16, 16, 1>}, {pipeline_mode = #tpu.pipeline_mode<synchronous>, transform_indices = @transform_1, window_bounds = array<i64: 32, 128>}, {pipeline_mode = #tpu.pipeline_mode<synchronous>, transform_indices = @transform_2, window_bounds = array<i64: 1, 128>}, {pipeline_mode = #tpu.pipeline_mode<synchronous>, transform_indices = @transform_3, window_bounds = array<i64: 1152, 64>}, {pipeline_mode = #tpu.pipeline_mode<synchronous>, transform_indices = @transform_4, window_bounds = array<i64: 1, 64>}, {pipeline_mode = #tpu.pipeline_mode<synchronous>, transform_indices = @transform_5, window_bounds = array<i64: 576, 32>}, {pipeline_mode = #tpu.pipeline_mode<synchronous>, transform_indices = @transform_6, window_bounds = array<i64: 1, 32>}, {pipeline_mode = #tpu.pipeline_mode<synchronous>, transform_indices = @transform_7, window_bounds = array<i64: 288, 4>}, {pipeline_mode = #tpu.pipeline_mode<synchronous>, transform_indices = @transform_8, window_bounds = array<i64: 1, 4>}, {transform_indices = @transform_9, window_bounds = array<i64: 1, 256, 4>}]} {
    %cst = arith.constant 0.000000e+00 : f32
    %0 = vector.broadcast %cst : f32 to vector<20x20x1xf32>
    %c0 = arith.constant 0 : index
    %c0_0 = arith.constant 0 : index
    %c0_1 = arith.constant 0 : index
    %1 = vector.load %arg11[%c0, %c0_0, %c0_1] : memref<20x20x1xf32, #tpu.memory_space<vmem>>, vector<20x20x1xf32>
    tpu.vector_store %arg11[%c0, %c0_0, %c0_1], %0 {strides = array<i32>} : memref<20x20x1xf32, #tpu.memory_space<vmem>>, vector<20x20x1xf32>,
    %cst_2 = arith.constant 0.000000e+00 : f32
    %2 = vector.broadcast %cst_2 : f32 to vector<18x18x128xf32>
    %c0_3 = arith.constant 0 : index
    %c0_4 = arith.constant 0 : index
    %c0_5 = arith.constant 0 : index
    %3 = vector.load %arg12[%c0_3, %c0_4, %c0_5] : memref<18x18x128xf32, #tpu.memory_space<vmem>>, vector<18x18x128xf32>
    tpu.vector_store %arg12[%c0_3, %c0_4, %c0_5], %2 {strides = array<i32>} : memref<18x18x128xf32, #tpu.memory_space<vmem>>, vector<18x18x128xf32>,
    %cst_6 = arith.constant 0.000000e+00 : f32
    %4 = vector.broadcast %cst_6 : f32 to vector<18x18x64xf32>
    %c0_7 = arith.constant 0 : index
    %c0_8 = arith.constant 0 : index
    %c0_9 = arith.constant 0 : index
    %5 = vector.load %arg13[%c0_7, %c0_8, %c0_9] : memref<18x18x64xf32, #tpu.memory_space<vmem>>, vector<18x18x64xf32>
    tpu.vector_store %arg13[%c0_7, %c0_8, %c0_9], %4 {strides = array<i32>} : memref<18x18x64xf32, #tpu.memory_space<vmem>>, vector<18x18x64xf32>,
    %cst_10 = arith.constant 0.000000e+00 : f32
    %6 = vector.broadcast %cst_10 : f32 to vector<18x18x32xf32>
    %c0_11 = arith.constant 0 : index
    %c0_12 = arith.constant 0 : index
    %c0_13 = arith.constant 0 : index
    %7 = vector.load %arg14[%c0_11, %c0_12, %c0_13] : memref<18x18x32xf32, #tpu.memory_space<vmem>>, vector<18x18x32xf32>
    tpu.vector_store %arg14[%c0_11, %c0_12, %c0_13], %6 {strides = array<i32>} : memref<18x18x32xf32, #tpu.memory_space<vmem>>, vector<18x18x32xf32>,
    %c0_14 = arith.constant 0 : index
    %c0_15 = arith.constant 0 : index
    %c0_16 = arith.constant 0 : index
    %c0_17 = arith.constant 0 : index
    %8 = vector.load %arg1[%c0_14, %c0_15, %c0_16, %c0_17] : memref<1x16x16x1xf32, #tpu.memory_space<vmem>>, vector<1x16x16x1xf32>
    %9 = vector.shape_cast %8 : vector<1x16x16x1xf32> to vector<16x16x1xf32>
    %c2 = arith.constant 2 : index
    %c2_18 = arith.constant 2 : index
    %c0_19 = arith.constant 0 : index
    %10 = vector.load %arg11[%c2, %c2_18, %c0_19] : memref<20x20x1xf32, #tpu.memory_space<vmem>>, vector<16x16x1xf32>
    tpu.vector_store %arg11[%c2, %c2_18, %c0_19], %9 {strides = array<i32>} : memref<20x20x1xf32, #tpu.memory_space<vmem>>, vector<16x16x1xf32>,
    %c0_20 = arith.constant 0 : index
    %c0_21 = arith.constant 0 : index
    %c0_22 = arith.constant 0 : index
    %11 = vector.load %arg11[%c0_20, %c0_21, %c0_22] : memref<20x20x1xf32, #tpu.memory_space<vmem>>, vector<16x16x1xf32>
    %12 = vector.shape_cast %11 : vector<16x16x1xf32> to vector<256x1xf32>
    %c0_23 = arith.constant 0 : index
    %c1 = arith.constant 1 : index
    %c0_24 = arith.constant 0 : index
    %13 = vector.load %arg11[%c0_23, %c1, %c0_24] : memref<20x20x1xf32, #tpu.memory_space<vmem>>, vector<16x16x1xf32>
    %14 = vector.shape_cast %13 : vector<16x16x1xf32> to vector<256x1xf32>
    %c0_25 = arith.constant 0 : index
    %c2_26 = arith.constant 2 : index
    %c0_27 = arith.constant 0 : index
    %15 = vector.load %arg11[%c0_25, %c2_26, %c0_27] : memref<20x20x1xf32, #tpu.memory_space<vmem>>, vector<16x16x1xf32>
    %16 = vector.shape_cast %15 : vector<16x16x1xf32> to vector<256x1xf32>
    %c0_28 = arith.constant 0 : index
    %c3 = arith.constant 3 : index
    %c0_29 = arith.constant 0 : index
    %17 = vector.load %arg11[%c0_28, %c3, %c0_29] : memref<20x20x1xf32, #tpu.memory_space<vmem>>, vector<16x16x1xf32>
    %18 = vector.shape_cast %17 : vector<16x16x1xf32> to vector<256x1xf32>
    %c0_30 = arith.constant 0 : index
    %c4 = arith.constant 4 : index
    %c0_31 = arith.constant 0 : index
    %19 = vector.load %arg11[%c0_30, %c4, %c0_31] : memref<20x20x1xf32, #tpu.memory_space<vmem>>, vector<16x16x1xf32>
    %20 = vector.shape_cast %19 : vector<16x16x1xf32> to vector<256x1xf32>
    %c1_32 = arith.constant 1 : index
    %c0_33 = arith.constant 0 : index
    %c0_34 = arith.constant 0 : index
    %21 = vector.load %arg11[%c1_32, %c0_33, %c0_34] : memref<20x20x1xf32, #tpu.memory_space<vmem>>, vector<16x16x1xf32>
    %22 = vector.shape_cast %21 : vector<16x16x1xf32> to vector<256x1xf32>
    %c1_35 = arith.constant 1 : index
    %c1_36 = arith.constant 1 : index
    %c0_37 = arith.constant 0 : index
    %23 = vector.load %arg11[%c1_35, %c1_36, %c0_37] : memref<20x20x1xf32, #tpu.memory_space<vmem>>, vector<16x16x1xf32>
    %24 = vector.shape_cast %23 : vector<16x16x1xf32> to vector<256x1xf32>
    %c1_38 = arith.constant 1 : index
    %c2_39 = arith.constant 2 : index
    %c0_40 = arith.constant 0 : index
    %25 = vector.load %arg11[%c1_38, %c2_39, %c0_40] : memref<20x20x1xf32, #tpu.memory_space<vmem>>, vector<16x16x1xf32>
    %26 = vector.shape_cast %25 : vector<16x16x1xf32> to vector<256x1xf32>
    %c1_41 = arith.constant 1 : index
    %c3_42 = arith.constant 3 : index
    %c0_43 = arith.constant 0 : index
    %27 = vector.load %arg11[%c1_41, %c3_42, %c0_43] : memref<20x20x1xf32, #tpu.memory_space<vmem>>, vector<16x16x1xf32>
    %28 = vector.shape_cast %27 : vector<16x16x1xf32> to vector<256x1xf32>
    %c1_44 = arith.constant 1 : index
    %c4_45 = arith.constant 4 : index
    %c0_46 = arith.constant 0 : index
    %29 = vector.load %arg11[%c1_44, %c4_45, %c0_46] : memref<20x20x1xf32, #tpu.memory_space<vmem>>, vector<16x16x1xf32>
    %30 = vector.shape_cast %29 : vector<16x16x1xf32> to vector<256x1xf32>
    %c2_47 = arith.constant 2 : index
    %c0_48 = arith.constant 0 : index
    %c0_49 = arith.constant 0 : index
    %31 = vector.load %arg11[%c2_47, %c0_48, %c0_49] : memref<20x20x1xf32, #tpu.memory_space<vmem>>, vector<16x16x1xf32>
    %32 = vector.shape_cast %31 : vector<16x16x1xf32> to vector<256x1xf32>
    %c2_50 = arith.constant 2 : index
    %c1_51 = arith.constant 1 : index
    %c0_52 = arith.constant 0 : index
    %33 = vector.load %arg11[%c2_50, %c1_51, %c0_52] : memref<20x20x1xf32, #tpu.memory_space<vmem>>, vector<16x16x1xf32>
    %34 = vector.shape_cast %33 : vector<16x16x1xf32> to vector<256x1xf32>
    %c2_53 = arith.constant 2 : index
    %c2_54 = arith.constant 2 : index
    %c0_55 = arith.constant 0 : index
    %35 = vector.load %arg11[%c2_53, %c2_54, %c0_55] : memref<20x20x1xf32, #tpu.memory_space<vmem>>, vector<16x16x1xf32>
    %36 = vector.shape_cast %35 : vector<16x16x1xf32> to vector<256x1xf32>
    %c2_56 = arith.constant 2 : index
    %c3_57 = arith.constant 3 : index
    %c0_58 = arith.constant 0 : index
    %37 = vector.load %arg11[%c2_56, %c3_57, %c0_58] : memref<20x20x1xf32, #tpu.memory_space<vmem>>, vector<16x16x1xf32>
    %38 = vector.shape_cast %37 : vector<16x16x1xf32> to vector<256x1xf32>
    %c2_59 = arith.constant 2 : index
    %c4_60 = arith.constant 4 : index
    %c0_61 = arith.constant 0 : index
    %39 = vector.load %arg11[%c2_59, %c4_60, %c0_61] : memref<20x20x1xf32, #tpu.memory_space<vmem>>, vector<16x16x1xf32>
    %40 = vector.shape_cast %39 : vector<16x16x1xf32> to vector<256x1xf32>
    %c3_62 = arith.constant 3 : index
    %c0_63 = arith.constant 0 : index
    %c0_64 = arith.constant 0 : index
    %41 = vector.load %arg11[%c3_62, %c0_63, %c0_64] : memref<20x20x1xf32, #tpu.memory_space<vmem>>, vector<16x16x1xf32>
    %42 = vector.shape_cast %41 : vector<16x16x1xf32> to vector<256x1xf32>
    %c3_65 = arith.constant 3 : index
    %c1_66 = arith.constant 1 : index
    %c0_67 = arith.constant 0 : index
    %43 = vector.load %arg11[%c3_65, %c1_66, %c0_67] : memref<20x20x1xf32, #tpu.memory_space<vmem>>, vector<16x16x1xf32>
    %44 = vector.shape_cast %43 : vector<16x16x1xf32> to vector<256x1xf32>
    %c3_68 = arith.constant 3 : index
    %c2_69 = arith.constant 2 : index
    %c0_70 = arith.constant 0 : index
    %45 = vector.load %arg11[%c3_68, %c2_69, %c0_70] : memref<20x20x1xf32, #tpu.memory_space<vmem>>, vector<16x16x1xf32>
    %46 = vector.shape_cast %45 : vector<16x16x1xf32> to vector<256x1xf32>
    %c3_71 = arith.constant 3 : index
    %c3_72 = arith.constant 3 : index
    %c0_73 = arith.constant 0 : index
    %47 = vector.load %arg11[%c3_71, %c3_72, %c0_73] : memref<20x20x1xf32, #tpu.memory_space<vmem>>, vector<16x16x1xf32>
    %48 = vector.shape_cast %47 : vector<16x16x1xf32> to vector<256x1xf32>
    %c3_74 = arith.constant 3 : index
    %c4_75 = arith.constant 4 : index
    %c0_76 = arith.constant 0 : index
    %49 = vector.load %arg11[%c3_74, %c4_75, %c0_76] : memref<20x20x1xf32, #tpu.memory_space<vmem>>, vector<16x16x1xf32>
    %50 = vector.shape_cast %49 : vector<16x16x1xf32> to vector<256x1xf32>
    %c4_77 = arith.constant 4 : index
    %c0_78 = arith.constant 0 : index
    %c0_79 = arith.constant 0 : index
    %51 = vector.load %arg11[%c4_77, %c0_78, %c0_79] : memref<20x20x1xf32, #tpu.memory_space<vmem>>, vector<16x16x1xf32>
    %52 = vector.shape_cast %51 : vector<16x16x1xf32> to vector<256x1xf32>
    %c4_80 = arith.constant 4 : index
    %c1_81 = arith.constant 1 : index
    %c0_82 = arith.constant 0 : index
    %53 = vector.load %arg11[%c4_80, %c1_81, %c0_82] : memref<20x20x1xf32, #tpu.memory_space<vmem>>, vector<16x16x1xf32>
    %54 = vector.shape_cast %53 : vector<16x16x1xf32> to vector<256x1xf32>
    %c4_83 = arith.constant 4 : index
    %c2_84 = arith.constant 2 : index
    %c0_85 = arith.constant 0 : index
    %55 = vector.load %arg11[%c4_83, %c2_84, %c0_85] : memref<20x20x1xf32, #tpu.memory_space<vmem>>, vector<16x16x1xf32>
    %56 = vector.shape_cast %55 : vector<16x16x1xf32> to vector<256x1xf32>
    %c4_86 = arith.constant 4 : index
    %c3_87 = arith.constant 3 : index
    %c0_88 = arith.constant 0 : index
    %57 = vector.load %arg11[%c4_86, %c3_87, %c0_88] : memref<20x20x1xf32, #tpu.memory_space<vmem>>, vector<16x16x1xf32>
    %58 = vector.shape_cast %57 : vector<16x16x1xf32> to vector<256x1xf32>
    %c4_89 = arith.constant 4 : index
    %c4_90 = arith.constant 4 : index
    %c0_91 = arith.constant 0 : index
    %59 = vector.load %arg11[%c4_89, %c4_90, %c0_91] : memref<20x20x1xf32, #tpu.memory_space<vmem>>, vector<16x16x1xf32>
    %60 = vector.shape_cast %59 : vector<16x16x1xf32> to vector<256x1xf32>
    %cst_92 = arith.constant 0.000000e+00 : f32
    %61 = vector.broadcast %cst_92 : f32 to vector<256x7xf32>
    %62 = tpu.concatenate %12, %14, %16, %18, %20, %22, %24, %26, %28, %30, %32, %34, %36, %38, %40, %42 in 1 : vector<256x1xf32>, vector<256x1xf32>, vector<256x1xf32>, vector<256x1xf32>, vector<256x1xf32>, vector<256x1xf32>, vector<256x1xf32>, vector<256x1xf32>, vector<256x1xf32>, vector<256x1xf32>, vector<256x1xf32>, vector<256x1xf32>, vector<256x1xf32>, vector<256x1xf32>, vector<256x1xf32>, vector<256x1xf32> -> vector<256x16xf32>
    %63 = tpu.concatenate %44, %46, %48, %50, %52, %54, %56, %58, %60, %61 in 1 : vector<256x1xf32>, vector<256x1xf32>, vector<256x1xf32>, vector<256x1xf32>, vector<256x1xf32>, vector<256x1xf32>, vector<256x1xf32>, vector<256x1xf32>, vector<256x1xf32>, vector<256x7xf32> -> vector<256x16xf32>
    %64 = tpu.concatenate %62, %63 in 1 : vector<256x16xf32>, vector<256x16xf32> -> vector<256x32xf32>
    %c0_93 = arith.constant 0 : index
    %c0_94 = arith.constant 0 : index
    %65 = vector.load %arg2[%c0_93, %c0_94] : memref<32x128xf32, #tpu.memory_space<vmem>>, vector<32x128xf32>
    %cst_95 = arith.constant dense<0.000000e+00> : vector<256x128xf32>
    %66 = tpu.matmul %64, %65, %cst_95 {dimension_numbers = #tpu.dot_dimension_numbers<[1], [0], [0], [1], [0, 0, 1, 1], [], []>} : vector<256x32xf32>, vector<32x128xf32>, vector<256x128xf32> -> vector<256x128xf32>
    %c0_96 = arith.constant 0 : index
    %c0_97 = arith.constant 0 : index
    %67 = vector.load %arg3[%c0_96, %c0_97] : memref<1x128xf32, #tpu.memory_space<vmem>>, vector<1x128xf32>
    %68 = vector.broadcast %67 : vector<1x128xf32> to vector<256x128xf32>
    %69 = arith.addf %66, %68 : vector<256x128xf32>
    %cst_98 = arith.constant 0.000000e+00 : f32
    %70 = vector.broadcast %cst_98 : f32 to vector<256x128xf32>
    %71 = arith.maximumf %69, %70 : vector<256x128xf32>
    %72 = vector.shape_cast %71 : vector<256x128xf32> to vector<16x16x128xf32>
    %c1_99 = arith.constant 1 : index
    %c1_100 = arith.constant 1 : index
    %c0_101 = arith.constant 0 : index
    %73 = vector.load %arg12[%c1_99, %c1_100, %c0_101] : memref<18x18x128xf32, #tpu.memory_space<vmem>>, vector<16x16x128xf32>
    tpu.vector_store %arg12[%c1_99, %c1_100, %c0_101], %72 {strides = array<i32>} : memref<18x18x128xf32, #tpu.memory_space<vmem>>, vector<16x16x128xf32>,
    %c0_102 = arith.constant 0 : index
    %c0_103 = arith.constant 0 : index
    %c0_104 = arith.constant 0 : index
    %74 = vector.load %arg12[%c0_102, %c0_103, %c0_104] : memref<18x18x128xf32, #tpu.memory_space<vmem>>, vector<16x16x128xf32>
    %75 = vector.shape_cast %74 : vector<16x16x128xf32> to vector<256x128xf32>
    %c0_105 = arith.constant 0 : index
    %c1_106 = arith.constant 1 : index
    %c0_107 = arith.constant 0 : index
    %76 = vector.load %arg12[%c0_105, %c1_106, %c0_107] : memref<18x18x128xf32, #tpu.memory_space<vmem>>, vector<16x16x128xf32>
    %77 = vector.shape_cast %76 : vector<16x16x128xf32> to vector<256x128xf32>
    %c0_108 = arith.constant 0 : index
    %c2_109 = arith.constant 2 : index
    %c0_110 = arith.constant 0 : index
    %78 = vector.load %arg12[%c0_108, %c2_109, %c0_110] : memref<18x18x128xf32, #tpu.memory_space<vmem>>, vector<16x16x128xf32>
    %79 = vector.shape_cast %78 : vector<16x16x128xf32> to vector<256x128xf32>
    %c1_111 = arith.constant 1 : index
    %c0_112 = arith.constant 0 : index
    %c0_113 = arith.constant 0 : index
    %80 = vector.load %arg12[%c1_111, %c0_112, %c0_113] : memref<18x18x128xf32, #tpu.memory_space<vmem>>, vector<16x16x128xf32>
    %81 = vector.shape_cast %80 : vector<16x16x128xf32> to vector<256x128xf32>
    %c1_114 = arith.constant 1 : index
    %c1_115 = arith.constant 1 : index
    %c0_116 = arith.constant 0 : index
    %82 = vector.load %arg12[%c1_114, %c1_115, %c0_116] : memref<18x18x128xf32, #tpu.memory_space<vmem>>, vector<16x16x128xf32>
    %83 = vector.shape_cast %82 : vector<16x16x128xf32> to vector<256x128xf32>
    %c1_117 = arith.constant 1 : index
    %c2_118 = arith.constant 2 : index
    %c0_119 = arith.constant 0 : index
    %84 = vector.load %arg12[%c1_117, %c2_118, %c0_119] : memref<18x18x128xf32, #tpu.memory_space<vmem>>, vector<16x16x128xf32>
    %85 = vector.shape_cast %84 : vector<16x16x128xf32> to vector<256x128xf32>
    %c2_120 = arith.constant 2 : index
    %c0_121 = arith.constant 0 : index
    %c0_122 = arith.constant 0 : index
    %86 = vector.load %arg12[%c2_120, %c0_121, %c0_122] : memref<18x18x128xf32, #tpu.memory_space<vmem>>, vector<16x16x128xf32>
    %87 = vector.shape_cast %86 : vector<16x16x128xf32> to vector<256x128xf32>
    %c2_123 = arith.constant 2 : index
    %c1_124 = arith.constant 1 : index
    %c0_125 = arith.constant 0 : index
    %88 = vector.load %arg12[%c2_123, %c1_124, %c0_125] : memref<18x18x128xf32, #tpu.memory_space<vmem>>, vector<16x16x128xf32>
    %89 = vector.shape_cast %88 : vector<16x16x128xf32> to vector<256x128xf32>
    %c2_126 = arith.constant 2 : index
    %c2_127 = arith.constant 2 : index
    %c0_128 = arith.constant 0 : index
    %90 = vector.load %arg12[%c2_126, %c2_127, %c0_128] : memref<18x18x128xf32, #tpu.memory_space<vmem>>, vector<16x16x128xf32>
    %91 = vector.shape_cast %90 : vector<16x16x128xf32> to vector<256x128xf32>
    %92 = tpu.concatenate %75, %77, %79, %81, %83, %85, %87, %89, %91 in 1 : vector<256x128xf32>, vector<256x128xf32>, vector<256x128xf32>, vector<256x128xf32>, vector<256x128xf32>, vector<256x128xf32>, vector<256x128xf32>, vector<256x128xf32>, vector<256x128xf32> -> vector<256x1152xf32>
    %c0_129 = arith.constant 0 : index
    %c0_130 = arith.constant 0 : index
    %93 = vector.load %arg4[%c0_129, %c0_130] : memref<1152x64xf32, #tpu.memory_space<vmem>>, vector<1152x64xf32>
    %cst_131 = arith.constant dense<0.000000e+00> : vector<256x64xf32>
    %94 = tpu.matmul %92, %93, %cst_131 {dimension_numbers = #tpu.dot_dimension_numbers<[1], [0], [0], [1], [0, 0, 1, 1], [], []>} : vector<256x1152xf32>, vector<1152x64xf32>, vector<256x64xf32> -> vector<256x64xf32>
    %c0_132 = arith.constant 0 : index
    %c0_133 = arith.constant 0 : index
    %95 = vector.load %arg5[%c0_132, %c0_133] : memref<1x64xf32, #tpu.memory_space<vmem>>, vector<1x64xf32>
    %96 = vector.broadcast %95 : vector<1x64xf32> to vector<256x64xf32>
    %97 = arith.addf %94, %96 : vector<256x64xf32>
    %cst_134 = arith.constant 0.000000e+00 : f32
    %98 = vector.broadcast %cst_134 : f32 to vector<256x64xf32>
    %99 = arith.maximumf %97, %98 : vector<256x64xf32>
    %100 = vector.shape_cast %99 : vector<256x64xf32> to vector<16x16x64xf32>
    %c1_135 = arith.constant 1 : index
    %c1_136 = arith.constant 1 : index
    %c0_137 = arith.constant 0 : index
    %101 = vector.load %arg13[%c1_135, %c1_136, %c0_137] : memref<18x18x64xf32, #tpu.memory_space<vmem>>, vector<16x16x64xf32>
    tpu.vector_store %arg13[%c1_135, %c1_136, %c0_137], %100 {strides = array<i32>} : memref<18x18x64xf32, #tpu.memory_space<vmem>>, vector<16x16x64xf32>,
    %c0_138 = arith.constant 0 : index
    %c0_139 = arith.constant 0 : index
    %c0_140 = arith.constant 0 : index
    %102 = vector.load %arg13[%c0_138, %c0_139, %c0_140] : memref<18x18x64xf32, #tpu.memory_space<vmem>>, vector<16x16x64xf32>
    %103 = vector.shape_cast %102 : vector<16x16x64xf32> to vector<256x64xf32>
    %c0_141 = arith.constant 0 : index
    %c1_142 = arith.constant 1 : index
    %c0_143 = arith.constant 0 : index
    %104 = vector.load %arg13[%c0_141, %c1_142, %c0_143] : memref<18x18x64xf32, #tpu.memory_space<vmem>>, vector<16x16x64xf32>
    %105 = vector.shape_cast %104 : vector<16x16x64xf32> to vector<256x64xf32>
    %c0_144 = arith.constant 0 : index
    %c2_145 = arith.constant 2 : index
    %c0_146 = arith.constant 0 : index
    %106 = vector.load %arg13[%c0_144, %c2_145, %c0_146] : memref<18x18x64xf32, #tpu.memory_space<vmem>>, vector<16x16x64xf32>
    %107 = vector.shape_cast %106 : vector<16x16x64xf32> to vector<256x64xf32>
    %c1_147 = arith.constant 1 : index
    %c0_148 = arith.constant 0 : index
    %c0_149 = arith.constant 0 : index
    %108 = vector.load %arg13[%c1_147, %c0_148, %c0_149] : memref<18x18x64xf32, #tpu.memory_space<vmem>>, vector<16x16x64xf32>
    %109 = vector.shape_cast %108 : vector<16x16x64xf32> to vector<256x64xf32>
    %c1_150 = arith.constant 1 : index
    %c1_151 = arith.constant 1 : index
    %c0_152 = arith.constant 0 : index
    %110 = vector.load %arg13[%c1_150, %c1_151, %c0_152] : memref<18x18x64xf32, #tpu.memory_space<vmem>>, vector<16x16x64xf32>
    %111 = vector.shape_cast %110 : vector<16x16x64xf32> to vector<256x64xf32>
    %c1_153 = arith.constant 1 : index
    %c2_154 = arith.constant 2 : index
    %c0_155 = arith.constant 0 : index
    %112 = vector.load %arg13[%c1_153, %c2_154, %c0_155] : memref<18x18x64xf32, #tpu.memory_space<vmem>>, vector<16x16x64xf32>
    %113 = vector.shape_cast %112 : vector<16x16x64xf32> to vector<256x64xf32>
    %c2_156 = arith.constant 2 : index
    %c0_157 = arith.constant 0 : index
    %c0_158 = arith.constant 0 : index
    %114 = vector.load %arg13[%c2_156, %c0_157, %c0_158] : memref<18x18x64xf32, #tpu.memory_space<vmem>>, vector<16x16x64xf32>
    %115 = vector.shape_cast %114 : vector<16x16x64xf32> to vector<256x64xf32>
    %c2_159 = arith.constant 2 : index
    %c1_160 = arith.constant 1 : index
    %c0_161 = arith.constant 0 : index
    %116 = vector.load %arg13[%c2_159, %c1_160, %c0_161] : memref<18x18x64xf32, #tpu.memory_space<vmem>>, vector<16x16x64xf32>
    %117 = vector.shape_cast %116 : vector<16x16x64xf32> to vector<256x64xf32>
    %c2_162 = arith.constant 2 : index
    %c2_163 = arith.constant 2 : index
    %c0_164 = arith.constant 0 : index
    %118 = vector.load %arg13[%c2_162, %c2_163, %c0_164] : memref<18x18x64xf32, #tpu.memory_space<vmem>>, vector<16x16x64xf32>
    %119 = vector.shape_cast %118 : vector<16x16x64xf32> to vector<256x64xf32>
    %120 = tpu.concatenate %103, %105, %107, %109, %111, %113, %115, %117, %119 in 1 : vector<256x64xf32>, vector<256x64xf32>, vector<256x64xf32>, vector<256x64xf32>, vector<256x64xf32>, vector<256x64xf32>, vector<256x64xf32>, vector<256x64xf32>, vector<256x64xf32> -> vector<256x576xf32>
    %c0_165 = arith.constant 0 : index
    %c0_166 = arith.constant 0 : index
    %121 = vector.load %arg6[%c0_165, %c0_166] : memref<576x32xf32, #tpu.memory_space<vmem>>, vector<576x32xf32>
    %cst_167 = arith.constant dense<0.000000e+00> : vector<256x32xf32>
    %122 = tpu.matmul %120, %121, %cst_167 {dimension_numbers = #tpu.dot_dimension_numbers<[1], [0], [0], [1], [0, 0, 1, 1], [], []>} : vector<256x576xf32>, vector<576x32xf32>, vector<256x32xf32> -> vector<256x32xf32>
    %c0_168 = arith.constant 0 : index
    %c0_169 = arith.constant 0 : index
    %123 = vector.load %arg7[%c0_168, %c0_169] : memref<1x32xf32, #tpu.memory_space<vmem>>, vector<1x32xf32>
    %124 = vector.broadcast %123 : vector<1x32xf32> to vector<256x32xf32>
    %125 = arith.addf %122, %124 : vector<256x32xf32>
    %cst_170 = arith.constant 0.000000e+00 : f32
    %126 = vector.broadcast %cst_170 : f32 to vector<256x32xf32>
    %127 = arith.maximumf %125, %126 : vector<256x32xf32>
    %128 = vector.shape_cast %127 : vector<256x32xf32> to vector<16x16x32xf32>
    %c1_171 = arith.constant 1 : index
    %c1_172 = arith.constant 1 : index
    %c0_173 = arith.constant 0 : index
    %129 = vector.load %arg14[%c1_171, %c1_172, %c0_173] : memref<18x18x32xf32, #tpu.memory_space<vmem>>, vector<16x16x32xf32>
    tpu.vector_store %arg14[%c1_171, %c1_172, %c0_173], %128 {strides = array<i32>} : memref<18x18x32xf32, #tpu.memory_space<vmem>>, vector<16x16x32xf32>,
    %c0_174 = arith.constant 0 : index
    %c0_175 = arith.constant 0 : index
    %c0_176 = arith.constant 0 : index
    %130 = vector.load %arg14[%c0_174, %c0_175, %c0_176] : memref<18x18x32xf32, #tpu.memory_space<vmem>>, vector<16x16x32xf32>
    %131 = vector.shape_cast %130 : vector<16x16x32xf32> to vector<256x32xf32>
    %c0_177 = arith.constant 0 : index
    %c1_178 = arith.constant 1 : index
    %c0_179 = arith.constant 0 : index
    %132 = vector.load %arg14[%c0_177, %c1_178, %c0_179] : memref<18x18x32xf32, #tpu.memory_space<vmem>>, vector<16x16x32xf32>
    %133 = vector.shape_cast %132 : vector<16x16x32xf32> to vector<256x32xf32>
    %c0_180 = arith.constant 0 : index
    %c2_181 = arith.constant 2 : index
    %c0_182 = arith.constant 0 : index
    %134 = vector.load %arg14[%c0_180, %c2_181, %c0_182] : memref<18x18x32xf32, #tpu.memory_space<vmem>>, vector<16x16x32xf32>
    %135 = vector.shape_cast %134 : vector<16x16x32xf32> to vector<256x32xf32>
    %c1_183 = arith.constant 1 : index
    %c0_184 = arith.constant 0 : index
    %c0_185 = arith.constant 0 : index
    %136 = vector.load %arg14[%c1_183, %c0_184, %c0_185] : memref<18x18x32xf32, #tpu.memory_space<vmem>>, vector<16x16x32xf32>
    %137 = vector.shape_cast %136 : vector<16x16x32xf32> to vector<256x32xf32>
    %c1_186 = arith.constant 1 : index
    %c1_187 = arith.constant 1 : index
    %c0_188 = arith.constant 0 : index
    %138 = vector.load %arg14[%c1_186, %c1_187, %c0_188] : memref<18x18x32xf32, #tpu.memory_space<vmem>>, vector<16x16x32xf32>
    %139 = vector.shape_cast %138 : vector<16x16x32xf32> to vector<256x32xf32>
    %c1_189 = arith.constant 1 : index
    %c2_190 = arith.constant 2 : index
    %c0_191 = arith.constant 0 : index
    %140 = vector.load %arg14[%c1_189, %c2_190, %c0_191] : memref<18x18x32xf32, #tpu.memory_space<vmem>>, vector<16x16x32xf32>
    %141 = vector.shape_cast %140 : vector<16x16x32xf32> to vector<256x32xf32>
    %c2_192 = arith.constant 2 : index
    %c0_193 = arith.constant 0 : index
    %c0_194 = arith.constant 0 : index
    %142 = vector.load %arg14[%c2_192, %c0_193, %c0_194] : memref<18x18x32xf32, #tpu.memory_space<vmem>>, vector<16x16x32xf32>
    %143 = vector.shape_cast %142 : vector<16x16x32xf32> to vector<256x32xf32>
    %c2_195 = arith.constant 2 : index
    %c1_196 = arith.constant 1 : index
    %c0_197 = arith.constant 0 : index
    %144 = vector.load %arg14[%c2_195, %c1_196, %c0_197] : memref<18x18x32xf32, #tpu.memory_space<vmem>>, vector<16x16x32xf32>
    %145 = vector.shape_cast %144 : vector<16x16x32xf32> to vector<256x32xf32>
    %c2_198 = arith.constant 2 : index
    %c2_199 = arith.constant 2 : index
    %c0_200 = arith.constant 0 : index
    %146 = vector.load %arg14[%c2_198, %c2_199, %c0_200] : memref<18x18x32xf32, #tpu.memory_space<vmem>>, vector<16x16x32xf32>
    %147 = vector.shape_cast %146 : vector<16x16x32xf32> to vector<256x32xf32>
    %148 = tpu.concatenate %131, %133, %135, %137, %139, %141, %143, %145, %147 in 1 : vector<256x32xf32>, vector<256x32xf32>, vector<256x32xf32>, vector<256x32xf32>, vector<256x32xf32>, vector<256x32xf32>, vector<256x32xf32>, vector<256x32xf32>, vector<256x32xf32> -> vector<256x288xf32>
    %c0_201 = arith.constant 0 : index
    %c0_202 = arith.constant 0 : index
    %149 = vector.load %arg8[%c0_201, %c0_202] : memref<288x4xf32, #tpu.memory_space<vmem>>, vector<288x4xf32>
    %cst_203 = arith.constant dense<0.000000e+00> : vector<256x4xf32>
    %150 = tpu.matmul %148, %149, %cst_203 {dimension_numbers = #tpu.dot_dimension_numbers<[1], [0], [0], [1], [0, 0, 1, 1], [], []>} : vector<256x288xf32>, vector<288x4xf32>, vector<256x4xf32> -> vector<256x4xf32>
    %c0_204 = arith.constant 0 : index
    %c0_205 = arith.constant 0 : index
    %151 = vector.load %arg9[%c0_204, %c0_205] : memref<1x4xf32, #tpu.memory_space<vmem>>, vector<1x4xf32>
    %152 = vector.broadcast %151 : vector<1x4xf32> to vector<256x4xf32>
    %153 = arith.addf %150, %152 : vector<256x4xf32>
    %c0_206 = arith.constant 0 : index
    %c0_207 = arith.constant 0 : index
    %c0_208 = arith.constant 0 : index
    %154 = vector.load %arg10[%c0_206, %c0_207, %c0_208] : memref<1x256x4xf32, #tpu.memory_space<vmem>>, vector<1x256x4xf32>
    %155 = vector.shape_cast %154 : vector<1x256x4xf32> to vector<256x4xf32>
    %156 = vector.shape_cast %153 : vector<256x4xf32> to vector<1x256x4xf32>
    tpu.vector_store %arg10[%c0_206, %c0_207, %c0_208], %156 {strides = array<i32>} : memref<1x256x4xf32, #tpu.memory_space<vmem>>, vector<1x256x4xf32>,
    return
  }
  func.func @transform_0(%arg0: i32) -> (i32, i32, i32, i32) {
    %c0_i32 = arith.constant 0 : i32
    %c0_i32_0 = arith.constant 0 : i32
    %c0_i32_1 = arith.constant 0 : i32
    %c0_i32_2 = arith.constant 0 : i32
    return %arg0, %c0_i32, %c0_i32_0, %c0_i32_1 : i32, i32, i32, i32
  }
  func.func @transform_1(%arg0: i32) -> (i32, i32) {
    %c0_i32 = arith.constant 0 : i32
    %c0_i32_0 = arith.constant 0 : i32
    %c0_i32_1 = arith.constant 0 : i32
    return %c0_i32, %c0_i32_0 : i32, i32
  }
  func.func @transform_2(%arg0: i32) -> (i32, i32) {
    %c0_i32 = arith.constant 0 : i32
    %c0_i32_0 = arith.constant 0 : i32
    %c0_i32_1 = arith.constant 0 : i32
    return %c0_i32, %c0_i32_0 : i32, i32
  }
  func.func @transform_3(%arg0: i32) -> (i32, i32) {
    %c0_i32 = arith.constant 0 : i32
    %c0_i32_0 = arith.constant 0 : i32
    %c0_i32_1 = arith.constant 0 : i32
    return %c0_i32, %c0_i32_0 : i32, i32
  }
  func.func @transform_4(%arg0: i32) -> (i32, i32) {
    %c0_i32 = arith.constant 0 : i32
    %c0_i32_0 = arith.constant 0 : i32
    %c0_i32_1 = arith.constant 0 : i32
    return %c0_i32, %c0_i32_0 : i32, i32
  }
  func.func @transform_5(%arg0: i32) -> (i32, i32) {
    %c0_i32 = arith.constant 0 : i32
    %c0_i32_0 = arith.constant 0 : i32
    %c0_i32_1 = arith.constant 0 : i32
    return %c0_i32, %c0_i32_0 : i32, i32
  }
  func.func @transform_6(%arg0: i32) -> (i32, i32) {
    %c0_i32 = arith.constant 0 : i32
    %c0_i32_0 = arith.constant 0 : i32
    %c0_i32_1 = arith.constant 0 : i32
    return %c0_i32, %c0_i32_0 : i32, i32
  }
  func.func @transform_7(%arg0: i32) -> (i32, i32) {
    %c0_i32 = arith.constant 0 : i32
    %c0_i32_0 = arith.constant 0 : i32
    %c0_i32_1 = arith.constant 0 : i32
    return %c0_i32, %c0_i32_0 : i32, i32
  }
  func.func @transform_8(%arg0: i32) -> (i32, i32) {
    %c0_i32 = arith.constant 0 : i32
    %c0_i32_0 = arith.constant 0 : i32
    %c0_i32_1 = arith.constant 0 : i32
    return %c0_i32, %c0_i32_0 : i32, i32
  }
  func.func @transform_9(%arg0: i32) -> (i32, i32, i32) {
    %c0_i32 = arith.constant 0 : i32
    %c0_i32_0 = arith.constant 0 : i32
    %c0_i32_1 = arith.constant 0 : i32
    return %arg0, %c0_i32, %c0_i32_0 : i32, i32, i32
  }
}

</mosaic_0001>

<llo_original>
// kernel: net_forward.1
$region0: #{net_forward.1}
  #allocation0 [shape = 'u32[]', space=smem, size = 0x4, offset = 0x4, fixed_abs, tag = 'smem constant byte address 0x4 - core index']
  #allocation1 [shape = 'u32[144,128]{1,0:T(1,128)}', space=vmem, size = 0x12000, scoped, tag = 'internal scratch']
  #allocation2 [shape = 'f32[20,20,1]{2,1,0:T(8,128)}', space=vmem, size = 0x3c000, scoped, tag = 'scratch operand']
  #allocation3 [shape = 'f32[18,18,128]{2,1,0:T(8,128)}', space=vmem, size = 0x36000, scoped, tag = 'scratch operand']
  #allocation4 [shape = 'f32[18,18,64]{2,1,0:T(8,128)}', space=vmem, size = 0x36000, scoped, tag = 'scratch operand']
  #allocation5 [shape = 'f32[18,18,32]{2,1,0:T(8,128)}', space=vmem, size = 0x36000, scoped, tag = 'scratch operand']
  %s0 = inlined_call_operand.vmem [shape: f32[2,16,16,1], index: 0, kind: input, shape index: {}]
  %s1 = inlined_call_operand.vmem [shape: f32[32,128], index: 1, kind: input, shape index: {}]
  %s2 = inlined_call_operand.vmem [shape: f32[1,128], index: 2, kind: input, shape index: {}]
  %s3 = inlined_call_operand.vmem [shape: f32[1152,64], index: 3, kind: input, shape index: {}]
  %s4 = inlined_call_operand.vmem [shape: f32[1,64], index: 4, kind: input, shape index: {}]
  %s5 = inlined_call_operand.vmem [shape: f32[576,32], index: 5, kind: input, shape index: {}]
  %s6 = inlined_call_operand.vmem [shape: f32[1,32], index: 6, kind: input, shape index: {}]
  %s7 = inlined_call_operand.vmem [shape: f32[288,4], index: 7, kind: input, shape index: {}]
  %s8 = inlined_call_operand.vmem [shape: f32[1,4], index: 8, kind: input, shape index: {}]
  %s9 = inlined_call_operand.vmem [shape: f32[2,256,4], index: 9, kind: output, shape index: {}]
  %s10 = sld [smem:[#allocation0]]
  $region69: #{net_forward.1} parent=0
    _
  %s12 = ssub.s32 1, %s10
  %s13 = scalar_select 0, %s12, %s10
  loop: start=0, step=1, limit=4
  $region2: #{net_forward.1} parent=0 // loop_pre_header
    _
  $region3: #{net_forward.1} parent=0 // loop_header
    %s15 = sphi 0, %s19
    %p16 = scmp.ge.s32.totalorder %s15, 4
    %s25 = sphi 0, %s27
    %s28 = sphi 0, %s25
    %s29 = sphi 0, %s28
    %s45 = sphi 0, %s29
    %s49 = sphi 0, %s49
    %s51 = sphi 0, %s49
    %s52 = sphi 0, %s51
    %s66 = sphi 0, %s52
    %s70 = sphi 0, %s70
    %s72 = sphi 0, %s70
    %s73 = sphi 0, %s72
    %s87 = sphi 0, %s73
    %s91 = sphi 0, %s91
    %s93 = sphi 0, %s91
    %s94 = sphi 0, %s93
    %s108 = sphi 0, %s94
    %s112 = sphi 0, %s112
    %s114 = sphi 0, %s112
    %s115 = sphi 0, %s114
    %s129 = sphi 0, %s115
    %s133 = sphi 0, %s133
    %s135 = sphi 0, %s133
    %s136 = sphi 0, %s135
    %s150 = sphi 0, %s136
    %s154 = sphi 0, %s154
    %s156 = sphi 0, %s154
    %s157 = sphi 0, %s156
    %s171 = sphi 0, %s157
    %s175 = sphi 0, %s175
    %s177 = sphi 0, %s175
    %s178 = sphi 0, %s177
    %s192 = sphi 0, %s178
    %s196 = sphi 0, %s196
    %s198 = sphi 0, %s196
    %s199 = sphi 0, %s198
    %s213 = sphi 0, %s199
    %s219 = sphi 0, %s221
    %s222 = sphi 0, %s219
    %s223 = sphi 0, %s222
    %s239 = sphi 0, %s223
  $region4: #{net_forward.1} parent=0 // loop_header_branch
    %18 = sbr.rel (%p16) target = $region8
  $region5: #{net_forward.1} parent=0 // loop_body
    %s20 = ssub.s32 %s15, 1
    %s21 = ssub.s32 %s15, 2
    %s22 = sadd.s32 %s15, 1
    %s23 = ssub.s32 %s15, %s22
    %p24 = scmp.eq.s32.totalorder %s23, 0
    %s26 = sadd.s32 %s25, 1
    %s27 = scalar_select %p24, %s25, %s26
    %p30 = pneg %p24
    %p31 = scmp.eq.s32.totalorder %s15, 1
    %p32 = por %p30, %p31
    %p33 = scmp.ne.s32.totalorder %s25, %s28
    %p34 = scmp.eq.s32.totalorder %s15, 0
    %p35 = por %p33, %p34
    %p36 = scmp.ne.s32.totalorder %s25, %s28
    %p37 = scmp.eq.s32.totalorder %s20, 1
    %p38 = por %p36, %p37
    %p39 = scmp.ne.s32.totalorder %s28, %s29
    %p40 = scmp.eq.s32.totalorder %s20, 0
    %p41 = por %p39, %p40
    %p42 = scmp.ne.s32.totalorder %s28, %s29
    %p43 = scmp.eq.s32.totalorder %s21, 1
    %p44 = por %p42, %p43
    %p46 = scmp.ne.s32.totalorder %s29, %s45
    %p47 = scmp.eq.s32.totalorder %s21, 0
    %p48 = por %p46, %p47
    %s50 = sadd.s32 %s49, 1
    %p53 = scmp.eq.s32.totalorder %s15, 1
    %p54 = scmp.ne.s32.totalorder %s49, %s51
    %p55 = scmp.eq.s32.totalorder %s15, 0
    %p56 = por %p54, %p55
    %p57 = scmp.ne.s32.totalorder %s49, %s51
    %p58 = scmp.eq.s32.totalorder %s20, 1
    %p59 = por %p57, %p58
    %p60 = scmp.ne.s32.totalorder %s51, %s52
    %p61 = scmp.eq.s32.totalorder %s20, 0
    %p62 = por %p60, %p61
    %p63 = scmp.ne.s32.totalorder %s51, %s52
    %p64 = scmp.eq.s32.totalorder %s21, 1
    %p65 = por %p63, %p64
    %p67 = scmp.ne.s32.totalorder %s52, %s66
    %p68 = scmp.eq.s32.totalorder %s21, 0
    %p69 = por %p67, %p68
    %s71 = sadd.s32 %s70, 1
    %p74 = scmp.eq.s32.totalorder %s15, 1
    %p75 = scmp.ne.s32.totalorder %s70, %s72
    %p76 = scmp.eq.s32.totalorder %s15, 0
    %p77 = por %p75, %p76
    %p78 = scmp.ne.s32.totalorder %s70, %s72
    %p79 = scmp.eq.s32.totalorder %s20, 1
    %p80 = por %p78, %p79
    %p81 = scmp.ne.s32.totalorder %s72, %s73
    %p82 = scmp.eq.s32.totalorder %s20, 0
    %p83 = por %p81, %p82
    %p84 = scmp.ne.s32.totalorder %s72, %s73
    %p85 = scmp.eq.s32.totalorder %s21, 1
    %p86 = por %p84, %p85
    %p88 = scmp.ne.s32.totalorder %s73, %s87
    %p89 = scmp.eq.s32.totalorder %s21, 0
    %p90 = por %p88, %p89
    %s92 = sadd.s32 %s91, 1
    %p95 = scmp.eq.s32.totalorder %s15, 1
    %p96 = scmp.ne.s32.totalorder %s91, %s93
    %p97 = scmp.eq.s32.totalorder %s15, 0
    %p98 = por %p96, %p97
    %p99 = scmp.ne.s32.totalorder %s91, %s93
    %p100 = scmp.eq.s32.totalorder %s20, 1
    %p101 = por %p99, %p100
    %p102 = scmp.ne.s32.totalorder %s93, %s94
    %p103 = scmp.eq.s32.totalorder %s20, 0
    %p104 = por %p102, %p103
    %p105 = scmp.ne.s32.totalorder %s93, %s94
    %p106 = scmp.eq.s32.totalorder %s21, 1
    %p107 = por %p105, %p106
    %p109 = scmp.ne.s32.totalorder %s94, %s108
    %p110 = scmp.eq.s32.totalorder %s21, 0
    %p111 = por %p109, %p110
    %s113 = sadd.s32 %s112, 1
    %p116 = scmp.eq.s32.totalorder %s15, 1
    %p117 = scmp.ne.s32.totalorder %s112, %s114
    %p118 = scmp.eq.s32.totalorder %s15, 0
    %p119 = por %p117, %p118
    %p120 = scmp.ne.s32.totalorder %s112, %s114
    %p121 = scmp.eq.s32.totalorder %s20, 1
    %p122 = por %p120, %p121
    %p123 = scmp.ne.s32.totalorder %s114, %s115
    %p124 = scmp.eq.s32.totalorder %s20, 0
    %p125 = por %p123, %p124
    %p126 = scmp.ne.s32.totalorder %s114, %s115
    %p127 = scmp.eq.s32.totalorder %s21, 1
    %p128 = por %p126, %p127
    %p130 = scmp.ne.s32.totalorder %s115, %s129
    %p131 = scmp.eq.s32.totalorder %s21, 0
    %p132 = por %p130, %p131
    %s134 = sadd.s32 %s133, 1
    %p137 = scmp.eq.s32.totalorder %s15, 1
    %p138 = scmp.ne.s32.totalorder %s133, %s135
    %p139 = scmp.eq.s32.totalorder %s15, 0
    %p140 = por %p138, %p139
    %p141 = scmp.ne.s32.totalorder %s133, %s135
    %p142 = scmp.eq.s32.totalorder %s20, 1
    %p143 = por %p141, %p142
    %p144 = scmp.ne.s32.totalorder %s135, %s136
    %p145 = scmp.eq.s32.totalorder %s20, 0
    %p146 = por %p144, %p145
    %p147 = scmp.ne.s32.totalorder %s135, %s136
    %p148 = scmp.eq.s32.totalorder %s21, 1
    %p149 = por %p147, %p148
    %p151 = scmp.ne.s32.totalorder %s136, %s150
    %p152 = scmp.eq.s32.totalorder %s21, 0
    %p153 = por %p151, %p152
    %s155 = sadd.s32 %s154, 1
    %p158 = scmp.eq.s32.totalorder %s15, 1
    %p159 = scmp.ne.s32.totalorder %s154, %s156
    %p160 = scmp.eq.s32.totalorder %s15, 0
    %p161 = por %p159, %p160
    %p162 = scmp.ne.s32.totalorder %s154, %s156
    %p163 = scmp.eq.s32.totalorder %s20, 1
    %p164 = por %p162, %p163
    %p165 = scmp.ne.s32.totalorder %s156, %s157
    %p166 = scmp.eq.s32.totalorder %s20, 0
    %p167 = por %p165, %p166
    %p168 = scmp.ne.s32.totalorder %s156, %s157
    %p169 = scmp.eq.s32.totalorder %s21, 1
    %p170 = por %p168, %p169
    %p172 = scmp.ne.s32.totalorder %s157, %s171
    %p173 = scmp.eq.s32.totalorder %s21, 0
    %p174 = por %p172, %p173
    %s176 = sadd.s32 %s175, 1
    %p179 = scmp.eq.s32.totalorder %s15, 1
    %p180 = scmp.ne.s32.totalorder %s175, %s177
    %p181 = scmp.eq.s32.totalorder %s15, 0
    %p182 = por %p180, %p181
    %p183 = scmp.ne.s32.totalorder %s175, %s177
    %p184 = scmp.eq.s32.totalorder %s20, 1
    %p185 = por %p183, %p184
    %p186 = scmp.ne.s32.totalorder %s177, %s178
    %p187 = scmp.eq.s32.totalorder %s20, 0
    %p188 = por %p186, %p187
    %p189 = scmp.ne.s32.totalorder %s177, %s178
    %p190 = scmp.eq.s32.totalorder %s21, 1
    %p191 = por %p189, %p190
    %p193 = scmp.ne.s32.totalorder %s178, %s192
    %p194 = scmp.eq.s32.totalorder %s21, 0
    %p195 = por %p193, %p194
    %s197 = sadd.s32 %s196, 1
    %p200 = scmp.eq.s32.totalorder %s15, 1
    %p201 = scmp.ne.s32.totalorder %s196, %s198
    %p202 = scmp.eq.s32.totalorder %s15, 0
    %p203 = por %p201, %p202
    %p204 = scmp.ne.s32.totalorder %s196, %s198
    %p205 = scmp.eq.s32.totalorder %s20, 1
    %p206 = por %p204, %p205
    %p207 = scmp.ne.s32.totalorder %s198, %s199
    %p208 = scmp.eq.s32.totalorder %s20, 0
    %p209 = por %p207, %p208
    %p210 = scmp.ne.s32.totalorder %s198, %s199
    %p211 = scmp.eq.s32.totalorder %s21, 1
    %p212 = por %p210, %p211
    %p214 = scmp.ne.s32.totalorder %s199, %s213
    %p215 = scmp.eq.s32.totalorder %s21, 0
    %p216 = por %p214, %p215
    %s217 = ssub.s32 %s15, %s22
    %p218 = scmp.eq.s32.totalorder %s217, 0
    %s220 = sadd.s32 %s219, 1
    %s221 = scalar_select %p218, %s219, %s220
    %p224 = pneg %p218
    %p225 = scmp.eq.s32.totalorder %s15, 1
    %p226 = por %p224, %p225
    %p227 = scmp.ne.s32.totalorder %s219, %s222
    %p228 = scmp.eq.s32.totalorder %s15, 0
    %p229 = por %p227, %p228
    %p230 = scmp.ne.s32.totalorder %s219, %s222
    %p231 = scmp.eq.s32.totalorder %s20, 1
    %p232 = por %p230, %p231
    %p233 = scmp.ne.s32.totalorder %s222, %s223
    %p234 = scmp.eq.s32.totalorder %s20, 0
    %p235 = por %p233, %p234
    %p236 = scmp.ne.s32.totalorder %s222, %s223
    %p237 = scmp.eq.s32.totalorder %s21, 1
    %p238 = por %p236, %p237
    %p240 = scmp.ne.s32.totalorder %s223, %s239
    %p241 = scmp.eq.s32.totalorder %s21, 0
    %p242 = por %p240, %p241
    %p243 = scmp.le.s32.totalorder 1, %s15
    %p244 = scmp.lt.s32.totalorder %s15, 3
    %p245 = pnand %p243, %p244
    %p246 = pneg %p245
    // Predicated region
    $region9: #{net_forward.1} parent=5 // pred_check
      _
    $region10: #{net_forward.1} parent=5 // pred_check_branch
      %248 = sbr.rel (%p245) target = $region12
    $region11: #{net_forward.1} parent=5 // pred_region
      %s249 = ssub.s32 %s15, 1
      // Predicated region
      $region13: #{net_forward.1} parent=11 // pred_check
        %p250 = pneg %p62
      $region14: #{net_forward.1} parent=11 // pred_check_branch
        %252 = sbr.rel (%p250) target = $region16
      $region15: #{net_forward.1} parent=11 // pred_region
        _
      $region16: #{net_forward.1} parent=11 // pred_fallthru
        _
      // Predicated region
      $region17: #{net_forward.1} parent=11 // pred_check
        %p253 = pneg %p83
      $region18: #{net_forward.1} parent=11 // pred_check_branch
        %255 = sbr.rel (%p253) target = $region20
      $region19: #{net_forward.1} parent=11 // pred_region
        _
      $region20: #{net_forward.1} parent=11 // pred_fallthru
        _
      // Predicated region
      $region21: #{net_forward.1} parent=11 // pred_check
        %p256 = pneg %p104
      $region22: #{net_forward.1} parent=11 // pred_check_branch
        %258 = sbr.rel (%p256) target = $region24
      $region23: #{net_forward.1} parent=11 // pred_region
        _
      $region24: #{net_forward.1} parent=11 // pred_fallthru
        _
      // Predicated region
      $region25: #{net_forward.1} parent=11 // pred_check
        %p259 = pneg %p125
      $region26: #{net_forward.1} parent=11 // pred_check_branch
        %261 = sbr.rel (%p259) target = $region28
      $region27: #{net_forward.1} parent=11 // pred_region
        _
      $region28: #{net_forward.1} parent=11 // pred_fallthru
        _
      // Predicated region
      $region29: #{net_forward.1} parent=11 // pred_check
        %p262 = pneg %p146
      $region30: #{net_forward.1} parent=11 // pred_check_branch
        %264 = sbr.rel (%p262) target = $region32
      $region31: #{net_forward.1} parent=11 // pred_region
        _
      $region32: #{net_forward.1} parent=11 // pred_fallthru
        _
      // Predicated region
      $region33: #{net_forward.1} parent=11 // pred_check
        %p265 = pneg %p167
      $region34: #{net_forward.1} parent=11 // pred_check_branch
        %267 = sbr.rel (%p265) target = $region36
      $region35: #{net_forward.1} parent=11 // pred_region
        _
      $region36: #{net_forward.1} parent=11 // pred_fallthru
        _
      // Predicated region
      $region37: #{net_forward.1} parent=11 // pred_check
        %p268 = pneg %p188
      $region38: #{net_forward.1} parent=11 // pred_check_branch
        %270 = sbr.rel (%p268) target = $region40
      $region39: #{net_forward.1} parent=11 // pred_region
        _
      $region40: #{net_forward.1} parent=11 // pred_fallthru
        _
      // Predicated region
      $region41: #{net_forward.1} parent=11 // pred_check
        %p271 = pneg %p209
      $region42: #{net_forward.1} parent=11 // pred_check_branch
        %273 = sbr.rel (%p271) target = $region44
      $region43: #{net_forward.1} parent=11 // pred_region
        _
      $region44: #{net_forward.1} parent=11 // pred_fallthru
        _
    $region12: #{net_forward.1} parent=5 // pred_fallthru
      _
    %p274 = scmp.lt.s32.totalorder %s15, 2
    // Predicated region
    $region45: #{net_forward.1} parent=5 // pred_check
      %p275 = pneg %p274
    $region46: #{net_forward.1} parent=5 // pred_check_branch
      %277 = sbr.rel (%p275) target = $region48
    $region47: #{net_forward.1} parent=5 // pred_region
      // Predicated region
      $region49: #{net_forward.1} parent=47 // pred_check
        %p278 = pneg %p35
      $region50: #{net_forward.1} parent=47 // pred_check_branch
        %280 = sbr.rel (%p278) target = $region52
      $region51: #{net_forward.1} parent=47 // pred_region
        %p281 = scmp.lt.s32.totalorder %s15, 1
        %s282 = scalar_select %p281, %s15, 1
        %s283 = smul.addr %s282, 32
        %s284 = smul.addr %s283, 8
        %s285 = scalar_lea.vmem %s0, %s284
      $region52: #{net_forward.1} parent=47 // pred_fallthru
        _
    $region48: #{net_forward.1} parent=5 // pred_fallthru
      _
    %p286 = scmp.le.s32.totalorder 1, %s15
    %p287 = scmp.lt.s32.totalorder %s15, 3
    %p288 = pnand %p286, %p287
    %p289 = pneg %p288
    // Predicated region
    $region53: #{net_forward.1} parent=5 // pred_check
      _
    $region54: #{net_forward.1} parent=5 // pred_check_branch
      %291 = sbr.rel (%p288) target = $region56
    $region55: #{net_forward.1} parent=5 // pred_region
      %s292 = ssub.s32 %s15, 1
      %p293 = scmp.lt.s32.totalorder %s20, 1
      %s294 = scalar_select %p293, %s20, 1
      %s295 = smul.addr %s294, 32
      %s296 = smul.addr %s295, 8
      %s297 = scalar_lea.vmem %s0, %s296
      %p298 = pneg %p41
      %p299 = pneg %p38
      %p300 = pneg %p62
      %p301 = pneg %p59
      %p302 = pneg %p83
      %p303 = pneg %p80
      %p304 = pneg %p104
      %p305 = pneg %p101
      %p306 = pneg %p125
      %p307 = pneg %p122
      %p308 = pneg %p146
      %p309 = pneg %p143
      %p310 = pneg %p167
      %p311 = pneg %p164
      %p312 = pneg %p188
      %p313 = pneg %p185
      %p314 = pneg %p209
      %p315 = pneg %p206
      %p316 = pneg %p235
      %p317 = pneg %p232
      %p318 = scmp.lt.s32.totalorder %s20, 1
      %s319 = scalar_select %p318, %s20, 1
      %s320 = smul.addr %s319, 32
      %s321 = smul.addr %s320, 8
      %s322 = scalar_lea.vmem %s9, %s321
      %p323 = scmp.lt.s32.totalorder %s20, 1
      %s324 = scalar_select %p323, %s20, 1
      %s325 = smul.addr %s324, 32
      %s326 = smul.addr %s325, 8
      %s327 = scalar_lea.vmem %s0, %s326
      %p328 = scmp.lt.s32.totalorder %s20, 1
      %s329 = scalar_select %p328, %s20, 1
      %s330 = smul.addr %s329, 32
      %s331 = smul.addr %s330, 8
      %s332 = scalar_lea.vmem %s9, %s331
      %vm333 = vcmask 7168
      %334 = vst.msk [vmem:[#allocation2] sm:$0xff] %vm333, 0.0
      %335 = vst.msk [vmem:[#allocation2 + $0x8] sm:$0xff] %vm333, 0.0
      %vm336 = vcmask 3072
      %337 = vst.msk [vmem:[#allocation2 + $0x10] sm:$0xf] %vm336, 0.0
      %338 = vst.msk [vmem:[#allocation2 + $0x18] sm:$0xff] %vm333, 0.0
      %339 = vst.msk [vmem:[#allocation2 + $0x20] sm:$0xff] %vm333, 0.0
      %340 = vst.msk [vmem:[#allocation2 + $0x28] sm:$0xf] %vm336, 0.0
      %341 = vst.msk [vmem:[#allocation2 + $0x30] sm:$0xff] %vm333, 0.0
      %342 = vst.msk [vmem:[#allocation2 + $0x38] sm:$0xff] %vm333, 0.0
      %343 = vst.msk [vmem:[#allocation2 + $0x40] sm:$0xf] %vm336, 0.0
      %344 = vst.msk [vmem:[#allocation2 + $0x48] sm:$0xff] %vm333, 0.0
      %345 = vst.msk [vmem:[#allocation2 + $0x50] sm:$0xff] %vm333, 0.0
      %346 = vst.msk [vmem:[#allocation2 + $0x58] sm:$0xf] %vm336, 0.0
      %347 = vst.msk [vmem:[#allocation2 + $0x60] sm:$0xff] %vm333, 0.0
      %348 = vst.msk [vmem:[#allocation2 + $0x68] sm:$0xff] %vm333, 0.0
      %349 = vst.msk [vmem:[#allocation2 + $0x70] sm:$0xf] %vm336, 0.0
      %350 = vst.msk [vmem:[#allocation2 + $0x78] sm:$0xff] %vm333, 0.0
      %351 = vst.msk [vmem:[#allocation2 + $0x80] sm:$0xff] %vm333, 0.0
      %352 = vst.msk [vmem:[#allocation2 + $0x88] sm:$0xf] %vm336, 0.0
      %353 = vst.msk [vmem:[#allocation2 + $0x90] sm:$0xff] %vm333, 0.0
      %354 = vst.msk [vmem:[#allocation2 + $0x98] sm:$0xff] %vm333, 0.0
      %355 = vst.msk [vmem:[#allocation2 + $0xa0] sm:$0xf] %vm336, 0.0
      %356 = vst.msk [vmem:[#allocation2 + $0xa8] sm:$0xff] %vm333, 0.0
      %357 = vst.msk [vmem:[#allocation2 + $0xb0] sm:$0xff] %vm333, 0.0
      %358 = vst.msk [vmem:[#allocation2 + $0xb8] sm:$0xf] %vm336, 0.0
      %359 = vst.msk [vmem:[#allocation2 + $0xc0] sm:$0xff] %vm333, 0.0
      %360 = vst.msk [vmem:[#allocation2 + $0xc8] sm:$0xff] %vm333, 0.0
      %361 = vst.msk [vmem:[#allocation2 + $0xd0] sm:$0xf] %vm336, 0.0
      %362 = vst.msk [vmem:[#allocation2 + $0xd8] sm:$0xff] %vm333, 0.0
      %363 = vst.msk [vmem:[#allocation2 + $0xe0] sm:$0xff] %vm333, 0.0
      %364 = vst.msk [vmem:[#allocation2 + $0xe8] sm:$0xf] %vm336, 0.0
      %365 = vst.msk [vmem:[#allocation2 + $0xf0] sm:$0xff] %vm333, 0.0
      %366 = vst.msk [vmem:[#allocation2 + $0xf8] sm:$0xff] %vm333, 0.0
      %367 = vst.msk [vmem:[#allocation2 + $0x100] sm:$0xf] %vm336, 0.0
      %368 = vst.msk [vmem:[#allocation2 + $0x108] sm:$0xff] %vm333, 0.0
      %369 = vst.msk [vmem:[#allocation2 + $0x110] sm:$0xff] %vm333, 0.0
      %370 = vst.msk [vmem:[#allocation2 + $0x118] sm:$0xf] %vm336, 0.0
      %371 = vst.msk [vmem:[#allocation2 + $0x120] sm:$0xff] %vm333, 0.0
      %372 = vst.msk [vmem:[#allocation2 + $0x128] sm:$0xff] %vm333, 0.0
      %373 = vst.msk [vmem:[#allocation2 + $0x130] sm:$0xf] %vm336, 0.0
      %374 = vst.msk [vmem:[#allocation2 + $0x138] sm:$0xff] %vm333, 0.0
      %375 = vst.msk [vmem:[#allocation2 + $0x140] sm:$0xff] %vm333, 0.0
      %376 = vst.msk [vmem:[#allocation2 + $0x148] sm:$0xf] %vm336, 0.0
      %377 = vst.msk [vmem:[#allocation2 + $0x150] sm:$0xff] %vm333, 0.0
      %378 = vst.msk [vmem:[#allocation2 + $0x158] sm:$0xff] %vm333, 0.0
      %379 = vst.msk [vmem:[#allocation2 + $0x160] sm:$0xf] %vm336, 0.0
      %380 = vst.msk [vmem:[#allocation2 + $0x168] sm:$0xff] %vm333, 0.0
      %381 = vst.msk [vmem:[#allocation2 + $0x170] sm:$0xff] %vm333, 0.0
      %382 = vst.msk [vmem:[#allocation2 + $0x178] sm:$0xf] %vm336, 0.0
      %383 = vst.msk [vmem:[#allocation2 + $0x180] sm:$0xff] %vm333, 0.0
      %384 = vst.msk [vmem:[#allocation2 + $0x188] sm:$0xff] %vm333, 0.0
      %385 = vst.msk [vmem:[#allocation2 + $0x190] sm:$0xf] %vm336, 0.0
      %386 = vst.msk [vmem:[#allocation2 + $0x198] sm:$0xff] %vm333, 0.0
      %387 = vst.msk [vmem:[#allocation2 + $0x1a0] sm:$0xff] %vm333, 0.0
      %388 = vst.msk [vmem:[#allocation2 + $0x1a8] sm:$0xf] %vm336, 0.0
      %389 = vst.msk [vmem:[#allocation2 + $0x1b0] sm:$0xff] %vm333, 0.0
      %390 = vst.msk [vmem:[#allocation2 + $0x1b8] sm:$0xff] %vm333, 0.0
      %391 = vst.msk [vmem:[#allocation2 + $0x1c0] sm:$0xf] %vm336, 0.0
      %392 = vst.msk [vmem:[#allocation2 + $0x1c8] sm:$0xff] %vm333, 0.0
      %393 = vst.msk [vmem:[#allocation2 + $0x1d0] sm:$0xff] %vm333, 0.0
      %394 = vst.msk [vmem:[#allocation2 + $0x1d8] sm:$0xf] %vm336, 0.0
      %395 = vst [vmem:[#allocation3] sm:$0xff] 0.0
      %396 = vst [vmem:[#allocation3 + $0x8] sm:$0xff] 0.0
      %397 = vst [vmem:[#allocation3 + $0x10] sm:$0x3] 0.0
      %398 = vst [vmem:[#allocation3 + $0x18] sm:$0xff] 0.0
      %399 = vst [vmem:[#allocation3 + $0x20] sm:$0xff] 0.0
      %400 = vst [vmem:[#allocation3 + $0x28] sm:$0x3] 0.0
      %401 = vst [vmem:[#allocation3 + $0x30] sm:$0xff] 0.0
      %402 = vst [vmem:[#allocation3 + $0x38] sm:$0xff] 0.0
      %403 = vst [vmem:[#allocation3 + $0x40] sm:$0x3] 0.0
      %404 = vst [vmem:[#allocation3 + $0x48] sm:$0xff] 0.0
      %405 = vst [vmem:[#allocation3 + $0x50] sm:$0xff] 0.0
      %406 = vst [vmem:[#allocation3 + $0x58] sm:$0x3] 0.0
      %407 = vst [vmem:[#allocation3 + $0x60] sm:$0xff] 0.0
      %408 = vst [vmem:[#allocation3 + $0x68] sm:$0xff] 0.0
      %409 = vst [vmem:[#allocation3 + $0x70] sm:$0x3] 0.0
      %410 = vst [vmem:[#allocation3 + $0x78] sm:$0xff] 0.0
      %411 = vst [vmem:[#allocation3 + $0x80] sm:$0xff] 0.0
      %412 = vst [vmem:[#allocation3 + $0x88] sm:$0x3] 0.0
      %413 = vst [vmem:[#allocation3 + $0x90] sm:$0xff] 0.0
      %414 = vst [vmem:[#allocation3 + $0x98] sm:$0xff] 0.0
      %415 = vst [vmem:[#allocation3 + $0xa0] sm:$0x3] 0.0
      %416 = vst [vmem:[#allocation3 + $0xa8] sm:$0xff] 0.0
      %417 = vst [vmem:[#allocation3 + $0xb0] sm:$0xff] 0.0
      %418 = vst [vmem:[#allocation3 + $0xb8] sm:$0x3] 0.0
      %419 = vst [vmem:[#allocation3 + $0xc0] sm:$0xff] 0.0
      %420 = vst [vmem:[#allocation3 + $0xc8] sm:$0xff] 0.0
      %421 = vst [vmem:[#allocation3 + $0xd0] sm:$0x3] 0.0
      %422 = vst [vmem:[#allocation3 + $0xd8] sm:$0xff] 0.0
      %423 = vst [vmem:[#allocation3 + $0xe0] sm:$0xff] 0.0
      %424 = vst [vmem:[#allocation3 + $0xe8] sm:$0x3] 0.0
      %425 = vst [vmem:[#allocation3 + $0xf0] sm:$0xff] 0.0
      %426 = vst [vmem:[#allocation3 + $0xf8] sm:$0xff] 0.0
      %427 = vst [vmem:[#allocation3 + $0x100] sm:$0x3] 0.0
      %428 = vst [vmem:[#allocation3 + $0x108] sm:$0xff] 0.0
      %429 = vst [vmem:[#allocation3 + $0x110] sm:$0xff] 0.0
      %430 = vst [vmem:[#allocation3 + $0x118] sm:$0x3] 0.0
      %431 = vst [vmem:[#allocation3 + $0x120] sm:$0xff] 0.0
      %432 = vst [vmem:[#allocation3 + $0x128] sm:$0xff] 0.0
      %433 = vst [vmem:[#allocation3 + $0x130] sm:$0x3] 0.0
      %434 = vst [vmem:[#allocation3 + $0x138] sm:$0xff] 0.0
      %435 = vst [vmem:[#allocation3 + $0x140] sm:$0xff] 0.0
      %436 = vst [vmem:[#allocation3 + $0x148] sm:$0x3] 0.0
      %437 = vst [vmem:[#allocation3 + $0x150] sm:$0xff] 0.0
      %438 = vst [vmem:[#allocation3 + $0x158] sm:$0xff] 0.0
      %439 = vst [vmem:[#allocation3 + $0x160] sm:$0x3] 0.0
      %440 = vst [vmem:[#allocation3 + $0x168] sm:$0xff] 0.0
      %441 = vst [vmem:[#allocation3 + $0x170] sm:$0xff] 0.0
      %442 = vst [vmem:[#allocation3 + $0x178] sm:$0x3] 0.0
      %443 = vst [vmem:[#allocation3 + $0x180] sm:$0xff] 0.0
      %444 = vst [vmem:[#allocation3 + $0x188] sm:$0xff] 0.0
      %445 = vst [vmem:[#allocation3 + $0x190] sm:$0x3] 0.0
      %446 = vst [vmem:[#allocation3 + $0x198] sm:$0xff] 0.0
      %447 = vst [vmem:[#allocation3 + $0x1a0] sm:$0xff] 0.0
      %448 = vst [vmem:[#allocation3 + $0x1a8] sm:$0x3] 0.0
      %vm449 = vcmask 523264
      %450 = vst.msk [vmem:[#allocation4] sm:$0xff] %vm449, 0.0
      %451 = vst.msk [vmem:[#allocation4 + $0x8] sm:$0xff] %vm449, 0.0
      %vm452 = vcmask 517120
      %453 = vst.msk [vmem:[#allocation4 + $0x10] sm:$0x3] %vm452, 0.0
      %454 = vst.msk [vmem:[#allocation4 + $0x18] sm:$0xff] %vm449, 0.0
      %455 = vst.msk [vmem:[#allocation4 + $0x20] sm:$0xff] %vm449, 0.0
      %456 = vst.msk [vmem:[#allocation4 + $0x28] sm:$0x3] %vm452, 0.0
      %457 = vst.msk [vmem:[#allocation4 + $0x30] sm:$0xff] %vm449, 0.0
      %458 = vst.msk [vmem:[#allocation4 + $0x38] sm:$0xff] %vm449, 0.0
      %459 = vst.msk [vmem:[#allocation4 + $0x40] sm:$0x3] %vm452, 0.0
      %460 = vst.msk [vmem:[#allocation4 + $0x48] sm:$0xff] %vm449, 0.0
      %461 = vst.msk [vmem:[#allocation4 + $0x50] sm:$0xff] %vm449, 0.0
      %462 = vst.msk [vmem:[#allocation4 + $0x58] sm:$0x3] %vm452, 0.0
      %463 = vst.msk [vmem:[#allocation4 + $0x60] sm:$0xff] %vm449, 0.0
      %464 = vst.msk [vmem:[#allocation4 + $0x68] sm:$0xff] %vm449, 0.0
      %465 = vst.msk [vmem:[#allocation4 + $0x70] sm:$0x3] %vm452, 0.0
      %466 = vst.msk [vmem:[#allocation4 + $0x78] sm:$0xff] %vm449, 0.0
      %467 = vst.msk [vmem:[#allocation4 + $0x80] sm:$0xff] %vm449, 0.0
      %468 = vst.msk [vmem:[#allocation4 + $0x88] sm:$0x3] %vm452, 0.0
      %469 = vst.msk [vmem:[#allocation4 + $0x90] sm:$0xff] %vm449, 0.0
      %470 = vst.msk [vmem:[#allocation4 + $0x98] sm:$0xff] %vm449, 0.0
      %471 = vst.msk [vmem:[#allocation4 + $0xa0] sm:$0x3] %vm452, 0.0
      %472 = vst.msk [vmem:[#allocation4 + $0xa8] sm:$0xff] %vm449, 0.0
      %473 = vst.msk [vmem:[#allocation4 + $0xb0] sm:$0xff] %vm449, 0.0
      %474 = vst.msk [vmem:[#allocation4 + $0xb8] sm:$0x3] %vm452, 0.0
      %475 = vst.msk [vmem:[#allocation4 + $0xc0] sm:$0xff] %vm449, 0.0
      %476 = vst.msk [vmem:[#allocation4 + $0xc8] sm:$0xff] %vm449, 0.0
      %477 = vst.msk [vmem:[#allocation4 + $0xd0] sm:$0x3] %vm452, 0.0
      %478 = vst.msk [vmem:[#allocation4 + $0xd8] sm:$0xff] %vm449, 0.0
      %479 = vst.msk [vmem:[#allocation4 + $0xe0] sm:$0xff] %vm449, 0.0
      %480 = vst.msk [vmem:[#allocation4 + $0xe8] sm:$0x3] %vm452, 0.0
      %481 = vst.msk [vmem:[#allocation4 + $0xf0] sm:$0xff] %vm449, 0.0
      %482 = vst.msk [vmem:[#allocation4 + $0xf8] sm:$0xff] %vm449, 0.0
      %483 = vst.msk [vmem:[#allocation4 + $0x100] sm:$0x3] %vm452, 0.0
      %484 = vst.msk [vmem:[#allocation4 + $0x108] sm:$0xff] %vm449, 0.0
      %485 = vst.msk [vmem:[#allocation4 + $0x110] sm:$0xff] %vm449, 0.0
      %486 = vst.msk [vmem:[#allocation4 + $0x118] sm:$0x3] %vm452, 0.0
      %487 = vst.msk [vmem:[#allocation4 + $0x120] sm:$0xff] %vm449, 0.0
      %488 = vst.msk [vmem:[#allocation4 + $0x128] sm:$0xff] %vm449, 0.0
      %489 = vst.msk [vmem:[#allocation4 + $0x130] sm:$0x3] %vm452, 0.0
      %490 = vst.msk [vmem:[#allocation4 + $0x138] sm:$0xff] %vm449, 0.0
      %491 = vst.msk [vmem:[#allocation4 + $0x140] sm:$0xff] %vm449, 0.0
      %492 = vst.msk [vmem:[#allocation4 + $0x148] sm:$0x3] %vm452, 0.0
      %493 = vst.msk [vmem:[#allocation4 + $0x150] sm:$0xff] %vm449, 0.0
      %494 = vst.msk [vmem:[#allocation4 + $0x158] sm:$0xff] %vm449, 0.0
      %495 = vst.msk [vmem:[#allocation4 + $0x160] sm:$0x3] %vm452, 0.0
      %496 = vst.msk [vmem:[#allocation4 + $0x168] sm:$0xff] %vm449, 0.0
      %497 = vst.msk [vmem:[#allocation4 + $0x170] sm:$0xff] %vm449, 0.0
      %498 = vst.msk [vmem:[#allocation4 + $0x178] sm:$0x3] %vm452, 0.0
      %499 = vst.msk [vmem:[#allocation4 + $0x180] sm:$0xff] %vm449, 0.0
      %500 = vst.msk [vmem:[#allocation4 + $0x188] sm:$0xff] %vm449, 0.0
      %501 = vst.msk [vmem:[#allocation4 + $0x190] sm:$0x3] %vm452, 0.0
      %502 = vst.msk [vmem:[#allocation4 + $0x198] sm:$0xff] %vm449, 0.0
      %503 = vst.msk [vmem:[#allocation4 + $0x1a0] sm:$0xff] %vm449, 0.0
      %504 = vst.msk [vmem:[#allocation4 + $0x1a8] sm:$0x3] %vm452, 0.0
      %vm505 = vcmask 261120
      %506 = vst.msk [vmem:[#allocation5] sm:$0xff] %vm505, 0.0
      %507 = vst.msk [vmem:[#allocation5 + $0x8] sm:$0xff] %vm505, 0.0
      %vm508 = vcmask 254976
      %509 = vst.msk [vmem:[#allocation5 + $0x10] sm:$0x3] %vm508, 0.0
      %510 = vst.msk [vmem:[#allocation5 + $0x18] sm:$0xff] %vm505, 0.0
      %511 = vst.msk [vmem:[#allocation5 + $0x20] sm:$0xff] %vm505, 0.0
      %512 = vst.msk [vmem:[#allocation5 + $0x28] sm:$0x3] %vm508, 0.0
      %513 = vst.msk [vmem:[#allocation5 + $0x30] sm:$0xff] %vm505, 0.0
      %514 = vst.msk [vmem:[#allocation5 + $0x38] sm:$0xff] %vm505, 0.0
      %515 = vst.msk [vmem:[#allocation5 + $0x40] sm:$0x3] %vm508, 0.0
      %516 = vst.msk [vmem:[#allocation5 + $0x48] sm:$0xff] %vm505, 0.0
      %517 = vst.msk [vmem:[#allocation5 + $0x50] sm:$0xff] %vm505, 0.0
      %518 = vst.msk [vmem:[#allocation5 + $0x58] sm:$0x3] %vm508, 0.0
      %519 = vst.msk [vmem:[#allocation5 + $0x60] sm:$0xff] %vm505, 0.0
      %520 = vst.msk [vmem:[#allocation5 + $0x68] sm:$0xff] %vm505, 0.0
      %521 = vst.msk [vmem:[#allocation5 + $0x70] sm:$0x3] %vm508, 0.0
      %522 = vst.msk [vmem:[#allocation5 + $0x78] sm:$0xff] %vm505, 0.0
      %523 = vst.msk [vmem:[#allocation5 + $0x80] sm:$0xff] %vm505, 0.0
      %524 = vst.msk [vmem:[#allocation5 + $0x88] sm:$0x3] %vm508, 0.0
      %525 = vst.msk [vmem:[#allocation5 + $0x90] sm:$0xff] %vm505, 0.0
      %526 = vst.msk [vmem:[#allocation5 + $0x98] sm:$0xff] %vm505, 0.0
      %527 = vst.msk [vmem:[#allocation5 + $0xa0] sm:$0x3] %vm508, 0.0
      %528 = vst.msk [vmem:[#allocation5 + $0xa8] sm:$0xff] %vm505, 0.0
      %529 = vst.msk [vmem:[#allocation5 + $0xb0] sm:$0xff] %vm505, 0.0
      %530 = vst.msk [vmem:[#allocation5 + $0xb8] sm:$0x3] %vm508, 0.0
      %531 = vst.msk [vmem:[#allocation5 + $0xc0] sm:$0xff] %vm505, 0.0
      %532 = vst.msk [vmem:[#allocation5 + $0xc8] sm:$0xff] %vm505, 0.0
      %533 = vst.msk [vmem:[#allocation5 + $0xd0] sm:$0x3] %vm508, 0.0
      %534 = vst.msk [vmem:[#allocation5 + $0xd8] sm:$0xff] %vm505, 0.0
      %535 = vst.msk [vmem:[#allocation5 + $0xe0] sm:$0xff] %vm505, 0.0
      %536 = vst.msk [vmem:[#allocation5 + $0xe8] sm:$0x3] %vm508, 0.0
      %537 = vst.msk [vmem:[#allocation5 + $0xf0] sm:$0xff] %vm505, 0.0
      %538 = vst.msk [vmem:[#allocation5 + $0xf8] sm:$0xff] %vm505, 0.0
      %539 = vst.msk [vmem:[#allocation5 + $0x100] sm:$0x3] %vm508, 0.0
      %540 = vst.msk [vmem:[#allocation5 + $0x108] sm:$0xff] %vm505, 0.0
      %541 = vst.msk [vmem:[#allocation5 + $0x110] sm:$0xff] %vm505, 0.0
      %542 = vst.msk [vmem:[#allocation5 + $0x118] sm:$0x3] %vm508, 0.0
      %543 = vst.msk [vmem:[#allocation5 + $0x120] sm:$0xff] %vm505, 0.0
      %544 = vst.msk [vmem:[#allocation5 + $0x128] sm:$0xff] %vm505, 0.0
      %545 = vst.msk [vmem:[#allocation5 + $0x130] sm:$0x3] %vm508, 0.0
      %546 = vst.msk [vmem:[#allocation5 + $0x138] sm:$0xff] %vm505, 0.0
      %547 = vst.msk [vmem:[#allocation5 + $0x140] sm:$0xff] %vm505, 0.0
      %548 = vst.msk [vmem:[#allocation5 + $0x148] sm:$0x3] %vm508, 0.0
      %549 = vst.msk [vmem:[#allocation5 + $0x150] sm:$0xff] %vm505, 0.0
      %550 = vst.msk [vmem:[#allocation5 + $0x158] sm:$0xff] %vm505, 0.0
      %551 = vst.msk [vmem:[#allocation5 + $0x160] sm:$0x3] %vm508, 0.0
      %552 = vst.msk [vmem:[#allocation5 + $0x168] sm:$0xff] %vm505, 0.0
      %553 = vst.msk [vmem:[#allocation5 + $0x170] sm:$0xff] %vm505, 0.0
      %554 = vst.msk [vmem:[#allocation5 + $0x178] sm:$0x3] %vm508, 0.0
      %555 = vst.msk [vmem:[#allocation5 + $0x180] sm:$0xff] %vm505, 0.0
      %556 = vst.msk [vmem:[#allocation5 + $0x188] sm:$0xff] %vm505, 0.0
      %557 = vst.msk [vmem:[#allocation5 + $0x190] sm:$0x3] %vm508, 0.0
      %558 = vst.msk [vmem:[#allocation5 + $0x198] sm:$0xff] %vm505, 0.0
      %559 = vst.msk [vmem:[#allocation5 + $0x1a0] sm:$0xff] %vm505, 0.0
      %560 = vst.msk [vmem:[#allocation5 + $0x1a8] sm:$0x3] %vm508, 0.0
      %v561 = vld [vmem:[%s327] sm:$0xff]
      %v562 = vld [vmem:[%s327 + $0x8] sm:$0xff]
      %v563 = vld [vmem:[%s327 + $0x10] sm:$0xff]
      %v564 = vld [vmem:[%s327 + $0x18] sm:$0xff]
      %v565 = vld [vmem:[%s327 + $0x20] sm:$0xff]
      %v566 = vld [vmem:[%s327 + $0x28] sm:$0xff]
      %v567 = vld [vmem:[%s327 + $0x30] sm:$0xff]
      %v568 = vld [vmem:[%s327 + $0x38] sm:$0xff]
      %v569 = vld [vmem:[%s327 + $0x40] sm:$0xff]
      %v570 = vld [vmem:[%s327 + $0x48] sm:$0xff]
      %v571 = vld [vmem:[%s327 + $0x50] sm:$0xff]
      %v572 = vld [vmem:[%s327 + $0x58] sm:$0xff]
      %v573 = vld [vmem:[%s327 + $0x60] sm:$0xff]
      %v574 = vld [vmem:[%s327 + $0x68] sm:$0xff]
      %v575 = vld [vmem:[%s327 + $0x70] sm:$0xff]
      %v576 = vld [vmem:[%s327 + $0x78] sm:$0xff]
      %v577 = vld [vmem:[%s327 + $0x80] sm:$0xff]
      %v578 = vld [vmem:[%s327 + $0x88] sm:$0xff]
      %v579 = vld [vmem:[%s327 + $0x90] sm:$0xff]
      %v580 = vld [vmem:[%s327 + $0x98] sm:$0xff]
      %v581 = vld [vmem:[%s327 + $0xa0] sm:$0xff]
      %v582 = vld [vmem:[%s327 + $0xa8] sm:$0xff]
      %v583 = vld [vmem:[%s327 + $0xb0] sm:$0xff]
      %v584 = vld [vmem:[%s327 + $0xb8] sm:$0xff]
      %v585 = vld [vmem:[%s327 + $0xc0] sm:$0xff]
      %v586 = vld [vmem:[%s327 + $0xc8] sm:$0xff]
      %v587 = vld [vmem:[%s327 + $0xd0] sm:$0xff]
      %v588 = vld [vmem:[%s327 + $0xd8] sm:$0xff]
      %v589 = vld [vmem:[%s327 + $0xe0] sm:$0xff]
      %v590 = vld [vmem:[%s327 + $0xe8] sm:$0xff]
      %v591 = vld [vmem:[%s327 + $0xf0] sm:$0xff]
      %v592 = vld [vmem:[%s327 + $0xf8] sm:$0xff]
      %s593 = scalar_lea.vmem [#allocation2], 48
      %594 = vst.msk [vmem:[%s593 + $0x2] sm:$0xff] %vm333, %v561
      %595 = vst.msk [vmem:[%s593 + $0xa] sm:$0xff] %vm333, %v562
      %596 = vst.msk [vmem:[%s593 + $0x1a] sm:$0xff] %vm333, %v563
      %597 = vst.msk [vmem:[%s593 + $0x22] sm:$0xff] %vm333, %v564
      %598 = vst.msk [vmem:[%s593 + $0x32] sm:$0xff] %vm333, %v565
      %599 = vst.msk [vmem:[%s593 + $0x3a] sm:$0xff] %vm333, %v566
      %600 = vst.msk [vmem:[%s593 + $0x4a] sm:$0xff] %vm333, %v567
      %601 = vst.msk [vmem:[%s593 + $0x52] sm:$0xff] %vm333, %v568
      %602 = vst.msk [vmem:[%s593 + $0x62] sm:$0xff] %vm333, %v569
      %603 = vst.msk [vmem:[%s593 + $0x6a] sm:$0xff] %vm333, %v570
      %604 = vst.msk [vmem:[%s593 + $0x7a] sm:$0xff] %vm333, %v571
      %605 = vst.msk [vmem:[%s593 + $0x82] sm:$0xff] %vm333, %v572
      %606 = vst.msk [vmem:[%s593 + $0x92] sm:$0xff] %vm333, %v573
      %607 = vst.msk [vmem:[%s593 + $0x9a] sm:$0xff] %vm333, %v574
      %608 = vst.msk [vmem:[%s593 + $0xaa] sm:$0xff] %vm333, %v575
      %609 = vst.msk [vmem:[%s593 + $0xb2] sm:$0xff] %vm333, %v576
      %610 = vst.msk [vmem:[%s593 + $0xc2] sm:$0xff] %vm333, %v577
      %611 = vst.msk [vmem:[%s593 + $0xca] sm:$0xff] %vm333, %v578
      %612 = vst.msk [vmem:[%s593 + $0xda] sm:$0xff] %vm333, %v579
      %613 = vst.msk [vmem:[%s593 + $0xe2] sm:$0xff] %vm333, %v580
      %614 = vst.msk [vmem:[%s593 + $0xf2] sm:$0xff] %vm333, %v581
      %615 = vst.msk [vmem:[%s593 + $0xfa] sm:$0xff] %vm333, %v582
      %616 = vst.msk [vmem:[%s593 + $0x10a] sm:$0xff] %vm333, %v583
      %617 = vst.msk [vmem:[%s593 + $0x112] sm:$0xff] %vm333, %v584
      %618 = vst.msk [vmem:[%s593 + $0x122] sm:$0xff] %vm333, %v585
      %619 = vst.msk [vmem:[%s593 + $0x12a] sm:$0xff] %vm333, %v586
      %620 = vst.msk [vmem:[%s593 + $0x13a] sm:$0xff] %vm333, %v587
      %621 = vst.msk [vmem:[%s593 + $0x142] sm:$0xff] %vm333, %v588
      %622 = vst.msk [vmem:[%s593 + $0x152] sm:$0xff] %vm333, %v589
      %623 = vst.msk [vmem:[%s593 + $0x15a] sm:$0xff] %vm333, %v590
      %624 = vst.msk [vmem:[%s593 + $0x16a] sm:$0xff] %vm333, %v591
      %625 = vst.msk [vmem:[%s593 + $0x172] sm:$0xff] %vm333, %v592
      %v626 = vld [vmem:[#allocation2] sm:$0xff]
      %v627 = vld [vmem:[#allocation2 + $0x8] sm:$0xff]
      %v628 = vld [vmem:[#allocation2 + $0x18] sm:$0xff]
      %v629 = vld [vmem:[#allocation2 + $0x20] sm:$0xff]
      %v630 = vld [vmem:[#allocation2 + $0x30] sm:$0xff]
      %v631 = vld [vmem:[#allocation2 + $0x38] sm:$0xff]
      %v632 = vld [vmem:[#allocation2 + $0x48] sm:$0xff]
      %v633 = vld [vmem:[#allocation2 + $0x50] sm:$0xff]
      %v634 = vld [vmem:[#allocation2 + $0x60] sm:$0xff]
      %v635 = vld [vmem:[#allocation2 + $0x68] sm:$0xff]
      %v636 = vld [vmem:[#allocation2 + $0x78] sm:$0xff]
      %v637 = vld [vmem:[#allocation2 + $0x80] sm:$0xff]
      %v638 = vld [vmem:[#allocation2 + $0x90] sm:$0xff]
      %v639 = vld [vmem:[#allocation2 + $0x98] sm:$0xff]
      %v640 = vld [vmem:[#allocation2 + $0xa8] sm:$0xff]
      %v641 = vld [vmem:[#allocation2 + $0xb0] sm:$0xff]
      %v642 = vld [vmem:[#allocation2 + $0xc0] sm:$0xff]
      %v643 = vld [vmem:[#allocation2 + $0xc8] sm:$0xff]
      %v644 = vld [vmem:[#allocation2 + $0xd8] sm:$0xff]
      %v645 = vld [vmem:[#allocation2 + $0xe0] sm:$0xff]
      %v646 = vld [vmem:[#allocation2 + $0xf0] sm:$0xff]
      %v647 = vld [vmem:[#allocation2 + $0xf8] sm:$0xff]
      %v648 = vld [vmem:[#allocation2 + $0x108] sm:$0xff]
      %v649 = vld [vmem:[#allocation2 + $0x110] sm:$0xff]
      %v650 = vld [vmem:[#allocation2 + $0x120] sm:$0xff]
      %v651 = vld [vmem:[#allocation2 + $0x128] sm:$0xff]
      %v652 = vld [vmem:[#allocation2 + $0x138] sm:$0xff]
      %v653 = vld [vmem:[#allocation2 + $0x140] sm:$0xff]
      %v654 = vld [vmem:[#allocation2 + $0x150] sm:$0xff]
      %v655 = vld [vmem:[#allocation2 + $0x158] sm:$0xff]
      %v656 = vld [vmem:[#allocation2 + $0x168] sm:$0xff]
      %v657 = vld [vmem:[#allocation2 + $0x170] sm:$0xff]
      %v658 = vld [vmem:[#allocation2 + $0x1] sm:$0xff]
      %v659 = vld [vmem:[#allocation2 + $0x9] sm:$0xff]
      %v660 = vld [vmem:[#allocation2 + $0x19] sm:$0xff]
      %v661 = vld [vmem:[#allocation2 + $0x21] sm:$0xff]
      %v662 = vld [vmem:[#allocation2 + $0x31] sm:$0xff]
      %v663 = vld [vmem:[#allocation2 + $0x39] sm:$0xff]
      %v664 = vld [vmem:[#allocation2 + $0x49] sm:$0xff]
      %v665 = vld [vmem:[#allocation2 + $0x51] sm:$0xff]
      %v666 = vld [vmem:[#allocation2 + $0x61] sm:$0xff]
      %v667 = vld [vmem:[#allocation2 + $0x69] sm:$0xff]
      %v668 = vld [vmem:[#allocation2 + $0x79] sm:$0xff]
      %v669 = vld [vmem:[#allocation2 + $0x81] sm:$0xff]
      %v670 = vld [vmem:[#allocation2 + $0x91] sm:$0xff]
      %v671 = vld [vmem:[#allocation2 + $0x99] sm:$0xff]
      %v672 = vld [vmem:[#allocation2 + $0xa9] sm:$0xff]
      %v673 = vld [vmem:[#allocation2 + $0xb1] sm:$0xff]
      %v674 = vld [vmem:[#allocation2 + $0xc1] sm:$0xff]
      %v675 = vld [vmem:[#allocation2 + $0xc9] sm:$0xff]
      %v676 = vld [vmem:[#allocation2 + $0xd9] sm:$0xff]
      %v677 = vld [vmem:[#allocation2 + $0xe1] sm:$0xff]
      %v678 = vld [vmem:[#allocation2 + $0xf1] sm:$0xff]
      %v679 = vld [vmem:[#allocation2 + $0xf9] sm:$0xff]
      %v680 = vld [vmem:[#allocation2 + $0x109] sm:$0xff]
      %v681 = vld [vmem:[#allocation2 + $0x111] sm:$0xff]
      %v682 = vld [vmem:[#allocation2 + $0x121] sm:$0xff]
      %v683 = vld [vmem:[#allocation2 + $0x129] sm:$0xff]
      %v684 = vld [vmem:[#allocation2 + $0x139] sm:$0xff]
      %v685 = vld [vmem:[#allocation2 + $0x141] sm:$0xff]
      %v686 = vld [vmem:[#allocation2 + $0x151] sm:$0xff]
      %v687 = vld [vmem:[#allocation2 + $0x159] sm:$0xff]
      %v688 = vld [vmem:[#allocation2 + $0x169] sm:$0xff]
      %v689 = vld [vmem:[#allocation2 + $0x171] sm:$0xff]
      %v690 = vld [vmem:[#allocation2 + $0x2] sm:$0xff]
      %v691 = vld [vmem:[#allocation2 + $0xa] sm:$0xff]
      %v692 = vld [vmem:[#allocation2 + $0x1a] sm:$0xff]
      %v693 = vld [vmem:[#allocation2 + $0x22] sm:$0xff]
      %v694 = vld [vmem:[#allocation2 + $0x32] sm:$0xff]
      %v695 = vld [vmem:[#allocation2 + $0x3a] sm:$0xff]
      %v696 = vld [vmem:[#allocation2 + $0x4a] sm:$0xff]
      %v697 = vld [vmem:[#allocation2 + $0x52] sm:$0xff]
      %v698 = vld [vmem:[#allocation2 + $0x62] sm:$0xff]
      %v699 = vld [vmem:[#allocation2 + $0x6a] sm:$0xff]
      %v700 = vld [vmem:[#allocation2 + $0x7a] sm:$0xff]
      %v701 = vld [vmem:[#allocation2 + $0x82] sm:$0xff]
      %v702 = vld [vmem:[#allocation2 + $0x92] sm:$0xff]
      %v703 = vld [vmem:[#allocation2 + $0x9a] sm:$0xff]
      %v704 = vld [vmem:[#allocation2 + $0xaa] sm:$0xff]
      %v705 = vld [vmem:[#allocation2 + $0xb2] sm:$0xff]
      %v706 = vld [vmem:[#allocation2 + $0xc2] sm:$0xff]
      %v707 = vld [vmem:[#allocation2 + $0xca] sm:$0xff]
      %v708 = vld [vmem:[#allocation2 + $0xda] sm:$0xff]
      %v709 = vld [vmem:[#allocation2 + $0xe2] sm:$0xff]
      %v710 = vld [vmem:[#allocation2 + $0xf2] sm:$0xff]
      %v711 = vld [vmem:[#allocation2 + $0xfa] sm:$0xff]
      %v712 = vld [vmem:[#allocation2 + $0x10a] sm:$0xff]
      %v713 = vld [vmem:[#allocation2 + $0x112] sm:$0xff]
      %v714 = vld [vmem:[#allocation2 + $0x122] sm:$0xff]
      %v715 = vld [vmem:[#allocation2 + $0x12a] sm:$0xff]
      %v716 = vld [vmem:[#allocation2 + $0x13a] sm:$0xff]
      %v717 = vld [vmem:[#allocation2 + $0x142] sm:$0xff]
      %v718 = vld [vmem:[#allocation2 + $0x152] sm:$0xff]
      %v719 = vld [vmem:[#allocation2 + $0x15a] sm:$0xff]
      %v720 = vld [vmem:[#allocation2 + $0x16a] sm:$0xff]
      %v721 = vld [vmem:[#allocation2 + $0x172] sm:$0xff]
      %v722 = vld [vmem:[#allocation2 + $0x3] sm:$0xff]
      %v723 = vld [vmem:[#allocation2 + $0xb] sm:$0xff]
      %v724 = vld [vmem:[#allocation2 + $0x1b] sm:$0xff]
      %v725 = vld [vmem:[#allocation2 + $0x23] sm:$0xff]
      %v726 = vld [vmem:[#allocation2 + $0x33] sm:$0xff]
      %v727 = vld [vmem:[#allocation2 + $0x3b] sm:$0xff]
      %v728 = vld [vmem:[#allocation2 + $0x4b] sm:$0xff]
      %v729 = vld [vmem:[#allocation2 + $0x53] sm:$0xff]
      %v730 = vld [vmem:[#allocation2 + $0x63] sm:$0xff]
      %v731 = vld [vmem:[#allocation2 + $0x6b] sm:$0xff]
      %v732 = vld [vmem:[#allocation2 + $0x7b] sm:$0xff]
      %v733 = vld [vmem:[#allocation2 + $0x83] sm:$0xff]
      %v734 = vld [vmem:[#allocation2 + $0x93] sm:$0xff]
      %v735 = vld [vmem:[#allocation2 + $0x9b] sm:$0xff]
      %v736 = vld [vmem:[#allocation2 + $0xab] sm:$0xff]
      %v737 = vld [vmem:[#allocation2 + $0xb3] sm:$0xff]
      %v738 = vld [vmem:[#allocation2 + $0xc3] sm:$0xff]
      %v739 = vld [vmem:[#allocation2 + $0xcb] sm:$0xff]
      %v740 = vld [vmem:[#allocation2 + $0xdb] sm:$0xff]
      %v741 = vld [vmem:[#allocation2 + $0xe3] sm:$0xff]
      %v742 = vld [vmem:[#allocation2 + $0xf3] sm:$0xff]
      %v743 = vld [vmem:[#allocation2 + $0xfb] sm:$0xff]
      %v744 = vld [vmem:[#allocation2 + $0x10b] sm:$0xff]
      %v745 = vld [vmem:[#allocation2 + $0x113] sm:$0xff]
      %v746 = vld [vmem:[#allocation2 + $0x123] sm:$0xff]
      %v747 = vld [vmem:[#allocation2 + $0x12b] sm:$0xff]
      %v748 = vld [vmem:[#allocation2 + $0x13b] sm:$0xff]
      %v749 = vld [vmem:[#allocation2 + $0x143] sm:$0xff]
      %v750 = vld [vmem:[#allocation2 + $0x153] sm:$0xff]
      %v751 = vld [vmem:[#allocation2 + $0x15b] sm:$0xff]
      %v752 = vld [vmem:[#allocation2 + $0x16b] sm:$0xff]
      %v753 = vld [vmem:[#allocation2 + $0x173] sm:$0xff]
      %v754 = vld [vmem:[#allocation2 + $0x4] sm:$0xff]
      %v755 = vld [vmem:[#allocation2 + $0xc] sm:$0xff]
      %v756 = vld [vmem:[#allocation2 + $0x1c] sm:$0xff]
      %v757 = vld [vmem:[#allocation2 + $0x24] sm:$0xff]
      %v758 = vld [vmem:[#allocation2 + $0x34] sm:$0xff]
      %v759 = vld [vmem:[#allocation2 + $0x3c] sm:$0xff]
      %v760 = vld [vmem:[#allocation2 + $0x4c] sm:$0xff]
      %v761 = vld [vmem:[#allocation2 + $0x54] sm:$0xff]
      %v762 = vld [vmem:[#allocation2 + $0x64] sm:$0xff]
      %v763 = vld [vmem:[#allocation2 + $0x6c] sm:$0xff]
      %v764 = vld [vmem:[#allocation2 + $0x7c] sm:$0xff]
      %v765 = vld [vmem:[#allocation2 + $0x84] sm:$0xff]
      %v766 = vld [vmem:[#allocation2 + $0x94] sm:$0xff]
      %v767 = vld [vmem:[#allocation2 + $0x9c] sm:$0xff]
      %v768 = vld [vmem:[#allocation2 + $0xac] sm:$0xff]
      %v769 = vld [vmem:[#allocation2 + $0xb4] sm:$0xff]
      %v770 = vld [vmem:[#allocation2 + $0xc4] sm:$0xff]
      %v771 = vld [vmem:[#allocation2 + $0xcc] sm:$0xff]
      %v772 = vld [vmem:[#allocation2 + $0xdc] sm:$0xff]
      %v773 = vld [vmem:[#allocation2 + $0xe4] sm:$0xff]
      %v774 = vld [vmem:[#allocation2 + $0xf4] sm:$0xff]
      %v775 = vld [vmem:[#allocation2 + $0xfc] sm:$0xff]
      %v776 = vld [vmem:[#allocation2 + $0x10c] sm:$0xff]
      %v777 = vld [vmem:[#allocation2 + $0x114] sm:$0xff]
      %v778 = vld [vmem:[#allocation2 + $0x124] sm:$0xff]
      %v779 = vld [vmem:[#allocation2 + $0x12c] sm:$0xff]
      %v780 = vld [vmem:[#allocation2 + $0x13c] sm:$0xff]
      %v781 = vld [vmem:[#allocation2 + $0x144] sm:$0xff]
      %v782 = vld [vmem:[#allocation2 + $0x154] sm:$0xff]
      %v783 = vld [vmem:[#allocation2 + $0x15c] sm:$0xff]
      %v784 = vld [vmem:[#allocation2 + $0x16c] sm:$0xff]
      %v785 = vld [vmem:[#allocation2 + $0x174] sm:$0xff]
      %s786 = scalar_lea.vmem [#allocation2], 24
      %v787 = vld [vmem:[%s786] sm:$0xff]
      %v788 = vld [vmem:[%s786 + $0x8] sm:$0xff]
      %v789 = vld [vmem:[%s786 + $0x18] sm:$0xff]
      %v790 = vld [vmem:[%s786 + $0x20] sm:$0xff]
      %v791 = vld [vmem:[%s786 + $0x30] sm:$0xff]
      %v792 = vld [vmem:[%s786 + $0x38] sm:$0xff]
      %v793 = vld [vmem:[%s786 + $0x48] sm:$0xff]
      %v794 = vld [vmem:[%s786 + $0x50] sm:$0xff]
      %v795 = vld [vmem:[%s786 + $0x60] sm:$0xff]
      %v796 = vld [vmem:[%s786 + $0x68] sm:$0xff]
      %v797 = vld [vmem:[%s786 + $0x78] sm:$0xff]
      %v798 = vld [vmem:[%s786 + $0x80] sm:$0xff]
      %v799 = vld [vmem:[%s786 + $0x90] sm:$0xff]
      %v800 = vld [vmem:[%s786 + $0x98] sm:$0xff]
      %v801 = vld [vmem:[%s786 + $0xa8] sm:$0xff]
      %v802 = vld [vmem:[%s786 + $0xb0] sm:$0xff]
      %v803 = vld [vmem:[%s786 + $0xc0] sm:$0xff]
      %v804 = vld [vmem:[%s786 + $0xc8] sm:$0xff]
      %v805 = vld [vmem:[%s786 + $0xd8] sm:$0xff]
      %v806 = vld [vmem:[%s786 + $0xe0] sm:$0xff]
      %v807 = vld [vmem:[%s786 + $0xf0] sm:$0xff]
      %v808 = vld [vmem:[%s786 + $0xf8] sm:$0xff]
      %v809 = vld [vmem:[%s786 + $0x108] sm:$0xff]
      %v810 = vld [vmem:[%s786 + $0x110] sm:$0xff]
      %v811 = vld [vmem:[%s786 + $0x120] sm:$0xff]
      %v812 = vld [vmem:[%s786 + $0x128] sm:$0xff]
      %v813 = vld [vmem:[%s786 + $0x138] sm:$0xff]
      %v814 = vld [vmem:[%s786 + $0x140] sm:$0xff]
      %v815 = vld [vmem:[%s786 + $0x150] sm:$0xff]
      %v816 = vld [vmem:[%s786 + $0x158] sm:$0xff]
      %v817 = vld [vmem:[%s786 + $0x168] sm:$0xff]
      %v818 = vld [vmem:[%s786 + $0x170] sm:$0xff]
      %v819 = vld [vmem:[%s786 + $0x1] sm:$0xff]
      %v820 = vld [vmem:[%s786 + $0x9] sm:$0xff]
      %v821 = vld [vmem:[%s786 + $0x19] sm:$0xff]
      %v822 = vld [vmem:[%s786 + $0x21] sm:$0xff]
      %v823 = vld [vmem:[%s786 + $0x31] sm:$0xff]
      %v824 = vld [vmem:[%s786 + $0x39] sm:$0xff]
      %v825 = vld [vmem:[%s786 + $0x49] sm:$0xff]
      %v826 = vld [vmem:[%s786 + $0x51] sm:$0xff]
      %v827 = vld [vmem:[%s786 + $0x61] sm:$0xff]
      %v828 = vld [vmem:[%s786 + $0x69] sm:$0xff]
      %v829 = vld [vmem:[%s786 + $0x79] sm:$0xff]
      %v830 = vld [vmem:[%s786 + $0x81] sm:$0xff]
      %v831 = vld [vmem:[%s786 + $0x91] sm:$0xff]
      %v832 = vld [vmem:[%s786 + $0x99] sm:$0xff]
      %v833 = vld [vmem:[%s786 + $0xa9] sm:$0xff]
      %v834 = vld [vmem:[%s786 + $0xb1] sm:$0xff]
      %v835 = vld [vmem:[%s786 + $0xc1] sm:$0xff]
      %v836 = vld [vmem:[%s786 + $0xc9] sm:$0xff]
      %v837 = vld [vmem:[%s786 + $0xd9] sm:$0xff]
      %v838 = vld [vmem:[%s786 + $0xe1] sm:$0xff]
      %v839 = vld [vmem:[%s786 + $0xf1] sm:$0xff]
      %v840 = vld [vmem:[%s786 + $0xf9] sm:$0xff]
      %v841 = vld [vmem:[%s786 + $0x109] sm:$0xff]
      %v842 = vld [vmem:[%s786 + $0x111] sm:$0xff]
      %v843 = vld [vmem:[%s786 + $0x121] sm:$0xff]
      %v844 = vld [vmem:[%s786 + $0x129] sm:$0xff]
      %v845 = vld [vmem:[%s786 + $0x139] sm:$0xff]
      %v846 = vld [vmem:[%s786 + $0x141] sm:$0xff]
      %v847 = vld [vmem:[%s786 + $0x151] sm:$0xff]
      %v848 = vld [vmem:[%s786 + $0x159] sm:$0xff]
      %v849 = vld [vmem:[%s786 + $0x169] sm:$0xff]
      %v850 = vld [vmem:[%s786 + $0x171] sm:$0xff]
      %v851 = vld [vmem:[%s786 + $0x2] sm:$0xff]
      %v852 = vld [vmem:[%s786 + $0xa] sm:$0xff]
      %v853 = vld [vmem:[%s786 + $0x1a] sm:$0xff]
      %v854 = vld [vmem:[%s786 + $0x22] sm:$0xff]
      %v855 = vld [vmem:[%s786 + $0x32] sm:$0xff]
      %v856 = vld [vmem:[%s786 + $0x3a] sm:$0xff]
      %v857 = vld [vmem:[%s786 + $0x4a] sm:$0xff]
      %v858 = vld [vmem:[%s786 + $0x52] sm:$0xff]
      %v859 = vld [vmem:[%s786 + $0x62] sm:$0xff]
      %v860 = vld [vmem:[%s786 + $0x6a] sm:$0xff]
      %v861 = vld [vmem:[%s786 + $0x7a] sm:$0xff]
      %v862 = vld [vmem:[%s786 + $0x82] sm:$0xff]
      %v863 = vld [vmem:[%s786 + $0x92] sm:$0xff]
      %v864 = vld [vmem:[%s786 + $0x9a] sm:$0xff]
      %v865 = vld [vmem:[%s786 + $0xaa] sm:$0xff]
      %v866 = vld [vmem:[%s786 + $0xb2] sm:$0xff]
      %v867 = vld [vmem:[%s786 + $0xc2] sm:$0xff]
      %v868 = vld [vmem:[%s786 + $0xca] sm:$0xff]
      %v869 = vld [vmem:[%s786 + $0xda] sm:$0xff]
      %v870 = vld [vmem:[%s786 + $0xe2] sm:$0xff]
      %v871 = vld [vmem:[%s786 + $0xf2] sm:$0xff]
      %v872 = vld [vmem:[%s786 + $0xfa] sm:$0xff]
      %v873 = vld [vmem:[%s786 + $0x10a] sm:$0xff]
      %v874 = vld [vmem:[%s786 + $0x112] sm:$0xff]
      %v875 = vld [vmem:[%s786 + $0x122] sm:$0xff]
      %v876 = vld [vmem:[%s786 + $0x12a] sm:$0xff]
      %v877 = vld [vmem:[%s786 + $0x13a] sm:$0xff]
      %v878 = vld [vmem:[%s786 + $0x142] sm:$0xff]
      %v879 = vld [vmem:[%s786 + $0x152] sm:$0xff]
      %v880 = vld [vmem:[%s786 + $0x15a] sm:$0xff]
      %v881 = vld [vmem:[%s786 + $0x16a] sm:$0xff]
      %v882 = vld [vmem:[%s786 + $0x172] sm:$0xff]
      %v883 = vld [vmem:[%s786 + $0x3] sm:$0xff]
      %v884 = vld [vmem:[%s786 + $0xb] sm:$0xff]
      %v885 = vld [vmem:[%s786 + $0x1b] sm:$0xff]
      %v886 = vld [vmem:[%s786 + $0x23] sm:$0xff]
      %v887 = vld [vmem:[%s786 + $0x33] sm:$0xff]
      %v888 = vld [vmem:[%s786 + $0x3b] sm:$0xff]
      %v889 = vld [vmem:[%s786 + $0x4b] sm:$0xff]
      %v890 = vld [vmem:[%s786 + $0x53] sm:$0xff]
      %v891 = vld [vmem:[%s786 + $0x63] sm:$0xff]
      %v892 = vld [vmem:[%s786 + $0x6b] sm:$0xff]
      %v893 = vld [vmem:[%s786 + $0x7b] sm:$0xff]
      %v894 = vld [vmem:[%s786 + $0x83] sm:$0xff]
      %v895 = vld [vmem:[%s786 + $0x93] sm:$0xff]
      %v896 = vld [vmem:[%s786 + $0x9b] sm:$0xff]
      %v897 = vld [vmem:[%s786 + $0xab] sm:$0xff]
      %v898 = vld [vmem:[%s786 + $0xb3] sm:$0xff]
      %v899 = vld [vmem:[%s786 + $0xc3] sm:$0xff]
      %v900 = vld [vmem:[%s786 + $0xcb] sm:$0xff]
      %v901 = vld [vmem:[%s786 + $0xdb] sm:$0xff]
      %v902 = vld [vmem:[%s786 + $0xe3] sm:$0xff]
      %v903 = vld [vmem:[%s786 + $0xf3] sm:$0xff]
      %v904 = vld [vmem:[%s786 + $0xfb] sm:$0xff]
      %v905 = vld [vmem:[%s786 + $0x10b] sm:$0xff]
      %v906 = vld [vmem:[%s786 + $0x113] sm:$0xff]
      %v907 = vld [vmem:[%s786 + $0x123] sm:$0xff]
      %v908 = vld [vmem:[%s786 + $0x12b] sm:$0xff]
      %v909 = vld [vmem:[%s786 + $0x13b] sm:$0xff]
      %v910 = vld [vmem:[%s786 + $0x143] sm:$0xff]
      %v911 = vld [vmem:[%s786 + $0x153] sm:$0xff]
      %v912 = vld [vmem:[%s786 + $0x15b] sm:$0xff]
      %v913 = vld [vmem:[%s786 + $0x16b] sm:$0xff]
      %v914 = vld [vmem:[%s786 + $0x173] sm:$0xff]
      %v915 = vld [vmem:[%s786 + $0x4] sm:$0xff]
      %v916 = vld [vmem:[%s786 + $0xc] sm:$0xff]
      %v917 = vld [vmem:[%s786 + $0x1c] sm:$0xff]
      %v918 = vld [vmem:[%s786 + $0x24] sm:$0xff]
      %v919 = vld [vmem:[%s786 + $0x34] sm:$0xff]
      %v920 = vld [vmem:[%s786 + $0x3c] sm:$0xff]
      %v921 = vld [vmem:[%s786 + $0x4c] sm:$0xff]
      %v922 = vld [vmem:[%s786 + $0x54] sm:$0xff]
      %v923 = vld [vmem:[%s786 + $0x64] sm:$0xff]
      %v924 = vld [vmem:[%s786 + $0x6c] sm:$0xff]
      %v925 = vld [vmem:[%s786 + $0x7c] sm:$0xff]
      %v926 = vld [vmem:[%s786 + $0x84] sm:$0xff]
      %v927 = vld [vmem:[%s786 + $0x94] sm:$0xff]
      %v928 = vld [vmem:[%s786 + $0x9c] sm:$0xff]
      %v929 = vld [vmem:[%s786 + $0xac] sm:$0xff]
      %v930 = vld [vmem:[%s786 + $0xb4] sm:$0xff]
      %v931 = vld [vmem:[%s786 + $0xc4] sm:$0xff]
      %v932 = vld [vmem:[%s786 + $0xcc] sm:$0xff]
      %v933 = vld [vmem:[%s786 + $0xdc] sm:$0xff]
      %v934 = vld [vmem:[%s786 + $0xe4] sm:$0xff]
      %v935 = vld [vmem:[%s786 + $0xf4] sm:$0xff]
      %v936 = vld [vmem:[%s786 + $0xfc] sm:$0xff]
      %v937 = vld [vmem:[%s786 + $0x10c] sm:$0xff]
      %v938 = vld [vmem:[%s786 + $0x114] sm:$0xff]
      %v939 = vld [vmem:[%s786 + $0x124] sm:$0xff]
      %v940 = vld [vmem:[%s786 + $0x12c] sm:$0xff]
      %v941 = vld [vmem:[%s786 + $0x13c] sm:$0xff]
      %v942 = vld [vmem:[%s786 + $0x144] sm:$0xff]
      %v943 = vld [vmem:[%s786 + $0x154] sm:$0xff]
      %v944 = vld [vmem:[%s786 + $0x15c] sm:$0xff]
      %v945 = vld [vmem:[%s786 + $0x16c] sm:$0xff]
      %v946 = vld [vmem:[%s786 + $0x174] sm:$0xff]
      %v947 = vld [vmem:[%s593] sm:$0xff]
      %v948 = vld [vmem:[%s593 + $0x8] sm:$0xff]
      %v949 = vld [vmem:[%s593 + $0x18] sm:$0xff]
      %v950 = vld [vmem:[%s593 + $0x20] sm:$0xff]
      %v951 = vld [vmem:[%s593 + $0x30] sm:$0xff]
      %v952 = vld [vmem:[%s593 + $0x38] sm:$0xff]
      %v953 = vld [vmem:[%s593 + $0x48] sm:$0xff]
      %v954 = vld [vmem:[%s593 + $0x50] sm:$0xff]
      %v955 = vld [vmem:[%s593 + $0x60] sm:$0xff]
      %v956 = vld [vmem:[%s593 + $0x68] sm:$0xff]
      %v957 = vld [vmem:[%s593 + $0x78] sm:$0xff]
      %v958 = vld [vmem:[%s593 + $0x80] sm:$0xff]
      %v959 = vld [vmem:[%s593 + $0x90] sm:$0xff]
      %v960 = vld [vmem:[%s593 + $0x98] sm:$0xff]
      %v961 = vld [vmem:[%s593 + $0xa8] sm:$0xff]
      %v962 = vld [vmem:[%s593 + $0xb0] sm:$0xff]
      %v963 = vld [vmem:[%s593 + $0xc0] sm:$0xff]
      %v964 = vld [vmem:[%s593 + $0xc8] sm:$0xff]
      %v965 = vld [vmem:[%s593 + $0xd8] sm:$0xff]
      %v966 = vld [vmem:[%s593 + $0xe0] sm:$0xff]
      %v967 = vld [vmem:[%s593 + $0xf0] sm:$0xff]
      %v968 = vld [vmem:[%s593 + $0xf8] sm:$0xff]
      %v969 = vld [vmem:[%s593 + $0x108] sm:$0xff]
      %v970 = vld [vmem:[%s593 + $0x110] sm:$0xff]
      %v971 = vld [vmem:[%s593 + $0x120] sm:$0xff]
      %v972 = vld [vmem:[%s593 + $0x128] sm:$0xff]
      %v973 = vld [vmem:[%s593 + $0x138] sm:$0xff]
      %v974 = vld [vmem:[%s593 + $0x140] sm:$0xff]
      %v975 = vld [vmem:[%s593 + $0x150] sm:$0xff]
      %v976 = vld [vmem:[%s593 + $0x158] sm:$0xff]
      %v977 = vld [vmem:[%s593 + $0x168] sm:$0xff]
      %v978 = vld [vmem:[%s593 + $0x170] sm:$0xff]
      %v979 = vld [vmem:[%s593 + $0x1] sm:$0xff]
      %v980 = vld [vmem:[%s593 + $0x9] sm:$0xff]
      %v981 = vld [vmem:[%s593 + $0x19] sm:$0xff]
      %v982 = vld [vmem:[%s593 + $0x21] sm:$0xff]
      %v983 = vld [vmem:[%s593 + $0x31] sm:$0xff]
      %v984 = vld [vmem:[%s593 + $0x39] sm:$0xff]
      %v985 = vld [vmem:[%s593 + $0x49] sm:$0xff]
      %v986 = vld [vmem:[%s593 + $0x51] sm:$0xff]
      %v987 = vld [vmem:[%s593 + $0x61] sm:$0xff]
      %v988 = vld [vmem:[%s593 + $0x69] sm:$0xff]
      %v989 = vld [vmem:[%s593 + $0x79] sm:$0xff]
      %v990 = vld [vmem:[%s593 + $0x81] sm:$0xff]
      %v991 = vld [vmem:[%s593 + $0x91] sm:$0xff]
      %v992 = vld [vmem:[%s593 + $0x99] sm:$0xff]
      %v993 = vld [vmem:[%s593 + $0xa9] sm:$0xff]
      %v994 = vld [vmem:[%s593 + $0xb1] sm:$0xff]
      %v995 = vld [vmem:[%s593 + $0xc1] sm:$0xff]
      %v996 = vld [vmem:[%s593 + $0xc9] sm:$0xff]
      %v997 = vld [vmem:[%s593 + $0xd9] sm:$0xff]
      %v998 = vld [vmem:[%s593 + $0xe1] sm:$0xff]
      %v999 = vld [vmem:[%s593 + $0xf1] sm:$0xff]
      %v1000 = vld [vmem:[%s593 + $0xf9] sm:$0xff]
      %v1001 = vld [vmem:[%s593 + $0x109] sm:$0xff]
      %v1002 = vld [vmem:[%s593 + $0x111] sm:$0xff]
      %v1003 = vld [vmem:[%s593 + $0x121] sm:$0xff]
      %v1004 = vld [vmem:[%s593 + $0x129] sm:$0xff]
      %v1005 = vld [vmem:[%s593 + $0x139] sm:$0xff]
      %v1006 = vld [vmem:[%s593 + $0x141] sm:$0xff]
      %v1007 = vld [vmem:[%s593 + $0x151] sm:$0xff]
      %v1008 = vld [vmem:[%s593 + $0x159] sm:$0xff]
      %v1009 = vld [vmem:[%s593 + $0x169] sm:$0xff]
      %v1010 = vld [vmem:[%s593 + $0x171] sm:$0xff]
      %v1011 = vld [vmem:[%s593 + $0x2] sm:$0xff]
      %v1012 = vld [vmem:[%s593 + $0xa] sm:$0xff]
      %v1013 = vld [vmem:[%s593 + $0x1a] sm:$0xff]
      %v1014 = vld [vmem:[%s593 + $0x22] sm:$0xff]
      %v1015 = vld [vmem:[%s593 + $0x32] sm:$0xff]
      %v1016 = vld [vmem:[%s593 + $0x3a] sm:$0xff]
      %v1017 = vld [vmem:[%s593 + $0x4a] sm:$0xff]
      %v1018 = vld [vmem:[%s593 + $0x52] sm:$0xff]
      %v1019 = vld [vmem:[%s593 + $0x62] sm:$0xff]
      %v1020 = vld [vmem:[%s593 + $0x6a] sm:$0xff]
      %v1021 = vld [vmem:[%s593 + $0x7a] sm:$0xff]
      %v1022 = vld [vmem:[%s593 + $0x82] sm:$0xff]
      %v1023 = vld [vmem:[%s593 + $0x92] sm:$0xff]
      %v1024 = vld [vmem:[%s593 + $0x9a] sm:$0xff]
      %v1025 = vld [vmem:[%s593 + $0xaa] sm:$0xff]
      %v1026 = vld [vmem:[%s593 + $0xb2] sm:$0xff]
      %v1027 = vld [vmem:[%s593 + $0xc2] sm:$0xff]
      %v1028 = vld [vmem:[%s593 + $0xca] sm:$0xff]
      %v1029 = vld [vmem:[%s593 + $0xda] sm:$0xff]
      %v1030 = vld [vmem:[%s593 + $0xe2] sm:$0xff]
      %v1031 = vld [vmem:[%s593 + $0xf2] sm:$0xff]
      %v1032 = vld [vmem:[%s593 + $0xfa] sm:$0xff]
      %v1033 = vld [vmem:[%s593 + $0x10a] sm:$0xff]
      %v1034 = vld [vmem:[%s593 + $0x112] sm:$0xff]
      %v1035 = vld [vmem:[%s593 + $0x122] sm:$0xff]
      %v1036 = vld [vmem:[%s593 + $0x12a] sm:$0xff]
      %v1037 = vld [vmem:[%s593 + $0x13a] sm:$0xff]
      %v1038 = vld [vmem:[%s593 + $0x142] sm:$0xff]
      %v1039 = vld [vmem:[%s593 + $0x152] sm:$0xff]
      %v1040 = vld [vmem:[%s593 + $0x15a] sm:$0xff]
      %v1041 = vld [vmem:[%s593 + $0x16a] sm:$0xff]
      %v1042 = vld [vmem:[%s593 + $0x172] sm:$0xff]
      %v1043 = vld [vmem:[%s593 + $0x3] sm:$0xff]
      %v1044 = vld [vmem:[%s593 + $0xb] sm:$0xff]
      %v1045 = vld [vmem:[%s593 + $0x1b] sm:$0xff]
      %v1046 = vld [vmem:[%s593 + $0x23] sm:$0xff]
      %v1047 = vld [vmem:[%s593 + $0x33] sm:$0xff]
      %v1048 = vld [vmem:[%s593 + $0x3b] sm:$0xff]
      %v1049 = vld [vmem:[%s593 + $0x4b] sm:$0xff]
      %v1050 = vld [vmem:[%s593 + $0x53] sm:$0xff]
      %v1051 = vld [vmem:[%s593 + $0x63] sm:$0xff]
      %v1052 = vld [vmem:[%s593 + $0x6b] sm:$0xff]
      %v1053 = vld [vmem:[%s593 + $0x7b] sm:$0xff]
      %v1054 = vld [vmem:[%s593 + $0x83] sm:$0xff]
      %v1055 = vld [vmem:[%s593 + $0x93] sm:$0xff]
      %v1056 = vld [vmem:[%s593 + $0x9b] sm:$0xff]
      %v1057 = vld [vmem:[%s593 + $0xab] sm:$0xff]
      %v1058 = vld [vmem:[%s593 + $0xb3] sm:$0xff]
      %v1059 = vld [vmem:[%s593 + $0xc3] sm:$0xff]
      %v1060 = vld [vmem:[%s593 + $0xcb] sm:$0xff]
      %v1061 = vld [vmem:[%s593 + $0xdb] sm:$0xff]
      %v1062 = vld [vmem:[%s593 + $0xe3] sm:$0xff]
      %v1063 = vld [vmem:[%s593 + $0xf3] sm:$0xff]
      %v1064 = vld [vmem:[%s593 + $0xfb] sm:$0xff]
      %v1065 = vld [vmem:[%s593 + $0x10b] sm:$0xff]
      %v1066 = vld [vmem:[%s593 + $0x113] sm:$0xff]
      %v1067 = vld [vmem:[%s593 + $0x123] sm:$0xff]
      %v1068 = vld [vmem:[%s593 + $0x12b] sm:$0xff]
      %v1069 = vld [vmem:[%s593 + $0x13b] sm:$0xff]
      %v1070 = vld [vmem:[%s593 + $0x143] sm:$0xff]
      %v1071 = vld [vmem:[%s593 + $0x153] sm:$0xff]
      %v1072 = vld [vmem:[%s593 + $0x15b] sm:$0xff]
      %v1073 = vld [vmem:[%s593 + $0x16b] sm:$0xff]
      %v1074 = vld [vmem:[%s593 + $0x173] sm:$0xff]
      %v1075 = vld [vmem:[%s593 + $0x4] sm:$0xff]
      %v1076 = vld [vmem:[%s593 + $0xc] sm:$0xff]
      %v1077 = vld [vmem:[%s593 + $0x1c] sm:$0xff]
      %v1078 = vld [vmem:[%s593 + $0x24] sm:$0xff]
      %v1079 = vld [vmem:[%s593 + $0x34] sm:$0xff]
      %v1080 = vld [vmem:[%s593 + $0x3c] sm:$0xff]
      %v1081 = vld [vmem:[%s593 + $0x4c] sm:$0xff]
      %v1082 = vld [vmem:[%s593 + $0x54] sm:$0xff]
      %v1083 = vld [vmem:[%s593 + $0x64] sm:$0xff]
      %v1084 = vld [vmem:[%s593 + $0x6c] sm:$0xff]
      %v1085 = vld [vmem:[%s593 + $0x7c] sm:$0xff]
      %v1086 = vld [vmem:[%s593 + $0x84] sm:$0xff]
      %v1087 = vld [vmem:[%s593 + $0x94] sm:$0xff]
      %v1088 = vld [vmem:[%s593 + $0x9c] sm:$0xff]
      %v1089 = vld [vmem:[%s593 + $0xac] sm:$0xff]
      %v1090 = vld [vmem:[%s593 + $0xb4] sm:$0xff]
      %v1091 = vld [vmem:[%s593 + $0xc4] sm:$0xff]
      %v1092 = vld [vmem:[%s593 + $0xcc] sm:$0xff]
      %v1093 = vld [vmem:[%s593 + $0xdc] sm:$0xff]
      %v1094 = vld [vmem:[%s593 + $0xe4] sm:$0xff]
      %v1095 = vld [vmem:[%s593 + $0xf4] sm:$0xff]
      %v1096 = vld [vmem:[%s593 + $0xfc] sm:$0xff]
      %v1097 = vld [vmem:[%s593 + $0x10c] sm:$0xff]
      %v1098 = vld [vmem:[%s593 + $0x114] sm:$0xff]
      %v1099 = vld [vmem:[%s593 + $0x124] sm:$0xff]
      %v1100 = vld [vmem:[%s593 + $0x12c] sm:$0xff]
      %v1101 = vld [vmem:[%s593 + $0x13c] sm:$0xff]
      %v1102 = vld [vmem:[%s593 + $0x144] sm:$0xff]
      %v1103 = vld [vmem:[%s593 + $0x154] sm:$0xff]
      %v1104 = vld [vmem:[%s593 + $0x15c] sm:$0xff]
      %v1105 = vld [vmem:[%s593 + $0x16c] sm:$0xff]
      %v1106 = vld [vmem:[%s593 + $0x174] sm:$0xff]
      %s1107 = scalar_lea.vmem [#allocation2], 72
      %v1108 = vld [vmem:[%s1107] sm:$0xff]
      %v1109 = vld [vmem:[%s1107 + $0x8] sm:$0xff]
      %v1110 = vld [vmem:[%s1107 + $0x18] sm:$0xff]
      %v1111 = vld [vmem:[%s1107 + $0x20] sm:$0xff]
      %v1112 = vld [vmem:[%s1107 + $0x30] sm:$0xff]
      %v1113 = vld [vmem:[%s1107 + $0x38] sm:$0xff]
      %v1114 = vld [vmem:[%s1107 + $0x48] sm:$0xff]
      %v1115 = vld [vmem:[%s1107 + $0x50] sm:$0xff]
      %v1116 = vld [vmem:[%s1107 + $0x60] sm:$0xff]
      %v1117 = vld [vmem:[%s1107 + $0x68] sm:$0xff]
      %v1118 = vld [vmem:[%s1107 + $0x78] sm:$0xff]
      %v1119 = vld [vmem:[%s1107 + $0x80] sm:$0xff]
      %v1120 = vld [vmem:[%s1107 + $0x90] sm:$0xff]
      %v1121 = vld [vmem:[%s1107 + $0x98] sm:$0xff]
      %v1122 = vld [vmem:[%s1107 + $0xa8] sm:$0xff]
      %v1123 = vld [vmem:[%s1107 + $0xb0] sm:$0xff]
      %v1124 = vld [vmem:[%s1107 + $0xc0] sm:$0xff]
      %v1125 = vld [vmem:[%s1107 + $0xc8] sm:$0xff]
      %v1126 = vld [vmem:[%s1107 + $0xd8] sm:$0xff]
      %v1127 = vld [vmem:[%s1107 + $0xe0] sm:$0xff]
      %v1128 = vld [vmem:[%s1107 + $0xf0] sm:$0xff]
      %v1129 = vld [vmem:[%s1107 + $0xf8] sm:$0xff]
      %v1130 = vld [vmem:[%s1107 + $0x108] sm:$0xff]
      %v1131 = vld [vmem:[%s1107 + $0x110] sm:$0xff]
      %v1132 = vld [vmem:[%s1107 + $0x120] sm:$0xff]
      %v1133 = vld [vmem:[%s1107 + $0x128] sm:$0xff]
      %v1134 = vld [vmem:[%s1107 + $0x138] sm:$0xff]
      %v1135 = vld [vmem:[%s1107 + $0x140] sm:$0xff]
      %v1136 = vld [vmem:[%s1107 + $0x150] sm:$0xff]
      %v1137 = vld [vmem:[%s1107 + $0x158] sm:$0xff]
      %v1138 = vld [vmem:[%s1107 + $0x168] sm:$0xff]
      %v1139 = vld [vmem:[%s1107 + $0x170] sm:$0xff]
      %v1140 = vld [vmem:[%s1107 + $0x1] sm:$0xff]
      %v1141 = vld [vmem:[%s1107 + $0x9] sm:$0xff]
      %v1142 = vld [vmem:[%s1107 + $0x19] sm:$0xff]
      %v1143 = vld [vmem:[%s1107 + $0x21] sm:$0xff]
      %v1144 = vld [vmem:[%s1107 + $0x31] sm:$0xff]
      %v1145 = vld [vmem:[%s1107 + $0x39] sm:$0xff]
      %v1146 = vld [vmem:[%s1107 + $0x49] sm:$0xff]
      %v1147 = vld [vmem:[%s1107 + $0x51] sm:$0xff]
      %v1148 = vld [vmem:[%s1107 + $0x61] sm:$0xff]
      %v1149 = vld [vmem:[%s1107 + $0x69] sm:$0xff]
      %v1150 = vld [vmem:[%s1107 + $0x79] sm:$0xff]
      %v1151 = vld [vmem:[%s1107 + $0x81] sm:$0xff]
      %v1152 = vld [vmem:[%s1107 + $0x91] sm:$0xff]
      %v1153 = vld [vmem:[%s1107 + $0x99] sm:$0xff]
      %v1154 = vld [vmem:[%s1107 + $0xa9] sm:$0xff]
      %v1155 = vld [vmem:[%s1107 + $0xb1] sm:$0xff]
      %v1156 = vld [vmem:[%s1107 + $0xc1] sm:$0xff]
      %v1157 = vld [vmem:[%s1107 + $0xc9] sm:$0xff]
      %v1158 = vld [vmem:[%s1107 + $0xd9] sm:$0xff]
      %v1159 = vld [vmem:[%s1107 + $0xe1] sm:$0xff]
      %v1160 = vld [vmem:[%s1107 + $0xf1] sm:$0xff]
      %v1161 = vld [vmem:[%s1107 + $0xf9] sm:$0xff]
      %v1162 = vld [vmem:[%s1107 + $0x109] sm:$0xff]
      %v1163 = vld [vmem:[%s1107 + $0x111] sm:$0xff]
      %v1164 = vld [vmem:[%s1107 + $0x121] sm:$0xff]
      %v1165 = vld [vmem:[%s1107 + $0x129] sm:$0xff]
      %v1166 = vld [vmem:[%s1107 + $0x139] sm:$0xff]
      %v1167 = vld [vmem:[%s1107 + $0x141] sm:$0xff]
      %v1168 = vld [vmem:[%s1107 + $0x151] sm:$0xff]
      %v1169 = vld [vmem:[%s1107 + $0x159] sm:$0xff]
      %v1170 = vld [vmem:[%s1107 + $0x169] sm:$0xff]
      %v1171 = vld [vmem:[%s1107 + $0x171] sm:$0xff]
      %v1172 = vld [vmem:[%s1107 + $0x2] sm:$0xff]
      %v1173 = vld [vmem:[%s1107 + $0xa] sm:$0xff]
      %v1174 = vld [vmem:[%s1107 + $0x1a] sm:$0xff]
      %v1175 = vld [vmem:[%s1107 + $0x22] sm:$0xff]
      %v1176 = vld [vmem:[%s1107 + $0x32] sm:$0xff]
      %v1177 = vld [vmem:[%s1107 + $0x3a] sm:$0xff]
      %v1178 = vld [vmem:[%s1107 + $0x4a] sm:$0xff]
      %v1179 = vld [vmem:[%s1107 + $0x52] sm:$0xff]
      %v1180 = vld [vmem:[%s1107 + $0x62] sm:$0xff]
      %v1181 = vld [vmem:[%s1107 + $0x6a] sm:$0xff]
      %v1182 = vld [vmem:[%s1107 + $0x7a] sm:$0xff]
      %v1183 = vld [vmem:[%s1107 + $0x82] sm:$0xff]
      %v1184 = vld [vmem:[%s1107 + $0x92] sm:$0xff]
      %v1185 = vld [vmem:[%s1107 + $0x9a] sm:$0xff]
      %v1186 = vld [vmem:[%s1107 + $0xaa] sm:$0xff]
      %v1187 = vld [vmem:[%s1107 + $0xb2] sm:$0xff]
      %v1188 = vld [vmem:[%s1107 + $0xc2] sm:$0xff]
      %v1189 = vld [vmem:[%s1107 + $0xca] sm:$0xff]
      %v1190 = vld [vmem:[%s1107 + $0xda] sm:$0xff]
      %v1191 = vld [vmem:[%s1107 + $0xe2] sm:$0xff]
      %v1192 = vld [vmem:[%s1107 + $0xf2] sm:$0xff]
      %v1193 = vld [vmem:[%s1107 + $0xfa] sm:$0xff]
      %v1194 = vld [vmem:[%s1107 + $0x10a] sm:$0xff]
      %v1195 = vld [vmem:[%s1107 + $0x112] sm:$0xff]
      %v1196 = vld [vmem:[%s1107 + $0x122] sm:$0xff]
      %v1197 = vld [vmem:[%s1107 + $0x12a] sm:$0xff]
      %v1198 = vld [vmem:[%s1107 + $0x13a] sm:$0xff]
      %v1199 = vld [vmem:[%s1107 + $0x142] sm:$0xff]
      %v1200 = vld [vmem:[%s1107 + $0x152] sm:$0xff]
      %v1201 = vld [vmem:[%s1107 + $0x15a] sm:$0xff]
      %v1202 = vld [vmem:[%s1107 + $0x16a] sm:$0xff]
      %v1203 = vld [vmem:[%s1107 + $0x172] sm:$0xff]
      %v1204 = vld [vmem:[%s1107 + $0x3] sm:$0xff]
      %v1205 = vld [vmem:[%s1107 + $0xb] sm:$0xff]
      %v1206 = vld [vmem:[%s1107 + $0x1b] sm:$0xff]
      %v1207 = vld [vmem:[%s1107 + $0x23] sm:$0xff]
      %v1208 = vld [vmem:[%s1107 + $0x33] sm:$0xff]
      %v1209 = vld [vmem:[%s1107 + $0x3b] sm:$0xff]
      %v1210 = vld [vmem:[%s1107 + $0x4b] sm:$0xff]
      %v1211 = vld [vmem:[%s1107 + $0x53] sm:$0xff]
      %v1212 = vld [vmem:[%s1107 + $0x63] sm:$0xff]
      %v1213 = vld [vmem:[%s1107 + $0x6b] sm:$0xff]
      %v1214 = vld [vmem:[%s1107 + $0x7b] sm:$0xff]
      %v1215 = vld [vmem:[%s1107 + $0x83] sm:$0xff]
      %v1216 = vld [vmem:[%s1107 + $0x93] sm:$0xff]
      %v1217 = vld [vmem:[%s1107 + $0x9b] sm:$0xff]
      %v1218 = vld [vmem:[%s1107 + $0xab] sm:$0xff]
      %v1219 = vld [vmem:[%s1107 + $0xb3] sm:$0xff]
      %v1220 = vld [vmem:[%s1107 + $0xc3] sm:$0xff]
      %v1221 = vld [vmem:[%s1107 + $0xcb] sm:$0xff]
      %v1222 = vld [vmem:[%s1107 + $0xdb] sm:$0xff]
      %v1223 = vld [vmem:[%s1107 + $0xe3] sm:$0xff]
      %v1224 = vld [vmem:[%s1107 + $0xf3] sm:$0xff]
      %v1225 = vld [vmem:[%s1107 + $0xfb] sm:$0xff]
      %v1226 = vld [vmem:[%s1107 + $0x10b] sm:$0xff]
      %v1227 = vld [vmem:[%s1107 + $0x113] sm:$0xff]
      %v1228 = vld [vmem:[%s1107 + $0x123] sm:$0xff]
      %v1229 = vld [vmem:[%s1107 + $0x12b] sm:$0xff]
      %v1230 = vld [vmem:[%s1107 + $0x13b] sm:$0xff]
      %v1231 = vld [vmem:[%s1107 + $0x143] sm:$0xff]
      %v1232 = vld [vmem:[%s1107 + $0x153] sm:$0xff]
      %v1233 = vld [vmem:[%s1107 + $0x15b] sm:$0xff]
      %v1234 = vld [vmem:[%s1107 + $0x16b] sm:$0xff]
      %v1235 = vld [vmem:[%s1107 + $0x173] sm:$0xff]
      %v1236 = vld [vmem:[%s1107 + $0x4] sm:$0xff]
      %v1237 = vld [vmem:[%s1107 + $0xc] sm:$0xff]
      %v1238 = vld [vmem:[%s1107 + $0x1c] sm:$0xff]
      %v1239 = vld [vmem:[%s1107 + $0x24] sm:$0xff]
      %v1240 = vld [vmem:[%s1107 + $0x34] sm:$0xff]
      %v1241 = vld [vmem:[%s1107 + $0x3c] sm:$0xff]
      %v1242 = vld [vmem:[%s1107 + $0x4c] sm:$0xff]
      %v1243 = vld [vmem:[%s1107 + $0x54] sm:$0xff]
      %v1244 = vld [vmem:[%s1107 + $0x64] sm:$0xff]
      %v1245 = vld [vmem:[%s1107 + $0x6c] sm:$0xff]
      %v1246 = vld [vmem:[%s1107 + $0x7c] sm:$0xff]
      %v1247 = vld [vmem:[%s1107 + $0x84] sm:$0xff]
      %v1248 = vld [vmem:[%s1107 + $0x94] sm:$0xff]
      %v1249 = vld [vmem:[%s1107 + $0x9c] sm:$0xff]
      %v1250 = vld [vmem:[%s1107 + $0xac] sm:$0xff]
      %v1251 = vld [vmem:[%s1107 + $0xb4] sm:$0xff]
      %v1252 = vld [vmem:[%s1107 + $0xc4] sm:$0xff]
      %v1253 = vld [vmem:[%s1107 + $0xcc] sm:$0xff]
      %v1254 = vld [vmem:[%s1107 + $0xdc] sm:$0xff]
      %v1255 = vld [vmem:[%s1107 + $0xe4] sm:$0xff]
      %v1256 = vld [vmem:[%s1107 + $0xf4] sm:$0xff]
      %v1257 = vld [vmem:[%s1107 + $0xfc] sm:$0xff]
      %v1258 = vld [vmem:[%s1107 + $0x10c] sm:$0xff]
      %v1259 = vld [vmem:[%s1107 + $0x114] sm:$0xff]
      %v1260 = vld [vmem:[%s1107 + $0x124] sm:$0xff]
      %v1261 = vld [vmem:[%s1107 + $0x12c] sm:$0xff]
      %v1262 = vld [vmem:[%s1107 + $0x13c] sm:$0xff]
      %v1263 = vld [vmem:[%s1107 + $0x144] sm:$0xff]
      %v1264 = vld [vmem:[%s1107 + $0x154] sm:$0xff]
      %v1265 = vld [vmem:[%s1107 + $0x15c] sm:$0xff]
      %v1266 = vld [vmem:[%s1107 + $0x16c] sm:$0xff]
      %v1267 = vld [vmem:[%s1107 + $0x174] sm:$0xff]
      %s1268 = scalar_lea.vmem [#allocation2], 96
      %v1269 = vld [vmem:[%s1268] sm:$0xff]
      %v1270 = vld [vmem:[%s1268 + $0x8] sm:$0xff]
      %v1271 = vld [vmem:[%s1268 + $0x18] sm:$0xff]
      %v1272 = vld [vmem:[%s1268 + $0x20] sm:$0xff]
      %v1273 = vld [vmem:[%s1268 + $0x30] sm:$0xff]
      %v1274 = vld [vmem:[%s1268 + $0x38] sm:$0xff]
      %v1275 = vld [vmem:[%s1268 + $0x48] sm:$0xff]
      %v1276 = vld [vmem:[%s1268 + $0x50] sm:$0xff]
      %v1277 = vld [vmem:[%s1268 + $0x60] sm:$0xff]
      %v1278 = vld [vmem:[%s1268 + $0x68] sm:$0xff]
      %v1279 = vld [vmem:[%s1268 + $0x78] sm:$0xff]
      %v1280 = vld [vmem:[%s1268 + $0x80] sm:$0xff]
      %v1281 = vld [vmem:[%s1268 + $0x90] sm:$0xff]
      %v1282 = vld [vmem:[%s1268 + $0x98] sm:$0xff]
      %v1283 = vld [vmem:[%s1268 + $0xa8] sm:$0xff]
      %v1284 = vld [vmem:[%s1268 + $0xb0] sm:$0xff]
      %v1285 = vld [vmem:[%s1268 + $0xc0] sm:$0xff]
      %v1286 = vld [vmem:[%s1268 + $0xc8] sm:$0xff]
      %v1287 = vld [vmem:[%s1268 + $0xd8] sm:$0xff]
      %v1288 = vld [vmem:[%s1268 + $0xe0] sm:$0xff]
      %v1289 = vld [vmem:[%s1268 + $0xf0] sm:$0xff]
      %v1290 = vld [vmem:[%s1268 + $0xf8] sm:$0xff]
      %v1291 = vld [vmem:[%s1268 + $0x108] sm:$0xff]
      %v1292 = vld [vmem:[%s1268 + $0x110] sm:$0xff]
      %v1293 = vld [vmem:[%s1268 + $0x120] sm:$0xff]
      %v1294 = vld [vmem:[%s1268 + $0x128] sm:$0xff]
      %v1295 = vld [vmem:[%s1268 + $0x138] sm:$0xff]
      %v1296 = vld [vmem:[%s1268 + $0x140] sm:$0xff]
      %v1297 = vld [vmem:[%s1268 + $0x150] sm:$0xff]
      %v1298 = vld [vmem:[%s1268 + $0x158] sm:$0xff]
      %v1299 = vld [vmem:[%s1268 + $0x168] sm:$0xff]
      %v1300 = vld [vmem:[%s1268 + $0x170] sm:$0xff]
      %v1301 = vld [vmem:[%s1268 + $0x1] sm:$0xff]
      %v1302 = vld [vmem:[%s1268 + $0x9] sm:$0xff]
      %v1303 = vld [vmem:[%s1268 + $0x19] sm:$0xff]
      %v1304 = vld [vmem:[%s1268 + $0x21] sm:$0xff]
      %v1305 = vld [vmem:[%s1268 + $0x31] sm:$0xff]
      %v1306 = vld [vmem:[%s1268 + $0x39] sm:$0xff]
      %v1307 = vld [vmem:[%s1268 + $0x49] sm:$0xff]
      %v1308 = vld [vmem:[%s1268 + $0x51] sm:$0xff]
      %v1309 = vld [vmem:[%s1268 + $0x61] sm:$0xff]
      %v1310 = vld [vmem:[%s1268 + $0x69] sm:$0xff]
      %v1311 = vld [vmem:[%s1268 + $0x79] sm:$0xff]
      %v1312 = vld [vmem:[%s1268 + $0x81] sm:$0xff]
      %v1313 = vld [vmem:[%s1268 + $0x91] sm:$0xff]
      %v1314 = vld [vmem:[%s1268 + $0x99] sm:$0xff]
      %v1315 = vld [vmem:[%s1268 + $0xa9] sm:$0xff]
      %v1316 = vld [vmem:[%s1268 + $0xb1] sm:$0xff]
      %v1317 = vld [vmem:[%s1268 + $0xc1] sm:$0xff]
      %v1318 = vld [vmem:[%s1268 + $0xc9] sm:$0xff]
      %v1319 = vld [vmem:[%s1268 + $0xd9] sm:$0xff]
      %v1320 = vld [vmem:[%s1268 + $0xe1] sm:$0xff]
      %v1321 = vld [vmem:[%s1268 + $0xf1] sm:$0xff]
      %v1322 = vld [vmem:[%s1268 + $0xf9] sm:$0xff]
      %v1323 = vld [vmem:[%s1268 + $0x109] sm:$0xff]
      %v1324 = vld [vmem:[%s1268 + $0x111] sm:$0xff]
      %v1325 = vld [vmem:[%s1268 + $0x121] sm:$0xff]
      %v1326 = vld [vmem:[%s1268 + $0x129] sm:$0xff]
      %v1327 = vld [vmem:[%s1268 + $0x139] sm:$0xff]
      %v1328 = vld [vmem:[%s1268 + $0x141] sm:$0xff]
      %v1329 = vld [vmem:[%s1268 + $0x151] sm:$0xff]
      %v1330 = vld [vmem:[%s1268 + $0x159] sm:$0xff]
      %v1331 = vld [vmem:[%s1268 + $0x169] sm:$0xff]
      %v1332 = vld [vmem:[%s1268 + $0x171] sm:$0xff]
      %v1333 = vld [vmem:[%s1268 + $0x2] sm:$0xff]
      %v1334 = vld [vmem:[%s1268 + $0xa] sm:$0xff]
      %v1335 = vld [vmem:[%s1268 + $0x1a] sm:$0xff]
      %v1336 = vld [vmem:[%s1268 + $0x22] sm:$0xff]
      %v1337 = vld [vmem:[%s1268 + $0x32] sm:$0xff]
      %v1338 = vld [vmem:[%s1268 + $0x3a] sm:$0xff]
      %v1339 = vld [vmem:[%s1268 + $0x4a] sm:$0xff]
      %v1340 = vld [vmem:[%s1268 + $0x52] sm:$0xff]
      %v1341 = vld [vmem:[%s1268 + $0x62] sm:$0xff]
      %v1342 = vld [vmem:[%s1268 + $0x6a] sm:$0xff]
      %v1343 = vld [vmem:[%s1268 + $0x7a] sm:$0xff]
      %v1344 = vld [vmem:[%s1268 + $0x82] sm:$0xff]
      %v1345 = vld [vmem:[%s1268 + $0x92] sm:$0xff]
      %v1346 = vld [vmem:[%s1268 + $0x9a] sm:$0xff]
      %v1347 = vld [vmem:[%s1268 + $0xaa] sm:$0xff]
      %v1348 = vld [vmem:[%s1268 + $0xb2] sm:$0xff]
      %v1349 = vld [vmem:[%s1268 + $0xc2] sm:$0xff]
      %v1350 = vld [vmem:[%s1268 + $0xca] sm:$0xff]
      %v1351 = vld [vmem:[%s1268 + $0xda] sm:$0xff]
      %v1352 = vld [vmem:[%s1268 + $0xe2] sm:$0xff]
      %v1353 = vld [vmem:[%s1268 + $0xf2] sm:$0xff]
      %v1354 = vld [vmem:[%s1268 + $0xfa] sm:$0xff]
      %v1355 = vld [vmem:[%s1268 + $0x10a] sm:$0xff]
      %v1356 = vld [vmem:[%s1268 + $0x112] sm:$0xff]
      %v1357 = vld [vmem:[%s1268 + $0x122] sm:$0xff]
      %v1358 = vld [vmem:[%s1268 + $0x12a] sm:$0xff]
      %v1359 = vld [vmem:[%s1268 + $0x13a] sm:$0xff]
      %v1360 = vld [vmem:[%s1268 + $0x142] sm:$0xff]
      %v1361 = vld [vmem:[%s1268 + $0x152] sm:$0xff]
      %v1362 = vld [vmem:[%s1268 + $0x15a] sm:$0xff]
      %v1363 = vld [vmem:[%s1268 + $0x16a] sm:$0xff]
      %v1364 = vld [vmem:[%s1268 + $0x172] sm:$0xff]
      %v1365 = vld [vmem:[%s1268 + $0x3] sm:$0xff]
      %v1366 = vld [vmem:[%s1268 + $0xb] sm:$0xff]
      %v1367 = vld [vmem:[%s1268 + $0x1b] sm:$0xff]
      %v1368 = vld [vmem:[%s1268 + $0x23] sm:$0xff]
      %v1369 = vld [vmem:[%s1268 + $0x33] sm:$0xff]
      %v1370 = vld [vmem:[%s1268 + $0x3b] sm:$0xff]
      %v1371 = vld [vmem:[%s1268 + $0x4b] sm:$0xff]
      %v1372 = vld [vmem:[%s1268 + $0x53] sm:$0xff]
      %v1373 = vld [vmem:[%s1268 + $0x63] sm:$0xff]
      %v1374 = vld [vmem:[%s1268 + $0x6b] sm:$0xff]
      %v1375 = vld [vmem:[%s1268 + $0x7b] sm:$0xff]
      %v1376 = vld [vmem:[%s1268 + $0x83] sm:$0xff]
      %v1377 = vld [vmem:[%s1268 + $0x93] sm:$0xff]
      %v1378 = vld [vmem:[%s1268 + $0x9b] sm:$0xff]
      %v1379 = vld [vmem:[%s1268 + $0xab] sm:$0xff]
      %v1380 = vld [vmem:[%s1268 + $0xb3] sm:$0xff]
      %v1381 = vld [vmem:[%s1268 + $0xc3] sm:$0xff]
      %v1382 = vld [vmem:[%s1268 + $0xcb] sm:$0xff]
      %v1383 = vld [vmem:[%s1268 + $0xdb] sm:$0xff]
      %v1384 = vld [vmem:[%s1268 + $0xe3] sm:$0xff]
      %v1385 = vld [vmem:[%s1268 + $0xf3] sm:$0xff]
      %v1386 = vld [vmem:[%s1268 + $0xfb] sm:$0xff]
      %v1387 = vld [vmem:[%s1268 + $0x10b] sm:$0xff]
      %v1388 = vld [vmem:[%s1268 + $0x113] sm:$0xff]
      %v1389 = vld [vmem:[%s1268 + $0x123] sm:$0xff]
      %v1390 = vld [vmem:[%s1268 + $0x12b] sm:$0xff]
      %v1391 = vld [vmem:[%s1268 + $0x13b] sm:$0xff]
      %v1392 = vld [vmem:[%s1268 + $0x143] sm:$0xff]
      %v1393 = vld [vmem:[%s1268 + $0x153] sm:$0xff]
      %v1394 = vld [vmem:[%s1268 + $0x15b] sm:$0xff]
      %v1395 = vld [vmem:[%s1268 + $0x16b] sm:$0xff]
      %v1396 = vld [vmem:[%s1268 + $0x173] sm:$0xff]
      %v1397 = vld [vmem:[%s1268 + $0x4] sm:$0xff]
      %v1398 = vld [vmem:[%s1268 + $0xc] sm:$0xff]
      %v1399 = vld [vmem:[%s1268 + $0x1c] sm:$0xff]
      %v1400 = vld [vmem:[%s1268 + $0x24] sm:$0xff]
      %v1401 = vld [vmem:[%s1268 + $0x34] sm:$0xff]
      %v1402 = vld [vmem:[%s1268 + $0x3c] sm:$0xff]
      %v1403 = vld [vmem:[%s1268 + $0x4c] sm:$0xff]
      %v1404 = vld [vmem:[%s1268 + $0x54] sm:$0xff]
      %v1405 = vld [vmem:[%s1268 + $0x64] sm:$0xff]
      %v1406 = vld [vmem:[%s1268 + $0x6c] sm:$0xff]
      %v1407 = vld [vmem:[%s1268 + $0x7c] sm:$0xff]
      %v1408 = vld [vmem:[%s1268 + $0x84] sm:$0xff]
      %v1409 = vld [vmem:[%s1268 + $0x94] sm:$0xff]
      %v1410 = vld [vmem:[%s1268 + $0x9c] sm:$0xff]
      %v1411 = vld [vmem:[%s1268 + $0xac] sm:$0xff]
      %v1412 = vld [vmem:[%s1268 + $0xb4] sm:$0xff]
      %v1413 = vld [vmem:[%s1268 + $0xc4] sm:$0xff]
      %v1414 = vld [vmem:[%s1268 + $0xcc] sm:$0xff]
      %v1415 = vld [vmem:[%s1268 + $0xdc] sm:$0xff]
      %v1416 = vld [vmem:[%s1268 + $0xe4] sm:$0xff]
      %v1417 = vld [vmem:[%s1268 + $0xf4] sm:$0xff]
      %v1418 = vld [vmem:[%s1268 + $0xfc] sm:$0xff]
      %v1419 = vld [vmem:[%s1268 + $0x10c] sm:$0xff]
      %v1420 = vld [vmem:[%s1268 + $0x114] sm:$0xff]
      %v1421 = vld [vmem:[%s1268 + $0x124] sm:$0xff]
      %v1422 = vld [vmem:[%s1268 + $0x12c] sm:$0xff]
      %v1423 = vld [vmem:[%s1268 + $0x13c] sm:$0xff]
      %v1424 = vld [vmem:[%s1268 + $0x144] sm:$0xff]
      %v1425 = vld [vmem:[%s1268 + $0x154] sm:$0xff]
      %v1426 = vld [vmem:[%s1268 + $0x15c] sm:$0xff]
      %v1427 = vld [vmem:[%s1268 + $0x16c] sm:$0xff]
      %v1428 = vld [vmem:[%s1268 + $0x174] sm:$0xff]
      %1461 = vrot.lane.b32.xlu0 %v658, 1
      %v1462 = vpop.permute.xlu0 %1461
      %1463 = vrot.lane.b32.xlu0 %v659, 1
      %v1464 = vpop.permute.xlu0 %1463
      %1465 = vrot.lane.b32.xlu0 %v660, 1
      %v1466 = vpop.permute.xlu0 %1465
      %1467 = vrot.lane.b32.xlu0 %v661, 1
      %v1468 = vpop.permute.xlu0 %1467
      %1469 = vrot.lane.b32.xlu0 %v662, 1
      %v1470 = vpop.permute.xlu0 %1469
      %1471 = vrot.lane.b32.xlu0 %v663, 1
      %v1472 = vpop.permute.xlu0 %1471
      %1473 = vrot.lane.b32.xlu0 %v664, 1
      %v1474 = vpop.permute.xlu0 %1473
      %1475 = vrot.lane.b32.xlu0 %v665, 1
      %v1476 = vpop.permute.xlu0 %1475
      %1477 = vrot.lane.b32.xlu0 %v666, 1
      %v1478 = vpop.permute.xlu0 %1477
      %1479 = vrot.lane.b32.xlu0 %v667, 1
      %v1480 = vpop.permute.xlu0 %1479
      %1481 = vrot.lane.b32.xlu0 %v668, 1
      %v1482 = vpop.permute.xlu0 %1481
      %1483 = vrot.lane.b32.xlu0 %v669, 1
      %v1484 = vpop.permute.xlu0 %1483
      %1485 = vrot.lane.b32.xlu0 %v670, 1
      %v1486 = vpop.permute.xlu0 %1485
      %1487 = vrot.lane.b32.xlu0 %v671, 1
      %v1488 = vpop.permute.xlu0 %1487
      %1489 = vrot.lane.b32.xlu0 %v672, 1
      %v1490 = vpop.permute.xlu0 %1489
      %1491 = vrot.lane.b32.xlu0 %v673, 1
      %v1492 = vpop.permute.xlu0 %1491
      %1493 = vrot.lane.b32.xlu0 %v674, 1
      %v1494 = vpop.permute.xlu0 %1493
      %1495 = vrot.lane.b32.xlu0 %v675, 1
      %v1496 = vpop.permute.xlu0 %1495
      %1497 = vrot.lane.b32.xlu0 %v676, 1
      %v1498 = vpop.permute.xlu0 %1497
      %1499 = vrot.lane.b32.xlu0 %v677, 1
      %v1500 = vpop.permute.xlu0 %1499
      %1501 = vrot.lane.b32.xlu0 %v678, 1
      %v1502 = vpop.permute.xlu0 %1501
      %1503 = vrot.lane.b32.xlu0 %v679, 1
      %v1504 = vpop.permute.xlu0 %1503
      %1505 = vrot.lane.b32.xlu0 %v680, 1
      %v1506 = vpop.permute.xlu0 %1505
      %1507 = vrot.lane.b32.xlu0 %v681, 1
      %v1508 = vpop.permute.xlu0 %1507
      %1509 = vrot.lane.b32.xlu0 %v682, 1
      %v1510 = vpop.permute.xlu0 %1509
      %1511 = vrot.lane.b32.xlu0 %v683, 1
      %v1512 = vpop.permute.xlu0 %1511
      %1513 = vrot.lane.b32.xlu0 %v684, 1
      %v1514 = vpop.permute.xlu0 %1513
      %1515 = vrot.lane.b32.xlu0 %v685, 1
      %v1516 = vpop.permute.xlu0 %1515
      %1517 = vrot.lane.b32.xlu0 %v686, 1
      %v1518 = vpop.permute.xlu0 %1517
      %1519 = vrot.lane.b32.xlu0 %v687, 1
      %v1520 = vpop.permute.xlu0 %1519
      %1521 = vrot.lane.b32.xlu0 %v688, 1
      %v1522 = vpop.permute.xlu0 %1521
      %1523 = vrot.lane.b32.xlu0 %v689, 1
      %v1524 = vpop.permute.xlu0 %1523
      %1589 = vrot.lane.b32.xlu0 %v690, 2
      %v1590 = vpop.permute.xlu0 %1589
      %1591 = vrot.lane.b32.xlu0 %v691, 2
      %v1592 = vpop.permute.xlu0 %1591
      %1593 = vrot.lane.b32.xlu0 %v692, 2
      %v1594 = vpop.permute.xlu0 %1593
      %1595 = vrot.lane.b32.xlu0 %v693, 2
      %v1596 = vpop.permute.xlu0 %1595
      %1597 = vrot.lane.b32.xlu0 %v694, 2
      %v1598 = vpop.permute.xlu0 %1597
      %1599 = vrot.lane.b32.xlu0 %v695, 2
      %v1600 = vpop.permute.xlu0 %1599
      %1601 = vrot.lane.b32.xlu0 %v696, 2
      %v1602 = vpop.permute.xlu0 %1601
      %1603 = vrot.lane.b32.xlu0 %v697, 2
      %v1604 = vpop.permute.xlu0 %1603
      %1605 = vrot.lane.b32.xlu0 %v698, 2
      %v1606 = vpop.permute.xlu0 %1605
      %1607 = vrot.lane.b32.xlu0 %v699, 2
      %v1608 = vpop.permute.xlu0 %1607
      %1609 = vrot.lane.b32.xlu0 %v700, 2
      %v1610 = vpop.permute.xlu0 %1609
      %1611 = vrot.lane.b32.xlu0 %v701, 2
      %v1612 = vpop.permute.xlu0 %1611
      %1613 = vrot.lane.b32.xlu0 %v702, 2
      %v1614 = vpop.permute.xlu0 %1613
      %1615 = vrot.lane.b32.xlu0 %v703, 2
      %v1616 = vpop.permute.xlu0 %1615
      %1617 = vrot.lane.b32.xlu0 %v704, 2
      %v1618 = vpop.permute.xlu0 %1617
      %1619 = vrot.lane.b32.xlu0 %v705, 2
      %v1620 = vpop.permute.xlu0 %1619
      %1621 = vrot.lane.b32.xlu0 %v706, 2
      %v1622 = vpop.permute.xlu0 %1621
      %1623 = vrot.lane.b32.xlu0 %v707, 2
      %v1624 = vpop.permute.xlu0 %1623
      %1625 = vrot.lane.b32.xlu0 %v708, 2
      %v1626 = vpop.permute.xlu0 %1625
      %1627 = vrot.lane.b32.xlu0 %v709, 2
      %v1628 = vpop.permute.xlu0 %1627
      %1629 = vrot.lane.b32.xlu0 %v710, 2
      %v1630 = vpop.permute.xlu0 %1629
      %1631 = vrot.lane.b32.xlu0 %v711, 2
      %v1632 = vpop.permute.xlu0 %1631
      %1633 = vrot.lane.b32.xlu0 %v712, 2
      %v1634 = vpop.permute.xlu0 %1633
      %1635 = vrot.lane.b32.xlu0 %v713, 2
      %v1636 = vpop.permute.xlu0 %1635
      %1637 = vrot.lane.b32.xlu0 %v714, 2
      %v1638 = vpop.permute.xlu0 %1637
      %1639 = vrot.lane.b32.xlu0 %v715, 2
      %v1640 = vpop.permute.xlu0 %1639
      %1641 = vrot.lane.b32.xlu0 %v716, 2
      %v1642 = vpop.permute.xlu0 %1641
      %1643 = vrot.lane.b32.xlu0 %v717, 2
      %v1644 = vpop.permute.xlu0 %1643
      %1645 = vrot.lane.b32.xlu0 %v718, 2
      %v1646 = vpop.permute.xlu0 %1645
      %1647 = vrot.lane.b32.xlu0 %v719, 2
      %v1648 = vpop.permute.xlu0 %1647
      %1649 = vrot.lane.b32.xlu0 %v720, 2
      %v1650 = vpop.permute.xlu0 %1649
      %1651 = vrot.lane.b32.xlu0 %v721, 2
      %v1652 = vpop.permute.xlu0 %1651
      %1717 = vrot.lane.b32.xlu0 %v722, 3
      %v1718 = vpop.permute.xlu0 %1717
      %1719 = vrot.lane.b32.xlu0 %v723, 3
      %v1720 = vpop.permute.xlu0 %1719
      %1721 = vrot.lane.b32.xlu0 %v724, 3
      %v1722 = vpop.permute.xlu0 %1721
      %1723 = vrot.lane.b32.xlu0 %v725, 3
      %v1724 = vpop.permute.xlu0 %1723
      %1725 = vrot.lane.b32.xlu0 %v726, 3
      %v1726 = vpop.permute.xlu0 %1725
      %1727 = vrot.lane.b32.xlu0 %v727, 3
      %v1728 = vpop.permute.xlu0 %1727
      %1729 = vrot.lane.b32.xlu0 %v728, 3
      %v1730 = vpop.permute.xlu0 %1729
      %1731 = vrot.lane.b32.xlu0 %v729, 3
      %v1732 = vpop.permute.xlu0 %1731
      %1733 = vrot.lane.b32.xlu0 %v730, 3
      %v1734 = vpop.permute.xlu0 %1733
      %1735 = vrot.lane.b32.xlu0 %v731, 3
      %v1736 = vpop.permute.xlu0 %1735
      %1737 = vrot.lane.b32.xlu0 %v732, 3
      %v1738 = vpop.permute.xlu0 %1737
      %1739 = vrot.lane.b32.xlu0 %v733, 3
      %v1740 = vpop.permute.xlu0 %1739
      %1741 = vrot.lane.b32.xlu0 %v734, 3
      %v1742 = vpop.permute.xlu0 %1741
      %1743 = vrot.lane.b32.xlu0 %v735, 3
      %v1744 = vpop.permute.xlu0 %1743
      %1745 = vrot.lane.b32.xlu0 %v736, 3
      %v1746 = vpop.permute.xlu0 %1745
      %1747 = vrot.lane.b32.xlu0 %v737, 3
      %v1748 = vpop.permute.xlu0 %1747
      %1749 = vrot.lane.b32.xlu0 %v738, 3
      %v1750 = vpop.permute.xlu0 %1749
      %1751 = vrot.lane.b32.xlu0 %v739, 3
      %v1752 = vpop.permute.xlu0 %1751
      %1753 = vrot.lane.b32.xlu0 %v740, 3
      %v1754 = vpop.permute.xlu0 %1753
      %1755 = vrot.lane.b32.xlu0 %v741, 3
      %v1756 = vpop.permute.xlu0 %1755
      %1757 = vrot.lane.b32.xlu0 %v742, 3
      %v1758 = vpop.permute.xlu0 %1757
      %1759 = vrot.lane.b32.xlu0 %v743, 3
      %v1760 = vpop.permute.xlu0 %1759
      %1761 = vrot.lane.b32.xlu0 %v744, 3
      %v1762 = vpop.permute.xlu0 %1761
      %1763 = vrot.lane.b32.xlu0 %v745, 3
      %v1764 = vpop.permute.xlu0 %1763
      %1765 = vrot.lane.b32.xlu0 %v746, 3
      %v1766 = vpop.permute.xlu0 %1765
      %1767 = vrot.lane.b32.xlu0 %v747, 3
      %v1768 = vpop.permute.xlu0 %1767
      %1769 = vrot.lane.b32.xlu0 %v748, 3
      %v1770 = vpop.permute.xlu0 %1769
      %1771 = vrot.lane.b32.xlu0 %v749, 3
      %v1772 = vpop.permute.xlu0 %1771
      %1773 = vrot.lane.b32.xlu0 %v750, 3
      %v1774 = vpop.permute.xlu0 %1773
      %1775 = vrot.lane.b32.xlu0 %v751, 3
      %v1776 = vpop.permute.xlu0 %1775
      %1777 = vrot.lane.b32.xlu0 %v752, 3
      %v1778 = vpop.permute.xlu0 %1777
      %1779 = vrot.lane.b32.xlu0 %v753, 3
      %v1780 = vpop.permute.xlu0 %1779
      %1845 = vrot.lane.b32.xlu0 %v754, 4
      %v1846 = vpop.permute.xlu0 %1845
      %1847 = vrot.lane.b32.xlu0 %v755, 4
      %v1848 = vpop.permute.xlu0 %1847
      %1849 = vrot.lane.b32.xlu0 %v756, 4
      %v1850 = vpop.permute.xlu0 %1849
      %1851 = vrot.lane.b32.xlu0 %v757, 4
      %v1852 = vpop.permute.xlu0 %1851
      %1853 = vrot.lane.b32.xlu0 %v758, 4
      %v1854 = vpop.permute.xlu0 %1853
      %1855 = vrot.lane.b32.xlu0 %v759, 4
      %v1856 = vpop.permute.xlu0 %1855
      %1857 = vrot.lane.b32.xlu0 %v760, 4
      %v1858 = vpop.permute.xlu0 %1857
      %1859 = vrot.lane.b32.xlu0 %v761, 4
      %v1860 = vpop.permute.xlu0 %1859
      %1861 = vrot.lane.b32.xlu0 %v762, 4
      %v1862 = vpop.permute.xlu0 %1861
      %1863 = vrot.lane.b32.xlu0 %v763, 4
      %v1864 = vpop.permute.xlu0 %1863
      %1865 = vrot.lane.b32.xlu0 %v764, 4
      %v1866 = vpop.permute.xlu0 %1865
      %1867 = vrot.lane.b32.xlu0 %v765, 4
      %v1868 = vpop.permute.xlu0 %1867
      %1869 = vrot.lane.b32.xlu0 %v766, 4
      %v1870 = vpop.permute.xlu0 %1869
      %1871 = vrot.lane.b32.xlu0 %v767, 4
      %v1872 = vpop.permute.xlu0 %1871
      %1873 = vrot.lane.b32.xlu0 %v768, 4
      %v1874 = vpop.permute.xlu0 %1873
      %1875 = vrot.lane.b32.xlu0 %v769, 4
      %v1876 = vpop.permute.xlu0 %1875
      %1877 = vrot.lane.b32.xlu0 %v770, 4
      %v1878 = vpop.permute.xlu0 %1877
      %1879 = vrot.lane.b32.xlu0 %v771, 4
      %v1880 = vpop.permute.xlu0 %1879
      %1881 = vrot.lane.b32.xlu0 %v772, 4
      %v1882 = vpop.permute.xlu0 %1881
      %1883 = vrot.lane.b32.xlu0 %v773, 4
      %v1884 = vpop.permute.xlu0 %1883
      %1885 = vrot.lane.b32.xlu0 %v774, 4
      %v1886 = vpop.permute.xlu0 %1885
      %1887 = vrot.lane.b32.xlu0 %v775, 4
      %v1888 = vpop.permute.xlu0 %1887
      %1889 = vrot.lane.b32.xlu0 %v776, 4
      %v1890 = vpop.permute.xlu0 %1889
      %1891 = vrot.lane.b32.xlu0 %v777, 4
      %v1892 = vpop.permute.xlu0 %1891
      %1893 = vrot.lane.b32.xlu0 %v778, 4
      %v1894 = vpop.permute.xlu0 %1893
      %1895 = vrot.lane.b32.xlu0 %v779, 4
      %v1896 = vpop.permute.xlu0 %1895
      %1897 = vrot.lane.b32.xlu0 %v780, 4
      %v1898 = vpop.permute.xlu0 %1897
      %1899 = vrot.lane.b32.xlu0 %v781, 4
      %v1900 = vpop.permute.xlu0 %1899
      %1901 = vrot.lane.b32.xlu0 %v782, 4
      %v1902 = vpop.permute.xlu0 %1901
      %1903 = vrot.lane.b32.xlu0 %v783, 4
      %v1904 = vpop.permute.xlu0 %1903
      %1905 = vrot.lane.b32.xlu0 %v784, 4
      %v1906 = vpop.permute.xlu0 %1905
      %1907 = vrot.lane.b32.xlu0 %v785, 4
      %v1908 = vpop.permute.xlu0 %1907
      %1973 = vrot.lane.b32.xlu0 %v787, 5
      %v1974 = vpop.permute.xlu0 %1973
      %1975 = vrot.lane.b32.xlu0 %v788, 5
      %v1976 = vpop.permute.xlu0 %1975
      %1977 = vrot.lane.b32.xlu0 %v789, 5
      %v1978 = vpop.permute.xlu0 %1977
      %1979 = vrot.lane.b32.xlu0 %v790, 5
      %v1980 = vpop.permute.xlu0 %1979
      %1981 = vrot.lane.b32.xlu0 %v791, 5
      %v1982 = vpop.permute.xlu0 %1981
      %1983 = vrot.lane.b32.xlu0 %v792, 5
      %v1984 = vpop.permute.xlu0 %1983
      %1985 = vrot.lane.b32.xlu0 %v793, 5
      %v1986 = vpop.permute.xlu0 %1985
      %1987 = vrot.lane.b32.xlu0 %v794, 5
      %v1988 = vpop.permute.xlu0 %1987
      %1989 = vrot.lane.b32.xlu0 %v795, 5
      %v1990 = vpop.permute.xlu0 %1989
      %1991 = vrot.lane.b32.xlu0 %v796, 5
      %v1992 = vpop.permute.xlu0 %1991
      %1993 = vrot.lane.b32.xlu0 %v797, 5
      %v1994 = vpop.permute.xlu0 %1993
      %1995 = vrot.lane.b32.xlu0 %v798, 5
      %v1996 = vpop.permute.xlu0 %1995
      %1997 = vrot.lane.b32.xlu0 %v799, 5
      %v1998 = vpop.permute.xlu0 %1997
      %1999 = vrot.lane.b32.xlu0 %v800, 5
      %v2000 = vpop.permute.xlu0 %1999
      %2001 = vrot.lane.b32.xlu0 %v801, 5
      %v2002 = vpop.permute.xlu0 %2001
      %2003 = vrot.lane.b32.xlu0 %v802, 5
      %v2004 = vpop.permute.xlu0 %2003
      %2005 = vrot.lane.b32.xlu0 %v803, 5
      %v2006 = vpop.permute.xlu0 %2005
      %2007 = vrot.lane.b32.xlu0 %v804, 5
      %v2008 = vpop.permute.xlu0 %2007
      %2009 = vrot.lane.b32.xlu0 %v805, 5
      %v2010 = vpop.permute.xlu0 %2009
      %2011 = vrot.lane.b32.xlu0 %v806, 5
      %v2012 = vpop.permute.xlu0 %2011
      %2013 = vrot.lane.b32.xlu0 %v807, 5
      %v2014 = vpop.permute.xlu0 %2013
      %2015 = vrot.lane.b32.xlu0 %v808, 5
      %v2016 = vpop.permute.xlu0 %2015
      %2017 = vrot.lane.b32.xlu0 %v809, 5
      %v2018 = vpop.permute.xlu0 %2017
      %2019 = vrot.lane.b32.xlu0 %v810, 5
      %v2020 = vpop.permute.xlu0 %2019
      %2021 = vrot.lane.b32.xlu0 %v811, 5
      %v2022 = vpop.permute.xlu0 %2021
      %2023 = vrot.lane.b32.xlu0 %v812, 5
      %v2024 = vpop.permute.xlu0 %2023
      %2025 = vrot.lane.b32.xlu0 %v813, 5
      %v2026 = vpop.permute.xlu0 %2025
      %2027 = vrot.lane.b32.xlu0 %v814, 5
      %v2028 = vpop.permute.xlu0 %2027
      %2029 = vrot.lane.b32.xlu0 %v815, 5
      %v2030 = vpop.permute.xlu0 %2029
      %2031 = vrot.lane.b32.xlu0 %v816, 5
      %v2032 = vpop.permute.xlu0 %2031
      %2033 = vrot.lane.b32.xlu0 %v817, 5
      %v2034 = vpop.permute.xlu0 %2033
      %2035 = vrot.lane.b32.xlu0 %v818, 5
      %v2036 = vpop.permute.xlu0 %2035
      %2101 = vrot.lane.b32.xlu0 %v819, 6
      %v2102 = vpop.permute.xlu0 %2101
      %2103 = vrot.lane.b32.xlu0 %v820, 6
      %v2104 = vpop.permute.xlu0 %2103
      %2105 = vrot.lane.b32.xlu0 %v821, 6
      %v2106 = vpop.permute.xlu0 %2105
      %2107 = vrot.lane.b32.xlu0 %v822, 6
      %v2108 = vpop.permute.xlu0 %2107
      %2109 = vrot.lane.b32.xlu0 %v823, 6
      %v2110 = vpop.permute.xlu0 %2109
      %2111 = vrot.lane.b32.xlu0 %v824, 6
      %v2112 = vpop.permute.xlu0 %2111
      %2113 = vrot.lane.b32.xlu0 %v825, 6
      %v2114 = vpop.permute.xlu0 %2113
      %2115 = vrot.lane.b32.xlu0 %v826, 6
      %v2116 = vpop.permute.xlu0 %2115
      %2117 = vrot.lane.b32.xlu0 %v827, 6
      %v2118 = vpop.permute.xlu0 %2117
      %2119 = vrot.lane.b32.xlu0 %v828, 6
      %v2120 = vpop.permute.xlu0 %2119
      %2121 = vrot.lane.b32.xlu0 %v829, 6
      %v2122 = vpop.permute.xlu0 %2121
      %2123 = vrot.lane.b32.xlu0 %v830, 6
      %v2124 = vpop.permute.xlu0 %2123
      %2125 = vrot.lane.b32.xlu0 %v831, 6
      %v2126 = vpop.permute.xlu0 %2125
      %2127 = vrot.lane.b32.xlu0 %v832, 6
      %v2128 = vpop.permute.xlu0 %2127
      %2129 = vrot.lane.b32.xlu0 %v833, 6
      %v2130 = vpop.permute.xlu0 %2129
      %2131 = vrot.lane.b32.xlu0 %v834, 6
      %v2132 = vpop.permute.xlu0 %2131
      %2133 = vrot.lane.b32.xlu0 %v835, 6
      %v2134 = vpop.permute.xlu0 %2133
      %2135 = vrot.lane.b32.xlu0 %v836, 6
      %v2136 = vpop.permute.xlu0 %2135
      %2137 = vrot.lane.b32.xlu0 %v837, 6
      %v2138 = vpop.permute.xlu0 %2137
      %2139 = vrot.lane.b32.xlu0 %v838, 6
      %v2140 = vpop.permute.xlu0 %2139
      %2141 = vrot.lane.b32.xlu0 %v839, 6
      %v2142 = vpop.permute.xlu0 %2141
      %2143 = vrot.lane.b32.xlu0 %v840, 6
      %v2144 = vpop.permute.xlu0 %2143
      %2145 = vrot.lane.b32.xlu0 %v841, 6
      %v2146 = vpop.permute.xlu0 %2145
      %2147 = vrot.lane.b32.xlu0 %v842, 6
      %v2148 = vpop.permute.xlu0 %2147
      %2149 = vrot.lane.b32.xlu0 %v843, 6
      %v2150 = vpop.permute.xlu0 %2149
      %2151 = vrot.lane.b32.xlu0 %v844, 6
      %v2152 = vpop.permute.xlu0 %2151
      %2153 = vrot.lane.b32.xlu0 %v845, 6
      %v2154 = vpop.permute.xlu0 %2153
      %2155 = vrot.lane.b32.xlu0 %v846, 6
      %v2156 = vpop.permute.xlu0 %2155
      %2157 = vrot.lane.b32.xlu0 %v847, 6
      %v2158 = vpop.permute.xlu0 %2157
      %2159 = vrot.lane.b32.xlu0 %v848, 6
      %v2160 = vpop.permute.xlu0 %2159
      %2161 = vrot.lane.b32.xlu0 %v849, 6
      %v2162 = vpop.permute.xlu0 %2161
      %2163 = vrot.lane.b32.xlu0 %v850, 6
      %v2164 = vpop.permute.xlu0 %2163
      %2229 = vrot.lane.b32.xlu0 %v851, 7
      %v2230 = vpop.permute.xlu0 %2229
      %2231 = vrot.lane.b32.xlu0 %v852, 7
      %v2232 = vpop.permute.xlu0 %2231
      %2233 = vrot.lane.b32.xlu0 %v853, 7
      %v2234 = vpop.permute.xlu0 %2233
      %2235 = vrot.lane.b32.xlu0 %v854, 7
      %v2236 = vpop.permute.xlu0 %2235
      %2237 = vrot.lane.b32.xlu0 %v855, 7
      %v2238 = vpop.permute.xlu0 %2237
      %2239 = vrot.lane.b32.xlu0 %v856, 7
      %v2240 = vpop.permute.xlu0 %2239
      %2241 = vrot.lane.b32.xlu0 %v857, 7
      %v2242 = vpop.permute.xlu0 %2241
      %2243 = vrot.lane.b32.xlu0 %v858, 7
      %v2244 = vpop.permute.xlu0 %2243
      %2245 = vrot.lane.b32.xlu0 %v859, 7
      %v2246 = vpop.permute.xlu0 %2245
      %2247 = vrot.lane.b32.xlu0 %v860, 7
      %v2248 = vpop.permute.xlu0 %2247
      %2249 = vrot.lane.b32.xlu0 %v861, 7
      %v2250 = vpop.permute.xlu0 %2249
      %2251 = vrot.lane.b32.xlu0 %v862, 7
      %v2252 = vpop.permute.xlu0 %2251
      %2253 = vrot.lane.b32.xlu0 %v863, 7
      %v2254 = vpop.permute.xlu0 %2253
      %2255 = vrot.lane.b32.xlu0 %v864, 7
      %v2256 = vpop.permute.xlu0 %2255
      %2257 = vrot.lane.b32.xlu0 %v865, 7
      %v2258 = vpop.permute.xlu0 %2257
      %2259 = vrot.lane.b32.xlu0 %v866, 7
      %v2260 = vpop.permute.xlu0 %2259
      %2261 = vrot.lane.b32.xlu0 %v867, 7
      %v2262 = vpop.permute.xlu0 %2261
      %2263 = vrot.lane.b32.xlu0 %v868, 7
      %v2264 = vpop.permute.xlu0 %2263
      %2265 = vrot.lane.b32.xlu0 %v869, 7
      %v2266 = vpop.permute.xlu0 %2265
      %2267 = vrot.lane.b32.xlu0 %v870, 7
      %v2268 = vpop.permute.xlu0 %2267
      %2269 = vrot.lane.b32.xlu0 %v871, 7
      %v2270 = vpop.permute.xlu0 %2269
      %2271 = vrot.lane.b32.xlu0 %v872, 7
      %v2272 = vpop.permute.xlu0 %2271
      %2273 = vrot.lane.b32.xlu0 %v873, 7
      %v2274 = vpop.permute.xlu0 %2273
      %2275 = vrot.lane.b32.xlu0 %v874, 7
      %v2276 = vpop.permute.xlu0 %2275
      %2277 = vrot.lane.b32.xlu0 %v875, 7
      %v2278 = vpop.permute.xlu0 %2277
      %2279 = vrot.lane.b32.xlu0 %v876, 7
      %v2280 = vpop.permute.xlu0 %2279
      %2281 = vrot.lane.b32.xlu0 %v877, 7
      %v2282 = vpop.permute.xlu0 %2281
      %2283 = vrot.lane.b32.xlu0 %v878, 7
      %v2284 = vpop.permute.xlu0 %2283
      %2285 = vrot.lane.b32.xlu0 %v879, 7
      %v2286 = vpop.permute.xlu0 %2285
      %2287 = vrot.lane.b32.xlu0 %v880, 7
      %v2288 = vpop.permute.xlu0 %2287
      %2289 = vrot.lane.b32.xlu0 %v881, 7
      %v2290 = vpop.permute.xlu0 %2289
      %2291 = vrot.lane.b32.xlu0 %v882, 7
      %v2292 = vpop.permute.xlu0 %2291
      %2357 = vrot.lane.b32.xlu0 %v883, 8
      %v2358 = vpop.permute.xlu0 %2357
      %2359 = vrot.lane.b32.xlu0 %v884, 8
      %v2360 = vpop.permute.xlu0 %2359
      %2361 = vrot.lane.b32.xlu0 %v885, 8
      %v2362 = vpop.permute.xlu0 %2361
      %2363 = vrot.lane.b32.xlu0 %v886, 8
      %v2364 = vpop.permute.xlu0 %2363
      %2365 = vrot.lane.b32.xlu0 %v887, 8
      %v2366 = vpop.permute.xlu0 %2365
      %2367 = vrot.lane.b32.xlu0 %v888, 8
      %v2368 = vpop.permute.xlu0 %2367
      %2369 = vrot.lane.b32.xlu0 %v889, 8
      %v2370 = vpop.permute.xlu0 %2369
      %2371 = vrot.lane.b32.xlu0 %v890, 8
      %v2372 = vpop.permute.xlu0 %2371
      %2373 = vrot.lane.b32.xlu0 %v891, 8
      %v2374 = vpop.permute.xlu0 %2373
      %2375 = vrot.lane.b32.xlu0 %v892, 8
      %v2376 = vpop.permute.xlu0 %2375
      %2377 = vrot.lane.b32.xlu0 %v893, 8
      %v2378 = vpop.permute.xlu0 %2377
      %2379 = vrot.lane.b32.xlu0 %v894, 8
      %v2380 = vpop.permute.xlu0 %2379
      %2381 = vrot.lane.b32.xlu0 %v895, 8
      %v2382 = vpop.permute.xlu0 %2381
      %2383 = vrot.lane.b32.xlu0 %v896, 8
      %v2384 = vpop.permute.xlu0 %2383
      %2385 = vrot.lane.b32.xlu0 %v897, 8
      %v2386 = vpop.permute.xlu0 %2385
      %2387 = vrot.lane.b32.xlu0 %v898, 8
      %v2388 = vpop.permute.xlu0 %2387
      %2389 = vrot.lane.b32.xlu0 %v899, 8
      %v2390 = vpop.permute.xlu0 %2389
      %2391 = vrot.lane.b32.xlu0 %v900, 8
      %v2392 = vpop.permute.xlu0 %2391
      %2393 = vrot.lane.b32.xlu0 %v901, 8
      %v2394 = vpop.permute.xlu0 %2393
      %2395 = vrot.lane.b32.xlu0 %v902, 8
      %v2396 = vpop.permute.xlu0 %2395
      %2397 = vrot.lane.b32.xlu0 %v903, 8
      %v2398 = vpop.permute.xlu0 %2397
      %2399 = vrot.lane.b32.xlu0 %v904, 8
      %v2400 = vpop.permute.xlu0 %2399
      %2401 = vrot.lane.b32.xlu0 %v905, 8
      %v2402 = vpop.permute.xlu0 %2401
      %2403 = vrot.lane.b32.xlu0 %v906, 8
      %v2404 = vpop.permute.xlu0 %2403
      %2405 = vrot.lane.b32.xlu0 %v907, 8
      %v2406 = vpop.permute.xlu0 %2405
      %2407 = vrot.lane.b32.xlu0 %v908, 8
      %v2408 = vpop.permute.xlu0 %2407
      %2409 = vrot.lane.b32.xlu0 %v909, 8
      %v2410 = vpop.permute.xlu0 %2409
      %2411 = vrot.lane.b32.xlu0 %v910, 8
      %v2412 = vpop.permute.xlu0 %2411
      %2413 = vrot.lane.b32.xlu0 %v911, 8
      %v2414 = vpop.permute.xlu0 %2413
      %2415 = vrot.lane.b32.xlu0 %v912, 8
      %v2416 = vpop.permute.xlu0 %2415
      %2417 = vrot.lane.b32.xlu0 %v913, 8
      %v2418 = vpop.permute.xlu0 %2417
      %2419 = vrot.lane.b32.xlu0 %v914, 8
      %v2420 = vpop.permute.xlu0 %2419
      %2485 = vrot.lane.b32.xlu0 %v915, 9
      %v2486 = vpop.permute.xlu0 %2485
      %2487 = vrot.lane.b32.xlu0 %v916, 9
      %v2488 = vpop.permute.xlu0 %2487
      %2489 = vrot.lane.b32.xlu0 %v917, 9
      %v2490 = vpop.permute.xlu0 %2489
      %2491 = vrot.lane.b32.xlu0 %v918, 9
      %v2492 = vpop.permute.xlu0 %2491
      %2493 = vrot.lane.b32.xlu0 %v919, 9
      %v2494 = vpop.permute.xlu0 %2493
      %2495 = vrot.lane.b32.xlu0 %v920, 9
      %v2496 = vpop.permute.xlu0 %2495
      %2497 = vrot.lane.b32.xlu0 %v921, 9
      %v2498 = vpop.permute.xlu0 %2497
      %2499 = vrot.lane.b32.xlu0 %v922, 9
      %v2500 = vpop.permute.xlu0 %2499
      %2501 = vrot.lane.b32.xlu0 %v923, 9
      %v2502 = vpop.permute.xlu0 %2501
      %2503 = vrot.lane.b32.xlu0 %v924, 9
      %v2504 = vpop.permute.xlu0 %2503
      %2505 = vrot.lane.b32.xlu0 %v925, 9
      %v2506 = vpop.permute.xlu0 %2505
      %2507 = vrot.lane.b32.xlu0 %v926, 9
      %v2508 = vpop.permute.xlu0 %2507
      %2509 = vrot.lane.b32.xlu0 %v927, 9
      %v2510 = vpop.permute.xlu0 %2509
      %2511 = vrot.lane.b32.xlu0 %v928, 9
      %v2512 = vpop.permute.xlu0 %2511
      %2513 = vrot.lane.b32.xlu0 %v929, 9
      %v2514 = vpop.permute.xlu0 %2513
      %2515 = vrot.lane.b32.xlu0 %v930, 9
      %v2516 = vpop.permute.xlu0 %2515
      %2517 = vrot.lane.b32.xlu0 %v931, 9
      %v2518 = vpop.permute.xlu0 %2517
      %2519 = vrot.lane.b32.xlu0 %v932, 9
      %v2520 = vpop.permute.xlu0 %2519
      %2521 = vrot.lane.b32.xlu0 %v933, 9
      %v2522 = vpop.permute.xlu0 %2521
      %2523 = vrot.lane.b32.xlu0 %v934, 9
      %v2524 = vpop.permute.xlu0 %2523
      %2525 = vrot.lane.b32.xlu0 %v935, 9
      %v2526 = vpop.permute.xlu0 %2525
      %2527 = vrot.lane.b32.xlu0 %v936, 9
      %v2528 = vpop.permute.xlu0 %2527
      %2529 = vrot.lane.b32.xlu0 %v937, 9
      %v2530 = vpop.permute.xlu0 %2529
      %2531 = vrot.lane.b32.xlu0 %v938, 9
      %v2532 = vpop.permute.xlu0 %2531
      %2533 = vrot.lane.b32.xlu0 %v939, 9
      %v2534 = vpop.permute.xlu0 %2533
      %2535 = vrot.lane.b32.xlu0 %v940, 9
      %v2536 = vpop.permute.xlu0 %2535
      %2537 = vrot.lane.b32.xlu0 %v941, 9
      %v2538 = vpop.permute.xlu0 %2537
      %2539 = vrot.lane.b32.xlu0 %v942, 9
      %v2540 = vpop.permute.xlu0 %2539
      %2541 = vrot.lane.b32.xlu0 %v943, 9
      %v2542 = vpop.permute.xlu0 %2541
      %2543 = vrot.lane.b32.xlu0 %v944, 9
      %v2544 = vpop.permute.xlu0 %2543
      %2545 = vrot.lane.b32.xlu0 %v945, 9
      %v2546 = vpop.permute.xlu0 %2545
      %2547 = vrot.lane.b32.xlu0 %v946, 9
      %v2548 = vpop.permute.xlu0 %2547
      %2613 = vrot.lane.b32.xlu0 %v947, 10
      %v2614 = vpop.permute.xlu0 %2613
      %2615 = vrot.lane.b32.xlu0 %v948, 10
      %v2616 = vpop.permute.xlu0 %2615
      %2617 = vrot.lane.b32.xlu0 %v949, 10
      %v2618 = vpop.permute.xlu0 %2617
      %2619 = vrot.lane.b32.xlu0 %v950, 10
      %v2620 = vpop.permute.xlu0 %2619
      %2621 = vrot.lane.b32.xlu0 %v951, 10
      %v2622 = vpop.permute.xlu0 %2621
      %2623 = vrot.lane.b32.xlu0 %v952, 10
      %v2624 = vpop.permute.xlu0 %2623
      %2625 = vrot.lane.b32.xlu0 %v953, 10
      %v2626 = vpop.permute.xlu0 %2625
      %2627 = vrot.lane.b32.xlu0 %v954, 10
      %v2628 = vpop.permute.xlu0 %2627
      %2629 = vrot.lane.b32.xlu0 %v955, 10
      %v2630 = vpop.permute.xlu0 %2629
      %2631 = vrot.lane.b32.xlu0 %v956, 10
      %v2632 = vpop.permute.xlu0 %2631
      %2633 = vrot.lane.b32.xlu0 %v957, 10
      %v2634 = vpop.permute.xlu0 %2633
      %2635 = vrot.lane.b32.xlu0 %v958, 10
      %v2636 = vpop.permute.xlu0 %2635
      %2637 = vrot.lane.b32.xlu0 %v959, 10
      %v2638 = vpop.permute.xlu0 %2637
      %2639 = vrot.lane.b32.xlu0 %v960, 10
      %v2640 = vpop.permute.xlu0 %2639
      %2641 = vrot.lane.b32.xlu0 %v961, 10
      %v2642 = vpop.permute.xlu0 %2641
      %2643 = vrot.lane.b32.xlu0 %v962, 10
      %v2644 = vpop.permute.xlu0 %2643
      %2645 = vrot.lane.b32.xlu0 %v963, 10
      %v2646 = vpop.permute.xlu0 %2645
      %2647 = vrot.lane.b32.xlu0 %v964, 10
      %v2648 = vpop.permute.xlu0 %2647
      %2649 = vrot.lane.b32.xlu0 %v965, 10
      %v2650 = vpop.permute.xlu0 %2649
      %2651 = vrot.lane.b32.xlu0 %v966, 10
      %v2652 = vpop.permute.xlu0 %2651
      %2653 = vrot.lane.b32.xlu0 %v967, 10
      %v2654 = vpop.permute.xlu0 %2653
      %2655 = vrot.lane.b32.xlu0 %v968, 10
      %v2656 = vpop.permute.xlu0 %2655
      %2657 = vrot.lane.b32.xlu0 %v969, 10
      %v2658 = vpop.permute.xlu0 %2657
      %2659 = vrot.lane.b32.xlu0 %v970, 10
      %v2660 = vpop.permute.xlu0 %2659
      %2661 = vrot.lane.b32.xlu0 %v971, 10
      %v2662 = vpop.permute.xlu0 %2661
      %2663 = vrot.lane.b32.xlu0 %v972, 10
      %v2664 = vpop.permute.xlu0 %2663
      %2665 = vrot.lane.b32.xlu0 %v973, 10
      %v2666 = vpop.permute.xlu0 %2665
      %2667 = vrot.lane.b32.xlu0 %v974, 10
      %v2668 = vpop.permute.xlu0 %2667
      %2669 = vrot.lane.b32.xlu0 %v975, 10
      %v2670 = vpop.permute.xlu0 %2669
      %2671 = vrot.lane.b32.xlu0 %v976, 10
      %v2672 = vpop.permute.xlu0 %2671
      %2673 = vrot.lane.b32.xlu0 %v977, 10
      %v2674 = vpop.permute.xlu0 %2673
      %2675 = vrot.lane.b32.xlu0 %v978, 10
      %v2676 = vpop.permute.xlu0 %2675
      %2741 = vrot.lane.b32.xlu0 %v979, 11
      %v2742 = vpop.permute.xlu0 %2741
      %2743 = vrot.lane.b32.xlu0 %v980, 11
      %v2744 = vpop.permute.xlu0 %2743
      %2745 = vrot.lane.b32.xlu0 %v981, 11
      %v2746 = vpop.permute.xlu0 %2745
      %2747 = vrot.lane.b32.xlu0 %v982, 11
      %v2748 = vpop.permute.xlu0 %2747
      %2749 = vrot.lane.b32.xlu0 %v983, 11
      %v2750 = vpop.permute.xlu0 %2749
      %2751 = vrot.lane.b32.xlu0 %v984, 11
      %v2752 = vpop.permute.xlu0 %2751
      %2753 = vrot.lane.b32.xlu0 %v985, 11
      %v2754 = vpop.permute.xlu0 %2753
      %2755 = vrot.lane.b32.xlu0 %v986, 11
      %v2756 = vpop.permute.xlu0 %2755
      %2757 = vrot.lane.b32.xlu0 %v987, 11
      %v2758 = vpop.permute.xlu0 %2757
      %2759 = vrot.lane.b32.xlu0 %v988, 11
      %v2760 = vpop.permute.xlu0 %2759
      %2761 = vrot.lane.b32.xlu0 %v989, 11
      %v2762 = vpop.permute.xlu0 %2761
      %2763 = vrot.lane.b32.xlu0 %v990, 11
      %v2764 = vpop.permute.xlu0 %2763
      %2765 = vrot.lane.b32.xlu0 %v991, 11
      %v2766 = vpop.permute.xlu0 %2765
      %2767 = vrot.lane.b32.xlu0 %v992, 11
      %v2768 = vpop.permute.xlu0 %2767
      %2769 = vrot.lane.b32.xlu0 %v993, 11
      %v2770 = vpop.permute.xlu0 %2769
      %2771 = vrot.lane.b32.xlu0 %v994, 11
      %v2772 = vpop.permute.xlu0 %2771
      %2773 = vrot.lane.b32.xlu0 %v995, 11
      %v2774 = vpop.permute.xlu0 %2773
      %2775 = vrot.lane.b32.xlu0 %v996, 11
      %v2776 = vpop.permute.xlu0 %2775
      %2777 = vrot.lane.b32.xlu0 %v997, 11
      %v2778 = vpop.permute.xlu0 %2777
      %2779 = vrot.lane.b32.xlu0 %v998, 11
      %v2780 = vpop.permute.xlu0 %2779
      %2781 = vrot.lane.b32.xlu0 %v999, 11
      %v2782 = vpop.permute.xlu0 %2781
      %2783 = vrot.lane.b32.xlu0 %v1000, 11
      %v2784 = vpop.permute.xlu0 %2783
      %2785 = vrot.lane.b32.xlu0 %v1001, 11
      %v2786 = vpop.permute.xlu0 %2785
      %2787 = vrot.lane.b32.xlu0 %v1002, 11
      %v2788 = vpop.permute.xlu0 %2787
      %2789 = vrot.lane.b32.xlu0 %v1003, 11
      %v2790 = vpop.permute.xlu0 %2789
      %2791 = vrot.lane.b32.xlu0 %v1004, 11
      %v2792 = vpop.permute.xlu0 %2791
      %2793 = vrot.lane.b32.xlu0 %v1005, 11
      %v2794 = vpop.permute.xlu0 %2793
      %2795 = vrot.lane.b32.xlu0 %v1006, 11
      %v2796 = vpop.permute.xlu0 %2795
      %2797 = vrot.lane.b32.xlu0 %v1007, 11
      %v2798 = vpop.permute.xlu0 %2797
      %2799 = vrot.lane.b32.xlu0 %v1008, 11
      %v2800 = vpop.permute.xlu0 %2799
      %2801 = vrot.lane.b32.xlu0 %v1009, 11
      %v2802 = vpop.permute.xlu0 %2801
      %2803 = vrot.lane.b32.xlu0 %v1010, 11
      %v2804 = vpop.permute.xlu0 %2803
      %2869 = vrot.lane.b32.xlu0 %v1011, 12
      %v2870 = vpop.permute.xlu0 %2869
      %2871 = vrot.lane.b32.xlu0 %v1012, 12
      %v2872 = vpop.permute.xlu0 %2871
      %2873 = vrot.lane.b32.xlu0 %v1013, 12
      %v2874 = vpop.permute.xlu0 %2873
      %2875 = vrot.lane.b32.xlu0 %v1014, 12
      %v2876 = vpop.permute.xlu0 %2875
      %2877 = vrot.lane.b32.xlu0 %v1015, 12
      %v2878 = vpop.permute.xlu0 %2877
      %2879 = vrot.lane.b32.xlu0 %v1016, 12
      %v2880 = vpop.permute.xlu0 %2879
      %2881 = vrot.lane.b32.xlu0 %v1017, 12
      %v2882 = vpop.permute.xlu0 %2881
      %2883 = vrot.lane.b32.xlu0 %v1018, 12
      %v2884 = vpop.permute.xlu0 %2883
      %2885 = vrot.lane.b32.xlu0 %v1019, 12
      %v2886 = vpop.permute.xlu0 %2885
      %2887 = vrot.lane.b32.xlu0 %v1020, 12
      %v2888 = vpop.permute.xlu0 %2887
      %2889 = vrot.lane.b32.xlu0 %v1021, 12
      %v2890 = vpop.permute.xlu0 %2889
      %2891 = vrot.lane.b32.xlu0 %v1022, 12
      %v2892 = vpop.permute.xlu0 %2891
      %2893 = vrot.lane.b32.xlu0 %v1023, 12
      %v2894 = vpop.permute.xlu0 %2893
      %2895 = vrot.lane.b32.xlu0 %v1024, 12
      %v2896 = vpop.permute.xlu0 %2895
      %2897 = vrot.lane.b32.xlu0 %v1025, 12
      %v2898 = vpop.permute.xlu0 %2897
      %2899 = vrot.lane.b32.xlu0 %v1026, 12
      %v2900 = vpop.permute.xlu0 %2899
      %2901 = vrot.lane.b32.xlu0 %v1027, 12
      %v2902 = vpop.permute.xlu0 %2901
      %2903 = vrot.lane.b32.xlu0 %v1028, 12
      %v2904 = vpop.permute.xlu0 %2903
      %2905 = vrot.lane.b32.xlu0 %v1029, 12
      %v2906 = vpop.permute.xlu0 %2905
      %2907 = vrot.lane.b32.xlu0 %v1030, 12
      %v2908 = vpop.permute.xlu0 %2907
      %2909 = vrot.lane.b32.xlu0 %v1031, 12
      %v2910 = vpop.permute.xlu0 %2909
      %2911 = vrot.lane.b32.xlu0 %v1032, 12
      %v2912 = vpop.permute.xlu0 %2911
      %2913 = vrot.lane.b32.xlu0 %v1033, 12
      %v2914 = vpop.permute.xlu0 %2913
      %2915 = vrot.lane.b32.xlu0 %v1034, 12
      %v2916 = vpop.permute.xlu0 %2915
      %2917 = vrot.lane.b32.xlu0 %v1035, 12
      %v2918 = vpop.permute.xlu0 %2917
      %2919 = vrot.lane.b32.xlu0 %v1036, 12
      %v2920 = vpop.permute.xlu0 %2919
      %2921 = vrot.lane.b32.xlu0 %v1037, 12
      %v2922 = vpop.permute.xlu0 %2921
      %2923 = vrot.lane.b32.xlu0 %v1038, 12
      %v2924 = vpop.permute.xlu0 %2923
      %2925 = vrot.lane.b32.xlu0 %v1039, 12
      %v2926 = vpop.permute.xlu0 %2925
      %2927 = vrot.lane.b32.xlu0 %v1040, 12
      %v2928 = vpop.permute.xlu0 %2927
      %2929 = vrot.lane.b32.xlu0 %v1041, 12
      %v2930 = vpop.permute.xlu0 %2929
      %2931 = vrot.lane.b32.xlu0 %v1042, 12
      %v2932 = vpop.permute.xlu0 %2931
      %2997 = vrot.lane.b32.xlu0 %v1043, 13
      %v2998 = vpop.permute.xlu0 %2997
      %2999 = vrot.lane.b32.xlu0 %v1044, 13
      %v3000 = vpop.permute.xlu0 %2999
      %3001 = vrot.lane.b32.xlu0 %v1045, 13
      %v3002 = vpop.permute.xlu0 %3001
      %3003 = vrot.lane.b32.xlu0 %v1046, 13
      %v3004 = vpop.permute.xlu0 %3003
      %3005 = vrot.lane.b32.xlu0 %v1047, 13
      %v3006 = vpop.permute.xlu0 %3005
      %3007 = vrot.lane.b32.xlu0 %v1048, 13
      %v3008 = vpop.permute.xlu0 %3007
      %3009 = vrot.lane.b32.xlu0 %v1049, 13
      %v3010 = vpop.permute.xlu0 %3009
      %3011 = vrot.lane.b32.xlu0 %v1050, 13
      %v3012 = vpop.permute.xlu0 %3011
      %3013 = vrot.lane.b32.xlu0 %v1051, 13
      %v3014 = vpop.permute.xlu0 %3013
      %3015 = vrot.lane.b32.xlu0 %v1052, 13
      %v3016 = vpop.permute.xlu0 %3015
      %3017 = vrot.lane.b32.xlu0 %v1053, 13
      %v3018 = vpop.permute.xlu0 %3017
      %3019 = vrot.lane.b32.xlu0 %v1054, 13
      %v3020 = vpop.permute.xlu0 %3019
      %3021 = vrot.lane.b32.xlu0 %v1055, 13
      %v3022 = vpop.permute.xlu0 %3021
      %3023 = vrot.lane.b32.xlu0 %v1056, 13
      %v3024 = vpop.permute.xlu0 %3023
      %3025 = vrot.lane.b32.xlu0 %v1057, 13
      %v3026 = vpop.permute.xlu0 %3025
      %3027 = vrot.lane.b32.xlu0 %v1058, 13
      %v3028 = vpop.permute.xlu0 %3027
      %3029 = vrot.lane.b32.xlu0 %v1059, 13
      %v3030 = vpop.permute.xlu0 %3029
      %3031 = vrot.lane.b32.xlu0 %v1060, 13
      %v3032 = vpop.permute.xlu0 %3031
      %3033 = vrot.lane.b32.xlu0 %v1061, 13
      %v3034 = vpop.permute.xlu0 %3033
      %3035 = vrot.lane.b32.xlu0 %v1062, 13
      %v3036 = vpop.permute.xlu0 %3035
      %3037 = vrot.lane.b32.xlu0 %v1063, 13
      %v3038 = vpop.permute.xlu0 %3037
      %3039 = vrot.lane.b32.xlu0 %v1064, 13
      %v3040 = vpop.permute.xlu0 %3039
      %3041 = vrot.lane.b32.xlu0 %v1065, 13
      %v3042 = vpop.permute.xlu0 %3041
      %3043 = vrot.lane.b32.xlu0 %v1066, 13
      %v3044 = vpop.permute.xlu0 %3043
      %3045 = vrot.lane.b32.xlu0 %v1067, 13
      %v3046 = vpop.permute.xlu0 %3045
      %3047 = vrot.lane.b32.xlu0 %v1068, 13
      %v3048 = vpop.permute.xlu0 %3047
      %3049 = vrot.lane.b32.xlu0 %v1069, 13
      %v3050 = vpop.permute.xlu0 %3049
      %3051 = vrot.lane.b32.xlu0 %v1070, 13
      %v3052 = vpop.permute.xlu0 %3051
      %3053 = vrot.lane.b32.xlu0 %v1071, 13
      %v3054 = vpop.permute.xlu0 %3053
      %3055 = vrot.lane.b32.xlu0 %v1072, 13
      %v3056 = vpop.permute.xlu0 %3055
      %3057 = vrot.lane.b32.xlu0 %v1073, 13
      %v3058 = vpop.permute.xlu0 %3057
      %3059 = vrot.lane.b32.xlu0 %v1074, 13
      %v3060 = vpop.permute.xlu0 %3059
      %3125 = vrot.lane.b32.xlu0 %v1075, 14
      %v3126 = vpop.permute.xlu0 %3125
      %3127 = vrot.lane.b32.xlu0 %v1076, 14
      %v3128 = vpop.permute.xlu0 %3127
      %3129 = vrot.lane.b32.xlu0 %v1077, 14
      %v3130 = vpop.permute.xlu0 %3129
      %3131 = vrot.lane.b32.xlu0 %v1078, 14
      %v3132 = vpop.permute.xlu0 %3131
      %3133 = vrot.lane.b32.xlu0 %v1079, 14
      %v3134 = vpop.permute.xlu0 %3133
      %3135 = vrot.lane.b32.xlu0 %v1080, 14
      %v3136 = vpop.permute.xlu0 %3135
      %3137 = vrot.lane.b32.xlu0 %v1081, 14
      %v3138 = vpop.permute.xlu0 %3137
      %3139 = vrot.lane.b32.xlu0 %v1082, 14
      %v3140 = vpop.permute.xlu0 %3139
      %3141 = vrot.lane.b32.xlu0 %v1083, 14
      %v3142 = vpop.permute.xlu0 %3141
      %3143 = vrot.lane.b32.xlu0 %v1084, 14
      %v3144 = vpop.permute.xlu0 %3143
      %3145 = vrot.lane.b32.xlu0 %v1085, 14
      %v3146 = vpop.permute.xlu0 %3145
      %3147 = vrot.lane.b32.xlu0 %v1086, 14
      %v3148 = vpop.permute.xlu0 %3147
      %3149 = vrot.lane.b32.xlu0 %v1087, 14
      %v3150 = vpop.permute.xlu0 %3149
      %3151 = vrot.lane.b32.xlu0 %v1088, 14
      %v3152 = vpop.permute.xlu0 %3151
      %3153 = vrot.lane.b32.xlu0 %v1089, 14
      %v3154 = vpop.permute.xlu0 %3153
      %3155 = vrot.lane.b32.xlu0 %v1090, 14
      %v3156 = vpop.permute.xlu0 %3155
      %3157 = vrot.lane.b32.xlu0 %v1091, 14
      %v3158 = vpop.permute.xlu0 %3157
      %3159 = vrot.lane.b32.xlu0 %v1092, 14
      %v3160 = vpop.permute.xlu0 %3159
      %3161 = vrot.lane.b32.xlu0 %v1093, 14
      %v3162 = vpop.permute.xlu0 %3161
      %3163 = vrot.lane.b32.xlu0 %v1094, 14
      %v3164 = vpop.permute.xlu0 %3163
      %3165 = vrot.lane.b32.xlu0 %v1095, 14
      %v3166 = vpop.permute.xlu0 %3165
      %3167 = vrot.lane.b32.xlu0 %v1096, 14
      %v3168 = vpop.permute.xlu0 %3167
      %3169 = vrot.lane.b32.xlu0 %v1097, 14
      %v3170 = vpop.permute.xlu0 %3169
      %3171 = vrot.lane.b32.xlu0 %v1098, 14
      %v3172 = vpop.permute.xlu0 %3171
      %3173 = vrot.lane.b32.xlu0 %v1099, 14
      %v3174 = vpop.permute.xlu0 %3173
      %3175 = vrot.lane.b32.xlu0 %v1100, 14
      %v3176 = vpop.permute.xlu0 %3175
      %3177 = vrot.lane.b32.xlu0 %v1101, 14
      %v3178 = vpop.permute.xlu0 %3177
      %3179 = vrot.lane.b32.xlu0 %v1102, 14
      %v3180 = vpop.permute.xlu0 %3179
      %3181 = vrot.lane.b32.xlu0 %v1103, 14
      %v3182 = vpop.permute.xlu0 %3181
      %3183 = vrot.lane.b32.xlu0 %v1104, 14
      %v3184 = vpop.permute.xlu0 %3183
      %3185 = vrot.lane.b32.xlu0 %v1105, 14
      %v3186 = vpop.permute.xlu0 %3185
      %3187 = vrot.lane.b32.xlu0 %v1106, 14
      %v3188 = vpop.permute.xlu0 %3187
      %3253 = vrot.lane.b32.xlu0 %v1108, 15
      %v3254 = vpop.permute.xlu0 %3253
      %3255 = vrot.lane.b32.xlu0 %v1109, 15
      %v3256 = vpop.permute.xlu0 %3255
      %3257 = vrot.lane.b32.xlu0 %v1110, 15
      %v3258 = vpop.permute.xlu0 %3257
      %3259 = vrot.lane.b32.xlu0 %v1111, 15
      %v3260 = vpop.permute.xlu0 %3259
      %3261 = vrot.lane.b32.xlu0 %v1112, 15
      %v3262 = vpop.permute.xlu0 %3261
      %3263 = vrot.lane.b32.xlu0 %v1113, 15
      %v3264 = vpop.permute.xlu0 %3263
      %3265 = vrot.lane.b32.xlu0 %v1114, 15
      %v3266 = vpop.permute.xlu0 %3265
      %3267 = vrot.lane.b32.xlu0 %v1115, 15
      %v3268 = vpop.permute.xlu0 %3267
      %3269 = vrot.lane.b32.xlu0 %v1116, 15
      %v3270 = vpop.permute.xlu0 %3269
      %3271 = vrot.lane.b32.xlu0 %v1117, 15
      %v3272 = vpop.permute.xlu0 %3271
      %3273 = vrot.lane.b32.xlu0 %v1118, 15
      %v3274 = vpop.permute.xlu0 %3273
      %3275 = vrot.lane.b32.xlu0 %v1119, 15
      %v3276 = vpop.permute.xlu0 %3275
      %3277 = vrot.lane.b32.xlu0 %v1120, 15
      %v3278 = vpop.permute.xlu0 %3277
      %3279 = vrot.lane.b32.xlu0 %v1121, 15
      %v3280 = vpop.permute.xlu0 %3279
      %3281 = vrot.lane.b32.xlu0 %v1122, 15
      %v3282 = vpop.permute.xlu0 %3281
      %3283 = vrot.lane.b32.xlu0 %v1123, 15
      %v3284 = vpop.permute.xlu0 %3283
      %3285 = vrot.lane.b32.xlu0 %v1124, 15
      %v3286 = vpop.permute.xlu0 %3285
      %3287 = vrot.lane.b32.xlu0 %v1125, 15
      %v3288 = vpop.permute.xlu0 %3287
      %3289 = vrot.lane.b32.xlu0 %v1126, 15
      %v3290 = vpop.permute.xlu0 %3289
      %3291 = vrot.lane.b32.xlu0 %v1127, 15
      %v3292 = vpop.permute.xlu0 %3291
      %3293 = vrot.lane.b32.xlu0 %v1128, 15
      %v3294 = vpop.permute.xlu0 %3293
      %3295 = vrot.lane.b32.xlu0 %v1129, 15
      %v3296 = vpop.permute.xlu0 %3295
      %3297 = vrot.lane.b32.xlu0 %v1130, 15
      %v3298 = vpop.permute.xlu0 %3297
      %3299 = vrot.lane.b32.xlu0 %v1131, 15
      %v3300 = vpop.permute.xlu0 %3299
      %3301 = vrot.lane.b32.xlu0 %v1132, 15
      %v3302 = vpop.permute.xlu0 %3301
      %3303 = vrot.lane.b32.xlu0 %v1133, 15
      %v3304 = vpop.permute.xlu0 %3303
      %3305 = vrot.lane.b32.xlu0 %v1134, 15
      %v3306 = vpop.permute.xlu0 %3305
      %3307 = vrot.lane.b32.xlu0 %v1135, 15
      %v3308 = vpop.permute.xlu0 %3307
      %3309 = vrot.lane.b32.xlu0 %v1136, 15
      %v3310 = vpop.permute.xlu0 %3309
      %3311 = vrot.lane.b32.xlu0 %v1137, 15
      %v3312 = vpop.permute.xlu0 %3311
      %3313 = vrot.lane.b32.xlu0 %v1138, 15
      %v3314 = vpop.permute.xlu0 %3313
      %3315 = vrot.lane.b32.xlu0 %v1139, 15
      %v3316 = vpop.permute.xlu0 %3315
      %v3349 = vsel %vm333, %v626, %v1462
      %v3350 = vsel %vm333, %v627, %v1464
      %v3351 = vsel %vm333, %v628, %v1466
      %v3352 = vsel %vm333, %v629, %v1468
      %v3353 = vsel %vm333, %v630, %v1470
      %v3354 = vsel %vm333, %v631, %v1472
      %v3355 = vsel %vm333, %v632, %v1474
      %v3356 = vsel %vm333, %v633, %v1476
      %v3357 = vsel %vm333, %v634, %v1478
      %v3358 = vsel %vm333, %v635, %v1480
      %v3359 = vsel %vm333, %v636, %v1482
      %v3360 = vsel %vm333, %v637, %v1484
      %v3361 = vsel %vm333, %v638, %v1486
      %v3362 = vsel %vm333, %v639, %v1488
      %v3363 = vsel %vm333, %v640, %v1490
      %v3364 = vsel %vm333, %v641, %v1492
      %v3365 = vsel %vm333, %v642, %v1494
      %v3366 = vsel %vm333, %v643, %v1496
      %v3367 = vsel %vm333, %v644, %v1498
      %v3368 = vsel %vm333, %v645, %v1500
      %v3369 = vsel %vm333, %v646, %v1502
      %v3370 = vsel %vm333, %v647, %v1504
      %v3371 = vsel %vm333, %v648, %v1506
      %v3372 = vsel %vm333, %v649, %v1508
      %v3373 = vsel %vm333, %v650, %v1510
      %v3374 = vsel %vm333, %v651, %v1512
      %v3375 = vsel %vm333, %v652, %v1514
      %v3376 = vsel %vm333, %v653, %v1516
      %v3377 = vsel %vm333, %v654, %v1518
      %v3378 = vsel %vm333, %v655, %v1520
      %v3379 = vsel %vm333, %v656, %v1522
      %v3380 = vsel %vm333, %v657, %v1524
      %vm3381 = vcmask 15360
      %v3382 = vsel %vm3381, %v3349, %v1590
      %v3383 = vsel %vm3381, %v3350, %v1592
      %v3384 = vsel %vm3381, %v3351, %v1594
      %v3385 = vsel %vm3381, %v3352, %v1596
      %v3386 = vsel %vm3381, %v3353, %v1598
      %v3387 = vsel %vm3381, %v3354, %v1600
      %v3388 = vsel %vm3381, %v3355, %v1602
      %v3389 = vsel %vm3381, %v3356, %v1604
      %v3390 = vsel %vm3381, %v3357, %v1606
      %v3391 = vsel %vm3381, %v3358, %v1608
      %v3392 = vsel %vm3381, %v3359, %v1610
      %v3393 = vsel %vm3381, %v3360, %v1612
      %v3394 = vsel %vm3381, %v3361, %v1614
      %v3395 = vsel %vm3381, %v3362, %v1616
      %v3396 = vsel %vm3381, %v3363, %v1618
      %v3397 = vsel %vm3381, %v3364, %v1620
      %v3398 = vsel %vm3381, %v3365, %v1622
      %v3399 = vsel %vm3381, %v3366, %v1624
      %v3400 = vsel %vm3381, %v3367, %v1626
      %v3401 = vsel %vm3381, %v3368, %v1628
      %v3402 = vsel %vm3381, %v3369, %v1630
      %v3403 = vsel %vm3381, %v3370, %v1632
      %v3404 = vsel %vm3381, %v3371, %v1634
      %v3405 = vsel %vm3381, %v3372, %v1636
      %v3406 = vsel %vm3381, %v3373, %v1638
      %v3407 = vsel %vm3381, %v3374, %v1640
      %v3408 = vsel %vm3381, %v3375, %v1642
      %v3409 = vsel %vm3381, %v3376, %v1644
      %v3410 = vsel %vm3381, %v3377, %v1646
      %v3411 = vsel %vm3381, %v3378, %v1648
      %v3412 = vsel %vm3381, %v3379, %v1650
      %v3413 = vsel %vm3381, %v3380, %v1652
      %vm3414 = vcmask 23552
      %v3415 = vsel %vm3414, %v3382, %v1718
      %v3416 = vsel %vm3414, %v3383, %v1720
      %v3417 = vsel %vm3414, %v3384, %v1722
      %v3418 = vsel %vm3414, %v3385, %v1724
      %v3419 = vsel %vm3414, %v3386, %v1726
      %v3420 = vsel %vm3414, %v3387, %v1728
      %v3421 = vsel %vm3414, %v3388, %v1730
      %v3422 = vsel %vm3414, %v3389, %v1732
      %v3423 = vsel %vm3414, %v3390, %v1734
      %v3424 = vsel %vm3414, %v3391, %v1736
      %v3425 = vsel %vm3414, %v3392, %v1738
      %v3426 = vsel %vm3414, %v3393, %v1740
      %v3427 = vsel %vm3414, %v3394, %v1742
      %v3428 = vsel %vm3414, %v3395, %v1744
      %v3429 = vsel %vm3414, %v3396, %v1746
      %v3430 = vsel %vm3414, %v3397, %v1748
      %v3431 = vsel %vm3414, %v3398, %v1750
      %v3432 = vsel %vm3414, %v3399, %v1752
      %v3433 = vsel %vm3414, %v3400, %v1754
      %v3434 = vsel %vm3414, %v3401, %v1756
      %v3435 = vsel %vm3414, %v3402, %v1758
      %v3436 = vsel %vm3414, %v3403, %v1760
      %v3437 = vsel %vm3414, %v3404, %v1762
      %v3438 = vsel %vm3414, %v3405, %v1764
      %v3439 = vsel %vm3414, %v3406, %v1766
      %v3440 = vsel %vm3414, %v3407, %v1768
      %v3441 = vsel %vm3414, %v3408, %v1770
      %v3442 = vsel %vm3414, %v3409, %v1772
      %v3443 = vsel %vm3414, %v3410, %v1774
      %v3444 = vsel %vm3414, %v3411, %v1776
      %v3445 = vsel %vm3414, %v3412, %v1778
      %v3446 = vsel %vm3414, %v3413, %v1780
      %vm3447 = vcmask 31744
      %v3448 = vsel %vm3447, %v3415, %v1846
      %v3449 = vsel %vm3447, %v3416, %v1848
      %v3450 = vsel %vm3447, %v3417, %v1850
      %v3451 = vsel %vm3447, %v3418, %v1852
      %v3452 = vsel %vm3447, %v3419, %v1854
      %v3453 = vsel %vm3447, %v3420, %v1856
      %v3454 = vsel %vm3447, %v3421, %v1858
      %v3455 = vsel %vm3447, %v3422, %v1860
      %v3456 = vsel %vm3447, %v3423, %v1862
      %v3457 = vsel %vm3447, %v3424, %v1864
      %v3458 = vsel %vm3447, %v3425, %v1866
      %v3459 = vsel %vm3447, %v3426, %v1868
      %v3460 = vsel %vm3447, %v3427, %v1870
      %v3461 = vsel %vm3447, %v3428, %v1872
      %v3462 = vsel %vm3447, %v3429, %v1874
      %v3463 = vsel %vm3447, %v3430, %v1876
      %v3464 = vsel %vm3447, %v3431, %v1878
      %v3465 = vsel %vm3447, %v3432, %v1880
      %v3466 = vsel %vm3447, %v3433, %v1882
      %v3467 = vsel %vm3447, %v3434, %v1884
      %v3468 = vsel %vm3447, %v3435, %v1886
      %v3469 = vsel %vm3447, %v3436, %v1888
      %v3470 = vsel %vm3447, %v3437, %v1890
      %v3471 = vsel %vm3447, %v3438, %v1892
      %v3472 = vsel %vm3447, %v3439, %v1894
      %v3473 = vsel %vm3447, %v3440, %v1896
      %v3474 = vsel %vm3447, %v3441, %v1898
      %v3475 = vsel %vm3447, %v3442, %v1900
      %v3476 = vsel %vm3447, %v3443, %v1902
      %v3477 = vsel %vm3447, %v3444, %v1904
      %v3478 = vsel %vm3447, %v3445, %v1906
      %v3479 = vsel %vm3447, %v3446, %v1908
      %vm3480 = vcmask 39936
      %v3481 = vsel %vm3480, %v3448, %v1974
      %v3482 = vsel %vm3480, %v3449, %v1976
      %v3483 = vsel %vm3480, %v3450, %v1978
      %v3484 = vsel %vm3480, %v3451, %v1980
      %v3485 = vsel %vm3480, %v3452, %v1982
      %v3486 = vsel %vm3480, %v3453, %v1984
      %v3487 = vsel %vm3480, %v3454, %v1986
      %v3488 = vsel %vm3480, %v3455, %v1988
      %v3489 = vsel %vm3480, %v3456, %v1990
      %v3490 = vsel %vm3480, %v3457, %v1992
      %v3491 = vsel %vm3480, %v3458, %v1994
      %v3492 = vsel %vm3480, %v3459, %v1996
      %v3493 = vsel %vm3480, %v3460, %v1998
      %v3494 = vsel %vm3480, %v3461, %v2000
      %v3495 = vsel %vm3480, %v3462, %v2002
      %v3496 = vsel %vm3480, %v3463, %v2004
      %v3497 = vsel %vm3480, %v3464, %v2006
      %v3498 = vsel %vm3480, %v3465, %v2008
      %v3499 = vsel %vm3480, %v3466, %v2010
      %v3500 = vsel %vm3480, %v3467, %v2012
      %v3501 = vsel %vm3480, %v3468, %v2014
      %v3502 = vsel %vm3480, %v3469, %v2016
      %v3503 = vsel %vm3480, %v3470, %v2018
      %v3504 = vsel %vm3480, %v3471, %v2020
      %v3505 = vsel %vm3480, %v3472, %v2022
      %v3506 = vsel %vm3480, %v3473, %v2024
      %v3507 = vsel %vm3480, %v3474, %v2026
      %v3508 = vsel %vm3480, %v3475, %v2028
      %v3509 = vsel %vm3480, %v3476, %v2030
      %v3510 = vsel %vm3480, %v3477, %v2032
      %v3511 = vsel %vm3480, %v3478, %v2034
      %v3512 = vsel %vm3480, %v3479, %v2036
      %vm3513 = vcmask 48128
      %v3514 = vsel %vm3513, %v3481, %v2102
      %v3515 = vsel %vm3513, %v3482, %v2104
      %v3516 = vsel %vm3513, %v3483, %v2106
      %v3517 = vsel %vm3513, %v3484, %v2108
      %v3518 = vsel %vm3513, %v3485, %v2110
      %v3519 = vsel %vm3513, %v3486, %v2112
      %v3520 = vsel %vm3513, %v3487, %v2114
      %v3521 = vsel %vm3513, %v3488, %v2116
      %v3522 = vsel %vm3513, %v3489, %v2118
      %v3523 = vsel %vm3513, %v3490, %v2120
      %v3524 = vsel %vm3513, %v3491, %v2122
      %v3525 = vsel %vm3513, %v3492, %v2124
      %v3526 = vsel %vm3513, %v3493, %v2126
      %v3527 = vsel %vm3513, %v3494, %v2128
      %v3528 = vsel %vm3513, %v3495, %v2130
      %v3529 = vsel %vm3513, %v3496, %v2132
      %v3530 = vsel %vm3513, %v3497, %v2134
      %v3531 = vsel %vm3513, %v3498, %v2136
      %v3532 = vsel %vm3513, %v3499, %v2138
      %v3533 = vsel %vm3513, %v3500, %v2140
      %v3534 = vsel %vm3513, %v3501, %v2142
      %v3535 = vsel %vm3513, %v3502, %v2144
      %v3536 = vsel %vm3513, %v3503, %v2146
      %v3537 = vsel %vm3513, %v3504, %v2148
      %v3538 = vsel %vm3513, %v3505, %v2150
      %v3539 = vsel %vm3513, %v3506, %v2152
      %v3540 = vsel %vm3513, %v3507, %v2154
      %v3541 = vsel %vm3513, %v3508, %v2156
      %v3542 = vsel %vm3513, %v3509, %v2158
      %v3543 = vsel %vm3513, %v3510, %v2160
      %v3544 = vsel %vm3513, %v3511, %v2162
      %v3545 = vsel %vm3513, %v3512, %v2164
      %vm3546 = vcmask 56320
      %v3547 = vsel %vm3546, %v3514, %v2230
      %v3548 = vsel %vm3546, %v3515, %v2232
      %v3549 = vsel %vm3546, %v3516, %v2234
      %v3550 = vsel %vm3546, %v3517, %v2236
      %v3551 = vsel %vm3546, %v3518, %v2238
      %v3552 = vsel %vm3546, %v3519, %v2240
      %v3553 = vsel %vm3546, %v3520, %v2242
      %v3554 = vsel %vm3546, %v3521, %v2244
      %v3555 = vsel %vm3546, %v3522, %v2246
      %v3556 = vsel %vm3546, %v3523, %v2248
      %v3557 = vsel %vm3546, %v3524, %v2250
      %v3558 = vsel %vm3546, %v3525, %v2252
      %v3559 = vsel %vm3546, %v3526, %v2254
      %v3560 = vsel %vm3546, %v3527, %v2256
      %v3561 = vsel %vm3546, %v3528, %v2258
      %v3562 = vsel %vm3546, %v3529, %v2260
      %v3563 = vsel %vm3546, %v3530, %v2262
      %v3564 = vsel %vm3546, %v3531, %v2264
      %v3565 = vsel %vm3546, %v3532, %v2266
      %v3566 = vsel %vm3546, %v3533, %v2268
      %v3567 = vsel %vm3546, %v3534, %v2270
      %v3568 = vsel %vm3546, %v3535, %v2272
      %v3569 = vsel %vm3546, %v3536, %v2274
      %v3570 = vsel %vm3546, %v3537, %v2276
      %v3571 = vsel %vm3546, %v3538, %v2278
      %v3572 = vsel %vm3546, %v3539, %v2280
      %v3573 = vsel %vm3546, %v3540, %v2282
      %v3574 = vsel %vm3546, %v3541, %v2284
      %v3575 = vsel %vm3546, %v3542, %v2286
      %v3576 = vsel %vm3546, %v3543, %v2288
      %v3577 = vsel %vm3546, %v3544, %v2290
      %v3578 = vsel %vm3546, %v3545, %v2292
      %vm3579 = vcmask 64512
      %v3580 = vsel %vm3579, %v3547, %v2358
      %v3581 = vsel %vm3579, %v3548, %v2360
      %v3582 = vsel %vm3579, %v3549, %v2362
      %v3583 = vsel %vm3579, %v3550, %v2364
      %v3584 = vsel %vm3579, %v3551, %v2366
      %v3585 = vsel %vm3579, %v3552, %v2368
      %v3586 = vsel %vm3579, %v3553, %v2370
      %v3587 = vsel %vm3579, %v3554, %v2372
      %v3588 = vsel %vm3579, %v3555, %v2374
      %v3589 = vsel %vm3579, %v3556, %v2376
      %v3590 = vsel %vm3579, %v3557, %v2378
      %v3591 = vsel %vm3579, %v3558, %v2380
      %v3592 = vsel %vm3579, %v3559, %v2382
      %v3593 = vsel %vm3579, %v3560, %v2384
      %v3594 = vsel %vm3579, %v3561, %v2386
      %v3595 = vsel %vm3579, %v3562, %v2388
      %v3596 = vsel %vm3579, %v3563, %v2390
      %v3597 = vsel %vm3579, %v3564, %v2392
      %v3598 = vsel %vm3579, %v3565, %v2394
      %v3599 = vsel %vm3579, %v3566, %v2396
      %v3600 = vsel %vm3579, %v3567, %v2398
      %v3601 = vsel %vm3579, %v3568, %v2400
      %v3602 = vsel %vm3579, %v3569, %v2402
      %v3603 = vsel %vm3579, %v3570, %v2404
      %v3604 = vsel %vm3579, %v3571, %v2406
      %v3605 = vsel %vm3579, %v3572, %v2408
      %v3606 = vsel %vm3579, %v3573, %v2410
      %v3607 = vsel %vm3579, %v3574, %v2412
      %v3608 = vsel %vm3579, %v3575, %v2414
      %v3609 = vsel %vm3579, %v3576, %v2416
      %v3610 = vsel %vm3579, %v3577, %v2418
      %v3611 = vsel %vm3579, %v3578, %v2420
      %vm3612 = vcmask 72704
      %v3613 = vsel %vm3612, %v3580, %v2486
      %v3614 = vsel %vm3612, %v3581, %v2488
      %v3615 = vsel %vm3612, %v3582, %v2490
      %v3616 = vsel %vm3612, %v3583, %v2492
      %v3617 = vsel %vm3612, %v3584, %v2494
      %v3618 = vsel %vm3612, %v3585, %v2496
      %v3619 = vsel %vm3612, %v3586, %v2498
      %v3620 = vsel %vm3612, %v3587, %v2500
      %v3621 = vsel %vm3612, %v3588, %v2502
      %v3622 = vsel %vm3612, %v3589, %v2504
      %v3623 = vsel %vm3612, %v3590, %v2506
      %v3624 = vsel %vm3612, %v3591, %v2508
      %v3625 = vsel %vm3612, %v3592, %v2510
      %v3626 = vsel %vm3612, %v3593, %v2512
      %v3627 = vsel %vm3612, %v3594, %v2514
      %v3628 = vsel %vm3612, %v3595, %v2516
      %v3629 = vsel %vm3612, %v3596, %v2518
      %v3630 = vsel %vm3612, %v3597, %v2520
      %v3631 = vsel %vm3612, %v3598, %v2522
      %v3632 = vsel %vm3612, %v3599, %v2524
      %v3633 = vsel %vm3612, %v3600, %v2526
      %v3634 = vsel %vm3612, %v3601, %v2528
      %v3635 = vsel %vm3612, %v3602, %v2530
      %v3636 = vsel %vm3612, %v3603, %v2532
      %v3637 = vsel %vm3612, %v3604, %v2534
      %v3638 = vsel %vm3612, %v3605, %v2536
      %v3639 = vsel %vm3612, %v3606, %v2538
      %v3640 = vsel %vm3612, %v3607, %v2540
      %v3641 = vsel %vm3612, %v3608, %v2542
      %v3642 = vsel %vm3612, %v3609, %v2544
      %v3643 = vsel %vm3612, %v3610, %v2546
      %v3644 = vsel %vm3612, %v3611, %v2548
      %vm3645 = vcmask 80896
      %v3646 = vsel %vm3645, %v3613, %v2614
      %v3647 = vsel %vm3645, %v3614, %v2616
      %v3648 = vsel %vm3645, %v3615, %v2618
      %v3649 = vsel %vm3645, %v3616, %v2620
      %v3650 = vsel %vm3645, %v3617, %v2622
      %v3651 = vsel %vm3645, %v3618, %v2624
      %v3652 = vsel %vm3645, %v3619, %v2626
      %v3653 = vsel %vm3645, %v3620, %v2628
      %v3654 = vsel %vm3645, %v3621, %v2630
      %v3655 = vsel %vm3645, %v3622, %v2632
      %v3656 = vsel %vm3645, %v3623, %v2634
      %v3657 = vsel %vm3645, %v3624, %v2636
      %v3658 = vsel %vm3645, %v3625, %v2638
      %v3659 = vsel %vm3645, %v3626, %v2640
      %v3660 = vsel %vm3645, %v3627, %v2642
      %v3661 = vsel %vm3645, %v3628, %v2644
      %v3662 = vsel %vm3645, %v3629, %v2646
      %v3663 = vsel %vm3645, %v3630, %v2648
      %v3664 = vsel %vm3645, %v3631, %v2650
      %v3665 = vsel %vm3645, %v3632, %v2652
      %v3666 = vsel %vm3645, %v3633, %v2654
      %v3667 = vsel %vm3645, %v3634, %v2656
      %v3668 = vsel %vm3645, %v3635, %v2658
      %v3669 = vsel %vm3645, %v3636, %v2660
      %v3670 = vsel %vm3645, %v3637, %v2662
      %v3671 = vsel %vm3645, %v3638, %v2664
      %v3672 = vsel %vm3645, %v3639, %v2666
      %v3673 = vsel %vm3645, %v3640, %v2668
      %v3674 = vsel %vm3645, %v3641, %v2670
      %v3675 = vsel %vm3645, %v3642, %v2672
      %v3676 = vsel %vm3645, %v3643, %v2674
      %v3677 = vsel %vm3645, %v3644, %v2676
      %vm3678 = vcmask 89088
      %v3679 = vsel %vm3678, %v3646, %v2742
      %v3680 = vsel %vm3678, %v3647, %v2744
      %v3681 = vsel %vm3678, %v3648, %v2746
      %v3682 = vsel %vm3678, %v3649, %v2748
      %v3683 = vsel %vm3678, %v3650, %v2750
      %v3684 = vsel %vm3678, %v3651, %v2752
      %v3685 = vsel %vm3678, %v3652, %v2754
      %v3686 = vsel %vm3678, %v3653, %v2756
      %v3687 = vsel %vm3678, %v3654, %v2758
      %v3688 = vsel %vm3678, %v3655, %v2760
      %v3689 = vsel %vm3678, %v3656, %v2762
      %v3690 = vsel %vm3678, %v3657, %v2764
      %v3691 = vsel %vm3678, %v3658, %v2766
      %v3692 = vsel %vm3678, %v3659, %v2768
      %v3693 = vsel %vm3678, %v3660, %v2770
      %v3694 = vsel %vm3678, %v3661, %v2772
      %v3695 = vsel %vm3678, %v3662, %v2774
      %v3696 = vsel %vm3678, %v3663, %v2776
      %v3697 = vsel %vm3678, %v3664, %v2778
      %v3698 = vsel %vm3678, %v3665, %v2780
      %v3699 = vsel %vm3678, %v3666, %v2782
      %v3700 = vsel %vm3678, %v3667, %v2784
      %v3701 = vsel %vm3678, %v3668, %v2786
      %v3702 = vsel %vm3678, %v3669, %v2788
      %v3703 = vsel %vm3678, %v3670, %v2790
      %v3704 = vsel %vm3678, %v3671, %v2792
      %v3705 = vsel %vm3678, %v3672, %v2794
      %v3706 = vsel %vm3678, %v3673, %v2796
      %v3707 = vsel %vm3678, %v3674, %v2798
      %v3708 = vsel %vm3678, %v3675, %v2800
      %v3709 = vsel %vm3678, %v3676, %v2802
      %v3710 = vsel %vm3678, %v3677, %v2804
      %vm3711 = vcmask 97280
      %v3712 = vsel %vm3711, %v3679, %v2870
      %v3713 = vsel %vm3711, %v3680, %v2872
      %v3714 = vsel %vm3711, %v3681, %v2874
      %v3715 = vsel %vm3711, %v3682, %v2876
      %v3716 = vsel %vm3711, %v3683, %v2878
      %v3717 = vsel %vm3711, %v3684, %v2880
      %v3718 = vsel %vm3711, %v3685, %v2882
      %v3719 = vsel %vm3711, %v3686, %v2884
      %v3720 = vsel %vm3711, %v3687, %v2886
      %v3721 = vsel %vm3711, %v3688, %v2888
      %v3722 = vsel %vm3711, %v3689, %v2890
      %v3723 = vsel %vm3711, %v3690, %v2892
      %v3724 = vsel %vm3711, %v3691, %v2894
      %v3725 = vsel %vm3711, %v3692, %v2896
      %v3726 = vsel %vm3711, %v3693, %v2898
      %v3727 = vsel %vm3711, %v3694, %v2900
      %v3728 = vsel %vm3711, %v3695, %v2902
      %v3729 = vsel %vm3711, %v3696, %v2904
      %v3730 = vsel %vm3711, %v3697, %v2906
      %v3731 = vsel %vm3711, %v3698, %v2908
      %v3732 = vsel %vm3711, %v3699, %v2910
      %v3733 = vsel %vm3711, %v3700, %v2912
      %v3734 = vsel %vm3711, %v3701, %v2914
      %v3735 = vsel %vm3711, %v3702, %v2916
      %v3736 = vsel %vm3711, %v3703, %v2918
      %v3737 = vsel %vm3711, %v3704, %v2920
      %v3738 = vsel %vm3711, %v3705, %v2922
      %v3739 = vsel %vm3711, %v3706, %v2924
      %v3740 = vsel %vm3711, %v3707, %v2926
      %v3741 = vsel %vm3711, %v3708, %v2928
      %v3742 = vsel %vm3711, %v3709, %v2930
      %v3743 = vsel %vm3711, %v3710, %v2932
      %vm3744 = vcmask 105472
      %v3745 = vsel %vm3744, %v3712, %v2998
      %v3746 = vsel %vm3744, %v3713, %v3000
      %v3747 = vsel %vm3744, %v3714, %v3002
      %v3748 = vsel %vm3744, %v3715, %v3004
      %v3749 = vsel %vm3744, %v3716, %v3006
      %v3750 = vsel %vm3744, %v3717, %v3008
      %v3751 = vsel %vm3744, %v3718, %v3010
      %v3752 = vsel %vm3744, %v3719, %v3012
      %v3753 = vsel %vm3744, %v3720, %v3014
      %v3754 = vsel %vm3744, %v3721, %v3016
      %v3755 = vsel %vm3744, %v3722, %v3018
      %v3756 = vsel %vm3744, %v3723, %v3020
      %v3757 = vsel %vm3744, %v3724, %v3022
      %v3758 = vsel %vm3744, %v3725, %v3024
      %v3759 = vsel %vm3744, %v3726, %v3026
      %v3760 = vsel %vm3744, %v3727, %v3028
      %v3761 = vsel %vm3744, %v3728, %v3030
      %v3762 = vsel %vm3744, %v3729, %v3032
      %v3763 = vsel %vm3744, %v3730, %v3034
      %v3764 = vsel %vm3744, %v3731, %v3036
      %v3765 = vsel %vm3744, %v3732, %v3038
      %v3766 = vsel %vm3744, %v3733, %v3040
      %v3767 = vsel %vm3744, %v3734, %v3042
      %v3768 = vsel %vm3744, %v3735, %v3044
      %v3769 = vsel %vm3744, %v3736, %v3046
      %v3770 = vsel %vm3744, %v3737, %v3048
      %v3771 = vsel %vm3744, %v3738, %v3050
      %v3772 = vsel %vm3744, %v3739, %v3052
      %v3773 = vsel %vm3744, %v3740, %v3054
      %v3774 = vsel %vm3744, %v3741, %v3056
      %v3775 = vsel %vm3744, %v3742, %v3058
      %v3776 = vsel %vm3744, %v3743, %v3060
      %vm3777 = vcmask 113664
      %v3778 = vsel %vm3777, %v3745, %v3126
      %v3779 = vsel %vm3777, %v3746, %v3128
      %v3780 = vsel %vm3777, %v3747, %v3130
      %v3781 = vsel %vm3777, %v3748, %v3132
      %v3782 = vsel %vm3777, %v3749, %v3134
      %v3783 = vsel %vm3777, %v3750, %v3136
      %v3784 = vsel %vm3777, %v3751, %v3138
      %v3785 = vsel %vm3777, %v3752, %v3140
      %v3786 = vsel %vm3777, %v3753, %v3142
      %v3787 = vsel %vm3777, %v3754, %v3144
      %v3788 = vsel %vm3777, %v3755, %v3146
      %v3789 = vsel %vm3777, %v3756, %v3148
      %v3790 = vsel %vm3777, %v3757, %v3150
      %v3791 = vsel %vm3777, %v3758, %v3152
      %v3792 = vsel %vm3777, %v3759, %v3154
      %v3793 = vsel %vm3777, %v3760, %v3156
      %v3794 = vsel %vm3777, %v3761, %v3158
      %v3795 = vsel %vm3777, %v3762, %v3160
      %v3796 = vsel %vm3777, %v3763, %v3162
      %v3797 = vsel %vm3777, %v3764, %v3164
      %v3798 = vsel %vm3777, %v3765, %v3166
      %v3799 = vsel %vm3777, %v3766, %v3168
      %v3800 = vsel %vm3777, %v3767, %v3170
      %v3801 = vsel %vm3777, %v3768, %v3172
      %v3802 = vsel %vm3777, %v3769, %v3174
      %v3803 = vsel %vm3777, %v3770, %v3176
      %v3804 = vsel %vm3777, %v3771, %v3178
      %v3805 = vsel %vm3777, %v3772, %v3180
      %v3806 = vsel %vm3777, %v3773, %v3182
      %v3807 = vsel %vm3777, %v3774, %v3184
      %v3808 = vsel %vm3777, %v3775, %v3186
      %v3809 = vsel %vm3777, %v3776, %v3188
      %vm3810 = vcmask 121856
      %v3811 = vsel %vm3810, %v3778, %v3254
      %v3812 = vsel %vm3810, %v3779, %v3256
      %v3813 = vsel %vm3810, %v3780, %v3258
      %v3814 = vsel %vm3810, %v3781, %v3260
      %v3815 = vsel %vm3810, %v3782, %v3262
      %v3816 = vsel %vm3810, %v3783, %v3264
      %v3817 = vsel %vm3810, %v3784, %v3266
      %v3818 = vsel %vm3810, %v3785, %v3268
      %v3819 = vsel %vm3810, %v3786, %v3270
      %v3820 = vsel %vm3810, %v3787, %v3272
      %v3821 = vsel %vm3810, %v3788, %v3274
      %v3822 = vsel %vm3810, %v3789, %v3276
      %v3823 = vsel %vm3810, %v3790, %v3278
      %v3824 = vsel %vm3810, %v3791, %v3280
      %v3825 = vsel %vm3810, %v3792, %v3282
      %v3826 = vsel %vm3810, %v3793, %v3284
      %v3827 = vsel %vm3810, %v3794, %v3286
      %v3828 = vsel %vm3810, %v3795, %v3288
      %v3829 = vsel %vm3810, %v3796, %v3290
      %v3830 = vsel %vm3810, %v3797, %v3292
      %v3831 = vsel %vm3810, %v3798, %v3294
      %v3832 = vsel %vm3810, %v3799, %v3296
      %v3833 = vsel %vm3810, %v3800, %v3298
      %v3834 = vsel %vm3810, %v3801, %v3300
      %v3835 = vsel %vm3810, %v3802, %v3302
      %v3836 = vsel %vm3810, %v3803, %v3304
      %v3837 = vsel %vm3810, %v3804, %v3306
      %v3838 = vsel %vm3810, %v3805, %v3308
      %v3839 = vsel %vm3810, %v3806, %v3310
      %v3840 = vsel %vm3810, %v3807, %v3312
      %v3841 = vsel %vm3810, %v3808, %v3314
      %v3842 = vsel %vm3810, %v3809, %v3316
      %3875 = vrot.lane.b32.xlu0 %v1172, 1
      %v3876 = vpop.permute.xlu0 %3875
      %3877 = vrot.lane.b32.xlu0 %v1173, 1
      %v3878 = vpop.permute.xlu0 %3877
      %3879 = vrot.lane.b32.xlu0 %v1174, 1
      %v3880 = vpop.permute.xlu0 %3879
      %3881 = vrot.lane.b32.xlu0 %v1175, 1
      %v3882 = vpop.permute.xlu0 %3881
      %3883 = vrot.lane.b32.xlu0 %v1176, 1
      %v3884 = vpop.permute.xlu0 %3883
      %3885 = vrot.lane.b32.xlu0 %v1177, 1
      %v3886 = vpop.permute.xlu0 %3885
      %3887 = vrot.lane.b32.xlu0 %v1178, 1
      %v3888 = vpop.permute.xlu0 %3887
      %3889 = vrot.lane.b32.xlu0 %v1179, 1
      %v3890 = vpop.permute.xlu0 %3889
      %3891 = vrot.lane.b32.xlu0 %v1180, 1
      %v3892 = vpop.permute.xlu0 %3891
      %3893 = vrot.lane.b32.xlu0 %v1181, 1
      %v3894 = vpop.permute.xlu0 %3893
      %3895 = vrot.lane.b32.xlu0 %v1182, 1
      %v3896 = vpop.permute.xlu0 %3895
      %3897 = vrot.lane.b32.xlu0 %v1183, 1
      %v3898 = vpop.permute.xlu0 %3897
      %3899 = vrot.lane.b32.xlu0 %v1184, 1
      %v3900 = vpop.permute.xlu0 %3899
      %3901 = vrot.lane.b32.xlu0 %v1185, 1
      %v3902 = vpop.permute.xlu0 %3901
      %3903 = vrot.lane.b32.xlu0 %v1186, 1
      %v3904 = vpop.permute.xlu0 %3903
      %3905 = vrot.lane.b32.xlu0 %v1187, 1
      %v3906 = vpop.permute.xlu0 %3905
      %3907 = vrot.lane.b32.xlu0 %v1188, 1
      %v3908 = vpop.permute.xlu0 %3907
      %3909 = vrot.lane.b32.xlu0 %v1189, 1
      %v3910 = vpop.permute.xlu0 %3909
      %3911 = vrot.lane.b32.xlu0 %v1190, 1
      %v3912 = vpop.permute.xlu0 %3911
      %3913 = vrot.lane.b32.xlu0 %v1191, 1
      %v3914 = vpop.permute.xlu0 %3913
      %3915 = vrot.lane.b32.xlu0 %v1192, 1
      %v3916 = vpop.permute.xlu0 %3915
      %3917 = vrot.lane.b32.xlu0 %v1193, 1
      %v3918 = vpop.permute.xlu0 %3917
      %3919 = vrot.lane.b32.xlu0 %v1194, 1
      %v3920 = vpop.permute.xlu0 %3919
      %3921 = vrot.lane.b32.xlu0 %v1195, 1
      %v3922 = vpop.permute.xlu0 %3921
      %3923 = vrot.lane.b32.xlu0 %v1196, 1
      %v3924 = vpop.permute.xlu0 %3923
      %3925 = vrot.lane.b32.xlu0 %v1197, 1
      %v3926 = vpop.permute.xlu0 %3925
      %3927 = vrot.lane.b32.xlu0 %v1198, 1
      %v3928 = vpop.permute.xlu0 %3927
      %3929 = vrot.lane.b32.xlu0 %v1199, 1
      %v3930 = vpop.permute.xlu0 %3929
      %3931 = vrot.lane.b32.xlu0 %v1200, 1
      %v3932 = vpop.permute.xlu0 %3931
      %3933 = vrot.lane.b32.xlu0 %v1201, 1
      %v3934 = vpop.permute.xlu0 %3933
      %3935 = vrot.lane.b32.xlu0 %v1202, 1
      %v3936 = vpop.permute.xlu0 %3935
      %3937 = vrot.lane.b32.xlu0 %v1203, 1
      %v3938 = vpop.permute.xlu0 %3937
      %4003 = vrot.lane.b32.xlu0 %v1204, 2
      %v4004 = vpop.permute.xlu0 %4003
      %4005 = vrot.lane.b32.xlu0 %v1205, 2
      %v4006 = vpop.permute.xlu0 %4005
      %4007 = vrot.lane.b32.xlu0 %v1206, 2
      %v4008 = vpop.permute.xlu0 %4007
      %4009 = vrot.lane.b32.xlu0 %v1207, 2
      %v4010 = vpop.permute.xlu0 %4009
      %4011 = vrot.lane.b32.xlu0 %v1208, 2
      %v4012 = vpop.permute.xlu0 %4011
      %4013 = vrot.lane.b32.xlu0 %v1209, 2
      %v4014 = vpop.permute.xlu0 %4013
      %4015 = vrot.lane.b32.xlu0 %v1210, 2
      %v4016 = vpop.permute.xlu0 %4015
      %4017 = vrot.lane.b32.xlu0 %v1211, 2
      %v4018 = vpop.permute.xlu0 %4017
      %4019 = vrot.lane.b32.xlu0 %v1212, 2
      %v4020 = vpop.permute.xlu0 %4019
      %4021 = vrot.lane.b32.xlu0 %v1213, 2
      %v4022 = vpop.permute.xlu0 %4021
      %4023 = vrot.lane.b32.xlu0 %v1214, 2
      %v4024 = vpop.permute.xlu0 %4023
      %4025 = vrot.lane.b32.xlu0 %v1215, 2
      %v4026 = vpop.permute.xlu0 %4025
      %4027 = vrot.lane.b32.xlu0 %v1216, 2
      %v4028 = vpop.permute.xlu0 %4027
      %4029 = vrot.lane.b32.xlu0 %v1217, 2
      %v4030 = vpop.permute.xlu0 %4029
      %4031 = vrot.lane.b32.xlu0 %v1218, 2
      %v4032 = vpop.permute.xlu0 %4031
      %4033 = vrot.lane.b32.xlu0 %v1219, 2
      %v4034 = vpop.permute.xlu0 %4033
      %4035 = vrot.lane.b32.xlu0 %v1220, 2
      %v4036 = vpop.permute.xlu0 %4035
      %4037 = vrot.lane.b32.xlu0 %v1221, 2
      %v4038 = vpop.permute.xlu0 %4037
      %4039 = vrot.lane.b32.xlu0 %v1222, 2
      %v4040 = vpop.permute.xlu0 %4039
      %4041 = vrot.lane.b32.xlu0 %v1223, 2
      %v4042 = vpop.permute.xlu0 %4041
      %4043 = vrot.lane.b32.xlu0 %v1224, 2
      %v4044 = vpop.permute.xlu0 %4043
      %4045 = vrot.lane.b32.xlu0 %v1225, 2
      %v4046 = vpop.permute.xlu0 %4045
      %4047 = vrot.lane.b32.xlu0 %v1226, 2
      %v4048 = vpop.permute.xlu0 %4047
      %4049 = vrot.lane.b32.xlu0 %v1227, 2
      %v4050 = vpop.permute.xlu0 %4049
      %4051 = vrot.lane.b32.xlu0 %v1228, 2
      %v4052 = vpop.permute.xlu0 %4051
      %4053 = vrot.lane.b32.xlu0 %v1229, 2
      %v4054 = vpop.permute.xlu0 %4053
      %4055 = vrot.lane.b32.xlu0 %v1230, 2
      %v4056 = vpop.permute.xlu0 %4055
      %4057 = vrot.lane.b32.xlu0 %v1231, 2
      %v4058 = vpop.permute.xlu0 %4057
      %4059 = vrot.lane.b32.xlu0 %v1232, 2
      %v4060 = vpop.permute.xlu0 %4059
      %4061 = vrot.lane.b32.xlu0 %v1233, 2
      %v4062 = vpop.permute.xlu0 %4061
      %4063 = vrot.lane.b32.xlu0 %v1234, 2
      %v4064 = vpop.permute.xlu0 %4063
      %4065 = vrot.lane.b32.xlu0 %v1235, 2
      %v4066 = vpop.permute.xlu0 %4065
      %4131 = vrot.lane.b32.xlu0 %v1236, 3
      %v4132 = vpop.permute.xlu0 %4131
      %4133 = vrot.lane.b32.xlu0 %v1237, 3
      %v4134 = vpop.permute.xlu0 %4133
      %4135 = vrot.lane.b32.xlu0 %v1238, 3
      %v4136 = vpop.permute.xlu0 %4135
      %4137 = vrot.lane.b32.xlu0 %v1239, 3
      %v4138 = vpop.permute.xlu0 %4137
      %4139 = vrot.lane.b32.xlu0 %v1240, 3
      %v4140 = vpop.permute.xlu0 %4139
      %4141 = vrot.lane.b32.xlu0 %v1241, 3
      %v4142 = vpop.permute.xlu0 %4141
      %4143 = vrot.lane.b32.xlu0 %v1242, 3
      %v4144 = vpop.permute.xlu0 %4143
      %4145 = vrot.lane.b32.xlu0 %v1243, 3
      %v4146 = vpop.permute.xlu0 %4145
      %4147 = vrot.lane.b32.xlu0 %v1244, 3
      %v4148 = vpop.permute.xlu0 %4147
      %4149 = vrot.lane.b32.xlu0 %v1245, 3
      %v4150 = vpop.permute.xlu0 %4149
      %4151 = vrot.lane.b32.xlu0 %v1246, 3
      %v4152 = vpop.permute.xlu0 %4151
      %4153 = vrot.lane.b32.xlu0 %v1247, 3
      %v4154 = vpop.permute.xlu0 %4153
      %4155 = vrot.lane.b32.xlu0 %v1248, 3
      %v4156 = vpop.permute.xlu0 %4155
      %4157 = vrot.lane.b32.xlu0 %v1249, 3
      %v4158 = vpop.permute.xlu0 %4157
      %4159 = vrot.lane.b32.xlu0 %v1250, 3
      %v4160 = vpop.permute.xlu0 %4159
      %4161 = vrot.lane.b32.xlu0 %v1251, 3
      %v4162 = vpop.permute.xlu0 %4161
      %4163 = vrot.lane.b32.xlu0 %v1252, 3
      %v4164 = vpop.permute.xlu0 %4163
      %4165 = vrot.lane.b32.xlu0 %v1253, 3
      %v4166 = vpop.permute.xlu0 %4165
      %4167 = vrot.lane.b32.xlu0 %v1254, 3
      %v4168 = vpop.permute.xlu0 %4167
      %4169 = vrot.lane.b32.xlu0 %v1255, 3
      %v4170 = vpop.permute.xlu0 %4169
      %4171 = vrot.lane.b32.xlu0 %v1256, 3
      %v4172 = vpop.permute.xlu0 %4171
      %4173 = vrot.lane.b32.xlu0 %v1257, 3
      %v4174 = vpop.permute.xlu0 %4173
      %4175 = vrot.lane.b32.xlu0 %v1258, 3
      %v4176 = vpop.permute.xlu0 %4175
      %4177 = vrot.lane.b32.xlu0 %v1259, 3
      %v4178 = vpop.permute.xlu0 %4177
      %4179 = vrot.lane.b32.xlu0 %v1260, 3
      %v4180 = vpop.permute.xlu0 %4179
      %4181 = vrot.lane.b32.xlu0 %v1261, 3
      %v4182 = vpop.permute.xlu0 %4181
      %4183 = vrot.lane.b32.xlu0 %v1262, 3
      %v4184 = vpop.permute.xlu0 %4183
      %4185 = vrot.lane.b32.xlu0 %v1263, 3
      %v4186 = vpop.permute.xlu0 %4185
      %4187 = vrot.lane.b32.xlu0 %v1264, 3
      %v4188 = vpop.permute.xlu0 %4187
      %4189 = vrot.lane.b32.xlu0 %v1265, 3
      %v4190 = vpop.permute.xlu0 %4189
      %4191 = vrot.lane.b32.xlu0 %v1266, 3
      %v4192 = vpop.permute.xlu0 %4191
      %4193 = vrot.lane.b32.xlu0 %v1267, 3
      %v4194 = vpop.permute.xlu0 %4193
      %4259 = vrot.lane.b32.xlu0 %v1269, 4
      %v4260 = vpop.permute.xlu0 %4259
      %4261 = vrot.lane.b32.xlu0 %v1270, 4
      %v4262 = vpop.permute.xlu0 %4261
      %4263 = vrot.lane.b32.xlu0 %v1271, 4
      %v4264 = vpop.permute.xlu0 %4263
      %4265 = vrot.lane.b32.xlu0 %v1272, 4
      %v4266 = vpop.permute.xlu0 %4265
      %4267 = vrot.lane.b32.xlu0 %v1273, 4
      %v4268 = vpop.permute.xlu0 %4267
      %4269 = vrot.lane.b32.xlu0 %v1274, 4
      %v4270 = vpop.permute.xlu0 %4269
      %4271 = vrot.lane.b32.xlu0 %v1275, 4
      %v4272 = vpop.permute.xlu0 %4271
      %4273 = vrot.lane.b32.xlu0 %v1276, 4
      %v4274 = vpop.permute.xlu0 %4273
      %4275 = vrot.lane.b32.xlu0 %v1277, 4
      %v4276 = vpop.permute.xlu0 %4275
      %4277 = vrot.lane.b32.xlu0 %v1278, 4
      %v4278 = vpop.permute.xlu0 %4277
      %4279 = vrot.lane.b32.xlu0 %v1279, 4
      %v4280 = vpop.permute.xlu0 %4279
      %4281 = vrot.lane.b32.xlu0 %v1280, 4
      %v4282 = vpop.permute.xlu0 %4281
      %4283 = vrot.lane.b32.xlu0 %v1281, 4
      %v4284 = vpop.permute.xlu0 %4283
      %4285 = vrot.lane.b32.xlu0 %v1282, 4
      %v4286 = vpop.permute.xlu0 %4285
      %4287 = vrot.lane.b32.xlu0 %v1283, 4
      %v4288 = vpop.permute.xlu0 %4287
      %4289 = vrot.lane.b32.xlu0 %v1284, 4
      %v4290 = vpop.permute.xlu0 %4289
      %4291 = vrot.lane.b32.xlu0 %v1285, 4
      %v4292 = vpop.permute.xlu0 %4291
      %4293 = vrot.lane.b32.xlu0 %v1286, 4
      %v4294 = vpop.permute.xlu0 %4293
      %4295 = vrot.lane.b32.xlu0 %v1287, 4
      %v4296 = vpop.permute.xlu0 %4295
      %4297 = vrot.lane.b32.xlu0 %v1288, 4
      %v4298 = vpop.permute.xlu0 %4297
      %4299 = vrot.lane.b32.xlu0 %v1289, 4
      %v4300 = vpop.permute.xlu0 %4299
      %4301 = vrot.lane.b32.xlu0 %v1290, 4
      %v4302 = vpop.permute.xlu0 %4301
      %4303 = vrot.lane.b32.xlu0 %v1291, 4
      %v4304 = vpop.permute.xlu0 %4303
      %4305 = vrot.lane.b32.xlu0 %v1292, 4
      %v4306 = vpop.permute.xlu0 %4305
      %4307 = vrot.lane.b32.xlu0 %v1293, 4
      %v4308 = vpop.permute.xlu0 %4307
      %4309 = vrot.lane.b32.xlu0 %v1294, 4
      %v4310 = vpop.permute.xlu0 %4309
      %4311 = vrot.lane.b32.xlu0 %v1295, 4
      %v4312 = vpop.permute.xlu0 %4311
      %4313 = vrot.lane.b32.xlu0 %v1296, 4
      %v4314 = vpop.permute.xlu0 %4313
      %4315 = vrot.lane.b32.xlu0 %v1297, 4
      %v4316 = vpop.permute.xlu0 %4315
      %4317 = vrot.lane.b32.xlu0 %v1298, 4
      %v4318 = vpop.permute.xlu0 %4317
      %4319 = vrot.lane.b32.xlu0 %v1299, 4
      %v4320 = vpop.permute.xlu0 %4319
      %4321 = vrot.lane.b32.xlu0 %v1300, 4
      %v4322 = vpop.permute.xlu0 %4321
      %4387 = vrot.lane.b32.xlu0 %v1301, 5
      %v4388 = vpop.permute.xlu0 %4387
      %4389 = vrot.lane.b32.xlu0 %v1302, 5
      %v4390 = vpop.permute.xlu0 %4389
      %4391 = vrot.lane.b32.xlu0 %v1303, 5
      %v4392 = vpop.permute.xlu0 %4391
      %4393 = vrot.lane.b32.xlu0 %v1304, 5
      %v4394 = vpop.permute.xlu0 %4393
      %4395 = vrot.lane.b32.xlu0 %v1305, 5
      %v4396 = vpop.permute.xlu0 %4395
      %4397 = vrot.lane.b32.xlu0 %v1306, 5
      %v4398 = vpop.permute.xlu0 %4397
      %4399 = vrot.lane.b32.xlu0 %v1307, 5
      %v4400 = vpop.permute.xlu0 %4399
      %4401 = vrot.lane.b32.xlu0 %v1308, 5
      %v4402 = vpop.permute.xlu0 %4401
      %4403 = vrot.lane.b32.xlu0 %v1309, 5
      %v4404 = vpop.permute.xlu0 %4403
      %4405 = vrot.lane.b32.xlu0 %v1310, 5
      %v4406 = vpop.permute.xlu0 %4405
      %4407 = vrot.lane.b32.xlu0 %v1311, 5
      %v4408 = vpop.permute.xlu0 %4407
      %4409 = vrot.lane.b32.xlu0 %v1312, 5
      %v4410 = vpop.permute.xlu0 %4409
      %4411 = vrot.lane.b32.xlu0 %v1313, 5
      %v4412 = vpop.permute.xlu0 %4411
      %4413 = vrot.lane.b32.xlu0 %v1314, 5
      %v4414 = vpop.permute.xlu0 %4413
      %4415 = vrot.lane.b32.xlu0 %v1315, 5
      %v4416 = vpop.permute.xlu0 %4415
      %4417 = vrot.lane.b32.xlu0 %v1316, 5
      %v4418 = vpop.permute.xlu0 %4417
      %4419 = vrot.lane.b32.xlu0 %v1317, 5
      %v4420 = vpop.permute.xlu0 %4419
      %4421 = vrot.lane.b32.xlu0 %v1318, 5
      %v4422 = vpop.permute.xlu0 %4421
      %4423 = vrot.lane.b32.xlu0 %v1319, 5
      %v4424 = vpop.permute.xlu0 %4423
      %4425 = vrot.lane.b32.xlu0 %v1320, 5
      %v4426 = vpop.permute.xlu0 %4425
      %4427 = vrot.lane.b32.xlu0 %v1321, 5
      %v4428 = vpop.permute.xlu0 %4427
      %4429 = vrot.lane.b32.xlu0 %v1322, 5
      %v4430 = vpop.permute.xlu0 %4429
      %4431 = vrot.lane.b32.xlu0 %v1323, 5
      %v4432 = vpop.permute.xlu0 %4431
      %4433 = vrot.lane.b32.xlu0 %v1324, 5
      %v4434 = vpop.permute.xlu0 %4433
      %4435 = vrot.lane.b32.xlu0 %v1325, 5
      %v4436 = vpop.permute.xlu0 %4435
      %4437 = vrot.lane.b32.xlu0 %v1326, 5
      %v4438 = vpop.permute.xlu0 %4437
      %4439 = vrot.lane.b32.xlu0 %v1327, 5
      %v4440 = vpop.permute.xlu0 %4439
      %4441 = vrot.lane.b32.xlu0 %v1328, 5
      %v4442 = vpop.permute.xlu0 %4441
      %4443 = vrot.lane.b32.xlu0 %v1329, 5
      %v4444 = vpop.permute.xlu0 %4443
      %4445 = vrot.lane.b32.xlu0 %v1330, 5
      %v4446 = vpop.permute.xlu0 %4445
      %4447 = vrot.lane.b32.xlu0 %v1331, 5
      %v4448 = vpop.permute.xlu0 %4447
      %4449 = vrot.lane.b32.xlu0 %v1332, 5
      %v4450 = vpop.permute.xlu0 %4449
      %4515 = vrot.lane.b32.xlu0 %v1333, 6
      %v4516 = vpop.permute.xlu0 %4515
      %4517 = vrot.lane.b32.xlu0 %v1334, 6
      %v4518 = vpop.permute.xlu0 %4517
      %4519 = vrot.lane.b32.xlu0 %v1335, 6
      %v4520 = vpop.permute.xlu0 %4519
      %4521 = vrot.lane.b32.xlu0 %v1336, 6
      %v4522 = vpop.permute.xlu0 %4521
      %4523 = vrot.lane.b32.xlu0 %v1337, 6
      %v4524 = vpop.permute.xlu0 %4523
      %4525 = vrot.lane.b32.xlu0 %v1338, 6
      %v4526 = vpop.permute.xlu0 %4525
      %4527 = vrot.lane.b32.xlu0 %v1339, 6
      %v4528 = vpop.permute.xlu0 %4527
      %4529 = vrot.lane.b32.xlu0 %v1340, 6
      %v4530 = vpop.permute.xlu0 %4529
      %4531 = vrot.lane.b32.xlu0 %v1341, 6
      %v4532 = vpop.permute.xlu0 %4531
      %4533 = vrot.lane.b32.xlu0 %v1342, 6
      %v4534 = vpop.permute.xlu0 %4533
      %4535 = vrot.lane.b32.xlu0 %v1343, 6
      %v4536 = vpop.permute.xlu0 %4535
      %4537 = vrot.lane.b32.xlu0 %v1344, 6
      %v4538 = vpop.permute.xlu0 %4537
      %4539 = vrot.lane.b32.xlu0 %v1345, 6
      %v4540 = vpop.permute.xlu0 %4539
      %4541 = vrot.lane.b32.xlu0 %v1346, 6
      %v4542 = vpop.permute.xlu0 %4541
      %4543 = vrot.lane.b32.xlu0 %v1347, 6
      %v4544 = vpop.permute.xlu0 %4543
      %4545 = vrot.lane.b32.xlu0 %v1348, 6
      %v4546 = vpop.permute.xlu0 %4545
      %4547 = vrot.lane.b32.xlu0 %v1349, 6
      %v4548 = vpop.permute.xlu0 %4547
      %4549 = vrot.lane.b32.xlu0 %v1350, 6
      %v4550 = vpop.permute.xlu0 %4549
      %4551 = vrot.lane.b32.xlu0 %v1351, 6
      %v4552 = vpop.permute.xlu0 %4551
      %4553 = vrot.lane.b32.xlu0 %v1352, 6
      %v4554 = vpop.permute.xlu0 %4553
      %4555 = vrot.lane.b32.xlu0 %v1353, 6
      %v4556 = vpop.permute.xlu0 %4555
      %4557 = vrot.lane.b32.xlu0 %v1354, 6
      %v4558 = vpop.permute.xlu0 %4557
      %4559 = vrot.lane.b32.xlu0 %v1355, 6
      %v4560 = vpop.permute.xlu0 %4559
      %4561 = vrot.lane.b32.xlu0 %v1356, 6
      %v4562 = vpop.permute.xlu0 %4561
      %4563 = vrot.lane.b32.xlu0 %v1357, 6
      %v4564 = vpop.permute.xlu0 %4563
      %4565 = vrot.lane.b32.xlu0 %v1358, 6
      %v4566 = vpop.permute.xlu0 %4565
      %4567 = vrot.lane.b32.xlu0 %v1359, 6
      %v4568 = vpop.permute.xlu0 %4567
      %4569 = vrot.lane.b32.xlu0 %v1360, 6
      %v4570 = vpop.permute.xlu0 %4569
      %4571 = vrot.lane.b32.xlu0 %v1361, 6
      %v4572 = vpop.permute.xlu0 %4571
      %4573 = vrot.lane.b32.xlu0 %v1362, 6
      %v4574 = vpop.permute.xlu0 %4573
      %4575 = vrot.lane.b32.xlu0 %v1363, 6
      %v4576 = vpop.permute.xlu0 %4575
      %4577 = vrot.lane.b32.xlu0 %v1364, 6
      %v4578 = vpop.permute.xlu0 %4577
      %4643 = vrot.lane.b32.xlu0 %v1365, 7
      %v4644 = vpop.permute.xlu0 %4643
      %4645 = vrot.lane.b32.xlu0 %v1366, 7
      %v4646 = vpop.permute.xlu0 %4645
      %4647 = vrot.lane.b32.xlu0 %v1367, 7
      %v4648 = vpop.permute.xlu0 %4647
      %4649 = vrot.lane.b32.xlu0 %v1368, 7
      %v4650 = vpop.permute.xlu0 %4649
      %4651 = vrot.lane.b32.xlu0 %v1369, 7
      %v4652 = vpop.permute.xlu0 %4651
      %4653 = vrot.lane.b32.xlu0 %v1370, 7
      %v4654 = vpop.permute.xlu0 %4653
      %4655 = vrot.lane.b32.xlu0 %v1371, 7
      %v4656 = vpop.permute.xlu0 %4655
      %4657 = vrot.lane.b32.xlu0 %v1372, 7
      %v4658 = vpop.permute.xlu0 %4657
      %4659 = vrot.lane.b32.xlu0 %v1373, 7
      %v4660 = vpop.permute.xlu0 %4659
      %4661 = vrot.lane.b32.xlu0 %v1374, 7
      %v4662 = vpop.permute.xlu0 %4661
      %4663 = vrot.lane.b32.xlu0 %v1375, 7
      %v4664 = vpop.permute.xlu0 %4663
      %4665 = vrot.lane.b32.xlu0 %v1376, 7
      %v4666 = vpop.permute.xlu0 %4665
      %4667 = vrot.lane.b32.xlu0 %v1377, 7
      %v4668 = vpop.permute.xlu0 %4667
      %4669 = vrot.lane.b32.xlu0 %v1378, 7
      %v4670 = vpop.permute.xlu0 %4669
      %4671 = vrot.lane.b32.xlu0 %v1379, 7
      %v4672 = vpop.permute.xlu0 %4671
      %4673 = vrot.lane.b32.xlu0 %v1380, 7
      %v4674 = vpop.permute.xlu0 %4673
      %4675 = vrot.lane.b32.xlu0 %v1381, 7
      %v4676 = vpop.permute.xlu0 %4675
      %4677 = vrot.lane.b32.xlu0 %v1382, 7
      %v4678 = vpop.permute.xlu0 %4677
      %4679 = vrot.lane.b32.xlu0 %v1383, 7
      %v4680 = vpop.permute.xlu0 %4679
      %4681 = vrot.lane.b32.xlu0 %v1384, 7
      %v4682 = vpop.permute.xlu0 %4681
      %4683 = vrot.lane.b32.xlu0 %v1385, 7
      %v4684 = vpop.permute.xlu0 %4683
      %4685 = vrot.lane.b32.xlu0 %v1386, 7
      %v4686 = vpop.permute.xlu0 %4685
      %4687 = vrot.lane.b32.xlu0 %v1387, 7
      %v4688 = vpop.permute.xlu0 %4687
      %4689 = vrot.lane.b32.xlu0 %v1388, 7
      %v4690 = vpop.permute.xlu0 %4689
      %4691 = vrot.lane.b32.xlu0 %v1389, 7
      %v4692 = vpop.permute.xlu0 %4691
      %4693 = vrot.lane.b32.xlu0 %v1390, 7
      %v4694 = vpop.permute.xlu0 %4693
      %4695 = vrot.lane.b32.xlu0 %v1391, 7
      %v4696 = vpop.permute.xlu0 %4695
      %4697 = vrot.lane.b32.xlu0 %v1392, 7
      %v4698 = vpop.permute.xlu0 %4697
      %4699 = vrot.lane.b32.xlu0 %v1393, 7
      %v4700 = vpop.permute.xlu0 %4699
      %4701 = vrot.lane.b32.xlu0 %v1394, 7
      %v4702 = vpop.permute.xlu0 %4701
      %4703 = vrot.lane.b32.xlu0 %v1395, 7
      %v4704 = vpop.permute.xlu0 %4703
      %4705 = vrot.lane.b32.xlu0 %v1396, 7
      %v4706 = vpop.permute.xlu0 %4705
      %4771 = vrot.lane.b32.xlu0 %v1397, 8
      %v4772 = vpop.permute.xlu0 %4771
      %4773 = vrot.lane.b32.xlu0 %v1398, 8
      %v4774 = vpop.permute.xlu0 %4773
      %4775 = vrot.lane.b32.xlu0 %v1399, 8
      %v4776 = vpop.permute.xlu0 %4775
      %4777 = vrot.lane.b32.xlu0 %v1400, 8
      %v4778 = vpop.permute.xlu0 %4777
      %4779 = vrot.lane.b32.xlu0 %v1401, 8
      %v4780 = vpop.permute.xlu0 %4779
      %4781 = vrot.lane.b32.xlu0 %v1402, 8
      %v4782 = vpop.permute.xlu0 %4781
      %4783 = vrot.lane.b32.xlu0 %v1403, 8
      %v4784 = vpop.permute.xlu0 %4783
      %4785 = vrot.lane.b32.xlu0 %v1404, 8
      %v4786 = vpop.permute.xlu0 %4785
      %4787 = vrot.lane.b32.xlu0 %v1405, 8
      %v4788 = vpop.permute.xlu0 %4787
      %4789 = vrot.lane.b32.xlu0 %v1406, 8
      %v4790 = vpop.permute.xlu0 %4789
      %4791 = vrot.lane.b32.xlu0 %v1407, 8
      %v4792 = vpop.permute.xlu0 %4791
      %4793 = vrot.lane.b32.xlu0 %v1408, 8
      %v4794 = vpop.permute.xlu0 %4793
      %4795 = vrot.lane.b32.xlu0 %v1409, 8
      %v4796 = vpop.permute.xlu0 %4795
      %4797 = vrot.lane.b32.xlu0 %v1410, 8
      %v4798 = vpop.permute.xlu0 %4797
      %4799 = vrot.lane.b32.xlu0 %v1411, 8
      %v4800 = vpop.permute.xlu0 %4799
      %4801 = vrot.lane.b32.xlu0 %v1412, 8
      %v4802 = vpop.permute.xlu0 %4801
      %4803 = vrot.lane.b32.xlu0 %v1413, 8
      %v4804 = vpop.permute.xlu0 %4803
      %4805 = vrot.lane.b32.xlu0 %v1414, 8
      %v4806 = vpop.permute.xlu0 %4805
      %4807 = vrot.lane.b32.xlu0 %v1415, 8
      %v4808 = vpop.permute.xlu0 %4807
      %4809 = vrot.lane.b32.xlu0 %v1416, 8
      %v4810 = vpop.permute.xlu0 %4809
      %4811 = vrot.lane.b32.xlu0 %v1417, 8
      %v4812 = vpop.permute.xlu0 %4811
      %4813 = vrot.lane.b32.xlu0 %v1418, 8
      %v4814 = vpop.permute.xlu0 %4813
      %4815 = vrot.lane.b32.xlu0 %v1419, 8
      %v4816 = vpop.permute.xlu0 %4815
      %4817 = vrot.lane.b32.xlu0 %v1420, 8
      %v4818 = vpop.permute.xlu0 %4817
      %4819 = vrot.lane.b32.xlu0 %v1421, 8
      %v4820 = vpop.permute.xlu0 %4819
      %4821 = vrot.lane.b32.xlu0 %v1422, 8
      %v4822 = vpop.permute.xlu0 %4821
      %4823 = vrot.lane.b32.xlu0 %v1423, 8
      %v4824 = vpop.permute.xlu0 %4823
      %4825 = vrot.lane.b32.xlu0 %v1424, 8
      %v4826 = vpop.permute.xlu0 %4825
      %4827 = vrot.lane.b32.xlu0 %v1425, 8
      %v4828 = vpop.permute.xlu0 %4827
      %4829 = vrot.lane.b32.xlu0 %v1426, 8
      %v4830 = vpop.permute.xlu0 %4829
      %4831 = vrot.lane.b32.xlu0 %v1427, 8
      %v4832 = vpop.permute.xlu0 %4831
      %4833 = vrot.lane.b32.xlu0 %v1428, 8
      %v4834 = vpop.permute.xlu0 %4833
      %v4867 = vsel %vm333, %v1140, %v3876
      %v4868 = vsel %vm333, %v1141, %v3878
      %v4869 = vsel %vm333, %v1142, %v3880
      %v4870 = vsel %vm333, %v1143, %v3882
      %v4871 = vsel %vm333, %v1144, %v3884
      %v4872 = vsel %vm333, %v1145, %v3886
      %v4873 = vsel %vm333, %v1146, %v3888
      %v4874 = vsel %vm333, %v1147, %v3890
      %v4875 = vsel %vm333, %v1148, %v3892
      %v4876 = vsel %vm333, %v1149, %v3894
      %v4877 = vsel %vm333, %v1150, %v3896
      %v4878 = vsel %vm333, %v1151, %v3898
      %v4879 = vsel %vm333, %v1152, %v3900
      %v4880 = vsel %vm333, %v1153, %v3902
      %v4881 = vsel %vm333, %v1154, %v3904
      %v4882 = vsel %vm333, %v1155, %v3906
      %v4883 = vsel %vm333, %v1156, %v3908
      %v4884 = vsel %vm333, %v1157, %v3910
      %v4885 = vsel %vm333, %v1158, %v3912
      %v4886 = vsel %vm333, %v1159, %v3914
      %v4887 = vsel %vm333, %v1160, %v3916
      %v4888 = vsel %vm333, %v1161, %v3918
      %v4889 = vsel %vm333, %v1162, %v3920
      %v4890 = vsel %vm333, %v1163, %v3922
      %v4891 = vsel %vm333, %v1164, %v3924
      %v4892 = vsel %vm333, %v1165, %v3926
      %v4893 = vsel %vm333, %v1166, %v3928
      %v4894 = vsel %vm333, %v1167, %v3930
      %v4895 = vsel %vm333, %v1168, %v3932
      %v4896 = vsel %vm333, %v1169, %v3934
      %v4897 = vsel %vm333, %v1170, %v3936
      %v4898 = vsel %vm333, %v1171, %v3938
      %v4899 = vsel %vm3381, %v4867, %v4004
      %v4900 = vsel %vm3381, %v4868, %v4006
      %v4901 = vsel %vm3381, %v4869, %v4008
      %v4902 = vsel %vm3381, %v4870, %v4010
      %v4903 = vsel %vm3381, %v4871, %v4012
      %v4904 = vsel %vm3381, %v4872, %v4014
      %v4905 = vsel %vm3381, %v4873, %v4016
      %v4906 = vsel %vm3381, %v4874, %v4018
      %v4907 = vsel %vm3381, %v4875, %v4020
      %v4908 = vsel %vm3381, %v4876, %v4022
      %v4909 = vsel %vm3381, %v4877, %v4024
      %v4910 = vsel %vm3381, %v4878, %v4026
      %v4911 = vsel %vm3381, %v4879, %v4028
      %v4912 = vsel %vm3381, %v4880, %v4030
      %v4913 = vsel %vm3381, %v4881, %v4032
      %v4914 = vsel %vm3381, %v4882, %v4034
      %v4915 = vsel %vm3381, %v4883, %v4036
      %v4916 = vsel %vm3381, %v4884, %v4038
      %v4917 = vsel %vm3381, %v4885, %v4040
      %v4918 = vsel %vm3381, %v4886, %v4042
      %v4919 = vsel %vm3381, %v4887, %v4044
      %v4920 = vsel %vm3381, %v4888, %v4046
      %v4921 = vsel %vm3381, %v4889, %v4048
      %v4922 = vsel %vm3381, %v4890, %v4050
      %v4923 = vsel %vm3381, %v4891, %v4052
      %v4924 = vsel %vm3381, %v4892, %v4054
      %v4925 = vsel %vm3381, %v4893, %v4056
      %v4926 = vsel %vm3381, %v4894, %v4058
      %v4927 = vsel %vm3381, %v4895, %v4060
      %v4928 = vsel %vm3381, %v4896, %v4062
      %v4929 = vsel %vm3381, %v4897, %v4064
      %v4930 = vsel %vm3381, %v4898, %v4066
      %v4931 = vsel %vm3414, %v4899, %v4132
      %v4932 = vsel %vm3414, %v4900, %v4134
      %v4933 = vsel %vm3414, %v4901, %v4136
      %v4934 = vsel %vm3414, %v4902, %v4138
      %v4935 = vsel %vm3414, %v4903, %v4140
      %v4936 = vsel %vm3414, %v4904, %v4142
      %v4937 = vsel %vm3414, %v4905, %v4144
      %v4938 = vsel %vm3414, %v4906, %v4146
      %v4939 = vsel %vm3414, %v4907, %v4148
      %v4940 = vsel %vm3414, %v4908, %v4150
      %v4941 = vsel %vm3414, %v4909, %v4152
      %v4942 = vsel %vm3414, %v4910, %v4154
      %v4943 = vsel %vm3414, %v4911, %v4156
      %v4944 = vsel %vm3414, %v4912, %v4158
      %v4945 = vsel %vm3414, %v4913, %v4160
      %v4946 = vsel %vm3414, %v4914, %v4162
      %v4947 = vsel %vm3414, %v4915, %v4164
      %v4948 = vsel %vm3414, %v4916, %v4166
      %v4949 = vsel %vm3414, %v4917, %v4168
      %v4950 = vsel %vm3414, %v4918, %v4170
      %v4951 = vsel %vm3414, %v4919, %v4172
      %v4952 = vsel %vm3414, %v4920, %v4174
      %v4953 = vsel %vm3414, %v4921, %v4176
      %v4954 = vsel %vm3414, %v4922, %v4178
      %v4955 = vsel %vm3414, %v4923, %v4180
      %v4956 = vsel %vm3414, %v4924, %v4182
      %v4957 = vsel %vm3414, %v4925, %v4184
      %v4958 = vsel %vm3414, %v4926, %v4186
      %v4959 = vsel %vm3414, %v4927, %v4188
      %v4960 = vsel %vm3414, %v4928, %v4190
      %v4961 = vsel %vm3414, %v4929, %v4192
      %v4962 = vsel %vm3414, %v4930, %v4194
      %v4963 = vsel %vm3447, %v4931, %v4260
      %v4964 = vsel %vm3447, %v4932, %v4262
      %v4965 = vsel %vm3447, %v4933, %v4264
      %v4966 = vsel %vm3447, %v4934, %v4266
      %v4967 = vsel %vm3447, %v4935, %v4268
      %v4968 = vsel %vm3447, %v4936, %v4270
      %v4969 = vsel %vm3447, %v4937, %v4272
      %v4970 = vsel %vm3447, %v4938, %v4274
      %v4971 = vsel %vm3447, %v4939, %v4276
      %v4972 = vsel %vm3447, %v4940, %v4278
      %v4973 = vsel %vm3447, %v4941, %v4280
      %v4974 = vsel %vm3447, %v4942, %v4282
      %v4975 = vsel %vm3447, %v4943, %v4284
      %v4976 = vsel %vm3447, %v4944, %v4286
      %v4977 = vsel %vm3447, %v4945, %v4288
      %v4978 = vsel %vm3447, %v4946, %v4290
      %v4979 = vsel %vm3447, %v4947, %v4292
      %v4980 = vsel %vm3447, %v4948, %v4294
      %v4981 = vsel %vm3447, %v4949, %v4296
      %v4982 = vsel %vm3447, %v4950, %v4298
      %v4983 = vsel %vm3447, %v4951, %v4300
      %v4984 = vsel %vm3447, %v4952, %v4302
      %v4985 = vsel %vm3447, %v4953, %v4304
      %v4986 = vsel %vm3447, %v4954, %v4306
      %v4987 = vsel %vm3447, %v4955, %v4308
      %v4988 = vsel %vm3447, %v4956, %v4310
      %v4989 = vsel %vm3447, %v4957, %v4312
      %v4990 = vsel %vm3447, %v4958, %v4314
      %v4991 = vsel %vm3447, %v4959, %v4316
      %v4992 = vsel %vm3447, %v4960, %v4318
      %v4993 = vsel %vm3447, %v4961, %v4320
      %v4994 = vsel %vm3447, %v4962, %v4322
      %v4995 = vsel %vm3480, %v4963, %v4388
      %v4996 = vsel %vm3480, %v4964, %v4390
      %v4997 = vsel %vm3480, %v4965, %v4392
      %v4998 = vsel %vm3480, %v4966, %v4394
      %v4999 = vsel %vm3480, %v4967, %v4396
      %v5000 = vsel %vm3480, %v4968, %v4398
      %v5001 = vsel %vm3480, %v4969, %v4400
      %v5002 = vsel %vm3480, %v4970, %v4402
      %v5003 = vsel %vm3480, %v4971, %v4404
      %v5004 = vsel %vm3480, %v4972, %v4406
      %v5005 = vsel %vm3480, %v4973, %v4408
      %v5006 = vsel %vm3480, %v4974, %v4410
      %v5007 = vsel %vm3480, %v4975, %v4412
      %v5008 = vsel %vm3480, %v4976, %v4414
      %v5009 = vsel %vm3480, %v4977, %v4416
      %v5010 = vsel %vm3480, %v4978, %v4418
      %v5011 = vsel %vm3480, %v4979, %v4420
      %v5012 = vsel %vm3480, %v4980, %v4422
      %v5013 = vsel %vm3480, %v4981, %v4424
      %v5014 = vsel %vm3480, %v4982, %v4426
      %v5015 = vsel %vm3480, %v4983, %v4428
      %v5016 = vsel %vm3480, %v4984, %v4430
      %v5017 = vsel %vm3480, %v4985, %v4432
      %v5018 = vsel %vm3480, %v4986, %v4434
      %v5019 = vsel %vm3480, %v4987, %v4436
      %v5020 = vsel %vm3480, %v4988, %v4438
      %v5021 = vsel %vm3480, %v4989, %v4440
      %v5022 = vsel %vm3480, %v4990, %v4442
      %v5023 = vsel %vm3480, %v4991, %v4444
      %v5024 = vsel %vm3480, %v4992, %v4446
      %v5025 = vsel %vm3480, %v4993, %v4448
      %v5026 = vsel %vm3480, %v4994, %v4450
      %v5027 = vsel %vm3513, %v4995, %v4516
      %v5028 = vsel %vm3513, %v4996, %v4518
      %v5029 = vsel %vm3513, %v4997, %v4520
      %v5030 = vsel %vm3513, %v4998, %v4522
      %v5031 = vsel %vm3513, %v4999, %v4524
      %v5032 = vsel %vm3513, %v5000, %v4526
      %v5033 = vsel %vm3513, %v5001, %v4528
      %v5034 = vsel %vm3513, %v5002, %v4530
      %v5035 = vsel %vm3513, %v5003, %v4532
      %v5036 = vsel %vm3513, %v5004, %v4534
      %v5037 = vsel %vm3513, %v5005, %v4536
      %v5038 = vsel %vm3513, %v5006, %v4538
      %v5039 = vsel %vm3513, %v5007, %v4540
      %v5040 = vsel %vm3513, %v5008, %v4542
      %v5041 = vsel %vm3513, %v5009, %v4544
      %v5042 = vsel %vm3513, %v5010, %v4546
      %v5043 = vsel %vm3513, %v5011, %v4548
      %v5044 = vsel %vm3513, %v5012, %v4550
      %v5045 = vsel %vm3513, %v5013, %v4552
      %v5046 = vsel %vm3513, %v5014, %v4554
      %v5047 = vsel %vm3513, %v5015, %v4556
      %v5048 = vsel %vm3513, %v5016, %v4558
      %v5049 = vsel %vm3513, %v5017, %v4560
      %v5050 = vsel %vm3513, %v5018, %v4562
      %v5051 = vsel %vm3513, %v5019, %v4564
      %v5052 = vsel %vm3513, %v5020, %v4566
      %v5053 = vsel %vm3513, %v5021, %v4568
      %v5054 = vsel %vm3513, %v5022, %v4570
      %v5055 = vsel %vm3513, %v5023, %v4572
      %v5056 = vsel %vm3513, %v5024, %v4574
      %v5057 = vsel %vm3513, %v5025, %v4576
      %v5058 = vsel %vm3513, %v5026, %v4578
      %v5059 = vsel %vm3546, %v5027, %v4644
      %v5060 = vsel %vm3546, %v5028, %v4646
      %v5061 = vsel %vm3546, %v5029, %v4648
      %v5062 = vsel %vm3546, %v5030, %v4650
      %v5063 = vsel %vm3546, %v5031, %v4652
      %v5064 = vsel %vm3546, %v5032, %v4654
      %v5065 = vsel %vm3546, %v5033, %v4656
      %v5066 = vsel %vm3546, %v5034, %v4658
      %v5067 = vsel %vm3546, %v5035, %v4660
      %v5068 = vsel %vm3546, %v5036, %v4662
      %v5069 = vsel %vm3546, %v5037, %v4664
      %v5070 = vsel %vm3546, %v5038, %v4666
      %v5071 = vsel %vm3546, %v5039, %v4668
      %v5072 = vsel %vm3546, %v5040, %v4670
      %v5073 = vsel %vm3546, %v5041, %v4672
      %v5074 = vsel %vm3546, %v5042, %v4674
      %v5075 = vsel %vm3546, %v5043, %v4676
      %v5076 = vsel %vm3546, %v5044, %v4678
      %v5077 = vsel %vm3546, %v5045, %v4680
      %v5078 = vsel %vm3546, %v5046, %v4682
      %v5079 = vsel %vm3546, %v5047, %v4684
      %v5080 = vsel %vm3546, %v5048, %v4686
      %v5081 = vsel %vm3546, %v5049, %v4688
      %v5082 = vsel %vm3546, %v5050, %v4690
      %v5083 = vsel %vm3546, %v5051, %v4692
      %v5084 = vsel %vm3546, %v5052, %v4694
      %v5085 = vsel %vm3546, %v5053, %v4696
      %v5086 = vsel %vm3546, %v5054, %v4698
      %v5087 = vsel %vm3546, %v5055, %v4700
      %v5088 = vsel %vm3546, %v5056, %v4702
      %v5089 = vsel %vm3546, %v5057, %v4704
      %v5090 = vsel %vm3546, %v5058, %v4706
      %v5091 = vsel %vm3579, %v5059, %v4772
      %v5092 = vsel %vm3579, %v5060, %v4774
      %v5093 = vsel %vm3579, %v5061, %v4776
      %v5094 = vsel %vm3579, %v5062, %v4778
      %v5095 = vsel %vm3579, %v5063, %v4780
      %v5096 = vsel %vm3579, %v5064, %v4782
      %v5097 = vsel %vm3579, %v5065, %v4784
      %v5098 = vsel %vm3579, %v5066, %v4786
      %v5099 = vsel %vm3579, %v5067, %v4788
      %v5100 = vsel %vm3579, %v5068, %v4790
      %v5101 = vsel %vm3579, %v5069, %v4792
      %v5102 = vsel %vm3579, %v5070, %v4794
      %v5103 = vsel %vm3579, %v5071, %v4796
      %v5104 = vsel %vm3579, %v5072, %v4798
      %v5105 = vsel %vm3579, %v5073, %v4800
      %v5106 = vsel %vm3579, %v5074, %v4802
      %v5107 = vsel %vm3579, %v5075, %v4804
      %v5108 = vsel %vm3579, %v5076, %v4806
      %v5109 = vsel %vm3579, %v5077, %v4808
      %v5110 = vsel %vm3579, %v5078, %v4810
      %v5111 = vsel %vm3579, %v5079, %v4812
      %v5112 = vsel %vm3579, %v5080, %v4814
      %v5113 = vsel %vm3579, %v5081, %v4816
      %v5114 = vsel %vm3579, %v5082, %v4818
      %v5115 = vsel %vm3579, %v5083, %v4820
      %v5116 = vsel %vm3579, %v5084, %v4822
      %v5117 = vsel %vm3579, %v5085, %v4824
      %v5118 = vsel %vm3579, %v5086, %v4826
      %v5119 = vsel %vm3579, %v5087, %v4828
      %v5120 = vsel %vm3579, %v5088, %v4830
      %v5121 = vsel %vm3579, %v5089, %v4832
      %v5122 = vsel %vm3579, %v5090, %v4834
      %v5123 = vsel %vm3612, %v5091, 0.0
      %v5124 = vsel %vm3612, %v5092, 0.0
      %v5125 = vsel %vm3612, %v5093, 0.0
      %v5126 = vsel %vm3612, %v5094, 0.0
      %v5127 = vsel %vm3612, %v5095, 0.0
      %v5128 = vsel %vm3612, %v5096, 0.0
      %v5129 = vsel %vm3612, %v5097, 0.0
      %v5130 = vsel %vm3612, %v5098, 0.0
      %v5131 = vsel %vm3612, %v5099, 0.0
      %v5132 = vsel %vm3612, %v5100, 0.0
      %v5133 = vsel %vm3612, %v5101, 0.0
      %v5134 = vsel %vm3612, %v5102, 0.0
      %v5135 = vsel %vm3612, %v5103, 0.0
      %v5136 = vsel %vm3612, %v5104, 0.0
      %v5137 = vsel %vm3612, %v5105, 0.0
      %v5138 = vsel %vm3612, %v5106, 0.0
      %v5139 = vsel %vm3612, %v5107, 0.0
      %v5140 = vsel %vm3612, %v5108, 0.0
      %v5141 = vsel %vm3612, %v5109, 0.0
      %v5142 = vsel %vm3612, %v5110, 0.0
      %v5143 = vsel %vm3612, %v5111, 0.0
      %v5144 = vsel %vm3612, %v5112, 0.0
      %v5145 = vsel %vm3612, %v5113, 0.0
      %v5146 = vsel %vm3612, %v5114, 0.0
      %v5147 = vsel %vm3612, %v5115, 0.0
      %v5148 = vsel %vm3612, %v5116, 0.0
      %v5149 = vsel %vm3612, %v5117, 0.0
      %v5150 = vsel %vm3612, %v5118, 0.0
      %v5151 = vsel %vm3612, %v5119, 0.0
      %v5152 = vsel %vm3612, %v5120, 0.0
      %v5153 = vsel %vm3612, %v5121, 0.0
      %v5154 = vsel %vm3612, %v5122, 0.0
      %5187 = vrot.lane.b32.xlu0 %v5123, 16
      %v5188 = vpop.permute.xlu0 %5187
      %5189 = vrot.lane.b32.xlu0 %v5124, 16
      %v5190 = vpop.permute.xlu0 %5189
      %5191 = vrot.lane.b32.xlu0 %v5125, 16
      %v5192 = vpop.permute.xlu0 %5191
      %5193 = vrot.lane.b32.xlu0 %v5126, 16
      %v5194 = vpop.permute.xlu0 %5193
      %5195 = vrot.lane.b32.xlu0 %v5127, 16
      %v5196 = vpop.permute.xlu0 %5195
      %5197 = vrot.lane.b32.xlu0 %v5128, 16
      %v5198 = vpop.permute.xlu0 %5197
      %5199 = vrot.lane.b32.xlu0 %v5129, 16
      %v5200 = vpop.permute.xlu0 %5199
      %5201 = vrot.lane.b32.xlu0 %v5130, 16
      %v5202 = vpop.permute.xlu0 %5201
      %5203 = vrot.lane.b32.xlu0 %v5131, 16
      %v5204 = vpop.permute.xlu0 %5203
      %5205 = vrot.lane.b32.xlu0 %v5132, 16
      %v5206 = vpop.permute.xlu0 %5205
      %5207 = vrot.lane.b32.xlu0 %v5133, 16
      %v5208 = vpop.permute.xlu0 %5207
      %5209 = vrot.lane.b32.xlu0 %v5134, 16
      %v5210 = vpop.permute.xlu0 %5209
      %5211 = vrot.lane.b32.xlu0 %v5135, 16
      %v5212 = vpop.permute.xlu0 %5211
      %5213 = vrot.lane.b32.xlu0 %v5136, 16
      %v5214 = vpop.permute.xlu0 %5213
      %5215 = vrot.lane.b32.xlu0 %v5137, 16
      %v5216 = vpop.permute.xlu0 %5215
      %5217 = vrot.lane.b32.xlu0 %v5138, 16
      %v5218 = vpop.permute.xlu0 %5217
      %5219 = vrot.lane.b32.xlu0 %v5139, 16
      %v5220 = vpop.permute.xlu0 %5219
      %5221 = vrot.lane.b32.xlu0 %v5140, 16
      %v5222 = vpop.permute.xlu0 %5221
      %5223 = vrot.lane.b32.xlu0 %v5141, 16
      %v5224 = vpop.permute.xlu0 %5223
      %5225 = vrot.lane.b32.xlu0 %v5142, 16
      %v5226 = vpop.permute.xlu0 %5225
      %5227 = vrot.lane.b32.xlu0 %v5143, 16
      %v5228 = vpop.permute.xlu0 %5227
      %5229 = vrot.lane.b32.xlu0 %v5144, 16
      %v5230 = vpop.permute.xlu0 %5229
      %5231 = vrot.lane.b32.xlu0 %v5145, 16
      %v5232 = vpop.permute.xlu0 %5231
      %5233 = vrot.lane.b32.xlu0 %v5146, 16
      %v5234 = vpop.permute.xlu0 %5233
      %5235 = vrot.lane.b32.xlu0 %v5147, 16
      %v5236 = vpop.permute.xlu0 %5235
      %5237 = vrot.lane.b32.xlu0 %v5148, 16
      %v5238 = vpop.permute.xlu0 %5237
      %5239 = vrot.lane.b32.xlu0 %v5149, 16
      %v5240 = vpop.permute.xlu0 %5239
      %5241 = vrot.lane.b32.xlu0 %v5150, 16
      %v5242 = vpop.permute.xlu0 %5241
      %5243 = vrot.lane.b32.xlu0 %v5151, 16
      %v5244 = vpop.permute.xlu0 %5243
      %5245 = vrot.lane.b32.xlu0 %v5152, 16
      %v5246 = vpop.permute.xlu0 %5245
      %5247 = vrot.lane.b32.xlu0 %v5153, 16
      %v5248 = vpop.permute.xlu0 %5247
      %5249 = vrot.lane.b32.xlu0 %v5154, 16
      %v5250 = vpop.permute.xlu0 %5249
      %vm5283 = vcmask 130048
      %v5284 = vsel %vm5283, %v3811, %v5188
      %v5285 = vsel %vm5283, %v3812, %v5190
      %v5286 = vsel %vm5283, %v3813, %v5192
      %v5287 = vsel %vm5283, %v3814, %v5194
      %v5288 = vsel %vm5283, %v3815, %v5196
      %v5289 = vsel %vm5283, %v3816, %v5198
      %v5290 = vsel %vm5283, %v3817, %v5200
      %v5291 = vsel %vm5283, %v3818, %v5202
      %v5292 = vsel %vm5283, %v3819, %v5204
      %v5293 = vsel %vm5283, %v3820, %v5206
      %v5294 = vsel %vm5283, %v3821, %v5208
      %v5295 = vsel %vm5283, %v3822, %v5210
      %v5296 = vsel %vm5283, %v3823, %v5212
      %v5297 = vsel %vm5283, %v3824, %v5214
      %v5298 = vsel %vm5283, %v3825, %v5216
      %v5299 = vsel %vm5283, %v3826, %v5218
      %v5300 = vsel %vm5283, %v3827, %v5220
      %v5301 = vsel %vm5283, %v3828, %v5222
      %v5302 = vsel %vm5283, %v3829, %v5224
      %v5303 = vsel %vm5283, %v3830, %v5226
      %v5304 = vsel %vm5283, %v3831, %v5228
      %v5305 = vsel %vm5283, %v3832, %v5230
      %v5306 = vsel %vm5283, %v3833, %v5232
      %v5307 = vsel %vm5283, %v3834, %v5234
      %v5308 = vsel %vm5283, %v3835, %v5236
      %v5309 = vsel %vm5283, %v3836, %v5238
      %v5310 = vsel %vm5283, %v3837, %v5240
      %v5311 = vsel %vm5283, %v3838, %v5242
      %v5312 = vsel %vm5283, %v3839, %v5244
      %v5313 = vsel %vm5283, %v3840, %v5246
      %v5314 = vsel %vm5283, %v3841, %v5248
      %v5315 = vsel %vm5283, %v3842, %v5250
      %v5316 = vld [vmem:[%s1] sm:$0xff]
      %v5317 = vld [vmem:[%s1 + $0x8] sm:$0xff]
      %v5318 = vld [vmem:[%s1 + $0x10] sm:$0xff]
      %v5319 = vld [vmem:[%s1 + $0x18] sm:$0xff]
      %v5320 = vld [vmem:[%s2] sm:$0x1]
      %v5322 = vlaneseq
      %v5323 = vshrl.u32 %v5322, 7
      %v5324 = vsub.s32 0, %v5323
      %v5325 = vrot.slane %v5320, %v5324
      %v5328 = vsel %vm505, %v5284, 0
      %v5331 = vsel %vm505, %v5285, 0
      %v5334 = vsel %vm505, %v5286, 0
      %v5337 = vsel %vm505, %v5287, 0
      %v5340 = vsel %vm505, %v5288, 0
      %v5343 = vsel %vm505, %v5289, 0
      %v5346 = vsel %vm505, %v5290, 0
      %v5349 = vsel %vm505, %v5291, 0
      %v5352 = vsel %vm505, %v5292, 0
      %v5355 = vsel %vm505, %v5293, 0
      %v5358 = vsel %vm505, %v5294, 0
      %v5361 = vsel %vm505, %v5295, 0
      %v5364 = vsel %vm505, %v5296, 0
      %v5367 = vsel %vm505, %v5297, 0
      %v5370 = vsel %vm505, %v5298, 0
      %v5373 = vsel %vm505, %v5299, 0
      %v5376 = vsel %vm505, %v5300, 0
      %v5379 = vsel %vm505, %v5301, 0
      %v5382 = vsel %vm505, %v5302, 0
      %v5385 = vsel %vm505, %v5303, 0
      %v5388 = vsel %vm505, %v5304, 0
      %v5391 = vsel %vm505, %v5305, 0
      %v5394 = vsel %vm505, %v5306, 0
      %v5397 = vsel %vm505, %v5307, 0
      %v5400 = vsel %vm505, %v5308, 0
      %v5403 = vsel %vm505, %v5309, 0
      %v5406 = vsel %vm505, %v5310, 0
      %v5409 = vsel %vm505, %v5311, 0
      %v5412 = vsel %vm505, %v5312, 0
      %v5415 = vsel %vm505, %v5313, 0
      %v5418 = vsel %vm505, %v5314, 0
      %v5421 = vsel %vm505, %v5315, 0
      %5423 = vmatprep.subr.mxu0 0.0
      %5424 = vmatpush1.msra.mxu0 0.0
      %5425 = vmatprep.subr.mxu0 0.0
      %5426 = vmatpush1.msra.mxu0 0.0
      %5427 = vmatprep.subr.mxu0 0.0
      %5428 = vmatpush1.msra.mxu0 0.0
      %5429 = vmatprep.subr.mxu0 0.0
      %5430 = vmatpush1.msra.mxu0 0.0
      %5431 = vmatprep.subr.mxu0 0.0
      %5432 = vmatpush1.msra.mxu0 0.0
      %5433 = vmatprep.subr.mxu0 0.0
      %5434 = vmatpush1.msra.mxu0 0.0
      %5435 = vmatprep.subr.mxu0 0.0
      %5436 = vmatpush1.msra.mxu0 0.0
      %5437 = vmatprep.subr.mxu0 0.0
      %5438 = vmatpush1.msra.mxu0 0.0
      %5439 = vmatprep.subr.mxu0 0.0
      %5440 = vmatpush1.msra.mxu0 0.0
      %5441 = vmatprep.subr.mxu0 0.0
      %5442 = vmatpush1.msra.mxu0 0.0
      %5443 = vmatprep.subr.mxu0 0.0
      %5444 = vmatpush1.msra.mxu0 0.0
      %5445 = vmatprep.subr.mxu0 0.0
      %5446 = vmatpush1.msra.mxu0 0.0
      %5447 = vmatprep.subr.mxu0 0.0
      %5448 = vmatpush1.msra.mxu0 %v5319
      %5449 = vmatprep.subr.mxu0 0.0
      %5450 = vmatpush1.msra.mxu0 %v5318
      %5451 = vmatprep.subr.mxu0 0.0
      %5452 = vmatpush1.msra.mxu0 %v5317
      %5453 = vmatprep.subr.mxu0 0.0
      %5454 = vmatpush1.msra.mxu0 %v5316
      %5455 = vmatprep.subr.mxu0 0.0
      %5456 = vmatpush2.msra.mxu0 0.0
      %5457 = vmatprep.subr.mxu0 0.0
      %5458 = vmatpush2.msra.mxu0 0.0
      %5459 = vmatprep.subr.mxu0 0.0
      %5460 = vmatpush2.msra.mxu0 0.0
      %5461 = vmatprep.subr.mxu0 0.0
      %5462 = vmatpush2.msra.mxu0 0.0
      %5463 = vmatprep.subr.mxu0 0.0
      %5464 = vmatpush2.msra.mxu0 0.0
      %5465 = vmatprep.subr.mxu0 0.0
      %5466 = vmatpush2.msra.mxu0 0.0
      %5467 = vmatprep.subr.mxu0 0.0
      %5468 = vmatpush2.msra.mxu0 0.0
      %5469 = vmatprep.subr.mxu0 0.0
      %5470 = vmatpush2.msra.mxu0 0.0
      %5471 = vmatprep.subr.mxu0 0.0
      %5472 = vmatpush2.msra.mxu0 0.0
      %5473 = vmatprep.subr.mxu0 0.0
      %5474 = vmatpush2.msra.mxu0 0.0
      %5475 = vmatprep.subr.mxu0 0.0
      %5476 = vmatpush2.msra.mxu0 0.0
      %5477 = vmatprep.subr.mxu0 0.0
      %5478 = vmatpush2.msra.mxu0 0.0
      %5479 = vmatprep.subr.mxu0 0.0
      %5480 = vmatpush2.msra.mxu0 0.0
      %5481 = vmatprep.subr.mxu0 0.0
      %5482 = vmatpush2.msra.mxu0 0.0
      %5483 = vmatprep.subr.mxu0 0.0
      %5484 = vmatpush2.msra.mxu0 0.0
      %5485 = vmatprep.subr.mxu0 0.0
      %5486 = vmatpush2.msra.mxu0 0.0
      %5487 = vmatprep.mubr.f32.mxu0 0.0
      %5488 = vmatmul.mubr.f32.gmra.mxu0 %v5328
      %v5489 = vpop.f32.mrf.mxu0
      %v5490 = vadd.f32 %v5325, %v5489
      %v5491 = vpop.f32.mrf.mxu0
      %5492 = vmatprep.mubr.f32.mxu0 0.0
      %5493 = vmatmul.mubr.f32.gmra.mxu0 %v5331
      %v5494 = vpop.f32.mrf.mxu0
      %v5495 = vadd.f32 %v5325, %v5494
      %v5496 = vpop.f32.mrf.mxu0
      %5497 = vmatprep.mubr.f32.mxu0 0.0
      %5498 = vmatmul.mubr.f32.gmra.mxu0 %v5334
      %v5499 = vpop.f32.mrf.mxu0
      %v5500 = vadd.f32 %v5325, %v5499
      %v5501 = vpop.f32.mrf.mxu0
      %5502 = vmatprep.mubr.f32.mxu0 0.0
      %5503 = vmatmul.mubr.f32.gmra.mxu0 %v5337
      %v5504 = vpop.f32.mrf.mxu0
      %v5505 = vadd.f32 %v5325, %v5504
      %v5506 = vpop.f32.mrf.mxu0
      %5507 = vmatprep.mubr.f32.mxu0 0.0
      %5508 = vmatmul.mubr.f32.gmra.mxu0 %v5340
      %v5509 = vpop.f32.mrf.mxu0
      %v5510 = vadd.f32 %v5325, %v5509
      %v5511 = vpop.f32.mrf.mxu0
      %5512 = vmatprep.mubr.f32.mxu0 0.0
      %5513 = vmatmul.mubr.f32.gmra.mxu0 %v5343
      %v5514 = vpop.f32.mrf.mxu0
      %v5515 = vadd.f32 %v5325, %v5514
      %v5516 = vpop.f32.mrf.mxu0
      %5517 = vmatprep.mubr.f32.mxu0 0.0
      %5518 = vmatmul.mubr.f32.gmra.mxu0 %v5346
      %v5519 = vpop.f32.mrf.mxu0
      %v5520 = vadd.f32 %v5325, %v5519
      %v5521 = vpop.f32.mrf.mxu0
      %5522 = vmatprep.mubr.f32.mxu0 0.0
      %5523 = vmatmul.mubr.f32.gmra.mxu0 %v5349
      %v5524 = vpop.f32.mrf.mxu0
      %v5525 = vadd.f32 %v5325, %v5524
      %v5526 = vpop.f32.mrf.mxu0
      %5527 = vmatprep.mubr.f32.mxu0 0.0
      %5528 = vmatmul.mubr.f32.gmra.mxu0 %v5352
      %v5529 = vpop.f32.mrf.mxu0
      %v5530 = vadd.f32 %v5325, %v5529
      %v5531 = vpop.f32.mrf.mxu0
      %5532 = vmatprep.mubr.f32.mxu0 0.0
      %5533 = vmatmul.mubr.f32.gmra.mxu0 %v5355
      %v5534 = vpop.f32.mrf.mxu0
      %v5535 = vadd.f32 %v5325, %v5534
      %v5536 = vpop.f32.mrf.mxu0
      %5537 = vmatprep.mubr.f32.mxu0 0.0
      %5538 = vmatmul.mubr.f32.gmra.mxu0 %v5358
      %v5539 = vpop.f32.mrf.mxu0
      %v5540 = vadd.f32 %v5325, %v5539
      %v5541 = vpop.f32.mrf.mxu0
      %5542 = vmatprep.mubr.f32.mxu0 0.0
      %5543 = vmatmul.mubr.f32.gmra.mxu0 %v5361
      %v5544 = vpop.f32.mrf.mxu0
      %v5545 = vadd.f32 %v5325, %v5544
      %v5546 = vpop.f32.mrf.mxu0
      %5547 = vmatprep.mubr.f32.mxu0 0.0
      %5548 = vmatmul.mubr.f32.gmra.mxu0 %v5364
      %v5549 = vpop.f32.mrf.mxu0
      %v5550 = vadd.f32 %v5325, %v5549
      %v5551 = vpop.f32.mrf.mxu0
      %5552 = vmatprep.mubr.f32.mxu0 0.0
      %5553 = vmatmul.mubr.f32.gmra.mxu0 %v5367
      %v5554 = vpop.f32.mrf.mxu0
      %v5555 = vadd.f32 %v5325, %v5554
      %v5556 = vpop.f32.mrf.mxu0
      %5557 = vmatprep.mubr.f32.mxu0 0.0
      %5558 = vmatmul.mubr.f32.gmra.mxu0 %v5370
      %v5559 = vpop.f32.mrf.mxu0
      %v5560 = vadd.f32 %v5325, %v5559
      %v5561 = vpop.f32.mrf.mxu0
      %5562 = vmatprep.mubr.f32.mxu0 0.0
      %5563 = vmatmul.mubr.f32.gmra.mxu0 %v5373
      %v5564 = vpop.f32.mrf.mxu0
      %v5565 = vadd.f32 %v5325, %v5564
      %v5566 = vpop.f32.mrf.mxu0
      %5567 = vmatprep.mubr.f32.mxu0 0.0
      %5568 = vmatmul.mubr.f32.gmra.mxu0 %v5376
      %v5569 = vpop.f32.mrf.mxu0
      %v5570 = vadd.f32 %v5325, %v5569
      %v5571 = vpop.f32.mrf.mxu0
      %5572 = vmatprep.mubr.f32.mxu0 0.0
      %5573 = vmatmul.mubr.f32.gmra.mxu0 %v5379
      %v5574 = vpop.f32.mrf.mxu0
      %v5575 = vadd.f32 %v5325, %v5574
      %v5576 = vpop.f32.mrf.mxu0
      %5577 = vmatprep.mubr.f32.mxu0 0.0
      %5578 = vmatmul.mubr.f32.gmra.mxu0 %v5382
      %v5579 = vpop.f32.mrf.mxu0
      %v5580 = vadd.f32 %v5325, %v5579
      %v5581 = vpop.f32.mrf.mxu0
      %5582 = vmatprep.mubr.f32.mxu0 0.0
      %5583 = vmatmul.mubr.f32.gmra.mxu0 %v5385
      %v5584 = vpop.f32.mrf.mxu0
      %v5585 = vadd.f32 %v5325, %v5584
      %v5586 = vpop.f32.mrf.mxu0
      %5587 = vmatprep.mubr.f32.mxu0 0.0
      %5588 = vmatmul.mubr.f32.gmra.mxu0 %v5388
      %v5589 = vpop.f32.mrf.mxu0
      %v5590 = vadd.f32 %v5325, %v5589
      %v5591 = vpop.f32.mrf.mxu0
      %5592 = vmatprep.mubr.f32.mxu0 0.0
      %5593 = vmatmul.mubr.f32.gmra.mxu0 %v5391
      %v5594 = vpop.f32.mrf.mxu0
      %v5595 = vadd.f32 %v5325, %v5594
      %v5596 = vpop.f32.mrf.mxu0
      %5597 = vmatprep.mubr.f32.mxu0 0.0
      %5598 = vmatmul.mubr.f32.gmra.mxu0 %v5394
      %v5599 = vpop.f32.mrf.mxu0
      %v5600 = vadd.f32 %v5325, %v5599
      %v5601 = vpop.f32.mrf.mxu0
      %5602 = vmatprep.mubr.f32.mxu0 0.0
      %5603 = vmatmul.mubr.f32.gmra.mxu0 %v5397
      %v5604 = vpop.f32.mrf.mxu0
      %v5605 = vadd.f32 %v5325, %v5604
      %v5606 = vpop.f32.mrf.mxu0
      %5607 = vmatprep.mubr.f32.mxu0 0.0
      %5608 = vmatmul.mubr.f32.gmra.mxu0 %v5400
      %v5609 = vpop.f32.mrf.mxu0
      %v5610 = vadd.f32 %v5325, %v5609
      %v5611 = vpop.f32.mrf.mxu0
      %5612 = vmatprep.mubr.f32.mxu0 0.0
      %5613 = vmatmul.mubr.f32.gmra.mxu0 %v5403
      %v5614 = vpop.f32.mrf.mxu0
      %v5615 = vadd.f32 %v5325, %v5614
      %v5616 = vpop.f32.mrf.mxu0
      %5617 = vmatprep.mubr.f32.mxu0 0.0
      %5618 = vmatmul.mubr.f32.gmra.mxu0 %v5406
      %v5619 = vpop.f32.mrf.mxu0
      %v5620 = vadd.f32 %v5325, %v5619
      %v5621 = vpop.f32.mrf.mxu0
      %5622 = vmatprep.mubr.f32.mxu0 0.0
      %5623 = vmatmul.mubr.f32.gmra.mxu0 %v5409
      %v5624 = vpop.f32.mrf.mxu0
      %v5625 = vadd.f32 %v5325, %v5624
      %v5626 = vpop.f32.mrf.mxu0
      %5627 = vmatprep.mubr.f32.mxu0 0.0
      %5628 = vmatmul.mubr.f32.gmra.mxu0 %v5412
      %v5629 = vpop.f32.mrf.mxu0
      %v5630 = vadd.f32 %v5325, %v5629
      %v5631 = vpop.f32.mrf.mxu0
      %5632 = vmatprep.mubr.f32.mxu0 0.0
      %5633 = vmatmul.mubr.f32.gmra.mxu0 %v5415
      %v5634 = vpop.f32.mrf.mxu0
      %v5635 = vadd.f32 %v5325, %v5634
      %v5636 = vpop.f32.mrf.mxu0
      %5637 = vmatprep.mubr.f32.mxu0 0.0
      %5638 = vmatmul.mubr.f32.gmra.mxu0 %v5418
      %v5639 = vpop.f32.mrf.mxu0
      %v5640 = vadd.f32 %v5325, %v5639
      %v5641 = vpop.f32.mrf.mxu0
      %5642 = vmatprep.mubr.f32.mxu0 0.0
      %5643 = vmatmul.mubr.f32.gmra.mxu0 %v5421
      %v5644 = vpop.f32.mrf.mxu0
      %v5645 = vadd.f32 %v5325, %v5644
      %v5646 = vpop.f32.mrf.mxu0
      %5647 = vdwg.mxu0
      %v5648 = vmax.f32 %v5490, 0.0
      %v5649 = vmax.f32 %v5495, 0.0
      %v5650 = vmax.f32 %v5500, 0.0
      %v5651 = vmax.f32 %v5505, 0.0
      %v5652 = vmax.f32 %v5510, 0.0
      %v5653 = vmax.f32 %v5515, 0.0
      %v5654 = vmax.f32 %v5520, 0.0
      %v5655 = vmax.f32 %v5525, 0.0
      %v5656 = vmax.f32 %v5530, 0.0
      %v5657 = vmax.f32 %v5535, 0.0
      %v5658 = vmax.f32 %v5540, 0.0
      %v5659 = vmax.f32 %v5545, 0.0
      %v5660 = vmax.f32 %v5550, 0.0
      %v5661 = vmax.f32 %v5555, 0.0
      %v5662 = vmax.f32 %v5560, 0.0
      %v5663 = vmax.f32 %v5565, 0.0
      %v5664 = vmax.f32 %v5570, 0.0
      %v5665 = vmax.f32 %v5575, 0.0
      %v5666 = vmax.f32 %v5580, 0.0
      %v5667 = vmax.f32 %v5585, 0.0
      %v5668 = vmax.f32 %v5590, 0.0
      %v5669 = vmax.f32 %v5595, 0.0
      %v5670 = vmax.f32 %v5600, 0.0
      %v5671 = vmax.f32 %v5605, 0.0
      %v5672 = vmax.f32 %v5610, 0.0
      %v5673 = vmax.f32 %v5615, 0.0
      %v5674 = vmax.f32 %v5620, 0.0
      %v5675 = vmax.f32 %v5625, 0.0
      %v5676 = vmax.f32 %v5630, 0.0
      %v5677 = vmax.f32 %v5635, 0.0
      %v5678 = vmax.f32 %v5640, 0.0
      %v5679 = vmax.f32 %v5645, 0.0
      %s5680 = scalar_lea.vmem [#allocation3], 24
      %5681 = vst [vmem:[%s5680 + $0x1] sm:$0xff] %v5648
      %5682 = vst [vmem:[%s5680 + $0x9] sm:$0xff] %v5649
      %5683 = vst [vmem:[%s5680 + $0x19] sm:$0xff] %v5650
      %5684 = vst [vmem:[%s5680 + $0x21] sm:$0xff] %v5651
      %5685 = vst [vmem:[%s5680 + $0x31] sm:$0xff] %v5652
      %5686 = vst [vmem:[%s5680 + $0x39] sm:$0xff] %v5653
      %5687 = vst [vmem:[%s5680 + $0x49] sm:$0xff] %v5654
      %5688 = vst [vmem:[%s5680 + $0x51] sm:$0xff] %v5655
      %5689 = vst [vmem:[%s5680 + $0x61] sm:$0xff] %v5656
      %5690 = vst [vmem:[%s5680 + $0x69] sm:$0xff] %v5657
      %5691 = vst [vmem:[%s5680 + $0x79] sm:$0xff] %v5658
      %5692 = vst [vmem:[%s5680 + $0x81] sm:$0xff] %v5659
      %5693 = vst [vmem:[%s5680 + $0x91] sm:$0xff] %v5660
      %5694 = vst [vmem:[%s5680 + $0x99] sm:$0xff] %v5661
      %5695 = vst [vmem:[%s5680 + $0xa9] sm:$0xff] %v5662
      %5696 = vst [vmem:[%s5680 + $0xb1] sm:$0xff] %v5663
      %5697 = vst [vmem:[%s5680 + $0xc1] sm:$0xff] %v5664
      %5698 = vst [vmem:[%s5680 + $0xc9] sm:$0xff] %v5665
      %5699 = vst [vmem:[%s5680 + $0xd9] sm:$0xff] %v5666
      %5700 = vst [vmem:[%s5680 + $0xe1] sm:$0xff] %v5667
      %5701 = vst [vmem:[%s5680 + $0xf1] sm:$0xff] %v5668
      %5702 = vst [vmem:[%s5680 + $0xf9] sm:$0xff] %v5669
      %5703 = vst [vmem:[%s5680 + $0x109] sm:$0xff] %v5670
      %5704 = vst [vmem:[%s5680 + $0x111] sm:$0xff] %v5671
      %5705 = vst [vmem:[%s5680 + $0x121] sm:$0xff] %v5672
      %5706 = vst [vmem:[%s5680 + $0x129] sm:$0xff] %v5673
      %5707 = vst [vmem:[%s5680 + $0x139] sm:$0xff] %v5674
      %5708 = vst [vmem:[%s5680 + $0x141] sm:$0xff] %v5675
      %5709 = vst [vmem:[%s5680 + $0x151] sm:$0xff] %v5676
      %5710 = vst [vmem:[%s5680 + $0x159] sm:$0xff] %v5677
      %5711 = vst [vmem:[%s5680 + $0x169] sm:$0xff] %v5678
      %5712 = vst [vmem:[%s5680 + $0x171] sm:$0xff] %v5679
      %v5713 = vld [vmem:[#allocation3] sm:$0xff]
      %v5714 = vld [vmem:[#allocation3 + $0x8] sm:$0xff]
      %v5715 = vld [vmem:[#allocation3 + $0x18] sm:$0xff]
      %v5716 = vld [vmem:[#allocation3 + $0x20] sm:$0xff]
      %v5717 = vld [vmem:[#allocation3 + $0x30] sm:$0xff]
      %v5718 = vld [vmem:[#allocation3 + $0x38] sm:$0xff]
      %v5719 = vld [vmem:[#allocation3 + $0x48] sm:$0xff]
      %v5720 = vld [vmem:[#allocation3 + $0x50] sm:$0xff]
      %v5721 = vld [vmem:[#allocation3 + $0x60] sm:$0xff]
      %v5722 = vld [vmem:[#allocation3 + $0x68] sm:$0xff]
      %v5723 = vld [vmem:[#allocation3 + $0x78] sm:$0xff]
      %v5724 = vld [vmem:[#allocation3 + $0x80] sm:$0xff]
      %v5725 = vld [vmem:[#allocation3 + $0x90] sm:$0xff]
      %v5726 = vld [vmem:[#allocation3 + $0x98] sm:$0xff]
      %v5727 = vld [vmem:[#allocation3 + $0xa8] sm:$0xff]
      %v5728 = vld [vmem:[#allocation3 + $0xb0] sm:$0xff]
      %v5729 = vld [vmem:[#allocation3 + $0xc0] sm:$0xff]
      %v5730 = vld [vmem:[#allocation3 + $0xc8] sm:$0xff]
      %v5731 = vld [vmem:[#allocation3 + $0xd8] sm:$0xff]
      %v5732 = vld [vmem:[#allocation3 + $0xe0] sm:$0xff]
      %v5733 = vld [vmem:[#allocation3 + $0xf0] sm:$0xff]
      %v5734 = vld [vmem:[#allocation3 + $0xf8] sm:$0xff]
      %v5735 = vld [vmem:[#allocation3 + $0x108] sm:$0xff]
      %v5736 = vld [vmem:[#allocation3 + $0x110] sm:$0xff]
      %v5737 = vld [vmem:[#allocation3 + $0x120] sm:$0xff]
      %v5738 = vld [vmem:[#allocation3 + $0x128] sm:$0xff]
      %v5739 = vld [vmem:[#allocation3 + $0x138] sm:$0xff]
      %v5740 = vld [vmem:[#allocation3 + $0x140] sm:$0xff]
      %v5741 = vld [vmem:[#allocation3 + $0x150] sm:$0xff]
      %v5742 = vld [vmem:[#allocation3 + $0x158] sm:$0xff]
      %v5743 = vld [vmem:[#allocation3 + $0x168] sm:$0xff]
      %v5744 = vld [vmem:[#allocation3 + $0x170] sm:$0xff]
      %v5745 = vld [vmem:[#allocation3 + $0x1] sm:$0xff]
      %v5746 = vld [vmem:[#allocation3 + $0x9] sm:$0xff]
      %v5747 = vld [vmem:[#allocation3 + $0x19] sm:$0xff]
      %v5748 = vld [vmem:[#allocation3 + $0x21] sm:$0xff]
      %v5749 = vld [vmem:[#allocation3 + $0x31] sm:$0xff]
      %v5750 = vld [vmem:[#allocation3 + $0x39] sm:$0xff]
      %v5751 = vld [vmem:[#allocation3 + $0x49] sm:$0xff]
      %v5752 = vld [vmem:[#allocation3 + $0x51] sm:$0xff]
      %v5753 = vld [vmem:[#allocation3 + $0x61] sm:$0xff]
      %v5754 = vld [vmem:[#allocation3 + $0x69] sm:$0xff]
      %v5755 = vld [vmem:[#allocation3 + $0x79] sm:$0xff]
      %v5756 = vld [vmem:[#allocation3 + $0x81] sm:$0xff]
      %v5757 = vld [vmem:[#allocation3 + $0x91] sm:$0xff]
      %v5758 = vld [vmem:[#allocation3 + $0x99] sm:$0xff]
      %v5759 = vld [vmem:[#allocation3 + $0xa9] sm:$0xff]
      %v5760 = vld [vmem:[#allocation3 + $0xb1] sm:$0xff]
      %v5761 = vld [vmem:[#allocation3 + $0xc1] sm:$0xff]
      %v5762 = vld [vmem:[#allocation3 + $0xc9] sm:$0xff]
      %v5763 = vld [vmem:[#allocation3 + $0xd9] sm:$0xff]
      %v5764 = vld [vmem:[#allocation3 + $0xe1] sm:$0xff]
      %v5765 = vld [vmem:[#allocation3 + $0xf1] sm:$0xff]
      %v5766 = vld [vmem:[#allocation3 + $0xf9] sm:$0xff]
      %v5767 = vld [vmem:[#allocation3 + $0x109] sm:$0xff]
      %v5768 = vld [vmem:[#allocation3 + $0x111] sm:$0xff]
      %v5769 = vld [vmem:[#allocation3 + $0x121] sm:$0xff]
      %v5770 = vld [vmem:[#allocation3 + $0x129] sm:$0xff]
      %v5771 = vld [vmem:[#allocation3 + $0x139] sm:$0xff]
      %v5772 = vld [vmem:[#allocation3 + $0x141] sm:$0xff]
      %v5773 = vld [vmem:[#allocation3 + $0x151] sm:$0xff]
      %v5774 = vld [vmem:[#allocation3 + $0x159] sm:$0xff]
      %v5775 = vld [vmem:[#allocation3 + $0x169] sm:$0xff]
      %v5776 = vld [vmem:[#allocation3 + $0x171] sm:$0xff]
      %v5777 = vld [vmem:[#allocation3 + $0x2] sm:$0xff]
      %v5778 = vld [vmem:[#allocation3 + $0xa] sm:$0xff]
      %v5779 = vld [vmem:[#allocation3 + $0x1a] sm:$0xff]
      %v5780 = vld [vmem:[#allocation3 + $0x22] sm:$0xff]
      %v5781 = vld [vmem:[#allocation3 + $0x32] sm:$0xff]
      %v5782 = vld [vmem:[#allocation3 + $0x3a] sm:$0xff]
      %v5783 = vld [vmem:[#allocation3 + $0x4a] sm:$0xff]
      %v5784 = vld [vmem:[#allocation3 + $0x52] sm:$0xff]
      %v5785 = vld [vmem:[#allocation3 + $0x62] sm:$0xff]
      %v5786 = vld [vmem:[#allocation3 + $0x6a] sm:$0xff]
      %v5787 = vld [vmem:[#allocation3 + $0x7a] sm:$0xff]
      %v5788 = vld [vmem:[#allocation3 + $0x82] sm:$0xff]
      %v5789 = vld [vmem:[#allocation3 + $0x92] sm:$0xff]
      %v5790 = vld [vmem:[#allocation3 + $0x9a] sm:$0xff]
      %v5791 = vld [vmem:[#allocation3 + $0xaa] sm:$0xff]
      %v5792 = vld [vmem:[#allocation3 + $0xb2] sm:$0xff]
      %v5793 = vld [vmem:[#allocation3 + $0xc2] sm:$0xff]
      %v5794 = vld [vmem:[#allocation3 + $0xca] sm:$0xff]
      %v5795 = vld [vmem:[#allocation3 + $0xda] sm:$0xff]
      %v5796 = vld [vmem:[#allocation3 + $0xe2] sm:$0xff]
      %v5797 = vld [vmem:[#allocation3 + $0xf2] sm:$0xff]
      %v5798 = vld [vmem:[#allocation3 + $0xfa] sm:$0xff]
      %v5799 = vld [vmem:[#allocation3 + $0x10a] sm:$0xff]
      %v5800 = vld [vmem:[#allocation3 + $0x112] sm:$0xff]
      %v5801 = vld [vmem:[#allocation3 + $0x122] sm:$0xff]
      %v5802 = vld [vmem:[#allocation3 + $0x12a] sm:$0xff]
      %v5803 = vld [vmem:[#allocation3 + $0x13a] sm:$0xff]
      %v5804 = vld [vmem:[#allocation3 + $0x142] sm:$0xff]
      %v5805 = vld [vmem:[#allocation3 + $0x152] sm:$0xff]
      %v5806 = vld [vmem:[#allocation3 + $0x15a] sm:$0xff]
      %v5807 = vld [vmem:[#allocation3 + $0x16a] sm:$0xff]
      %v5808 = vld [vmem:[#allocation3 + $0x172] sm:$0xff]
      %v5809 = vld [vmem:[%s5680] sm:$0xff]
      %v5810 = vld [vmem:[%s5680 + $0x8] sm:$0xff]
      %v5811 = vld [vmem:[%s5680 + $0x18] sm:$0xff]
      %v5812 = vld [vmem:[%s5680 + $0x20] sm:$0xff]
      %v5813 = vld [vmem:[%s5680 + $0x30] sm:$0xff]
      %v5814 = vld [vmem:[%s5680 + $0x38] sm:$0xff]
      %v5815 = vld [vmem:[%s5680 + $0x48] sm:$0xff]
      %v5816 = vld [vmem:[%s5680 + $0x50] sm:$0xff]
      %v5817 = vld [vmem:[%s5680 + $0x60] sm:$0xff]
      %v5818 = vld [vmem:[%s5680 + $0x68] sm:$0xff]
      %v5819 = vld [vmem:[%s5680 + $0x78] sm:$0xff]
      %v5820 = vld [vmem:[%s5680 + $0x80] sm:$0xff]
      %v5821 = vld [vmem:[%s5680 + $0x90] sm:$0xff]
      %v5822 = vld [vmem:[%s5680 + $0x98] sm:$0xff]
      %v5823 = vld [vmem:[%s5680 + $0xa8] sm:$0xff]
      %v5824 = vld [vmem:[%s5680 + $0xb0] sm:$0xff]
      %v5825 = vld [vmem:[%s5680 + $0xc0] sm:$0xff]
      %v5826 = vld [vmem:[%s5680 + $0xc8] sm:$0xff]
      %v5827 = vld [vmem:[%s5680 + $0xd8] sm:$0xff]
      %v5828 = vld [vmem:[%s5680 + $0xe0] sm:$0xff]
      %v5829 = vld [vmem:[%s5680 + $0xf0] sm:$0xff]
      %v5830 = vld [vmem:[%s5680 + $0xf8] sm:$0xff]
      %v5831 = vld [vmem:[%s5680 + $0x108] sm:$0xff]
      %v5832 = vld [vmem:[%s5680 + $0x110] sm:$0xff]
      %v5833 = vld [vmem:[%s5680 + $0x120] sm:$0xff]
      %v5834 = vld [vmem:[%s5680 + $0x128] sm:$0xff]
      %v5835 = vld [vmem:[%s5680 + $0x138] sm:$0xff]
      %v5836 = vld [vmem:[%s5680 + $0x140] sm:$0xff]
      %v5837 = vld [vmem:[%s5680 + $0x150] sm:$0xff]
      %v5838 = vld [vmem:[%s5680 + $0x158] sm:$0xff]
      %v5839 = vld [vmem:[%s5680 + $0x168] sm:$0xff]
      %v5840 = vld [vmem:[%s5680 + $0x170] sm:$0xff]
      %v5841 = vld [vmem:[%s5680 + $0x1] sm:$0xff]
      %v5842 = vld [vmem:[%s5680 + $0x9] sm:$0xff]
      %v5843 = vld [vmem:[%s5680 + $0x19] sm:$0xff]
      %v5844 = vld [vmem:[%s5680 + $0x21] sm:$0xff]
      %v5845 = vld [vmem:[%s5680 + $0x31] sm:$0xff]
      %v5846 = vld [vmem:[%s5680 + $0x39] sm:$0xff]
      %v5847 = vld [vmem:[%s5680 + $0x49] sm:$0xff]
      %v5848 = vld [vmem:[%s5680 + $0x51] sm:$0xff]
      %v5849 = vld [vmem:[%s5680 + $0x61] sm:$0xff]
      %v5850 = vld [vmem:[%s5680 + $0x69] sm:$0xff]
      %v5851 = vld [vmem:[%s5680 + $0x79] sm:$0xff]
      %v5852 = vld [vmem:[%s5680 + $0x81] sm:$0xff]
      %v5853 = vld [vmem:[%s5680 + $0x91] sm:$0xff]
      %v5854 = vld [vmem:[%s5680 + $0x99] sm:$0xff]
      %v5855 = vld [vmem:[%s5680 + $0xa9] sm:$0xff]
      %v5856 = vld [vmem:[%s5680 + $0xb1] sm:$0xff]
      %v5857 = vld [vmem:[%s5680 + $0xc1] sm:$0xff]
      %v5858 = vld [vmem:[%s5680 + $0xc9] sm:$0xff]
      %v5859 = vld [vmem:[%s5680 + $0xd9] sm:$0xff]
      %v5860 = vld [vmem:[%s5680 + $0xe1] sm:$0xff]
      %v5861 = vld [vmem:[%s5680 + $0xf1] sm:$0xff]
      %v5862 = vld [vmem:[%s5680 + $0xf9] sm:$0xff]
      %v5863 = vld [vmem:[%s5680 + $0x109] sm:$0xff]
      %v5864 = vld [vmem:[%s5680 + $0x111] sm:$0xff]
      %v5865 = vld [vmem:[%s5680 + $0x121] sm:$0xff]
      %v5866 = vld [vmem:[%s5680 + $0x129] sm:$0xff]
      %v5867 = vld [vmem:[%s5680 + $0x139] sm:$0xff]
      %v5868 = vld [vmem:[%s5680 + $0x141] sm:$0xff]
      %v5869 = vld [vmem:[%s5680 + $0x151] sm:$0xff]
      %v5870 = vld [vmem:[%s5680 + $0x159] sm:$0xff]
      %v5871 = vld [vmem:[%s5680 + $0x169] sm:$0xff]
      %v5872 = vld [vmem:[%s5680 + $0x171] sm:$0xff]
      %v5873 = vld [vmem:[%s5680 + $0x2] sm:$0xff]
      %v5874 = vld [vmem:[%s5680 + $0xa] sm:$0xff]
      %v5875 = vld [vmem:[%s5680 + $0x1a] sm:$0xff]
      %v5876 = vld [vmem:[%s5680 + $0x22] sm:$0xff]
      %v5877 = vld [vmem:[%s5680 + $0x32] sm:$0xff]
      %v5878 = vld [vmem:[%s5680 + $0x3a] sm:$0xff]
      %v5879 = vld [vmem:[%s5680 + $0x4a] sm:$0xff]
      %v5880 = vld [vmem:[%s5680 + $0x52] sm:$0xff]
      %v5881 = vld [vmem:[%s5680 + $0x62] sm:$0xff]
      %v5882 = vld [vmem:[%s5680 + $0x6a] sm:$0xff]
      %v5883 = vld [vmem:[%s5680 + $0x7a] sm:$0xff]
      %v5884 = vld [vmem:[%s5680 + $0x82] sm:$0xff]
      %v5885 = vld [vmem:[%s5680 + $0x92] sm:$0xff]
      %v5886 = vld [vmem:[%s5680 + $0x9a] sm:$0xff]
      %v5887 = vld [vmem:[%s5680 + $0xaa] sm:$0xff]
      %v5888 = vld [vmem:[%s5680 + $0xb2] sm:$0xff]
      %v5889 = vld [vmem:[%s5680 + $0xc2] sm:$0xff]
      %v5890 = vld [vmem:[%s5680 + $0xca] sm:$0xff]
      %v5891 = vld [vmem:[%s5680 + $0xda] sm:$0xff]
      %v5892 = vld [vmem:[%s5680 + $0xe2] sm:$0xff]
      %v5893 = vld [vmem:[%s5680 + $0xf2] sm:$0xff]
      %v5894 = vld [vmem:[%s5680 + $0xfa] sm:$0xff]
      %v5895 = vld [vmem:[%s5680 + $0x10a] sm:$0xff]
      %v5896 = vld [vmem:[%s5680 + $0x112] sm:$0xff]
      %v5897 = vld [vmem:[%s5680 + $0x122] sm:$0xff]
      %v5898 = vld [vmem:[%s5680 + $0x12a] sm:$0xff]
      %v5899 = vld [vmem:[%s5680 + $0x13a] sm:$0xff]
      %v5900 = vld [vmem:[%s5680 + $0x142] sm:$0xff]
      %v5901 = vld [vmem:[%s5680 + $0x152] sm:$0xff]
      %v5902 = vld [vmem:[%s5680 + $0x15a] sm:$0xff]
      %v5903 = vld [vmem:[%s5680 + $0x16a] sm:$0xff]
      %v5904 = vld [vmem:[%s5680 + $0x172] sm:$0xff]
      %s5905 = scalar_lea.vmem [#allocation3], 48
      %v5906 = vld [vmem:[%s5905] sm:$0xff]
      %v5907 = vld [vmem:[%s5905 + $0x8] sm:$0xff]
      %v5908 = vld [vmem:[%s5905 + $0x18] sm:$0xff]
      %v5909 = vld [vmem:[%s5905 + $0x20] sm:$0xff]
      %v5910 = vld [vmem:[%s5905 + $0x30] sm:$0xff]
      %v5911 = vld [vmem:[%s5905 + $0x38] sm:$0xff]
      %v5912 = vld [vmem:[%s5905 + $0x48] sm:$0xff]
      %v5913 = vld [vmem:[%s5905 + $0x50] sm:$0xff]
      %v5914 = vld [vmem:[%s5905 + $0x60] sm:$0xff]
      %v5915 = vld [vmem:[%s5905 + $0x68] sm:$0xff]
      %v5916 = vld [vmem:[%s5905 + $0x78] sm:$0xff]
      %v5917 = vld [vmem:[%s5905 + $0x80] sm:$0xff]
      %v5918 = vld [vmem:[%s5905 + $0x90] sm:$0xff]
      %v5919 = vld [vmem:[%s5905 + $0x98] sm:$0xff]
      %v5920 = vld [vmem:[%s5905 + $0xa8] sm:$0xff]
      %v5921 = vld [vmem:[%s5905 + $0xb0] sm:$0xff]
      %v5922 = vld [vmem:[%s5905 + $0xc0] sm:$0xff]
      %v5923 = vld [vmem:[%s5905 + $0xc8] sm:$0xff]
      %v5924 = vld [vmem:[%s5905 + $0xd8] sm:$0xff]
      %v5925 = vld [vmem:[%s5905 + $0xe0] sm:$0xff]
      %v5926 = vld [vmem:[%s5905 + $0xf0] sm:$0xff]
      %v5927 = vld [vmem:[%s5905 + $0xf8] sm:$0xff]
      %v5928 = vld [vmem:[%s5905 + $0x108] sm:$0xff]
      %v5929 = vld [vmem:[%s5905 + $0x110] sm:$0xff]
      %v5930 = vld [vmem:[%s5905 + $0x120] sm:$0xff]
      %v5931 = vld [vmem:[%s5905 + $0x128] sm:$0xff]
      %v5932 = vld [vmem:[%s5905 + $0x138] sm:$0xff]
      %v5933 = vld [vmem:[%s5905 + $0x140] sm:$0xff]
      %v5934 = vld [vmem:[%s5905 + $0x150] sm:$0xff]
      %v5935 = vld [vmem:[%s5905 + $0x158] sm:$0xff]
      %v5936 = vld [vmem:[%s5905 + $0x168] sm:$0xff]
      %v5937 = vld [vmem:[%s5905 + $0x170] sm:$0xff]
      %v5938 = vld [vmem:[%s5905 + $0x1] sm:$0xff]
      %v5939 = vld [vmem:[%s5905 + $0x9] sm:$0xff]
      %v5940 = vld [vmem:[%s5905 + $0x19] sm:$0xff]
      %v5941 = vld [vmem:[%s5905 + $0x21] sm:$0xff]
      %v5942 = vld [vmem:[%s5905 + $0x31] sm:$0xff]
      %v5943 = vld [vmem:[%s5905 + $0x39] sm:$0xff]
      %v5944 = vld [vmem:[%s5905 + $0x49] sm:$0xff]
      %v5945 = vld [vmem:[%s5905 + $0x51] sm:$0xff]
      %v5946 = vld [vmem:[%s5905 + $0x61] sm:$0xff]
      %v5947 = vld [vmem:[%s5905 + $0x69] sm:$0xff]
      %v5948 = vld [vmem:[%s5905 + $0x79] sm:$0xff]
      %v5949 = vld [vmem:[%s5905 + $0x81] sm:$0xff]
      %v5950 = vld [vmem:[%s5905 + $0x91] sm:$0xff]
      %v5951 = vld [vmem:[%s5905 + $0x99] sm:$0xff]
      %v5952 = vld [vmem:[%s5905 + $0xa9] sm:$0xff]
      %v5953 = vld [vmem:[%s5905 + $0xb1] sm:$0xff]
      %v5954 = vld [vmem:[%s5905 + $0xc1] sm:$0xff]
      %v5955 = vld [vmem:[%s5905 + $0xc9] sm:$0xff]
      %v5956 = vld [vmem:[%s5905 + $0xd9] sm:$0xff]
      %v5957 = vld [vmem:[%s5905 + $0xe1] sm:$0xff]
      %v5958 = vld [vmem:[%s5905 + $0xf1] sm:$0xff]
      %v5959 = vld [vmem:[%s5905 + $0xf9] sm:$0xff]
      %v5960 = vld [vmem:[%s5905 + $0x109] sm:$0xff]
      %v5961 = vld [vmem:[%s5905 + $0x111] sm:$0xff]
      %v5962 = vld [vmem:[%s5905 + $0x121] sm:$0xff]
      %v5963 = vld [vmem:[%s5905 + $0x129] sm:$0xff]
      %v5964 = vld [vmem:[%s5905 + $0x139] sm:$0xff]
      %v5965 = vld [vmem:[%s5905 + $0x141] sm:$0xff]
      %v5966 = vld [vmem:[%s5905 + $0x151] sm:$0xff]
      %v5967 = vld [vmem:[%s5905 + $0x159] sm:$0xff]
      %v5968 = vld [vmem:[%s5905 + $0x169] sm:$0xff]
      %v5969 = vld [vmem:[%s5905 + $0x171] sm:$0xff]
      %v5970 = vld [vmem:[%s5905 + $0x2] sm:$0xff]
      %v5971 = vld [vmem:[%s5905 + $0xa] sm:$0xff]
      %v5972 = vld [vmem:[%s5905 + $0x1a] sm:$0xff]
      %v5973 = vld [vmem:[%s5905 + $0x22] sm:$0xff]
      %v5974 = vld [vmem:[%s5905 + $0x32] sm:$0xff]
      %v5975 = vld [vmem:[%s5905 + $0x3a] sm:$0xff]
      %v5976 = vld [vmem:[%s5905 + $0x4a] sm:$0xff]
      %v5977 = vld [vmem:[%s5905 + $0x52] sm:$0xff]
      %v5978 = vld [vmem:[%s5905 + $0x62] sm:$0xff]
      %v5979 = vld [vmem:[%s5905 + $0x6a] sm:$0xff]
      %v5980 = vld [vmem:[%s5905 + $0x7a] sm:$0xff]
      %v5981 = vld [vmem:[%s5905 + $0x82] sm:$0xff]
      %v5982 = vld [vmem:[%s5905 + $0x92] sm:$0xff]
      %v5983 = vld [vmem:[%s5905 + $0x9a] sm:$0xff]
      %v5984 = vld [vmem:[%s5905 + $0xaa] sm:$0xff]
      %v5985 = vld [vmem:[%s5905 + $0xb2] sm:$0xff]
      %v5986 = vld [vmem:[%s5905 + $0xc2] sm:$0xff]
      %v5987 = vld [vmem:[%s5905 + $0xca] sm:$0xff]
      %v5988 = vld [vmem:[%s5905 + $0xda] sm:$0xff]
      %v5989 = vld [vmem:[%s5905 + $0xe2] sm:$0xff]
      %v5990 = vld [vmem:[%s5905 + $0xf2] sm:$0xff]
      %v5991 = vld [vmem:[%s5905 + $0xfa] sm:$0xff]
      %v5992 = vld [vmem:[%s5905 + $0x10a] sm:$0xff]
      %v5993 = vld [vmem:[%s5905 + $0x112] sm:$0xff]
      %v5994 = vld [vmem:[%s5905 + $0x122] sm:$0xff]
      %v5995 = vld [vmem:[%s5905 + $0x12a] sm:$0xff]
      %v5996 = vld [vmem:[%s5905 + $0x13a] sm:$0xff]
      %v5997 = vld [vmem:[%s5905 + $0x142] sm:$0xff]
      %v5998 = vld [vmem:[%s5905 + $0x152] sm:$0xff]
      %v5999 = vld [vmem:[%s5905 + $0x15a] sm:$0xff]
      %v6000 = vld [vmem:[%s5905 + $0x16a] sm:$0xff]
      %v6001 = vld [vmem:[%s5905 + $0x172] sm:$0xff]
      %v6002 = vld [vmem:[%s3] sm:$0xff]
      %v6003 = vld [vmem:[%s3 + $0x8] sm:$0xff]
      %v6004 = vld [vmem:[%s3 + $0x10] sm:$0xff]
      %v6005 = vld [vmem:[%s3 + $0x18] sm:$0xff]
      %v6006 = vld [vmem:[%s3 + $0x20] sm:$0xff]
      %v6007 = vld [vmem:[%s3 + $0x28] sm:$0xff]
      %v6008 = vld [vmem:[%s3 + $0x30] sm:$0xff]
      %v6009 = vld [vmem:[%s3 + $0x38] sm:$0xff]
      %v6010 = vld [vmem:[%s3 + $0x40] sm:$0xff]
      %v6011 = vld [vmem:[%s3 + $0x48] sm:$0xff]
      %v6012 = vld [vmem:[%s3 + $0x50] sm:$0xff]
      %v6013 = vld [vmem:[%s3 + $0x58] sm:$0xff]
      %v6014 = vld [vmem:[%s3 + $0x60] sm:$0xff]
      %v6015 = vld [vmem:[%s3 + $0x68] sm:$0xff]
      %v6016 = vld [vmem:[%s3 + $0x70] sm:$0xff]
      %v6017 = vld [vmem:[%s3 + $0x78] sm:$0xff]
      %v6018 = vld [vmem:[%s3 + $0x80] sm:$0xff]
      %v6019 = vld [vmem:[%s3 + $0x88] sm:$0xff]
      %v6020 = vld [vmem:[%s3 + $0x90] sm:$0xff]
      %v6021 = vld [vmem:[%s3 + $0x98] sm:$0xff]
      %v6022 = vld [vmem:[%s3 + $0xa0] sm:$0xff]
      %v6023 = vld [vmem:[%s3 + $0xa8] sm:$0xff]
      %v6024 = vld [vmem:[%s3 + $0xb0] sm:$0xff]
      %v6025 = vld [vmem:[%s3 + $0xb8] sm:$0xff]
      %v6026 = vld [vmem:[%s3 + $0xc0] sm:$0xff]
      %v6027 = vld [vmem:[%s3 + $0xc8] sm:$0xff]
      %v6028 = vld [vmem:[%s3 + $0xd0] sm:$0xff]
      %v6029 = vld [vmem:[%s3 + $0xd8] sm:$0xff]
      %v6030 = vld [vmem:[%s3 + $0xe0] sm:$0xff]
      %v6031 = vld [vmem:[%s3 + $0xe8] sm:$0xff]
      %v6032 = vld [vmem:[%s3 + $0xf0] sm:$0xff]
      %v6033 = vld [vmem:[%s3 + $0xf8] sm:$0xff]
      %v6034 = vld [vmem:[%s3 + $0x100] sm:$0xff]
      %v6035 = vld [vmem:[%s3 + $0x108] sm:$0xff]
      %v6036 = vld [vmem:[%s3 + $0x110] sm:$0xff]
      %v6037 = vld [vmem:[%s3 + $0x118] sm:$0xff]
      %v6038 = vld [vmem:[%s3 + $0x120] sm:$0xff]
      %v6039 = vld [vmem:[%s3 + $0x128] sm:$0xff]
      %v6040 = vld [vmem:[%s3 + $0x130] sm:$0xff]
      %v6041 = vld [vmem:[%s3 + $0x138] sm:$0xff]
      %v6042 = vld [vmem:[%s3 + $0x140] sm:$0xff]
      %v6043 = vld [vmem:[%s3 + $0x148] sm:$0xff]
      %v6044 = vld [vmem:[%s3 + $0x150] sm:$0xff]
      %v6045 = vld [vmem:[%s3 + $0x158] sm:$0xff]
      %v6046 = vld [vmem:[%s3 + $0x160] sm:$0xff]
      %v6047 = vld [vmem:[%s3 + $0x168] sm:$0xff]
      %v6048 = vld [vmem:[%s3 + $0x170] sm:$0xff]
      %v6049 = vld [vmem:[%s3 + $0x178] sm:$0xff]
      %v6050 = vld [vmem:[%s3 + $0x180] sm:$0xff]
      %v6051 = vld [vmem:[%s3 + $0x188] sm:$0xff]
      %v6052 = vld [vmem:[%s3 + $0x190] sm:$0xff]
      %v6053 = vld [vmem:[%s3 + $0x198] sm:$0xff]
      %v6054 = vld [vmem:[%s3 + $0x1a0] sm:$0xff]
      %v6055 = vld [vmem:[%s3 + $0x1a8] sm:$0xff]
      %v6056 = vld [vmem:[%s3 + $0x1b0] sm:$0xff]
      %v6057 = vld [vmem:[%s3 + $0x1b8] sm:$0xff]
      %v6058 = vld [vmem:[%s3 + $0x1c0] sm:$0xff]
      %v6059 = vld [vmem:[%s3 + $0x1c8] sm:$0xff]
      %v6060 = vld [vmem:[%s3 + $0x1d0] sm:$0xff]
      %v6061 = vld [vmem:[%s3 + $0x1d8] sm:$0xff]
      %v6062 = vld [vmem:[%s3 + $0x1e0] sm:$0xff]
      %v6063 = vld [vmem:[%s3 + $0x1e8] sm:$0xff]
      %v6064 = vld [vmem:[%s3 + $0x1f0] sm:$0xff]
      %v6065 = vld [vmem:[%s3 + $0x1f8] sm:$0xff]
      %v6066 = vld [vmem:[%s3 + $0x200] sm:$0xff]
      %v6067 = vld [vmem:[%s3 + $0x208] sm:$0xff]
      %v6068 = vld [vmem:[%s3 + $0x210] sm:$0xff]
      %v6069 = vld [vmem:[%s3 + $0x218] sm:$0xff]
      %v6070 = vld [vmem:[%s3 + $0x220] sm:$0xff]
      %v6071 = vld [vmem:[%s3 + $0x228] sm:$0xff]
      %v6072 = vld [vmem:[%s3 + $0x230] sm:$0xff]
      %v6073 = vld [vmem:[%s3 + $0x238] sm:$0xff]
      %v6074 = vld [vmem:[%s3 + $0x240] sm:$0xff]
      %v6075 = vld [vmem:[%s3 + $0x248] sm:$0xff]
      %v6076 = vld [vmem:[%s3 + $0x250] sm:$0xff]
      %v6077 = vld [vmem:[%s3 + $0x258] sm:$0xff]
      %v6078 = vld [vmem:[%s3 + $0x260] sm:$0xff]
      %v6079 = vld [vmem:[%s3 + $0x268] sm:$0xff]
      %v6080 = vld [vmem:[%s3 + $0x270] sm:$0xff]
      %v6081 = vld [vmem:[%s3 + $0x278] sm:$0xff]
      %v6082 = vld [vmem:[%s3 + $0x280] sm:$0xff]
      %v6083 = vld [vmem:[%s3 + $0x288] sm:$0xff]
      %v6084 = vld [vmem:[%s3 + $0x290] sm:$0xff]
      %v6085 = vld [vmem:[%s3 + $0x298] sm:$0xff]
      %v6086 = vld [vmem:[%s3 + $0x2a0] sm:$0xff]
      %v6087 = vld [vmem:[%s3 + $0x2a8] sm:$0xff]
      %v6088 = vld [vmem:[%s3 + $0x2b0] sm:$0xff]
      %v6089 = vld [vmem:[%s3 + $0x2b8] sm:$0xff]
      %v6090 = vld [vmem:[%s3 + $0x2c0] sm:$0xff]
      %v6091 = vld [vmem:[%s3 + $0x2c8] sm:$0xff]
      %v6092 = vld [vmem:[%s3 + $0x2d0] sm:$0xff]
      %v6093 = vld [vmem:[%s3 + $0x2d8] sm:$0xff]
      %v6094 = vld [vmem:[%s3 + $0x2e0] sm:$0xff]
      %v6095 = vld [vmem:[%s3 + $0x2e8] sm:$0xff]
      %v6096 = vld [vmem:[%s3 + $0x2f0] sm:$0xff]
      %v6097 = vld [vmem:[%s3 + $0x2f8] sm:$0xff]
      %v6098 = vld [vmem:[%s3 + $0x300] sm:$0xff]
      %v6099 = vld [vmem:[%s3 + $0x308] sm:$0xff]
      %v6100 = vld [vmem:[%s3 + $0x310] sm:$0xff]
      %v6101 = vld [vmem:[%s3 + $0x318] sm:$0xff]
      %v6102 = vld [vmem:[%s3 + $0x320] sm:$0xff]
      %v6103 = vld [vmem:[%s3 + $0x328] sm:$0xff]
      %v6104 = vld [vmem:[%s3 + $0x330] sm:$0xff]
      %v6105 = vld [vmem:[%s3 + $0x338] sm:$0xff]
      %v6106 = vld [vmem:[%s3 + $0x340] sm:$0xff]
      %v6107 = vld [vmem:[%s3 + $0x348] sm:$0xff]
      %v6108 = vld [vmem:[%s3 + $0x350] sm:$0xff]
      %v6109 = vld [vmem:[%s3 + $0x358] sm:$0xff]
      %v6110 = vld [vmem:[%s3 + $0x360] sm:$0xff]
      %v6111 = vld [vmem:[%s3 + $0x368] sm:$0xff]
      %v6112 = vld [vmem:[%s3 + $0x370] sm:$0xff]
      %v6113 = vld [vmem:[%s3 + $0x378] sm:$0xff]
      %v6114 = vld [vmem:[%s3 + $0x380] sm:$0xff]
      %v6115 = vld [vmem:[%s3 + $0x388] sm:$0xff]
      %v6116 = vld [vmem:[%s3 + $0x390] sm:$0xff]
      %v6117 = vld [vmem:[%s3 + $0x398] sm:$0xff]
      %v6118 = vld [vmem:[%s3 + $0x3a0] sm:$0xff]
      %v6119 = vld [vmem:[%s3 + $0x3a8] sm:$0xff]
      %v6120 = vld [vmem:[%s3 + $0x3b0] sm:$0xff]
      %v6121 = vld [vmem:[%s3 + $0x3b8] sm:$0xff]
      %v6122 = vld [vmem:[%s3 + $0x3c0] sm:$0xff]
      %v6123 = vld [vmem:[%s3 + $0x3c8] sm:$0xff]
      %v6124 = vld [vmem:[%s3 + $0x3d0] sm:$0xff]
      %v6125 = vld [vmem:[%s3 + $0x3d8] sm:$0xff]
      %v6126 = vld [vmem:[%s3 + $0x3e0] sm:$0xff]
      %v6127 = vld [vmem:[%s3 + $0x3e8] sm:$0xff]
      %v6128 = vld [vmem:[%s3 + $0x3f0] sm:$0xff]
      %v6129 = vld [vmem:[%s3 + $0x3f8] sm:$0xff]
      %v6130 = vld [vmem:[%s3 + $0x400] sm:$0xff]
      %v6131 = vld [vmem:[%s3 + $0x408] sm:$0xff]
      %v6132 = vld [vmem:[%s3 + $0x410] sm:$0xff]
      %v6133 = vld [vmem:[%s3 + $0x418] sm:$0xff]
      %v6134 = vld [vmem:[%s3 + $0x420] sm:$0xff]
      %v6135 = vld [vmem:[%s3 + $0x428] sm:$0xff]
      %v6136 = vld [vmem:[%s3 + $0x430] sm:$0xff]
      %v6137 = vld [vmem:[%s3 + $0x438] sm:$0xff]
      %v6138 = vld [vmem:[%s3 + $0x440] sm:$0xff]
      %v6139 = vld [vmem:[%s3 + $0x448] sm:$0xff]
      %v6140 = vld [vmem:[%s3 + $0x450] sm:$0xff]
      %v6141 = vld [vmem:[%s3 + $0x458] sm:$0xff]
      %v6142 = vld [vmem:[%s3 + $0x460] sm:$0xff]
      %v6143 = vld [vmem:[%s3 + $0x468] sm:$0xff]
      %v6144 = vld [vmem:[%s3 + $0x470] sm:$0xff]
      %v6145 = vld [vmem:[%s3 + $0x478] sm:$0xff]
      %v6146 = vld [vmem:[%s4] sm:$0x1]
      %v6148 = vlaneseq
      %v6149 = vshrl.u32 %v6148, 7
      %v6150 = vsub.s32 0, %v6149
      %v6151 = vrot.slane %v6146, %v6150
      %6153 = vmatprep.subr.mxu0 0.0
      %6154 = vmatpush1.msra.mxu0 %v6017
      %6155 = vmatprep.subr.mxu0 0.0
      %6156 = vmatpush1.msra.mxu0 %v6016
      %6157 = vmatprep.subr.mxu0 0.0
      %6158 = vmatpush1.msra.mxu0 %v6015
      %6159 = vmatprep.subr.mxu0 0.0
      %6160 = vmatpush1.msra.mxu0 %v6014
      %6161 = vmatprep.subr.mxu0 0.0
      %6162 = vmatpush1.msra.mxu0 %v6013
      %6163 = vmatprep.subr.mxu0 0.0
      %6164 = vmatpush1.msra.mxu0 %v6012
      %6165 = vmatprep.subr.mxu0 0.0
      %6166 = vmatpush1.msra.mxu0 %v6011
      %6167 = vmatprep.subr.mxu0 0.0
      %6168 = vmatpush1.msra.mxu0 %v6010
      %6169 = vmatprep.subr.mxu0 0.0
      %6170 = vmatpush1.msra.mxu0 %v6009
      %6171 = vmatprep.subr.mxu0 0.0
      %6172 = vmatpush1.msra.mxu0 %v6008
      %6173 = vmatprep.subr.mxu0 0.0
      %6174 = vmatpush1.msra.mxu0 %v6007
      %6175 = vmatprep.subr.mxu0 0.0
      %6176 = vmatpush1.msra.mxu0 %v6006
      %6177 = vmatprep.subr.mxu0 0.0
      %6178 = vmatpush1.msra.mxu0 %v6005
      %6179 = vmatprep.subr.mxu0 0.0
      %6180 = vmatpush1.msra.mxu0 %v6004
      %6181 = vmatprep.subr.mxu0 0.0
      %6182 = vmatpush1.msra.mxu0 %v6003
      %6183 = vmatprep.subr.mxu0 0.0
      %6184 = vmatpush1.msra.mxu0 %v6002
      %6185 = vmatprep.subr.mxu0 0.0
      %6186 = vmatpush2.msra.mxu0 %v6033
      %6187 = vmatprep.subr.mxu0 0.0
      %6188 = vmatpush2.msra.mxu0 %v6032
      %6189 = vmatprep.subr.mxu0 0.0
      %6190 = vmatpush2.msra.mxu0 %v6031
      %6191 = vmatprep.subr.mxu0 0.0
      %6192 = vmatpush2.msra.mxu0 %v6030
      %6193 = vmatprep.subr.mxu0 0.0
      %6194 = vmatpush2.msra.mxu0 %v6029
      %6195 = vmatprep.subr.mxu0 0.0
      %6196 = vmatpush2.msra.mxu0 %v6028
      %6197 = vmatprep.subr.mxu0 0.0
      %6198 = vmatpush2.msra.mxu0 %v6027
      %6199 = vmatprep.subr.mxu0 0.0
      %6200 = vmatpush2.msra.mxu0 %v6026
      %6201 = vmatprep.subr.mxu0 0.0
      %6202 = vmatpush2.msra.mxu0 %v6025
      %6203 = vmatprep.subr.mxu0 0.0
      %6204 = vmatpush2.msra.mxu0 %v6024
      %6205 = vmatprep.subr.mxu0 0.0
      %6206 = vmatpush2.msra.mxu0 %v6023
      %6207 = vmatprep.subr.mxu0 0.0
      %6208 = vmatpush2.msra.mxu0 %v6022
      %6209 = vmatprep.subr.mxu0 0.0
      %6210 = vmatpush2.msra.mxu0 %v6021
      %6211 = vmatprep.subr.mxu0 0.0
      %6212 = vmatpush2.msra.mxu0 %v6020
      %6213 = vmatprep.subr.mxu0 0.0
      %6214 = vmatpush2.msra.mxu0 %v6019
      %6215 = vmatprep.subr.mxu0 0.0
      %6216 = vmatpush2.msra.mxu0 %v6018
      %6217 = vmatprep.mubr.f32.mxu0 %v5745
      %6218 = vmatmul.mubr.f32.gmra.mxu0 %v5713
      %v6219 = vpop.f32.mrf.mxu0
      %v6220 = vadd.f32 %v6151, %v6219
      %v6221 = vpop.f32.mrf.mxu0
      %6222 = vmatprep.mubr.f32.mxu0 %v5746
      %6223 = vmatmul.mubr.f32.gmra.mxu0 %v5714
      %v6224 = vpop.f32.mrf.mxu0
      %v6225 = vadd.f32 %v6151, %v6224
      %v6226 = vpop.f32.mrf.mxu0
      %6227 = vmatprep.mubr.f32.mxu0 %v5747
      %6228 = vmatmul.mubr.f32.gmra.mxu0 %v5715
      %v6229 = vpop.f32.mrf.mxu0
      %v6230 = vadd.f32 %v6151, %v6229
      %v6231 = vpop.f32.mrf.mxu0
      %6232 = vmatprep.mubr.f32.mxu0 %v5748
      %6233 = vmatmul.mubr.f32.gmra.mxu0 %v5716
      %v6234 = vpop.f32.mrf.mxu0
      %v6235 = vadd.f32 %v6151, %v6234
      %v6236 = vpop.f32.mrf.mxu0
      %6237 = vmatprep.mubr.f32.mxu0 %v5749
      %6238 = vmatmul.mubr.f32.gmra.mxu0 %v5717
      %v6239 = vpop.f32.mrf.mxu0
      %v6240 = vadd.f32 %v6151, %v6239
      %v6241 = vpop.f32.mrf.mxu0
      %6242 = vmatprep.mubr.f32.mxu0 %v5750
      %6243 = vmatmul.mubr.f32.gmra.mxu0 %v5718
      %v6244 = vpop.f32.mrf.mxu0
      %v6245 = vadd.f32 %v6151, %v6244
      %v6246 = vpop.f32.mrf.mxu0
      %6247 = vmatprep.mubr.f32.mxu0 %v5751
      %6248 = vmatmul.mubr.f32.gmra.mxu0 %v5719
      %v6249 = vpop.f32.mrf.mxu0
      %v6250 = vadd.f32 %v6151, %v6249
      %v6251 = vpop.f32.mrf.mxu0
      %6252 = vmatprep.mubr.f32.mxu0 %v5752
      %6253 = vmatmul.mubr.f32.gmra.mxu0 %v5720
      %v6254 = vpop.f32.mrf.mxu0
      %v6255 = vadd.f32 %v6151, %v6254
      %v6256 = vpop.f32.mrf.mxu0
      %6257 = vmatprep.mubr.f32.mxu0 %v5753
      %6258 = vmatmul.mubr.f32.gmra.mxu0 %v5721
      %v6259 = vpop.f32.mrf.mxu0
      %v6260 = vadd.f32 %v6151, %v6259
      %v6261 = vpop.f32.mrf.mxu0
      %6262 = vmatprep.mubr.f32.mxu0 %v5754
      %6263 = vmatmul.mubr.f32.gmra.mxu0 %v5722
      %v6264 = vpop.f32.mrf.mxu0
      %v6265 = vadd.f32 %v6151, %v6264
      %v6266 = vpop.f32.mrf.mxu0
      %6267 = vmatprep.mubr.f32.mxu0 %v5755
      %6268 = vmatmul.mubr.f32.gmra.mxu0 %v5723
      %v6269 = vpop.f32.mrf.mxu0
      %v6270 = vadd.f32 %v6151, %v6269
      %v6271 = vpop.f32.mrf.mxu0
      %6272 = vmatprep.mubr.f32.mxu0 %v5756
      %6273 = vmatmul.mubr.f32.gmra.mxu0 %v5724
      %v6274 = vpop.f32.mrf.mxu0
      %v6275 = vadd.f32 %v6151, %v6274
      %v6276 = vpop.f32.mrf.mxu0
      %6277 = vmatprep.mubr.f32.mxu0 %v5757
      %6278 = vmatmul.mubr.f32.gmra.mxu0 %v5725
      %v6279 = vpop.f32.mrf.mxu0
      %v6280 = vadd.f32 %v6151, %v6279
      %v6281 = vpop.f32.mrf.mxu0
      %6282 = vmatprep.mubr.f32.mxu0 %v5758
      %6283 = vmatmul.mubr.f32.gmra.mxu0 %v5726
      %v6284 = vpop.f32.mrf.mxu0
      %v6285 = vadd.f32 %v6151, %v6284
      %v6286 = vpop.f32.mrf.mxu0
      %6287 = vmatprep.mubr.f32.mxu0 %v5759
      %6288 = vmatmul.mubr.f32.gmra.mxu0 %v5727
      %v6289 = vpop.f32.mrf.mxu0
      %v6290 = vadd.f32 %v6151, %v6289
      %v6291 = vpop.f32.mrf.mxu0
      %6292 = vmatprep.mubr.f32.mxu0 %v5760
      %6293 = vmatmul.mubr.f32.gmra.mxu0 %v5728
      %v6294 = vpop.f32.mrf.mxu0
      %v6295 = vadd.f32 %v6151, %v6294
      %v6296 = vpop.f32.mrf.mxu0
      %6297 = vmatprep.mubr.f32.mxu0 %v5761
      %6298 = vmatmul.mubr.f32.gmra.mxu0 %v5729
      %v6299 = vpop.f32.mrf.mxu0
      %v6300 = vadd.f32 %v6151, %v6299
      %v6301 = vpop.f32.mrf.mxu0
      %6302 = vmatprep.mubr.f32.mxu0 %v5762
      %6303 = vmatmul.mubr.f32.gmra.mxu0 %v5730
      %v6304 = vpop.f32.mrf.mxu0
      %v6305 = vadd.f32 %v6151, %v6304
      %v6306 = vpop.f32.mrf.mxu0
      %6307 = vmatprep.mubr.f32.mxu0 %v5763
      %6308 = vmatmul.mubr.f32.gmra.mxu0 %v5731
      %v6309 = vpop.f32.mrf.mxu0
      %v6310 = vadd.f32 %v6151, %v6309
      %v6311 = vpop.f32.mrf.mxu0
      %6312 = vmatprep.mubr.f32.mxu0 %v5764
      %6313 = vmatmul.mubr.f32.gmra.mxu0 %v5732
      %v6314 = vpop.f32.mrf.mxu0
      %v6315 = vadd.f32 %v6151, %v6314
      %v6316 = vpop.f32.mrf.mxu0
      %6317 = vmatprep.mubr.f32.mxu0 %v5765
      %6318 = vmatmul.mubr.f32.gmra.mxu0 %v5733
      %v6319 = vpop.f32.mrf.mxu0
      %v6320 = vadd.f32 %v6151, %v6319
      %v6321 = vpop.f32.mrf.mxu0
      %6322 = vmatprep.mubr.f32.mxu0 %v5766
      %6323 = vmatmul.mubr.f32.gmra.mxu0 %v5734
      %v6324 = vpop.f32.mrf.mxu0
      %v6325 = vadd.f32 %v6151, %v6324
      %v6326 = vpop.f32.mrf.mxu0
      %6327 = vmatprep.mubr.f32.mxu0 %v5767
      %6328 = vmatmul.mubr.f32.gmra.mxu0 %v5735
      %v6329 = vpop.f32.mrf.mxu0
      %v6330 = vadd.f32 %v6151, %v6329
      %v6331 = vpop.f32.mrf.mxu0
      %6332 = vmatprep.mubr.f32.mxu0 %v5768
      %6333 = vmatmul.mubr.f32.gmra.mxu0 %v5736
      %v6334 = vpop.f32.mrf.mxu0
      %v6335 = vadd.f32 %v6151, %v6334
      %v6336 = vpop.f32.mrf.mxu0
      %6337 = vmatprep.mubr.f32.mxu0 %v5769
      %6338 = vmatmul.mubr.f32.gmra.mxu0 %v5737
      %v6339 = vpop.f32.mrf.mxu0
      %v6340 = vadd.f32 %v6151, %v6339
      %v6341 = vpop.f32.mrf.mxu0
      %6342 = vmatprep.mubr.f32.mxu0 %v5770
      %6343 = vmatmul.mubr.f32.gmra.mxu0 %v5738
      %v6344 = vpop.f32.mrf.mxu0
      %v6345 = vadd.f32 %v6151, %v6344
      %v6346 = vpop.f32.mrf.mxu0
      %6347 = vmatprep.mubr.f32.mxu0 %v5771
      %6348 = vmatmul.mubr.f32.gmra.mxu0 %v5739
      %v6349 = vpop.f32.mrf.mxu0
      %v6350 = vadd.f32 %v6151, %v6349
      %v6351 = vpop.f32.mrf.mxu0
      %6352 = vmatprep.mubr.f32.mxu0 %v5772
      %6353 = vmatmul.mubr.f32.gmra.mxu0 %v5740
      %v6354 = vpop.f32.mrf.mxu0
      %v6355 = vadd.f32 %v6151, %v6354
      %v6356 = vpop.f32.mrf.mxu0
      %6357 = vmatprep.mubr.f32.mxu0 %v5773
      %6358 = vmatmul.mubr.f32.gmra.mxu0 %v5741
      %v6359 = vpop.f32.mrf.mxu0
      %v6360 = vadd.f32 %v6151, %v6359
      %v6361 = vpop.f32.mrf.mxu0
      %6362 = vmatprep.mubr.f32.mxu0 %v5774
      %6363 = vmatmul.mubr.f32.gmra.mxu0 %v5742
      %v6364 = vpop.f32.mrf.mxu0
      %v6365 = vadd.f32 %v6151, %v6364
      %v6366 = vpop.f32.mrf.mxu0
      %6367 = vmatprep.mubr.f32.mxu0 %v5775
      %6368 = vmatmul.mubr.f32.gmra.mxu0 %v5743
      %v6369 = vpop.f32.mrf.mxu0
      %v6370 = vadd.f32 %v6151, %v6369
      %v6371 = vpop.f32.mrf.mxu0
      %6372 = vmatprep.mubr.f32.mxu0 %v5776
      %6373 = vmatmul.mubr.f32.gmra.mxu0 %v5744
      %v6374 = vpop.f32.mrf.mxu0
      %v6375 = vadd.f32 %v6151, %v6374
      %v6376 = vpop.f32.mrf.mxu0
      %6377 = vdwg.mxu0
      %6378 = vmatprep.subr.mxu0 0.0
      %6379 = vmatpush1.msra.mxu0 %v6049
      %6380 = vmatprep.subr.mxu0 0.0
      %6381 = vmatpush1.msra.mxu0 %v6048
      %6382 = vmatprep.subr.mxu0 0.0
      %6383 = vmatpush1.msra.mxu0 %v6047
      %6384 = vmatprep.subr.mxu0 0.0
      %6385 = vmatpush1.msra.mxu0 %v6046
      %6386 = vmatprep.subr.mxu0 0.0
      %6387 = vmatpush1.msra.mxu0 %v6045
      %6388 = vmatprep.subr.mxu0 0.0
      %6389 = vmatpush1.msra.mxu0 %v6044
      %6390 = vmatprep.subr.mxu0 0.0
      %6391 = vmatpush1.msra.mxu0 %v6043
      %6392 = vmatprep.subr.mxu0 0.0
      %6393 = vmatpush1.msra.mxu0 %v6042
      %6394 = vmatprep.subr.mxu0 0.0
      %6395 = vmatpush1.msra.mxu0 %v6041
      %6396 = vmatprep.subr.mxu0 0.0
      %6397 = vmatpush1.msra.mxu0 %v6040
      %6398 = vmatprep.subr.mxu0 0.0
      %6399 = vmatpush1.msra.mxu0 %v6039
      %6400 = vmatprep.subr.mxu0 0.0
      %6401 = vmatpush1.msra.mxu0 %v6038
      %6402 = vmatprep.subr.mxu0 0.0
      %6403 = vmatpush1.msra.mxu0 %v6037
      %6404 = vmatprep.subr.mxu0 0.0
      %6405 = vmatpush1.msra.mxu0 %v6036
      %6406 = vmatprep.subr.mxu0 0.0
      %6407 = vmatpush1.msra.mxu0 %v6035
      %6408 = vmatprep.subr.mxu0 0.0
      %6409 = vmatpush1.msra.mxu0 %v6034
      %6410 = vmatprep.subr.mxu0 0.0
      %6411 = vmatpush2.msra.mxu0 %v6065
      %6412 = vmatprep.subr.mxu0 0.0
      %6413 = vmatpush2.msra.mxu0 %v6064
      %6414 = vmatprep.subr.mxu0 0.0
      %6415 = vmatpush2.msra.mxu0 %v6063
      %6416 = vmatprep.subr.mxu0 0.0
      %6417 = vmatpush2.msra.mxu0 %v6062
      %6418 = vmatprep.subr.mxu0 0.0
      %6419 = vmatpush2.msra.mxu0 %v6061
      %6420 = vmatprep.subr.mxu0 0.0
      %6421 = vmatpush2.msra.mxu0 %v6060
      %6422 = vmatprep.subr.mxu0 0.0
      %6423 = vmatpush2.msra.mxu0 %v6059
      %6424 = vmatprep.subr.mxu0 0.0
      %6425 = vmatpush2.msra.mxu0 %v6058
      %6426 = vmatprep.subr.mxu0 0.0
      %6427 = vmatpush2.msra.mxu0 %v6057
      %6428 = vmatprep.subr.mxu0 0.0
      %6429 = vmatpush2.msra.mxu0 %v6056
      %6430 = vmatprep.subr.mxu0 0.0
      %6431 = vmatpush2.msra.mxu0 %v6055
      %6432 = vmatprep.subr.mxu0 0.0
      %6433 = vmatpush2.msra.mxu0 %v6054
      %6434 = vmatprep.subr.mxu0 0.0
      %6435 = vmatpush2.msra.mxu0 %v6053
      %6436 = vmatprep.subr.mxu0 0.0
      %6437 = vmatpush2.msra.mxu0 %v6052
      %6438 = vmatprep.subr.mxu0 0.0
      %6439 = vmatpush2.msra.mxu0 %v6051
      %6440 = vmatprep.subr.mxu0 0.0
      %6441 = vmatpush2.msra.mxu0 %v6050
      %6442 = vmatprep.mubr.f32.mxu0 %v5809
      %6443 = vmatmul.mubr.f32.gmra.mxu0 %v5777
      %v6444 = vpop.f32.mrf.mxu0
      %v6445 = vadd.f32 %v6220, %v6444
      %v6446 = vpop.f32.mrf.mxu0
      %6447 = vmatprep.mubr.f32.mxu0 %v5810
      %6448 = vmatmul.mubr.f32.gmra.mxu0 %v5778
      %v6449 = vpop.f32.mrf.mxu0
      %v6450 = vadd.f32 %v6225, %v6449
      %v6451 = vpop.f32.mrf.mxu0
      %6452 = vmatprep.mubr.f32.mxu0 %v5811
      %6453 = vmatmul.mubr.f32.gmra.mxu0 %v5779
      %v6454 = vpop.f32.mrf.mxu0
      %v6455 = vadd.f32 %v6230, %v6454
      %v6456 = vpop.f32.mrf.mxu0
      %6457 = vmatprep.mubr.f32.mxu0 %v5812
      %6458 = vmatmul.mubr.f32.gmra.mxu0 %v5780
      %v6459 = vpop.f32.mrf.mxu0
      %v6460 = vadd.f32 %v6235, %v6459
      %v6461 = vpop.f32.mrf.mxu0
      %6462 = vmatprep.mubr.f32.mxu0 %v5813
      %6463 = vmatmul.mubr.f32.gmra.mxu0 %v5781
      %v6464 = vpop.f32.mrf.mxu0
      %v6465 = vadd.f32 %v6240, %v6464
      %v6466 = vpop.f32.mrf.mxu0
      %6467 = vmatprep.mubr.f32.mxu0 %v5814
      %6468 = vmatmul.mubr.f32.gmra.mxu0 %v5782
      %v6469 = vpop.f32.mrf.mxu0
      %v6470 = vadd.f32 %v6245, %v6469
      %v6471 = vpop.f32.mrf.mxu0
      %6472 = vmatprep.mubr.f32.mxu0 %v5815
      %6473 = vmatmul.mubr.f32.gmra.mxu0 %v5783
      %v6474 = vpop.f32.mrf.mxu0
      %v6475 = vadd.f32 %v6250, %v6474
      %v6476 = vpop.f32.mrf.mxu0
      %6477 = vmatprep.mubr.f32.mxu0 %v5816
      %6478 = vmatmul.mubr.f32.gmra.mxu0 %v5784
      %v6479 = vpop.f32.mrf.mxu0
      %v6480 = vadd.f32 %v6255, %v6479
      %v6481 = vpop.f32.mrf.mxu0
      %6482 = vmatprep.mubr.f32.mxu0 %v5817
      %6483 = vmatmul.mubr.f32.gmra.mxu0 %v5785
      %v6484 = vpop.f32.mrf.mxu0
      %v6485 = vadd.f32 %v6260, %v6484
      %v6486 = vpop.f32.mrf.mxu0
      %6487 = vmatprep.mubr.f32.mxu0 %v5818
      %6488 = vmatmul.mubr.f32.gmra.mxu0 %v5786
      %v6489 = vpop.f32.mrf.mxu0
      %v6490 = vadd.f32 %v6265, %v6489
      %v6491 = vpop.f32.mrf.mxu0
      %6492 = vmatprep.mubr.f32.mxu0 %v5819
      %6493 = vmatmul.mubr.f32.gmra.mxu0 %v5787
      %v6494 = vpop.f32.mrf.mxu0
      %v6495 = vadd.f32 %v6270, %v6494
      %v6496 = vpop.f32.mrf.mxu0
      %6497 = vmatprep.mubr.f32.mxu0 %v5820
      %6498 = vmatmul.mubr.f32.gmra.mxu0 %v5788
      %v6499 = vpop.f32.mrf.mxu0
      %v6500 = vadd.f32 %v6275, %v6499
      %v6501 = vpop.f32.mrf.mxu0
      %6502 = vmatprep.mubr.f32.mxu0 %v5821
      %6503 = vmatmul.mubr.f32.gmra.mxu0 %v5789
      %v6504 = vpop.f32.mrf.mxu0
      %v6505 = vadd.f32 %v6280, %v6504
      %v6506 = vpop.f32.mrf.mxu0
      %6507 = vmatprep.mubr.f32.mxu0 %v5822
      %6508 = vmatmul.mubr.f32.gmra.mxu0 %v5790
      %v6509 = vpop.f32.mrf.mxu0
      %v6510 = vadd.f32 %v6285, %v6509
      %v6511 = vpop.f32.mrf.mxu0
      %6512 = vmatprep.mubr.f32.mxu0 %v5823
      %6513 = vmatmul.mubr.f32.gmra.mxu0 %v5791
      %v6514 = vpop.f32.mrf.mxu0
      %v6515 = vadd.f32 %v6290, %v6514
      %v6516 = vpop.f32.mrf.mxu0
      %6517 = vmatprep.mubr.f32.mxu0 %v5824
      %6518 = vmatmul.mubr.f32.gmra.mxu0 %v5792
      %v6519 = vpop.f32.mrf.mxu0
      %v6520 = vadd.f32 %v6295, %v6519
      %v6521 = vpop.f32.mrf.mxu0
      %6522 = vmatprep.mubr.f32.mxu0 %v5825
      %6523 = vmatmul.mubr.f32.gmra.mxu0 %v5793
      %v6524 = vpop.f32.mrf.mxu0
      %v6525 = vadd.f32 %v6300, %v6524
      %v6526 = vpop.f32.mrf.mxu0
      %6527 = vmatprep.mubr.f32.mxu0 %v5826
      %6528 = vmatmul.mubr.f32.gmra.mxu0 %v5794
      %v6529 = vpop.f32.mrf.mxu0
      %v6530 = vadd.f32 %v6305, %v6529
      %v6531 = vpop.f32.mrf.mxu0
      %6532 = vmatprep.mubr.f32.mxu0 %v5827
      %6533 = vmatmul.mubr.f32.gmra.mxu0 %v5795
      %v6534 = vpop.f32.mrf.mxu0
      %v6535 = vadd.f32 %v6310, %v6534
      %v6536 = vpop.f32.mrf.mxu0
      %6537 = vmatprep.mubr.f32.mxu0 %v5828
      %6538 = vmatmul.mubr.f32.gmra.mxu0 %v5796
      %v6539 = vpop.f32.mrf.mxu0
      %v6540 = vadd.f32 %v6315, %v6539
      %v6541 = vpop.f32.mrf.mxu0
      %6542 = vmatprep.mubr.f32.mxu0 %v5829
      %6543 = vmatmul.mubr.f32.gmra.mxu0 %v5797
      %v6544 = vpop.f32.mrf.mxu0
      %v6545 = vadd.f32 %v6320, %v6544
      %v6546 = vpop.f32.mrf.mxu0
      %6547 = vmatprep.mubr.f32.mxu0 %v5830
      %6548 = vmatmul.mubr.f32.gmra.mxu0 %v5798
      %v6549 = vpop.f32.mrf.mxu0
      %v6550 = vadd.f32 %v6325, %v6549
      %v6551 = vpop.f32.mrf.mxu0
      %6552 = vmatprep.mubr.f32.mxu0 %v5831
      %6553 = vmatmul.mubr.f32.gmra.mxu0 %v5799
      %v6554 = vpop.f32.mrf.mxu0
      %v6555 = vadd.f32 %v6330, %v6554
      %v6556 = vpop.f32.mrf.mxu0
      %6557 = vmatprep.mubr.f32.mxu0 %v5832
      %6558 = vmatmul.mubr.f32.gmra.mxu0 %v5800
      %v6559 = vpop.f32.mrf.mxu0
      %v6560 = vadd.f32 %v6335, %v6559
      %v6561 = vpop.f32.mrf.mxu0
      %6562 = vmatprep.mubr.f32.mxu0 %v5833
      %6563 = vmatmul.mubr.f32.gmra.mxu0 %v5801
      %v6564 = vpop.f32.mrf.mxu0
      %v6565 = vadd.f32 %v6340, %v6564
      %v6566 = vpop.f32.mrf.mxu0
      %6567 = vmatprep.mubr.f32.mxu0 %v5834
      %6568 = vmatmul.mubr.f32.gmra.mxu0 %v5802
      %v6569 = vpop.f32.mrf.mxu0
      %v6570 = vadd.f32 %v6345, %v6569
      %v6571 = vpop.f32.mrf.mxu0
      %6572 = vmatprep.mubr.f32.mxu0 %v5835
      %6573 = vmatmul.mubr.f32.gmra.mxu0 %v5803
      %v6574 = vpop.f32.mrf.mxu0
      %v6575 = vadd.f32 %v6350, %v6574
      %v6576 = vpop.f32.mrf.mxu0
      %6577 = vmatprep.mubr.f32.mxu0 %v5836
      %6578 = vmatmul.mubr.f32.gmra.mxu0 %v5804
      %v6579 = vpop.f32.mrf.mxu0
      %v6580 = vadd.f32 %v6355, %v6579
      %v6581 = vpop.f32.mrf.mxu0
      %6582 = vmatprep.mubr.f32.mxu0 %v5837
      %6583 = vmatmul.mubr.f32.gmra.mxu0 %v5805
      %v6584 = vpop.f32.mrf.mxu0
      %v6585 = vadd.f32 %v6360, %v6584
      %v6586 = vpop.f32.mrf.mxu0
      %6587 = vmatprep.mubr.f32.mxu0 %v5838
      %6588 = vmatmul.mubr.f32.gmra.mxu0 %v5806
      %v6589 = vpop.f32.mrf.mxu0
      %v6590 = vadd.f32 %v6365, %v6589
      %v6591 = vpop.f32.mrf.mxu0
      %6592 = vmatprep.mubr.f32.mxu0 %v5839
      %6593 = vmatmul.mubr.f32.gmra.mxu0 %v5807
      %v6594 = vpop.f32.mrf.mxu0
      %v6595 = vadd.f32 %v6370, %v6594
      %v6596 = vpop.f32.mrf.mxu0
      %6597 = vmatprep.mubr.f32.mxu0 %v5840
      %6598 = vmatmul.mubr.f32.gmra.mxu0 %v5808
      %v6599 = vpop.f32.mrf.mxu0
      %v6600 = vadd.f32 %v6375, %v6599
      %v6601 = vpop.f32.mrf.mxu0
      %6602 = vdwg.mxu0
      %6603 = vmatprep.subr.mxu0 0.0
      %6604 = vmatpush1.msra.mxu0 %v6081
      %6605 = vmatprep.subr.mxu0 0.0
      %6606 = vmatpush1.msra.mxu0 %v6080
      %6607 = vmatprep.subr.mxu0 0.0
      %6608 = vmatpush1.msra.mxu0 %v6079
      %6609 = vmatprep.subr.mxu0 0.0
      %6610 = vmatpush1.msra.mxu0 %v6078
      %6611 = vmatprep.subr.mxu0 0.0
      %6612 = vmatpush1.msra.mxu0 %v6077
      %6613 = vmatprep.subr.mxu0 0.0
      %6614 = vmatpush1.msra.mxu0 %v6076
      %6615 = vmatprep.subr.mxu0 0.0
      %6616 = vmatpush1.msra.mxu0 %v6075
      %6617 = vmatprep.subr.mxu0 0.0
      %6618 = vmatpush1.msra.mxu0 %v6074
      %6619 = vmatprep.subr.mxu0 0.0
      %6620 = vmatpush1.msra.mxu0 %v6073
      %6621 = vmatprep.subr.mxu0 0.0
      %6622 = vmatpush1.msra.mxu0 %v6072
      %6623 = vmatprep.subr.mxu0 0.0
      %6624 = vmatpush1.msra.mxu0 %v6071
      %6625 = vmatprep.subr.mxu0 0.0
      %6626 = vmatpush1.msra.mxu0 %v6070
      %6627 = vmatprep.subr.mxu0 0.0
      %6628 = vmatpush1.msra.mxu0 %v6069
      %6629 = vmatprep.subr.mxu0 0.0
      %6630 = vmatpush1.msra.mxu0 %v6068
      %6631 = vmatprep.subr.mxu0 0.0
      %6632 = vmatpush1.msra.mxu0 %v6067
      %6633 = vmatprep.subr.mxu0 0.0
      %6634 = vmatpush1.msra.mxu0 %v6066
      %6635 = vmatprep.subr.mxu0 0.0
      %6636 = vmatpush2.msra.mxu0 %v6097
      %6637 = vmatprep.subr.mxu0 0.0
      %6638 = vmatpush2.msra.mxu0 %v6096
      %6639 = vmatprep.subr.mxu0 0.0
      %6640 = vmatpush2.msra.mxu0 %v6095
      %6641 = vmatprep.subr.mxu0 0.0
      %6642 = vmatpush2.msra.mxu0 %v6094
      %6643 = vmatprep.subr.mxu0 0.0
      %6644 = vmatpush2.msra.mxu0 %v6093
      %6645 = vmatprep.subr.mxu0 0.0
      %6646 = vmatpush2.msra.mxu0 %v6092
      %6647 = vmatprep.subr.mxu0 0.0
      %6648 = vmatpush2.msra.mxu0 %v6091
      %6649 = vmatprep.subr.mxu0 0.0
      %6650 = vmatpush2.msra.mxu0 %v6090
      %6651 = vmatprep.subr.mxu0 0.0
      %6652 = vmatpush2.msra.mxu0 %v6089
      %6653 = vmatprep.subr.mxu0 0.0
      %6654 = vmatpush2.msra.mxu0 %v6088
      %6655 = vmatprep.subr.mxu0 0.0
      %6656 = vmatpush2.msra.mxu0 %v6087
      %6657 = vmatprep.subr.mxu0 0.0
      %6658 = vmatpush2.msra.mxu0 %v6086
      %6659 = vmatprep.subr.mxu0 0.0
      %6660 = vmatpush2.msra.mxu0 %v6085
      %6661 = vmatprep.subr.mxu0 0.0
      %6662 = vmatpush2.msra.mxu0 %v6084
      %6663 = vmatprep.subr.mxu0 0.0
      %6664 = vmatpush2.msra.mxu0 %v6083
      %6665 = vmatprep.subr.mxu0 0.0
      %6666 = vmatpush2.msra.mxu0 %v6082
      %6667 = vmatprep.mubr.f32.mxu0 %v5873
      %6668 = vmatmul.mubr.f32.gmra.mxu0 %v5841
      %v6669 = vpop.f32.mrf.mxu0
      %v6670 = vadd.f32 %v6445, %v6669
      %v6671 = vpop.f32.mrf.mxu0
      %6672 = vmatprep.mubr.f32.mxu0 %v5874
      %6673 = vmatmul.mubr.f32.gmra.mxu0 %v5842
      %v6674 = vpop.f32.mrf.mxu0
      %v6675 = vadd.f32 %v6450, %v6674
      %v6676 = vpop.f32.mrf.mxu0
      %6677 = vmatprep.mubr.f32.mxu0 %v5875
      %6678 = vmatmul.mubr.f32.gmra.mxu0 %v5843
      %v6679 = vpop.f32.mrf.mxu0
      %v6680 = vadd.f32 %v6455, %v6679
      %v6681 = vpop.f32.mrf.mxu0
      %6682 = vmatprep.mubr.f32.mxu0 %v5876
      %6683 = vmatmul.mubr.f32.gmra.mxu0 %v5844
      %v6684 = vpop.f32.mrf.mxu0
      %v6685 = vadd.f32 %v6460, %v6684
      %v6686 = vpop.f32.mrf.mxu0
      %6687 = vmatprep.mubr.f32.mxu0 %v5877
      %6688 = vmatmul.mubr.f32.gmra.mxu0 %v5845
      %v6689 = vpop.f32.mrf.mxu0
      %v6690 = vadd.f32 %v6465, %v6689
      %v6691 = vpop.f32.mrf.mxu0
      %6692 = vmatprep.mubr.f32.mxu0 %v5878
      %6693 = vmatmul.mubr.f32.gmra.mxu0 %v5846
      %v6694 = vpop.f32.mrf.mxu0
      %v6695 = vadd.f32 %v6470, %v6694
      %v6696 = vpop.f32.mrf.mxu0
      %6697 = vmatprep.mubr.f32.mxu0 %v5879
      %6698 = vmatmul.mubr.f32.gmra.mxu0 %v5847
      %v6699 = vpop.f32.mrf.mxu0
      %v6700 = vadd.f32 %v6475, %v6699
      %v6701 = vpop.f32.mrf.mxu0
      %6702 = vmatprep.mubr.f32.mxu0 %v5880
      %6703 = vmatmul.mubr.f32.gmra.mxu0 %v5848
      %v6704 = vpop.f32.mrf.mxu0
      %v6705 = vadd.f32 %v6480, %v6704
      %v6706 = vpop.f32.mrf.mxu0
      %6707 = vmatprep.mubr.f32.mxu0 %v5881
      %6708 = vmatmul.mubr.f32.gmra.mxu0 %v5849
      %v6709 = vpop.f32.mrf.mxu0
      %v6710 = vadd.f32 %v6485, %v6709
      %v6711 = vpop.f32.mrf.mxu0
      %6712 = vmatprep.mubr.f32.mxu0 %v5882
      %6713 = vmatmul.mubr.f32.gmra.mxu0 %v5850
      %v6714 = vpop.f32.mrf.mxu0
      %v6715 = vadd.f32 %v6490, %v6714
      %v6716 = vpop.f32.mrf.mxu0
      %6717 = vmatprep.mubr.f32.mxu0 %v5883
      %6718 = vmatmul.mubr.f32.gmra.mxu0 %v5851
      %v6719 = vpop.f32.mrf.mxu0
      %v6720 = vadd.f32 %v6495, %v6719
      %v6721 = vpop.f32.mrf.mxu0
      %6722 = vmatprep.mubr.f32.mxu0 %v5884
      %6723 = vmatmul.mubr.f32.gmra.mxu0 %v5852
      %v6724 = vpop.f32.mrf.mxu0
      %v6725 = vadd.f32 %v6500, %v6724
      %v6726 = vpop.f32.mrf.mxu0
      %6727 = vmatprep.mubr.f32.mxu0 %v5885
      %6728 = vmatmul.mubr.f32.gmra.mxu0 %v5853
      %v6729 = vpop.f32.mrf.mxu0
      %v6730 = vadd.f32 %v6505, %v6729
      %v6731 = vpop.f32.mrf.mxu0
      %6732 = vmatprep.mubr.f32.mxu0 %v5886
      %6733 = vmatmul.mubr.f32.gmra.mxu0 %v5854
      %v6734 = vpop.f32.mrf.mxu0
      %v6735 = vadd.f32 %v6510, %v6734
      %v6736 = vpop.f32.mrf.mxu0
      %6737 = vmatprep.mubr.f32.mxu0 %v5887
      %6738 = vmatmul.mubr.f32.gmra.mxu0 %v5855
      %v6739 = vpop.f32.mrf.mxu0
      %v6740 = vadd.f32 %v6515, %v6739
      %v6741 = vpop.f32.mrf.mxu0
      %6742 = vmatprep.mubr.f32.mxu0 %v5888
      %6743 = vmatmul.mubr.f32.gmra.mxu0 %v5856
      %v6744 = vpop.f32.mrf.mxu0
      %v6745 = vadd.f32 %v6520, %v6744
      %v6746 = vpop.f32.mrf.mxu0
      %6747 = vmatprep.mubr.f32.mxu0 %v5889
      %6748 = vmatmul.mubr.f32.gmra.mxu0 %v5857
      %v6749 = vpop.f32.mrf.mxu0
      %v6750 = vadd.f32 %v6525, %v6749
      %v6751 = vpop.f32.mrf.mxu0
      %6752 = vmatprep.mubr.f32.mxu0 %v5890
      %6753 = vmatmul.mubr.f32.gmra.mxu0 %v5858
      %v6754 = vpop.f32.mrf.mxu0
      %v6755 = vadd.f32 %v6530, %v6754
      %v6756 = vpop.f32.mrf.mxu0
      %6757 = vmatprep.mubr.f32.mxu0 %v5891
      %6758 = vmatmul.mubr.f32.gmra.mxu0 %v5859
      %v6759 = vpop.f32.mrf.mxu0
      %v6760 = vadd.f32 %v6535, %v6759
      %v6761 = vpop.f32.mrf.mxu0
      %6762 = vmatprep.mubr.f32.mxu0 %v5892
      %6763 = vmatmul.mubr.f32.gmra.mxu0 %v5860
      %v6764 = vpop.f32.mrf.mxu0
      %v6765 = vadd.f32 %v6540, %v6764
      %v6766 = vpop.f32.mrf.mxu0
      %6767 = vmatprep.mubr.f32.mxu0 %v5893
      %6768 = vmatmul.mubr.f32.gmra.mxu0 %v5861
      %v6769 = vpop.f32.mrf.mxu0
      %v6770 = vadd.f32 %v6545, %v6769
      %v6771 = vpop.f32.mrf.mxu0
      %6772 = vmatprep.mubr.f32.mxu0 %v5894
      %6773 = vmatmul.mubr.f32.gmra.mxu0 %v5862
      %v6774 = vpop.f32.mrf.mxu0
      %v6775 = vadd.f32 %v6550, %v6774
      %v6776 = vpop.f32.mrf.mxu0
      %6777 = vmatprep.mubr.f32.mxu0 %v5895
      %6778 = vmatmul.mubr.f32.gmra.mxu0 %v5863
      %v6779 = vpop.f32.mrf.mxu0
      %v6780 = vadd.f32 %v6555, %v6779
      %v6781 = vpop.f32.mrf.mxu0
      %6782 = vmatprep.mubr.f32.mxu0 %v5896
      %6783 = vmatmul.mubr.f32.gmra.mxu0 %v5864
      %v6784 = vpop.f32.mrf.mxu0
      %v6785 = vadd.f32 %v6560, %v6784
      %v6786 = vpop.f32.mrf.mxu0
      %6787 = vmatprep.mubr.f32.mxu0 %v5897
      %6788 = vmatmul.mubr.f32.gmra.mxu0 %v5865
      %v6789 = vpop.f32.mrf.mxu0
      %v6790 = vadd.f32 %v6565, %v6789
      %v6791 = vpop.f32.mrf.mxu0
      %6792 = vmatprep.mubr.f32.mxu0 %v5898
      %6793 = vmatmul.mubr.f32.gmra.mxu0 %v5866
      %v6794 = vpop.f32.mrf.mxu0
      %v6795 = vadd.f32 %v6570, %v6794
      %v6796 = vpop.f32.mrf.mxu0
      %6797 = vmatprep.mubr.f32.mxu0 %v5899
      %6798 = vmatmul.mubr.f32.gmra.mxu0 %v5867
      %v6799 = vpop.f32.mrf.mxu0
      %v6800 = vadd.f32 %v6575, %v6799
      %v6801 = vpop.f32.mrf.mxu0
      %6802 = vmatprep.mubr.f32.mxu0 %v5900
      %6803 = vmatmul.mubr.f32.gmra.mxu0 %v5868
      %v6804 = vpop.f32.mrf.mxu0
      %v6805 = vadd.f32 %v6580, %v6804
      %v6806 = vpop.f32.mrf.mxu0
      %6807 = vmatprep.mubr.f32.mxu0 %v5901
      %6808 = vmatmul.mubr.f32.gmra.mxu0 %v5869
      %v6809 = vpop.f32.mrf.mxu0
      %v6810 = vadd.f32 %v6585, %v6809
      %v6811 = vpop.f32.mrf.mxu0
      %6812 = vmatprep.mubr.f32.mxu0 %v5902
      %6813 = vmatmul.mubr.f32.gmra.mxu0 %v5870
      %v6814 = vpop.f32.mrf.mxu0
      %v6815 = vadd.f32 %v6590, %v6814
      %v6816 = vpop.f32.mrf.mxu0
      %6817 = vmatprep.mubr.f32.mxu0 %v5903
      %6818 = vmatmul.mubr.f32.gmra.mxu0 %v5871
      %v6819 = vpop.f32.mrf.mxu0
      %v6820 = vadd.f32 %v6595, %v6819
      %v6821 = vpop.f32.mrf.mxu0
      %6822 = vmatprep.mubr.f32.mxu0 %v5904
      %6823 = vmatmul.mubr.f32.gmra.mxu0 %v5872
      %v6824 = vpop.f32.mrf.mxu0
      %v6825 = vadd.f32 %v6600, %v6824
      %v6826 = vpop.f32.mrf.mxu0
      %6827 = vdwg.mxu0
      %6828 = vmatprep.subr.mxu0 0.0
      %6829 = vmatpush1.msra.mxu0 %v6113
      %6830 = vmatprep.subr.mxu0 0.0
      %6831 = vmatpush1.msra.mxu0 %v6112
      %6832 = vmatprep.subr.mxu0 0.0
      %6833 = vmatpush1.msra.mxu0 %v6111
      %6834 = vmatprep.subr.mxu0 0.0
      %6835 = vmatpush1.msra.mxu0 %v6110
      %6836 = vmatprep.subr.mxu0 0.0
      %6837 = vmatpush1.msra.mxu0 %v6109
      %6838 = vmatprep.subr.mxu0 0.0
      %6839 = vmatpush1.msra.mxu0 %v6108
      %6840 = vmatprep.subr.mxu0 0.0
      %6841 = vmatpush1.msra.mxu0 %v6107
      %6842 = vmatprep.subr.mxu0 0.0
      %6843 = vmatpush1.msra.mxu0 %v6106
      %6844 = vmatprep.subr.mxu0 0.0
      %6845 = vmatpush1.msra.mxu0 %v6105
      %6846 = vmatprep.subr.mxu0 0.0
      %6847 = vmatpush1.msra.mxu0 %v6104
      %6848 = vmatprep.subr.mxu0 0.0
      %6849 = vmatpush1.msra.mxu0 %v6103
      %6850 = vmatprep.subr.mxu0 0.0
      %6851 = vmatpush1.msra.mxu0 %v6102
      %6852 = vmatprep.subr.mxu0 0.0
      %6853 = vmatpush1.msra.mxu0 %v6101
      %6854 = vmatprep.subr.mxu0 0.0
      %6855 = vmatpush1.msra.mxu0 %v6100
      %6856 = vmatprep.subr.mxu0 0.0
      %6857 = vmatpush1.msra.mxu0 %v6099
      %6858 = vmatprep.subr.mxu0 0.0
      %6859 = vmatpush1.msra.mxu0 %v6098
      %6860 = vmatprep.subr.mxu0 0.0
      %6861 = vmatpush2.msra.mxu0 %v6129
      %6862 = vmatprep.subr.mxu0 0.0
      %6863 = vmatpush2.msra.mxu0 %v6128
      %6864 = vmatprep.subr.mxu0 0.0
      %6865 = vmatpush2.msra.mxu0 %v6127
      %6866 = vmatprep.subr.mxu0 0.0
      %6867 = vmatpush2.msra.mxu0 %v6126
      %6868 = vmatprep.subr.mxu0 0.0
      %6869 = vmatpush2.msra.mxu0 %v6125
      %6870 = vmatprep.subr.mxu0 0.0
      %6871 = vmatpush2.msra.mxu0 %v6124
      %6872 = vmatprep.subr.mxu0 0.0
      %6873 = vmatpush2.msra.mxu0 %v6123
      %6874 = vmatprep.subr.mxu0 0.0
      %6875 = vmatpush2.msra.mxu0 %v6122
      %6876 = vmatprep.subr.mxu0 0.0
      %6877 = vmatpush2.msra.mxu0 %v6121
      %6878 = vmatprep.subr.mxu0 0.0
      %6879 = vmatpush2.msra.mxu0 %v6120
      %6880 = vmatprep.subr.mxu0 0.0
      %6881 = vmatpush2.msra.mxu0 %v6119
      %6882 = vmatprep.subr.mxu0 0.0
      %6883 = vmatpush2.msra.mxu0 %v6118
      %6884 = vmatprep.subr.mxu0 0.0
      %6885 = vmatpush2.msra.mxu0 %v6117
      %6886 = vmatprep.subr.mxu0 0.0
      %6887 = vmatpush2.msra.mxu0 %v6116
      %6888 = vmatprep.subr.mxu0 0.0
      %6889 = vmatpush2.msra.mxu0 %v6115
      %6890 = vmatprep.subr.mxu0 0.0
      %6891 = vmatpush2.msra.mxu0 %v6114
      %6892 = vmatprep.mubr.f32.mxu0 %v5938
      %6893 = vmatmul.mubr.f32.gmra.mxu0 %v5906
      %v6894 = vpop.f32.mrf.mxu0
      %v6895 = vadd.f32 %v6670, %v6894
      %v6896 = vpop.f32.mrf.mxu0
      %6897 = vmatprep.mubr.f32.mxu0 %v5939
      %6898 = vmatmul.mubr.f32.gmra.mxu0 %v5907
      %v6899 = vpop.f32.mrf.mxu0
      %v6900 = vadd.f32 %v6675, %v6899
      %v6901 = vpop.f32.mrf.mxu0
      %6902 = vmatprep.mubr.f32.mxu0 %v5940
      %6903 = vmatmul.mubr.f32.gmra.mxu0 %v5908
      %v6904 = vpop.f32.mrf.mxu0
      %v6905 = vadd.f32 %v6680, %v6904
      %v6906 = vpop.f32.mrf.mxu0
      %6907 = vmatprep.mubr.f32.mxu0 %v5941
      %6908 = vmatmul.mubr.f32.gmra.mxu0 %v5909
      %v6909 = vpop.f32.mrf.mxu0
      %v6910 = vadd.f32 %v6685, %v6909
      %v6911 = vpop.f32.mrf.mxu0
      %6912 = vmatprep.mubr.f32.mxu0 %v5942
      %6913 = vmatmul.mubr.f32.gmra.mxu0 %v5910
      %v6914 = vpop.f32.mrf.mxu0
      %v6915 = vadd.f32 %v6690, %v6914
      %v6916 = vpop.f32.mrf.mxu0
      %6917 = vmatprep.mubr.f32.mxu0 %v5943
      %6918 = vmatmul.mubr.f32.gmra.mxu0 %v5911
      %v6919 = vpop.f32.mrf.mxu0
      %v6920 = vadd.f32 %v6695, %v6919
      %v6921 = vpop.f32.mrf.mxu0
      %6922 = vmatprep.mubr.f32.mxu0 %v5944
      %6923 = vmatmul.mubr.f32.gmra.mxu0 %v5912
      %v6924 = vpop.f32.mrf.mxu0
      %v6925 = vadd.f32 %v6700, %v6924
      %v6926 = vpop.f32.mrf.mxu0
      %6927 = vmatprep.mubr.f32.mxu0 %v5945
      %6928 = vmatmul.mubr.f32.gmra.mxu0 %v5913
      %v6929 = vpop.f32.mrf.mxu0
      %v6930 = vadd.f32 %v6705, %v6929
      %v6931 = vpop.f32.mrf.mxu0
      %6932 = vmatprep.mubr.f32.mxu0 %v5946
      %6933 = vmatmul.mubr.f32.gmra.mxu0 %v5914
      %v6934 = vpop.f32.mrf.mxu0
      %v6935 = vadd.f32 %v6710, %v6934
      %v6936 = vpop.f32.mrf.mxu0
      %6937 = vmatprep.mubr.f32.mxu0 %v5947
      %6938 = vmatmul.mubr.f32.gmra.mxu0 %v5915
      %v6939 = vpop.f32.mrf.mxu0
      %v6940 = vadd.f32 %v6715, %v6939
      %v6941 = vpop.f32.mrf.mxu0
      %6942 = vmatprep.mubr.f32.mxu0 %v5948
      %6943 = vmatmul.mubr.f32.gmra.mxu0 %v5916
      %v6944 = vpop.f32.mrf.mxu0
      %v6945 = vadd.f32 %v6720, %v6944
      %v6946 = vpop.f32.mrf.mxu0
      %6947 = vmatprep.mubr.f32.mxu0 %v5949
      %6948 = vmatmul.mubr.f32.gmra.mxu0 %v5917
      %v6949 = vpop.f32.mrf.mxu0
      %v6950 = vadd.f32 %v6725, %v6949
      %v6951 = vpop.f32.mrf.mxu0
      %6952 = vmatprep.mubr.f32.mxu0 %v5950
      %6953 = vmatmul.mubr.f32.gmra.mxu0 %v5918
      %v6954 = vpop.f32.mrf.mxu0
      %v6955 = vadd.f32 %v6730, %v6954
      %v6956 = vpop.f32.mrf.mxu0
      %6957 = vmatprep.mubr.f32.mxu0 %v5951
      %6958 = vmatmul.mubr.f32.gmra.mxu0 %v5919
      %v6959 = vpop.f32.mrf.mxu0
      %v6960 = vadd.f32 %v6735, %v6959
      %v6961 = vpop.f32.mrf.mxu0
      %6962 = vmatprep.mubr.f32.mxu0 %v5952
      %6963 = vmatmul.mubr.f32.gmra.mxu0 %v5920
      %v6964 = vpop.f32.mrf.mxu0
      %v6965 = vadd.f32 %v6740, %v6964
      %v6966 = vpop.f32.mrf.mxu0
      %6967 = vmatprep.mubr.f32.mxu0 %v5953
      %6968 = vmatmul.mubr.f32.gmra.mxu0 %v5921
      %v6969 = vpop.f32.mrf.mxu0
      %v6970 = vadd.f32 %v6745, %v6969
      %v6971 = vpop.f32.mrf.mxu0
      %6972 = vmatprep.mubr.f32.mxu0 %v5954
      %6973 = vmatmul.mubr.f32.gmra.mxu0 %v5922
      %v6974 = vpop.f32.mrf.mxu0
      %v6975 = vadd.f32 %v6750, %v6974
      %v6976 = vpop.f32.mrf.mxu0
      %6977 = vmatprep.mubr.f32.mxu0 %v5955
      %6978 = vmatmul.mubr.f32.gmra.mxu0 %v5923
      %v6979 = vpop.f32.mrf.mxu0
      %v6980 = vadd.f32 %v6755, %v6979
      %v6981 = vpop.f32.mrf.mxu0
      %6982 = vmatprep.mubr.f32.mxu0 %v5956
      %6983 = vmatmul.mubr.f32.gmra.mxu0 %v5924
      %v6984 = vpop.f32.mrf.mxu0
      %v6985 = vadd.f32 %v6760, %v6984
      %v6986 = vpop.f32.mrf.mxu0
      %6987 = vmatprep.mubr.f32.mxu0 %v5957
      %6988 = vmatmul.mubr.f32.gmra.mxu0 %v5925
      %v6989 = vpop.f32.mrf.mxu0
      %v6990 = vadd.f32 %v6765, %v6989
      %v6991 = vpop.f32.mrf.mxu0
      %6992 = vmatprep.mubr.f32.mxu0 %v5958
      %6993 = vmatmul.mubr.f32.gmra.mxu0 %v5926
      %v6994 = vpop.f32.mrf.mxu0
      %v6995 = vadd.f32 %v6770, %v6994
      %v6996 = vpop.f32.mrf.mxu0
      %6997 = vmatprep.mubr.f32.mxu0 %v5959
      %6998 = vmatmul.mubr.f32.gmra.mxu0 %v5927
      %v6999 = vpop.f32.mrf.mxu0
      %v7000 = vadd.f32 %v6775, %v6999
      %v7001 = vpop.f32.mrf.mxu0
      %7002 = vmatprep.mubr.f32.mxu0 %v5960
      %7003 = vmatmul.mubr.f32.gmra.mxu0 %v5928
      %v7004 = vpop.f32.mrf.mxu0
      %v7005 = vadd.f32 %v6780, %v7004
      %v7006 = vpop.f32.mrf.mxu0
      %7007 = vmatprep.mubr.f32.mxu0 %v5961
      %7008 = vmatmul.mubr.f32.gmra.mxu0 %v5929
      %v7009 = vpop.f32.mrf.mxu0
      %v7010 = vadd.f32 %v6785, %v7009
      %v7011 = vpop.f32.mrf.mxu0
      %7012 = vmatprep.mubr.f32.mxu0 %v5962
      %7013 = vmatmul.mubr.f32.gmra.mxu0 %v5930
      %v7014 = vpop.f32.mrf.mxu0
      %v7015 = vadd.f32 %v6790, %v7014
      %v7016 = vpop.f32.mrf.mxu0
      %7017 = vmatprep.mubr.f32.mxu0 %v5963
      %7018 = vmatmul.mubr.f32.gmra.mxu0 %v5931
      %v7019 = vpop.f32.mrf.mxu0
      %v7020 = vadd.f32 %v6795, %v7019
      %v7021 = vpop.f32.mrf.mxu0
      %7022 = vmatprep.mubr.f32.mxu0 %v5964
      %7023 = vmatmul.mubr.f32.gmra.mxu0 %v5932
      %v7024 = vpop.f32.mrf.mxu0
      %v7025 = vadd.f32 %v6800, %v7024
      %v7026 = vpop.f32.mrf.mxu0
      %7027 = vmatprep.mubr.f32.mxu0 %v5965
      %7028 = vmatmul.mubr.f32.gmra.mxu0 %v5933
      %v7029 = vpop.f32.mrf.mxu0
      %v7030 = vadd.f32 %v6805, %v7029
      %v7031 = vpop.f32.mrf.mxu0
      %7032 = vmatprep.mubr.f32.mxu0 %v5966
      %7033 = vmatmul.mubr.f32.gmra.mxu0 %v5934
      %v7034 = vpop.f32.mrf.mxu0
      %v7035 = vadd.f32 %v6810, %v7034
      %v7036 = vpop.f32.mrf.mxu0
      %7037 = vmatprep.mubr.f32.mxu0 %v5967
      %7038 = vmatmul.mubr.f32.gmra.mxu0 %v5935
      %v7039 = vpop.f32.mrf.mxu0
      %v7040 = vadd.f32 %v6815, %v7039
      %v7041 = vpop.f32.mrf.mxu0
      %7042 = vmatprep.mubr.f32.mxu0 %v5968
      %7043 = vmatmul.mubr.f32.gmra.mxu0 %v5936
      %v7044 = vpop.f32.mrf.mxu0
      %v7045 = vadd.f32 %v6820, %v7044
      %v7046 = vpop.f32.mrf.mxu0
      %7047 = vmatprep.mubr.f32.mxu0 %v5969
      %7048 = vmatmul.mubr.f32.gmra.mxu0 %v5937
      %v7049 = vpop.f32.mrf.mxu0
      %v7050 = vadd.f32 %v6825, %v7049
      %v7051 = vpop.f32.mrf.mxu0
      %7052 = vdwg.mxu0
      %7053 = vmatprep.subr.mxu0 0.0
      %7054 = vmatpush1.msra.mxu0 %v6145
      %7055 = vmatprep.subr.mxu0 0.0
      %7056 = vmatpush1.msra.mxu0 %v6144
      %7057 = vmatprep.subr.mxu0 0.0
      %7058 = vmatpush1.msra.mxu0 %v6143
      %7059 = vmatprep.subr.mxu0 0.0
      %7060 = vmatpush1.msra.mxu0 %v6142
      %7061 = vmatprep.subr.mxu0 0.0
      %7062 = vmatpush1.msra.mxu0 %v6141
      %7063 = vmatprep.subr.mxu0 0.0
      %7064 = vmatpush1.msra.mxu0 %v6140
      %7065 = vmatprep.subr.mxu0 0.0
      %7066 = vmatpush1.msra.mxu0 %v6139
      %7067 = vmatprep.subr.mxu0 0.0
      %7068 = vmatpush1.msra.mxu0 %v6138
      %7069 = vmatprep.subr.mxu0 0.0
      %7070 = vmatpush1.msra.mxu0 %v6137
      %7071 = vmatprep.subr.mxu0 0.0
      %7072 = vmatpush1.msra.mxu0 %v6136
      %7073 = vmatprep.subr.mxu0 0.0
      %7074 = vmatpush1.msra.mxu0 %v6135
      %7075 = vmatprep.subr.mxu0 0.0
      %7076 = vmatpush1.msra.mxu0 %v6134
      %7077 = vmatprep.subr.mxu0 0.0
      %7078 = vmatpush1.msra.mxu0 %v6133
      %7079 = vmatprep.subr.mxu0 0.0
      %7080 = vmatpush1.msra.mxu0 %v6132
      %7081 = vmatprep.subr.mxu0 0.0
      %7082 = vmatpush1.msra.mxu0 %v6131
      %7083 = vmatprep.subr.mxu0 0.0
      %7084 = vmatpush1.msra.mxu0 %v6130
      %7085 = vmatprep.subr.mxu0 0.0
      %7086 = vmatpush2.msra.mxu0 0.0
      %7087 = vmatprep.subr.mxu0 0.0
      %7088 = vmatpush2.msra.mxu0 0.0
      %7089 = vmatprep.subr.mxu0 0.0
      %7090 = vmatpush2.msra.mxu0 0.0
      %7091 = vmatprep.subr.mxu0 0.0
      %7092 = vmatpush2.msra.mxu0 0.0
      %7093 = vmatprep.subr.mxu0 0.0
      %7094 = vmatpush2.msra.mxu0 0.0
      %7095 = vmatprep.subr.mxu0 0.0
      %7096 = vmatpush2.msra.mxu0 0.0
      %7097 = vmatprep.subr.mxu0 0.0
      %7098 = vmatpush2.msra.mxu0 0.0
      %7099 = vmatprep.subr.mxu0 0.0
      %7100 = vmatpush2.msra.mxu0 0.0
      %7101 = vmatprep.subr.mxu0 0.0
      %7102 = vmatpush2.msra.mxu0 0.0
      %7103 = vmatprep.subr.mxu0 0.0
      %7104 = vmatpush2.msra.mxu0 0.0
      %7105 = vmatprep.subr.mxu0 0.0
      %7106 = vmatpush2.msra.mxu0 0.0
      %7107 = vmatprep.subr.mxu0 0.0
      %7108 = vmatpush2.msra.mxu0 0.0
      %7109 = vmatprep.subr.mxu0 0.0
      %7110 = vmatpush2.msra.mxu0 0.0
      %7111 = vmatprep.subr.mxu0 0.0
      %7112 = vmatpush2.msra.mxu0 0.0
      %7113 = vmatprep.subr.mxu0 0.0
      %7114 = vmatpush2.msra.mxu0 0.0
      %7115 = vmatprep.subr.mxu0 0.0
      %7116 = vmatpush2.msra.mxu0 0.0
      %7117 = vmatprep.mubr.f32.mxu0 0.0
      %7118 = vmatmul.mubr.f32.gmra.mxu0 %v5970
      %v7119 = vpop.f32.mrf.mxu0
      %v7120 = vadd.f32 %v6895, %v7119
      %v7121 = vpop.f32.mrf.mxu0
      %7122 = vmatprep.mubr.f32.mxu0 0.0
      %7123 = vmatmul.mubr.f32.gmra.mxu0 %v5971
      %v7124 = vpop.f32.mrf.mxu0
      %v7125 = vadd.f32 %v6900, %v7124
      %v7126 = vpop.f32.mrf.mxu0
      %7127 = vmatprep.mubr.f32.mxu0 0.0
      %7128 = vmatmul.mubr.f32.gmra.mxu0 %v5972
      %v7129 = vpop.f32.mrf.mxu0
      %v7130 = vadd.f32 %v6905, %v7129
      %v7131 = vpop.f32.mrf.mxu0
      %7132 = vmatprep.mubr.f32.mxu0 0.0
      %7133 = vmatmul.mubr.f32.gmra.mxu0 %v5973
      %v7134 = vpop.f32.mrf.mxu0
      %v7135 = vadd.f32 %v6910, %v7134
      %v7136 = vpop.f32.mrf.mxu0
      %7137 = vmatprep.mubr.f32.mxu0 0.0
      %7138 = vmatmul.mubr.f32.gmra.mxu0 %v5974
      %v7139 = vpop.f32.mrf.mxu0
      %v7140 = vadd.f32 %v6915, %v7139
      %v7141 = vpop.f32.mrf.mxu0
      %7142 = vmatprep.mubr.f32.mxu0 0.0
      %7143 = vmatmul.mubr.f32.gmra.mxu0 %v5975
      %v7144 = vpop.f32.mrf.mxu0
      %v7145 = vadd.f32 %v6920, %v7144
      %v7146 = vpop.f32.mrf.mxu0
      %7147 = vmatprep.mubr.f32.mxu0 0.0
      %7148 = vmatmul.mubr.f32.gmra.mxu0 %v5976
      %v7149 = vpop.f32.mrf.mxu0
      %v7150 = vadd.f32 %v6925, %v7149
      %v7151 = vpop.f32.mrf.mxu0
      %7152 = vmatprep.mubr.f32.mxu0 0.0
      %7153 = vmatmul.mubr.f32.gmra.mxu0 %v5977
      %v7154 = vpop.f32.mrf.mxu0
      %v7155 = vadd.f32 %v6930, %v7154
      %v7156 = vpop.f32.mrf.mxu0
      %7157 = vmatprep.mubr.f32.mxu0 0.0
      %7158 = vmatmul.mubr.f32.gmra.mxu0 %v5978
      %v7159 = vpop.f32.mrf.mxu0
      %v7160 = vadd.f32 %v6935, %v7159
      %v7161 = vpop.f32.mrf.mxu0
      %7162 = vmatprep.mubr.f32.mxu0 0.0
      %7163 = vmatmul.mubr.f32.gmra.mxu0 %v5979
      %v7164 = vpop.f32.mrf.mxu0
      %v7165 = vadd.f32 %v6940, %v7164
      %v7166 = vpop.f32.mrf.mxu0
      %7167 = vmatprep.mubr.f32.mxu0 0.0
      %7168 = vmatmul.mubr.f32.gmra.mxu0 %v5980
      %v7169 = vpop.f32.mrf.mxu0
      %v7170 = vadd.f32 %v6945, %v7169
      %v7171 = vpop.f32.mrf.mxu0
      %7172 = vmatprep.mubr.f32.mxu0 0.0
      %7173 = vmatmul.mubr.f32.gmra.mxu0 %v5981
      %v7174 = vpop.f32.mrf.mxu0
      %v7175 = vadd.f32 %v6950, %v7174
      %v7176 = vpop.f32.mrf.mxu0
      %7177 = vmatprep.mubr.f32.mxu0 0.0
      %7178 = vmatmul.mubr.f32.gmra.mxu0 %v5982
      %v7179 = vpop.f32.mrf.mxu0
      %v7180 = vadd.f32 %v6955, %v7179
      %v7181 = vpop.f32.mrf.mxu0
      %7182 = vmatprep.mubr.f32.mxu0 0.0
      %7183 = vmatmul.mubr.f32.gmra.mxu0 %v5983
      %v7184 = vpop.f32.mrf.mxu0
      %v7185 = vadd.f32 %v6960, %v7184
      %v7186 = vpop.f32.mrf.mxu0
      %7187 = vmatprep.mubr.f32.mxu0 0.0
      %7188 = vmatmul.mubr.f32.gmra.mxu0 %v5984
      %v7189 = vpop.f32.mrf.mxu0
      %v7190 = vadd.f32 %v6965, %v7189
      %v7191 = vpop.f32.mrf.mxu0
      %7192 = vmatprep.mubr.f32.mxu0 0.0
      %7193 = vmatmul.mubr.f32.gmra.mxu0 %v5985
      %v7194 = vpop.f32.mrf.mxu0
      %v7195 = vadd.f32 %v6970, %v7194
      %v7196 = vpop.f32.mrf.mxu0
      %7197 = vmatprep.mubr.f32.mxu0 0.0
      %7198 = vmatmul.mubr.f32.gmra.mxu0 %v5986
      %v7199 = vpop.f32.mrf.mxu0
      %v7200 = vadd.f32 %v6975, %v7199
      %v7201 = vpop.f32.mrf.mxu0
      %7202 = vmatprep.mubr.f32.mxu0 0.0
      %7203 = vmatmul.mubr.f32.gmra.mxu0 %v5987
      %v7204 = vpop.f32.mrf.mxu0
      %v7205 = vadd.f32 %v6980, %v7204
      %v7206 = vpop.f32.mrf.mxu0
      %7207 = vmatprep.mubr.f32.mxu0 0.0
      %7208 = vmatmul.mubr.f32.gmra.mxu0 %v5988
      %v7209 = vpop.f32.mrf.mxu0
      %v7210 = vadd.f32 %v6985, %v7209
      %v7211 = vpop.f32.mrf.mxu0
      %7212 = vmatprep.mubr.f32.mxu0 0.0
      %7213 = vmatmul.mubr.f32.gmra.mxu0 %v5989
      %v7214 = vpop.f32.mrf.mxu0
      %v7215 = vadd.f32 %v6990, %v7214
      %v7216 = vpop.f32.mrf.mxu0
      %7217 = vmatprep.mubr.f32.mxu0 0.0
      %7218 = vmatmul.mubr.f32.gmra.mxu0 %v5990
      %v7219 = vpop.f32.mrf.mxu0
      %v7220 = vadd.f32 %v6995, %v7219
      %v7221 = vpop.f32.mrf.mxu0
      %7222 = vmatprep.mubr.f32.mxu0 0.0
      %7223 = vmatmul.mubr.f32.gmra.mxu0 %v5991
      %v7224 = vpop.f32.mrf.mxu0
      %v7225 = vadd.f32 %v7000, %v7224
      %v7226 = vpop.f32.mrf.mxu0
      %7227 = vmatprep.mubr.f32.mxu0 0.0
      %7228 = vmatmul.mubr.f32.gmra.mxu0 %v5992
      %v7229 = vpop.f32.mrf.mxu0
      %v7230 = vadd.f32 %v7005, %v7229
      %v7231 = vpop.f32.mrf.mxu0
      %7232 = vmatprep.mubr.f32.mxu0 0.0
      %7233 = vmatmul.mubr.f32.gmra.mxu0 %v5993
      %v7234 = vpop.f32.mrf.mxu0
      %v7235 = vadd.f32 %v7010, %v7234
      %v7236 = vpop.f32.mrf.mxu0
      %7237 = vmatprep.mubr.f32.mxu0 0.0
      %7238 = vmatmul.mubr.f32.gmra.mxu0 %v5994
      %v7239 = vpop.f32.mrf.mxu0
      %v7240 = vadd.f32 %v7015, %v7239
      %v7241 = vpop.f32.mrf.mxu0
      %7242 = vmatprep.mubr.f32.mxu0 0.0
      %7243 = vmatmul.mubr.f32.gmra.mxu0 %v5995
      %v7244 = vpop.f32.mrf.mxu0
      %v7245 = vadd.f32 %v7020, %v7244
      %v7246 = vpop.f32.mrf.mxu0
      %7247 = vmatprep.mubr.f32.mxu0 0.0
      %7248 = vmatmul.mubr.f32.gmra.mxu0 %v5996
      %v7249 = vpop.f32.mrf.mxu0
      %v7250 = vadd.f32 %v7025, %v7249
      %v7251 = vpop.f32.mrf.mxu0
      %7252 = vmatprep.mubr.f32.mxu0 0.0
      %7253 = vmatmul.mubr.f32.gmra.mxu0 %v5997
      %v7254 = vpop.f32.mrf.mxu0
      %v7255 = vadd.f32 %v7030, %v7254
      %v7256 = vpop.f32.mrf.mxu0
      %7257 = vmatprep.mubr.f32.mxu0 0.0
      %7258 = vmatmul.mubr.f32.gmra.mxu0 %v5998
      %v7259 = vpop.f32.mrf.mxu0
      %v7260 = vadd.f32 %v7035, %v7259
      %v7261 = vpop.f32.mrf.mxu0
      %7262 = vmatprep.mubr.f32.mxu0 0.0
      %7263 = vmatmul.mubr.f32.gmra.mxu0 %v5999
      %v7264 = vpop.f32.mrf.mxu0
      %v7265 = vadd.f32 %v7040, %v7264
      %v7266 = vpop.f32.mrf.mxu0
      %7267 = vmatprep.mubr.f32.mxu0 0.0
      %7268 = vmatmul.mubr.f32.gmra.mxu0 %v6000
      %v7269 = vpop.f32.mrf.mxu0
      %v7270 = vadd.f32 %v7045, %v7269
      %v7271 = vpop.f32.mrf.mxu0
      %7272 = vmatprep.mubr.f32.mxu0 0.0
      %7273 = vmatmul.mubr.f32.gmra.mxu0 %v6001
      %v7274 = vpop.f32.mrf.mxu0
      %v7275 = vadd.f32 %v7050, %v7274
      %v7276 = vpop.f32.mrf.mxu0
      %7277 = vdwg.mxu0
      %v7278 = vmax.f32 %v7120, 0.0
      %v7279 = vmax.f32 %v7125, 0.0
      %v7280 = vmax.f32 %v7130, 0.0
      %v7281 = vmax.f32 %v7135, 0.0
      %v7282 = vmax.f32 %v7140, 0.0
      %v7283 = vmax.f32 %v7145, 0.0
      %v7284 = vmax.f32 %v7150, 0.0
      %v7285 = vmax.f32 %v7155, 0.0
      %v7286 = vmax.f32 %v7160, 0.0
      %v7287 = vmax.f32 %v7165, 0.0
      %v7288 = vmax.f32 %v7170, 0.0
      %v7289 = vmax.f32 %v7175, 0.0
      %v7290 = vmax.f32 %v7180, 0.0
      %v7291 = vmax.f32 %v7185, 0.0
      %v7292 = vmax.f32 %v7190, 0.0
      %v7293 = vmax.f32 %v7195, 0.0
      %v7294 = vmax.f32 %v7200, 0.0
      %v7295 = vmax.f32 %v7205, 0.0
      %v7296 = vmax.f32 %v7210, 0.0
      %v7297 = vmax.f32 %v7215, 0.0
      %v7298 = vmax.f32 %v7220, 0.0
      %v7299 = vmax.f32 %v7225, 0.0
      %v7300 = vmax.f32 %v7230, 0.0
      %v7301 = vmax.f32 %v7235, 0.0
      %v7302 = vmax.f32 %v7240, 0.0
      %v7303 = vmax.f32 %v7245, 0.0
      %v7304 = vmax.f32 %v7250, 0.0
      %v7305 = vmax.f32 %v7255, 0.0
      %v7306 = vmax.f32 %v7260, 0.0
      %v7307 = vmax.f32 %v7265, 0.0
      %v7308 = vmax.f32 %v7270, 0.0
      %v7309 = vmax.f32 %v7275, 0.0
      %s7310 = scalar_lea.vmem [#allocation4], 24
      %7311 = vst.msk [vmem:[%s7310 + $0x1] sm:$0xff] %vm449, %v7278
      %7312 = vst.msk [vmem:[%s7310 + $0x9] sm:$0xff] %vm449, %v7279
      %7313 = vst.msk [vmem:[%s7310 + $0x19] sm:$0xff] %vm449, %v7280
      %7314 = vst.msk [vmem:[%s7310 + $0x21] sm:$0xff] %vm449, %v7281
      %7315 = vst.msk [vmem:[%s7310 + $0x31] sm:$0xff] %vm449, %v7282
      %7316 = vst.msk [vmem:[%s7310 + $0x39] sm:$0xff] %vm449, %v7283
      %7317 = vst.msk [vmem:[%s7310 + $0x49] sm:$0xff] %vm449, %v7284
      %7318 = vst.msk [vmem:[%s7310 + $0x51] sm:$0xff] %vm449, %v7285
      %7319 = vst.msk [vmem:[%s7310 + $0x61] sm:$0xff] %vm449, %v7286
      %7320 = vst.msk [vmem:[%s7310 + $0x69] sm:$0xff] %vm449, %v7287
      %7321 = vst.msk [vmem:[%s7310 + $0x79] sm:$0xff] %vm449, %v7288
      %7322 = vst.msk [vmem:[%s7310 + $0x81] sm:$0xff] %vm449, %v7289
      %7323 = vst.msk [vmem:[%s7310 + $0x91] sm:$0xff] %vm449, %v7290
      %7324 = vst.msk [vmem:[%s7310 + $0x99] sm:$0xff] %vm449, %v7291
      %7325 = vst.msk [vmem:[%s7310 + $0xa9] sm:$0xff] %vm449, %v7292
      %7326 = vst.msk [vmem:[%s7310 + $0xb1] sm:$0xff] %vm449, %v7293
      %7327 = vst.msk [vmem:[%s7310 + $0xc1] sm:$0xff] %vm449, %v7294
      %7328 = vst.msk [vmem:[%s7310 + $0xc9] sm:$0xff] %vm449, %v7295
      %7329 = vst.msk [vmem:[%s7310 + $0xd9] sm:$0xff] %vm449, %v7296
      %7330 = vst.msk [vmem:[%s7310 + $0xe1] sm:$0xff] %vm449, %v7297
      %7331 = vst.msk [vmem:[%s7310 + $0xf1] sm:$0xff] %vm449, %v7298
      %7332 = vst.msk [vmem:[%s7310 + $0xf9] sm:$0xff] %vm449, %v7299
      %7333 = vst.msk [vmem:[%s7310 + $0x109] sm:$0xff] %vm449, %v7300
      %7334 = vst.msk [vmem:[%s7310 + $0x111] sm:$0xff] %vm449, %v7301
      %7335 = vst.msk [vmem:[%s7310 + $0x121] sm:$0xff] %vm449, %v7302
      %7336 = vst.msk [vmem:[%s7310 + $0x129] sm:$0xff] %vm449, %v7303
      %7337 = vst.msk [vmem:[%s7310 + $0x139] sm:$0xff] %vm449, %v7304
      %7338 = vst.msk [vmem:[%s7310 + $0x141] sm:$0xff] %vm449, %v7305
      %7339 = vst.msk [vmem:[%s7310 + $0x151] sm:$0xff] %vm449, %v7306
      %7340 = vst.msk [vmem:[%s7310 + $0x159] sm:$0xff] %vm449, %v7307
      %7341 = vst.msk [vmem:[%s7310 + $0x169] sm:$0xff] %vm449, %v7308
      %7342 = vst.msk [vmem:[%s7310 + $0x171] sm:$0xff] %vm449, %v7309
      %v7343 = vld [vmem:[#allocation4] sm:$0xff]
      %v7344 = vld [vmem:[#allocation4 + $0x8] sm:$0xff]
      %v7345 = vld [vmem:[#allocation4 + $0x18] sm:$0xff]
      %v7346 = vld [vmem:[#allocation4 + $0x20] sm:$0xff]
      %v7347 = vld [vmem:[#allocation4 + $0x30] sm:$0xff]
      %v7348 = vld [vmem:[#allocation4 + $0x38] sm:$0xff]
      %v7349 = vld [vmem:[#allocation4 + $0x48] sm:$0xff]
      %v7350 = vld [vmem:[#allocation4 + $0x50] sm:$0xff]
      %v7351 = vld [vmem:[#allocation4 + $0x60] sm:$0xff]
      %v7352 = vld [vmem:[#allocation4 + $0x68] sm:$0xff]
      %v7353 = vld [vmem:[#allocation4 + $0x78] sm:$0xff]
      %v7354 = vld [vmem:[#allocation4 + $0x80] sm:$0xff]
      %v7355 = vld [vmem:[#allocation4 + $0x90] sm:$0xff]
      %v7356 = vld [vmem:[#allocation4 + $0x98] sm:$0xff]
      %v7357 = vld [vmem:[#allocation4 + $0xa8] sm:$0xff]
      %v7358 = vld [vmem:[#allocation4 + $0xb0] sm:$0xff]
      %v7359 = vld [vmem:[#allocation4 + $0xc0] sm:$0xff]
      %v7360 = vld [vmem:[#allocation4 + $0xc8] sm:$0xff]
      %v7361 = vld [vmem:[#allocation4 + $0xd8] sm:$0xff]
      %v7362 = vld [vmem:[#allocation4 + $0xe0] sm:$0xff]
      %v7363 = vld [vmem:[#allocation4 + $0xf0] sm:$0xff]
      %v7364 = vld [vmem:[#allocation4 + $0xf8] sm:$0xff]
      %v7365 = vld [vmem:[#allocation4 + $0x108] sm:$0xff]
      %v7366 = vld [vmem:[#allocation4 + $0x110] sm:$0xff]
      %v7367 = vld [vmem:[#allocation4 + $0x120] sm:$0xff]
      %v7368 = vld [vmem:[#allocation4 + $0x128] sm:$0xff]
      %v7369 = vld [vmem:[#allocation4 + $0x138] sm:$0xff]
      %v7370 = vld [vmem:[#allocation4 + $0x140] sm:$0xff]
      %v7371 = vld [vmem:[#allocation4 + $0x150] sm:$0xff]
      %v7372 = vld [vmem:[#allocation4 + $0x158] sm:$0xff]
      %v7373 = vld [vmem:[#allocation4 + $0x168] sm:$0xff]
      %v7374 = vld [vmem:[#allocation4 + $0x170] sm:$0xff]
      %v7375 = vld [vmem:[#allocation4 + $0x1] sm:$0xff]
      %v7376 = vld [vmem:[#allocation4 + $0x9] sm:$0xff]
      %v7377 = vld [vmem:[#allocation4 + $0x19] sm:$0xff]
      %v7378 = vld [vmem:[#allocation4 + $0x21] sm:$0xff]
      %v7379 = vld [vmem:[#allocation4 + $0x31] sm:$0xff]
      %v7380 = vld [vmem:[#allocation4 + $0x39] sm:$0xff]
      %v7381 = vld [vmem:[#allocation4 + $0x49] sm:$0xff]
      %v7382 = vld [vmem:[#allocation4 + $0x51] sm:$0xff]
      %v7383 = vld [vmem:[#allocation4 + $0x61] sm:$0xff]
      %v7384 = vld [vmem:[#allocation4 + $0x69] sm:$0xff]
      %v7385 = vld [vmem:[#allocation4 + $0x79] sm:$0xff]
      %v7386 = vld [vmem:[#allocation4 + $0x81] sm:$0xff]
      %v7387 = vld [vmem:[#allocation4 + $0x91] sm:$0xff]
      %v7388 = vld [vmem:[#allocation4 + $0x99] sm:$0xff]
      %v7389 = vld [vmem:[#allocation4 + $0xa9] sm:$0xff]
      %v7390 = vld [vmem:[#allocation4 + $0xb1] sm:$0xff]
      %v7391 = vld [vmem:[#allocation4 + $0xc1] sm:$0xff]
      %v7392 = vld [vmem:[#allocation4 + $0xc9] sm:$0xff]
      %v7393 = vld [vmem:[#allocation4 + $0xd9] sm:$0xff]
      %v7394 = vld [vmem:[#allocation4 + $0xe1] sm:$0xff]
      %v7395 = vld [vmem:[#allocation4 + $0xf1] sm:$0xff]
      %v7396 = vld [vmem:[#allocation4 + $0xf9] sm:$0xff]
      %v7397 = vld [vmem:[#allocation4 + $0x109] sm:$0xff]
      %v7398 = vld [vmem:[#allocation4 + $0x111] sm:$0xff]
      %v7399 = vld [vmem:[#allocation4 + $0x121] sm:$0xff]
      %v7400 = vld [vmem:[#allocation4 + $0x129] sm:$0xff]
      %v7401 = vld [vmem:[#allocation4 + $0x139] sm:$0xff]
      %v7402 = vld [vmem:[#allocation4 + $0x141] sm:$0xff]
      %v7403 = vld [vmem:[#allocation4 + $0x151] sm:$0xff]
      %v7404 = vld [vmem:[#allocation4 + $0x159] sm:$0xff]
      %v7405 = vld [vmem:[#allocation4 + $0x169] sm:$0xff]
      %v7406 = vld [vmem:[#allocation4 + $0x171] sm:$0xff]
      %v7407 = vld [vmem:[#allocation4 + $0x2] sm:$0xff]
      %v7408 = vld [vmem:[#allocation4 + $0xa] sm:$0xff]
      %v7409 = vld [vmem:[#allocation4 + $0x1a] sm:$0xff]
      %v7410 = vld [vmem:[#allocation4 + $0x22] sm:$0xff]
      %v7411 = vld [vmem:[#allocation4 + $0x32] sm:$0xff]
      %v7412 = vld [vmem:[#allocation4 + $0x3a] sm:$0xff]
      %v7413 = vld [vmem:[#allocation4 + $0x4a] sm:$0xff]
      %v7414 = vld [vmem:[#allocation4 + $0x52] sm:$0xff]
      %v7415 = vld [vmem:[#allocation4 + $0x62] sm:$0xff]
      %v7416 = vld [vmem:[#allocation4 + $0x6a] sm:$0xff]
      %v7417 = vld [vmem:[#allocation4 + $0x7a] sm:$0xff]
      %v7418 = vld [vmem:[#allocation4 + $0x82] sm:$0xff]
      %v7419 = vld [vmem:[#allocation4 + $0x92] sm:$0xff]
      %v7420 = vld [vmem:[#allocation4 + $0x9a] sm:$0xff]
      %v7421 = vld [vmem:[#allocation4 + $0xaa] sm:$0xff]
      %v7422 = vld [vmem:[#allocation4 + $0xb2] sm:$0xff]
      %v7423 = vld [vmem:[#allocation4 + $0xc2] sm:$0xff]
      %v7424 = vld [vmem:[#allocation4 + $0xca] sm:$0xff]
      %v7425 = vld [vmem:[#allocation4 + $0xda] sm:$0xff]
      %v7426 = vld [vmem:[#allocation4 + $0xe2] sm:$0xff]
      %v7427 = vld [vmem:[#allocation4 + $0xf2] sm:$0xff]
      %v7428 = vld [vmem:[#allocation4 + $0xfa] sm:$0xff]
      %v7429 = vld [vmem:[#allocation4 + $0x10a] sm:$0xff]
      %v7430 = vld [vmem:[#allocation4 + $0x112] sm:$0xff]
      %v7431 = vld [vmem:[#allocation4 + $0x122] sm:$0xff]
      %v7432 = vld [vmem:[#allocation4 + $0x12a] sm:$0xff]
      %v7433 = vld [vmem:[#allocation4 + $0x13a] sm:$0xff]
      %v7434 = vld [vmem:[#allocation4 + $0x142] sm:$0xff]
      %v7435 = vld [vmem:[#allocation4 + $0x152] sm:$0xff]
      %v7436 = vld [vmem:[#allocation4 + $0x15a] sm:$0xff]
      %v7437 = vld [vmem:[#allocation4 + $0x16a] sm:$0xff]
      %v7438 = vld [vmem:[#allocation4 + $0x172] sm:$0xff]
      %v7439 = vld [vmem:[%s7310] sm:$0xff]
      %v7440 = vld [vmem:[%s7310 + $0x8] sm:$0xff]
      %v7441 = vld [vmem:[%s7310 + $0x18] sm:$0xff]
      %v7442 = vld [vmem:[%s7310 + $0x20] sm:$0xff]
      %v7443 = vld [vmem:[%s7310 + $0x30] sm:$0xff]
      %v7444 = vld [vmem:[%s7310 + $0x38] sm:$0xff]
      %v7445 = vld [vmem:[%s7310 + $0x48] sm:$0xff]
      %v7446 = vld [vmem:[%s7310 + $0x50] sm:$0xff]
      %v7447 = vld [vmem:[%s7310 + $0x60] sm:$0xff]
      %v7448 = vld [vmem:[%s7310 + $0x68] sm:$0xff]
      %v7449 = vld [vmem:[%s7310 + $0x78] sm:$0xff]
      %v7450 = vld [vmem:[%s7310 + $0x80] sm:$0xff]
      %v7451 = vld [vmem:[%s7310 + $0x90] sm:$0xff]
      %v7452 = vld [vmem:[%s7310 + $0x98] sm:$0xff]
      %v7453 = vld [vmem:[%s7310 + $0xa8] sm:$0xff]
      %v7454 = vld [vmem:[%s7310 + $0xb0] sm:$0xff]
      %v7455 = vld [vmem:[%s7310 + $0xc0] sm:$0xff]
      %v7456 = vld [vmem:[%s7310 + $0xc8] sm:$0xff]
      %v7457 = vld [vmem:[%s7310 + $0xd8] sm:$0xff]
      %v7458 = vld [vmem:[%s7310 + $0xe0] sm:$0xff]
      %v7459 = vld [vmem:[%s7310 + $0xf0] sm:$0xff]
      %v7460 = vld [vmem:[%s7310 + $0xf8] sm:$0xff]
      %v7461 = vld [vmem:[%s7310 + $0x108] sm:$0xff]
      %v7462 = vld [vmem:[%s7310 + $0x110] sm:$0xff]
      %v7463 = vld [vmem:[%s7310 + $0x120] sm:$0xff]
      %v7464 = vld [vmem:[%s7310 + $0x128] sm:$0xff]
      %v7465 = vld [vmem:[%s7310 + $0x138] sm:$0xff]
      %v7466 = vld [vmem:[%s7310 + $0x140] sm:$0xff]
      %v7467 = vld [vmem:[%s7310 + $0x150] sm:$0xff]
      %v7468 = vld [vmem:[%s7310 + $0x158] sm:$0xff]
      %v7469 = vld [vmem:[%s7310 + $0x168] sm:$0xff]
      %v7470 = vld [vmem:[%s7310 + $0x170] sm:$0xff]
      %v7471 = vld [vmem:[%s7310 + $0x1] sm:$0xff]
      %v7472 = vld [vmem:[%s7310 + $0x9] sm:$0xff]
      %v7473 = vld [vmem:[%s7310 + $0x19] sm:$0xff]
      %v7474 = vld [vmem:[%s7310 + $0x21] sm:$0xff]
      %v7475 = vld [vmem:[%s7310 + $0x31] sm:$0xff]
      %v7476 = vld [vmem:[%s7310 + $0x39] sm:$0xff]
      %v7477 = vld [vmem:[%s7310 + $0x49] sm:$0xff]
      %v7478 = vld [vmem:[%s7310 + $0x51] sm:$0xff]
      %v7479 = vld [vmem:[%s7310 + $0x61] sm:$0xff]
      %v7480 = vld [vmem:[%s7310 + $0x69] sm:$0xff]
      %v7481 = vld [vmem:[%s7310 + $0x79] sm:$0xff]
      %v7482 = vld [vmem:[%s7310 + $0x81] sm:$0xff]
      %v7483 = vld [vmem:[%s7310 + $0x91] sm:$0xff]
      %v7484 = vld [vmem:[%s7310 + $0x99] sm:$0xff]
      %v7485 = vld [vmem:[%s7310 + $0xa9] sm:$0xff]
      %v7486 = vld [vmem:[%s7310 + $0xb1] sm:$0xff]
      %v7487 = vld [vmem:[%s7310 + $0xc1] sm:$0xff]
      %v7488 = vld [vmem:[%s7310 + $0xc9] sm:$0xff]
      %v7489 = vld [vmem:[%s7310 + $0xd9] sm:$0xff]
      %v7490 = vld [vmem:[%s7310 + $0xe1] sm:$0xff]
      %v7491 = vld [vmem:[%s7310 + $0xf1] sm:$0xff]
      %v7492 = vld [vmem:[%s7310 + $0xf9] sm:$0xff]
      %v7493 = vld [vmem:[%s7310 + $0x109] sm:$0xff]
      %v7494 = vld [vmem:[%s7310 + $0x111] sm:$0xff]
      %v7495 = vld [vmem:[%s7310 + $0x121] sm:$0xff]
      %v7496 = vld [vmem:[%s7310 + $0x129] sm:$0xff]
      %v7497 = vld [vmem:[%s7310 + $0x139] sm:$0xff]
      %v7498 = vld [vmem:[%s7310 + $0x141] sm:$0xff]
      %v7499 = vld [vmem:[%s7310 + $0x151] sm:$0xff]
      %v7500 = vld [vmem:[%s7310 + $0x159] sm:$0xff]
      %v7501 = vld [vmem:[%s7310 + $0x169] sm:$0xff]
      %v7502 = vld [vmem:[%s7310 + $0x171] sm:$0xff]
      %v7503 = vld [vmem:[%s7310 + $0x2] sm:$0xff]
      %v7504 = vld [vmem:[%s7310 + $0xa] sm:$0xff]
      %v7505 = vld [vmem:[%s7310 + $0x1a] sm:$0xff]
      %v7506 = vld [vmem:[%s7310 + $0x22] sm:$0xff]
      %v7507 = vld [vmem:[%s7310 + $0x32] sm:$0xff]
      %v7508 = vld [vmem:[%s7310 + $0x3a] sm:$0xff]
      %v7509 = vld [vmem:[%s7310 + $0x4a] sm:$0xff]
      %v7510 = vld [vmem:[%s7310 + $0x52] sm:$0xff]
      %v7511 = vld [vmem:[%s7310 + $0x62] sm:$0xff]
      %v7512 = vld [vmem:[%s7310 + $0x6a] sm:$0xff]
      %v7513 = vld [vmem:[%s7310 + $0x7a] sm:$0xff]
      %v7514 = vld [vmem:[%s7310 + $0x82] sm:$0xff]
      %v7515 = vld [vmem:[%s7310 + $0x92] sm:$0xff]
      %v7516 = vld [vmem:[%s7310 + $0x9a] sm:$0xff]
      %v7517 = vld [vmem:[%s7310 + $0xaa] sm:$0xff]
      %v7518 = vld [vmem:[%s7310 + $0xb2] sm:$0xff]
      %v7519 = vld [vmem:[%s7310 + $0xc2] sm:$0xff]
      %v7520 = vld [vmem:[%s7310 + $0xca] sm:$0xff]
      %v7521 = vld [vmem:[%s7310 + $0xda] sm:$0xff]
      %v7522 = vld [vmem:[%s7310 + $0xe2] sm:$0xff]
      %v7523 = vld [vmem:[%s7310 + $0xf2] sm:$0xff]
      %v7524 = vld [vmem:[%s7310 + $0xfa] sm:$0xff]
      %v7525 = vld [vmem:[%s7310 + $0x10a] sm:$0xff]
      %v7526 = vld [vmem:[%s7310 + $0x112] sm:$0xff]
      %v7527 = vld [vmem:[%s7310 + $0x122] sm:$0xff]
      %v7528 = vld [vmem:[%s7310 + $0x12a] sm:$0xff]
      %v7529 = vld [vmem:[%s7310 + $0x13a] sm:$0xff]
      %v7530 = vld [vmem:[%s7310 + $0x142] sm:$0xff]
      %v7531 = vld [vmem:[%s7310 + $0x152] sm:$0xff]
      %v7532 = vld [vmem:[%s7310 + $0x15a] sm:$0xff]
      %v7533 = vld [vmem:[%s7310 + $0x16a] sm:$0xff]
      %v7534 = vld [vmem:[%s7310 + $0x172] sm:$0xff]
      %s7535 = scalar_lea.vmem [#allocation4], 48
      %v7536 = vld [vmem:[%s7535] sm:$0xff]
      %v7537 = vld [vmem:[%s7535 + $0x8] sm:$0xff]
      %v7538 = vld [vmem:[%s7535 + $0x18] sm:$0xff]
      %v7539 = vld [vmem:[%s7535 + $0x20] sm:$0xff]
      %v7540 = vld [vmem:[%s7535 + $0x30] sm:$0xff]
      %v7541 = vld [vmem:[%s7535 + $0x38] sm:$0xff]
      %v7542 = vld [vmem:[%s7535 + $0x48] sm:$0xff]
      %v7543 = vld [vmem:[%s7535 + $0x50] sm:$0xff]
      %v7544 = vld [vmem:[%s7535 + $0x60] sm:$0xff]
      %v7545 = vld [vmem:[%s7535 + $0x68] sm:$0xff]
      %v7546 = vld [vmem:[%s7535 + $0x78] sm:$0xff]
      %v7547 = vld [vmem:[%s7535 + $0x80] sm:$0xff]
      %v7548 = vld [vmem:[%s7535 + $0x90] sm:$0xff]
      %v7549 = vld [vmem:[%s7535 + $0x98] sm:$0xff]
      %v7550 = vld [vmem:[%s7535 + $0xa8] sm:$0xff]
      %v7551 = vld [vmem:[%s7535 + $0xb0] sm:$0xff]
      %v7552 = vld [vmem:[%s7535 + $0xc0] sm:$0xff]
      %v7553 = vld [vmem:[%s7535 + $0xc8] sm:$0xff]
      %v7554 = vld [vmem:[%s7535 + $0xd8] sm:$0xff]
      %v7555 = vld [vmem:[%s7535 + $0xe0] sm:$0xff]
      %v7556 = vld [vmem:[%s7535 + $0xf0] sm:$0xff]
      %v7557 = vld [vmem:[%s7535 + $0xf8] sm:$0xff]
      %v7558 = vld [vmem:[%s7535 + $0x108] sm:$0xff]
      %v7559 = vld [vmem:[%s7535 + $0x110] sm:$0xff]
      %v7560 = vld [vmem:[%s7535 + $0x120] sm:$0xff]
      %v7561 = vld [vmem:[%s7535 + $0x128] sm:$0xff]
      %v7562 = vld [vmem:[%s7535 + $0x138] sm:$0xff]
      %v7563 = vld [vmem:[%s7535 + $0x140] sm:$0xff]
      %v7564 = vld [vmem:[%s7535 + $0x150] sm:$0xff]
      %v7565 = vld [vmem:[%s7535 + $0x158] sm:$0xff]
      %v7566 = vld [vmem:[%s7535 + $0x168] sm:$0xff]
      %v7567 = vld [vmem:[%s7535 + $0x170] sm:$0xff]
      %v7568 = vld [vmem:[%s7535 + $0x1] sm:$0xff]
      %v7569 = vld [vmem:[%s7535 + $0x9] sm:$0xff]
      %v7570 = vld [vmem:[%s7535 + $0x19] sm:$0xff]
      %v7571 = vld [vmem:[%s7535 + $0x21] sm:$0xff]
      %v7572 = vld [vmem:[%s7535 + $0x31] sm:$0xff]
      %v7573 = vld [vmem:[%s7535 + $0x39] sm:$0xff]
      %v7574 = vld [vmem:[%s7535 + $0x49] sm:$0xff]
      %v7575 = vld [vmem:[%s7535 + $0x51] sm:$0xff]
      %v7576 = vld [vmem:[%s7535 + $0x61] sm:$0xff]
      %v7577 = vld [vmem:[%s7535 + $0x69] sm:$0xff]
      %v7578 = vld [vmem:[%s7535 + $0x79] sm:$0xff]
      %v7579 = vld [vmem:[%s7535 + $0x81] sm:$0xff]
      %v7580 = vld [vmem:[%s7535 + $0x91] sm:$0xff]
      %v7581 = vld [vmem:[%s7535 + $0x99] sm:$0xff]
      %v7582 = vld [vmem:[%s7535 + $0xa9] sm:$0xff]
      %v7583 = vld [vmem:[%s7535 + $0xb1] sm:$0xff]
      %v7584 = vld [vmem:[%s7535 + $0xc1] sm:$0xff]
      %v7585 = vld [vmem:[%s7535 + $0xc9] sm:$0xff]
      %v7586 = vld [vmem:[%s7535 + $0xd9] sm:$0xff]
      %v7587 = vld [vmem:[%s7535 + $0xe1] sm:$0xff]
      %v7588 = vld [vmem:[%s7535 + $0xf1] sm:$0xff]
      %v7589 = vld [vmem:[%s7535 + $0xf9] sm:$0xff]
      %v7590 = vld [vmem:[%s7535 + $0x109] sm:$0xff]
      %v7591 = vld [vmem:[%s7535 + $0x111] sm:$0xff]
      %v7592 = vld [vmem:[%s7535 + $0x121] sm:$0xff]
      %v7593 = vld [vmem:[%s7535 + $0x129] sm:$0xff]
      %v7594 = vld [vmem:[%s7535 + $0x139] sm:$0xff]
      %v7595 = vld [vmem:[%s7535 + $0x141] sm:$0xff]
      %v7596 = vld [vmem:[%s7535 + $0x151] sm:$0xff]
      %v7597 = vld [vmem:[%s7535 + $0x159] sm:$0xff]
      %v7598 = vld [vmem:[%s7535 + $0x169] sm:$0xff]
      %v7599 = vld [vmem:[%s7535 + $0x171] sm:$0xff]
      %v7600 = vld [vmem:[%s7535 + $0x2] sm:$0xff]
      %v7601 = vld [vmem:[%s7535 + $0xa] sm:$0xff]
      %v7602 = vld [vmem:[%s7535 + $0x1a] sm:$0xff]
      %v7603 = vld [vmem:[%s7535 + $0x22] sm:$0xff]
      %v7604 = vld [vmem:[%s7535 + $0x32] sm:$0xff]
      %v7605 = vld [vmem:[%s7535 + $0x3a] sm:$0xff]
      %v7606 = vld [vmem:[%s7535 + $0x4a] sm:$0xff]
      %v7607 = vld [vmem:[%s7535 + $0x52] sm:$0xff]
      %v7608 = vld [vmem:[%s7535 + $0x62] sm:$0xff]
      %v7609 = vld [vmem:[%s7535 + $0x6a] sm:$0xff]
      %v7610 = vld [vmem:[%s7535 + $0x7a] sm:$0xff]
      %v7611 = vld [vmem:[%s7535 + $0x82] sm:$0xff]
      %v7612 = vld [vmem:[%s7535 + $0x92] sm:$0xff]
      %v7613 = vld [vmem:[%s7535 + $0x9a] sm:$0xff]
      %v7614 = vld [vmem:[%s7535 + $0xaa] sm:$0xff]
      %v7615 = vld [vmem:[%s7535 + $0xb2] sm:$0xff]
      %v7616 = vld [vmem:[%s7535 + $0xc2] sm:$0xff]
      %v7617 = vld [vmem:[%s7535 + $0xca] sm:$0xff]
      %v7618 = vld [vmem:[%s7535 + $0xda] sm:$0xff]
      %v7619 = vld [vmem:[%s7535 + $0xe2] sm:$0xff]
      %v7620 = vld [vmem:[%s7535 + $0xf2] sm:$0xff]
      %v7621 = vld [vmem:[%s7535 + $0xfa] sm:$0xff]
      %v7622 = vld [vmem:[%s7535 + $0x10a] sm:$0xff]
      %v7623 = vld [vmem:[%s7535 + $0x112] sm:$0xff]
      %v7624 = vld [vmem:[%s7535 + $0x122] sm:$0xff]
      %v7625 = vld [vmem:[%s7535 + $0x12a] sm:$0xff]
      %v7626 = vld [vmem:[%s7535 + $0x13a] sm:$0xff]
      %v7627 = vld [vmem:[%s7535 + $0x142] sm:$0xff]
      %v7628 = vld [vmem:[%s7535 + $0x152] sm:$0xff]
      %v7629 = vld [vmem:[%s7535 + $0x15a] sm:$0xff]
      %v7630 = vld [vmem:[%s7535 + $0x16a] sm:$0xff]
      %v7631 = vld [vmem:[%s7535 + $0x172] sm:$0xff]
      %7664 = vrot.lane.b32.xlu0 %v7375, 64
      %v7665 = vpop.permute.xlu0 %7664
      %7666 = vrot.lane.b32.xlu0 %v7376, 64
      %v7667 = vpop.permute.xlu0 %7666
      %7668 = vrot.lane.b32.xlu0 %v7377, 64
      %v7669 = vpop.permute.xlu0 %7668
      %7670 = vrot.lane.b32.xlu0 %v7378, 64
      %v7671 = vpop.permute.xlu0 %7670
      %7672 = vrot.lane.b32.xlu0 %v7379, 64
      %v7673 = vpop.permute.xlu0 %7672
      %7674 = vrot.lane.b32.xlu0 %v7380, 64
      %v7675 = vpop.permute.xlu0 %7674
      %7676 = vrot.lane.b32.xlu0 %v7381, 64
      %v7677 = vpop.permute.xlu0 %7676
      %7678 = vrot.lane.b32.xlu0 %v7382, 64
      %v7679 = vpop.permute.xlu0 %7678
      %7680 = vrot.lane.b32.xlu0 %v7383, 64
      %v7681 = vpop.permute.xlu0 %7680
      %7682 = vrot.lane.b32.xlu0 %v7384, 64
      %v7683 = vpop.permute.xlu0 %7682
      %7684 = vrot.lane.b32.xlu0 %v7385, 64
      %v7685 = vpop.permute.xlu0 %7684
      %7686 = vrot.lane.b32.xlu0 %v7386, 64
      %v7687 = vpop.permute.xlu0 %7686
      %7688 = vrot.lane.b32.xlu0 %v7387, 64
      %v7689 = vpop.permute.xlu0 %7688
      %7690 = vrot.lane.b32.xlu0 %v7388, 64
      %v7691 = vpop.permute.xlu0 %7690
      %7692 = vrot.lane.b32.xlu0 %v7389, 64
      %v7693 = vpop.permute.xlu0 %7692
      %7694 = vrot.lane.b32.xlu0 %v7390, 64
      %v7695 = vpop.permute.xlu0 %7694
      %7696 = vrot.lane.b32.xlu0 %v7391, 64
      %v7697 = vpop.permute.xlu0 %7696
      %7698 = vrot.lane.b32.xlu0 %v7392, 64
      %v7699 = vpop.permute.xlu0 %7698
      %7700 = vrot.lane.b32.xlu0 %v7393, 64
      %v7701 = vpop.permute.xlu0 %7700
      %7702 = vrot.lane.b32.xlu0 %v7394, 64
      %v7703 = vpop.permute.xlu0 %7702
      %7704 = vrot.lane.b32.xlu0 %v7395, 64
      %v7705 = vpop.permute.xlu0 %7704
      %7706 = vrot.lane.b32.xlu0 %v7396, 64
      %v7707 = vpop.permute.xlu0 %7706
      %7708 = vrot.lane.b32.xlu0 %v7397, 64
      %v7709 = vpop.permute.xlu0 %7708
      %7710 = vrot.lane.b32.xlu0 %v7398, 64
      %v7711 = vpop.permute.xlu0 %7710
      %7712 = vrot.lane.b32.xlu0 %v7399, 64
      %v7713 = vpop.permute.xlu0 %7712
      %7714 = vrot.lane.b32.xlu0 %v7400, 64
      %v7715 = vpop.permute.xlu0 %7714
      %7716 = vrot.lane.b32.xlu0 %v7401, 64
      %v7717 = vpop.permute.xlu0 %7716
      %7718 = vrot.lane.b32.xlu0 %v7402, 64
      %v7719 = vpop.permute.xlu0 %7718
      %7720 = vrot.lane.b32.xlu0 %v7403, 64
      %v7721 = vpop.permute.xlu0 %7720
      %7722 = vrot.lane.b32.xlu0 %v7404, 64
      %v7723 = vpop.permute.xlu0 %7722
      %7724 = vrot.lane.b32.xlu0 %v7405, 64
      %v7725 = vpop.permute.xlu0 %7724
      %7726 = vrot.lane.b32.xlu0 %v7406, 64
      %v7727 = vpop.permute.xlu0 %7726
      %7792 = vrot.lane.b32.xlu0 %v7439, 64
      %v7793 = vpop.permute.xlu0 %7792
      %7794 = vrot.lane.b32.xlu0 %v7440, 64
      %v7795 = vpop.permute.xlu0 %7794
      %7796 = vrot.lane.b32.xlu0 %v7441, 64
      %v7797 = vpop.permute.xlu0 %7796
      %7798 = vrot.lane.b32.xlu0 %v7442, 64
      %v7799 = vpop.permute.xlu0 %7798
      %7800 = vrot.lane.b32.xlu0 %v7443, 64
      %v7801 = vpop.permute.xlu0 %7800
      %7802 = vrot.lane.b32.xlu0 %v7444, 64
      %v7803 = vpop.permute.xlu0 %7802
      %7804 = vrot.lane.b32.xlu0 %v7445, 64
      %v7805 = vpop.permute.xlu0 %7804
      %7806 = vrot.lane.b32.xlu0 %v7446, 64
      %v7807 = vpop.permute.xlu0 %7806
      %7808 = vrot.lane.b32.xlu0 %v7447, 64
      %v7809 = vpop.permute.xlu0 %7808
      %7810 = vrot.lane.b32.xlu0 %v7448, 64
      %v7811 = vpop.permute.xlu0 %7810
      %7812 = vrot.lane.b32.xlu0 %v7449, 64
      %v7813 = vpop.permute.xlu0 %7812
      %7814 = vrot.lane.b32.xlu0 %v7450, 64
      %v7815 = vpop.permute.xlu0 %7814
      %7816 = vrot.lane.b32.xlu0 %v7451, 64
      %v7817 = vpop.permute.xlu0 %7816
      %7818 = vrot.lane.b32.xlu0 %v7452, 64
      %v7819 = vpop.permute.xlu0 %7818
      %7820 = vrot.lane.b32.xlu0 %v7453, 64
      %v7821 = vpop.permute.xlu0 %7820
      %7822 = vrot.lane.b32.xlu0 %v7454, 64
      %v7823 = vpop.permute.xlu0 %7822
      %7824 = vrot.lane.b32.xlu0 %v7455, 64
      %v7825 = vpop.permute.xlu0 %7824
      %7826 = vrot.lane.b32.xlu0 %v7456, 64
      %v7827 = vpop.permute.xlu0 %7826
      %7828 = vrot.lane.b32.xlu0 %v7457, 64
      %v7829 = vpop.permute.xlu0 %7828
      %7830 = vrot.lane.b32.xlu0 %v7458, 64
      %v7831 = vpop.permute.xlu0 %7830
      %7832 = vrot.lane.b32.xlu0 %v7459, 64
      %v7833 = vpop.permute.xlu0 %7832
      %7834 = vrot.lane.b32.xlu0 %v7460, 64
      %v7835 = vpop.permute.xlu0 %7834
      %7836 = vrot.lane.b32.xlu0 %v7461, 64
      %v7837 = vpop.permute.xlu0 %7836
      %7838 = vrot.lane.b32.xlu0 %v7462, 64
      %v7839 = vpop.permute.xlu0 %7838
      %7840 = vrot.lane.b32.xlu0 %v7463, 64
      %v7841 = vpop.permute.xlu0 %7840
      %7842 = vrot.lane.b32.xlu0 %v7464, 64
      %v7843 = vpop.permute.xlu0 %7842
      %7844 = vrot.lane.b32.xlu0 %v7465, 64
      %v7845 = vpop.permute.xlu0 %7844
      %7846 = vrot.lane.b32.xlu0 %v7466, 64
      %v7847 = vpop.permute.xlu0 %7846
      %7848 = vrot.lane.b32.xlu0 %v7467, 64
      %v7849 = vpop.permute.xlu0 %7848
      %7850 = vrot.lane.b32.xlu0 %v7468, 64
      %v7851 = vpop.permute.xlu0 %7850
      %7852 = vrot.lane.b32.xlu0 %v7469, 64
      %v7853 = vpop.permute.xlu0 %7852
      %7854 = vrot.lane.b32.xlu0 %v7470, 64
      %v7855 = vpop.permute.xlu0 %7854
      %7920 = vrot.lane.b32.xlu0 %v7503, 64
      %v7921 = vpop.permute.xlu0 %7920
      %7922 = vrot.lane.b32.xlu0 %v7504, 64
      %v7923 = vpop.permute.xlu0 %7922
      %7924 = vrot.lane.b32.xlu0 %v7505, 64
      %v7925 = vpop.permute.xlu0 %7924
      %7926 = vrot.lane.b32.xlu0 %v7506, 64
      %v7927 = vpop.permute.xlu0 %7926
      %7928 = vrot.lane.b32.xlu0 %v7507, 64
      %v7929 = vpop.permute.xlu0 %7928
      %7930 = vrot.lane.b32.xlu0 %v7508, 64
      %v7931 = vpop.permute.xlu0 %7930
      %7932 = vrot.lane.b32.xlu0 %v7509, 64
      %v7933 = vpop.permute.xlu0 %7932
      %7934 = vrot.lane.b32.xlu0 %v7510, 64
      %v7935 = vpop.permute.xlu0 %7934
      %7936 = vrot.lane.b32.xlu0 %v7511, 64
      %v7937 = vpop.permute.xlu0 %7936
      %7938 = vrot.lane.b32.xlu0 %v7512, 64
      %v7939 = vpop.permute.xlu0 %7938
      %7940 = vrot.lane.b32.xlu0 %v7513, 64
      %v7941 = vpop.permute.xlu0 %7940
      %7942 = vrot.lane.b32.xlu0 %v7514, 64
      %v7943 = vpop.permute.xlu0 %7942
      %7944 = vrot.lane.b32.xlu0 %v7515, 64
      %v7945 = vpop.permute.xlu0 %7944
      %7946 = vrot.lane.b32.xlu0 %v7516, 64
      %v7947 = vpop.permute.xlu0 %7946
      %7948 = vrot.lane.b32.xlu0 %v7517, 64
      %v7949 = vpop.permute.xlu0 %7948
      %7950 = vrot.lane.b32.xlu0 %v7518, 64
      %v7951 = vpop.permute.xlu0 %7950
      %7952 = vrot.lane.b32.xlu0 %v7519, 64
      %v7953 = vpop.permute.xlu0 %7952
      %7954 = vrot.lane.b32.xlu0 %v7520, 64
      %v7955 = vpop.permute.xlu0 %7954
      %7956 = vrot.lane.b32.xlu0 %v7521, 64
      %v7957 = vpop.permute.xlu0 %7956
      %7958 = vrot.lane.b32.xlu0 %v7522, 64
      %v7959 = vpop.permute.xlu0 %7958
      %7960 = vrot.lane.b32.xlu0 %v7523, 64
      %v7961 = vpop.permute.xlu0 %7960
      %7962 = vrot.lane.b32.xlu0 %v7524, 64
      %v7963 = vpop.permute.xlu0 %7962
      %7964 = vrot.lane.b32.xlu0 %v7525, 64
      %v7965 = vpop.permute.xlu0 %7964
      %7966 = vrot.lane.b32.xlu0 %v7526, 64
      %v7967 = vpop.permute.xlu0 %7966
      %7968 = vrot.lane.b32.xlu0 %v7527, 64
      %v7969 = vpop.permute.xlu0 %7968
      %7970 = vrot.lane.b32.xlu0 %v7528, 64
      %v7971 = vpop.permute.xlu0 %7970
      %7972 = vrot.lane.b32.xlu0 %v7529, 64
      %v7973 = vpop.permute.xlu0 %7972
      %7974 = vrot.lane.b32.xlu0 %v7530, 64
      %v7975 = vpop.permute.xlu0 %7974
      %7976 = vrot.lane.b32.xlu0 %v7531, 64
      %v7977 = vpop.permute.xlu0 %7976
      %7978 = vrot.lane.b32.xlu0 %v7532, 64
      %v7979 = vpop.permute.xlu0 %7978
      %7980 = vrot.lane.b32.xlu0 %v7533, 64
      %v7981 = vpop.permute.xlu0 %7980
      %7982 = vrot.lane.b32.xlu0 %v7534, 64
      %v7983 = vpop.permute.xlu0 %7982
      %8048 = vrot.lane.b32.xlu0 %v7568, 64
      %v8049 = vpop.permute.xlu0 %8048
      %8050 = vrot.lane.b32.xlu0 %v7569, 64
      %v8051 = vpop.permute.xlu0 %8050
      %8052 = vrot.lane.b32.xlu0 %v7570, 64
      %v8053 = vpop.permute.xlu0 %8052
      %8054 = vrot.lane.b32.xlu0 %v7571, 64
      %v8055 = vpop.permute.xlu0 %8054
      %8056 = vrot.lane.b32.xlu0 %v7572, 64
      %v8057 = vpop.permute.xlu0 %8056
      %8058 = vrot.lane.b32.xlu0 %v7573, 64
      %v8059 = vpop.permute.xlu0 %8058
      %8060 = vrot.lane.b32.xlu0 %v7574, 64
      %v8061 = vpop.permute.xlu0 %8060
      %8062 = vrot.lane.b32.xlu0 %v7575, 64
      %v8063 = vpop.permute.xlu0 %8062
      %8064 = vrot.lane.b32.xlu0 %v7576, 64
      %v8065 = vpop.permute.xlu0 %8064
      %8066 = vrot.lane.b32.xlu0 %v7577, 64
      %v8067 = vpop.permute.xlu0 %8066
      %8068 = vrot.lane.b32.xlu0 %v7578, 64
      %v8069 = vpop.permute.xlu0 %8068
      %8070 = vrot.lane.b32.xlu0 %v7579, 64
      %v8071 = vpop.permute.xlu0 %8070
      %8072 = vrot.lane.b32.xlu0 %v7580, 64
      %v8073 = vpop.permute.xlu0 %8072
      %8074 = vrot.lane.b32.xlu0 %v7581, 64
      %v8075 = vpop.permute.xlu0 %8074
      %8076 = vrot.lane.b32.xlu0 %v7582, 64
      %v8077 = vpop.permute.xlu0 %8076
      %8078 = vrot.lane.b32.xlu0 %v7583, 64
      %v8079 = vpop.permute.xlu0 %8078
      %8080 = vrot.lane.b32.xlu0 %v7584, 64
      %v8081 = vpop.permute.xlu0 %8080
      %8082 = vrot.lane.b32.xlu0 %v7585, 64
      %v8083 = vpop.permute.xlu0 %8082
      %8084 = vrot.lane.b32.xlu0 %v7586, 64
      %v8085 = vpop.permute.xlu0 %8084
      %8086 = vrot.lane.b32.xlu0 %v7587, 64
      %v8087 = vpop.permute.xlu0 %8086
      %8088 = vrot.lane.b32.xlu0 %v7588, 64
      %v8089 = vpop.permute.xlu0 %8088
      %8090 = vrot.lane.b32.xlu0 %v7589, 64
      %v8091 = vpop.permute.xlu0 %8090
      %8092 = vrot.lane.b32.xlu0 %v7590, 64
      %v8093 = vpop.permute.xlu0 %8092
      %8094 = vrot.lane.b32.xlu0 %v7591, 64
      %v8095 = vpop.permute.xlu0 %8094
      %8096 = vrot.lane.b32.xlu0 %v7592, 64
      %v8097 = vpop.permute.xlu0 %8096
      %8098 = vrot.lane.b32.xlu0 %v7593, 64
      %v8099 = vpop.permute.xlu0 %8098
      %8100 = vrot.lane.b32.xlu0 %v7594, 64
      %v8101 = vpop.permute.xlu0 %8100
      %8102 = vrot.lane.b32.xlu0 %v7595, 64
      %v8103 = vpop.permute.xlu0 %8102
      %8104 = vrot.lane.b32.xlu0 %v7596, 64
      %v8105 = vpop.permute.xlu0 %8104
      %8106 = vrot.lane.b32.xlu0 %v7597, 64
      %v8107 = vpop.permute.xlu0 %8106
      %8108 = vrot.lane.b32.xlu0 %v7598, 64
      %v8109 = vpop.permute.xlu0 %8108
      %8110 = vrot.lane.b32.xlu0 %v7599, 64
      %v8111 = vpop.permute.xlu0 %8110
      %v8144 = vsel %vm449, %v7343, %v7665
      %v8145 = vsel %vm449, %v7344, %v7667
      %v8146 = vsel %vm449, %v7345, %v7669
      %v8147 = vsel %vm449, %v7346, %v7671
      %v8148 = vsel %vm449, %v7347, %v7673
      %v8149 = vsel %vm449, %v7348, %v7675
      %v8150 = vsel %vm449, %v7349, %v7677
      %v8151 = vsel %vm449, %v7350, %v7679
      %v8152 = vsel %vm449, %v7351, %v7681
      %v8153 = vsel %vm449, %v7352, %v7683
      %v8154 = vsel %vm449, %v7353, %v7685
      %v8155 = vsel %vm449, %v7354, %v7687
      %v8156 = vsel %vm449, %v7355, %v7689
      %v8157 = vsel %vm449, %v7356, %v7691
      %v8158 = vsel %vm449, %v7357, %v7693
      %v8159 = vsel %vm449, %v7358, %v7695
      %v8160 = vsel %vm449, %v7359, %v7697
      %v8161 = vsel %vm449, %v7360, %v7699
      %v8162 = vsel %vm449, %v7361, %v7701
      %v8163 = vsel %vm449, %v7362, %v7703
      %v8164 = vsel %vm449, %v7363, %v7705
      %v8165 = vsel %vm449, %v7364, %v7707
      %v8166 = vsel %vm449, %v7365, %v7709
      %v8167 = vsel %vm449, %v7366, %v7711
      %v8168 = vsel %vm449, %v7367, %v7713
      %v8169 = vsel %vm449, %v7368, %v7715
      %v8170 = vsel %vm449, %v7369, %v7717
      %v8171 = vsel %vm449, %v7370, %v7719
      %v8172 = vsel %vm449, %v7371, %v7721
      %v8173 = vsel %vm449, %v7372, %v7723
      %v8174 = vsel %vm449, %v7373, %v7725
      %v8175 = vsel %vm449, %v7374, %v7727
      %v8176 = vsel %vm449, %v7407, %v7793
      %v8177 = vsel %vm449, %v7408, %v7795
      %v8178 = vsel %vm449, %v7409, %v7797
      %v8179 = vsel %vm449, %v7410, %v7799
      %v8180 = vsel %vm449, %v7411, %v7801
      %v8181 = vsel %vm449, %v7412, %v7803
      %v8182 = vsel %vm449, %v7413, %v7805
      %v8183 = vsel %vm449, %v7414, %v7807
      %v8184 = vsel %vm449, %v7415, %v7809
      %v8185 = vsel %vm449, %v7416, %v7811
      %v8186 = vsel %vm449, %v7417, %v7813
      %v8187 = vsel %vm449, %v7418, %v7815
      %v8188 = vsel %vm449, %v7419, %v7817
      %v8189 = vsel %vm449, %v7420, %v7819
      %v8190 = vsel %vm449, %v7421, %v7821
      %v8191 = vsel %vm449, %v7422, %v7823
      %v8192 = vsel %vm449, %v7423, %v7825
      %v8193 = vsel %vm449, %v7424, %v7827
      %v8194 = vsel %vm449, %v7425, %v7829
      %v8195 = vsel %vm449, %v7426, %v7831
      %v8196 = vsel %vm449, %v7427, %v7833
      %v8197 = vsel %vm449, %v7428, %v7835
      %v8198 = vsel %vm449, %v7429, %v7837
      %v8199 = vsel %vm449, %v7430, %v7839
      %v8200 = vsel %vm449, %v7431, %v7841
      %v8201 = vsel %vm449, %v7432, %v7843
      %v8202 = vsel %vm449, %v7433, %v7845
      %v8203 = vsel %vm449, %v7434, %v7847
      %v8204 = vsel %vm449, %v7435, %v7849
      %v8205 = vsel %vm449, %v7436, %v7851
      %v8206 = vsel %vm449, %v7437, %v7853
      %v8207 = vsel %vm449, %v7438, %v7855
      %v8208 = vsel %vm449, %v7471, %v7921
      %v8209 = vsel %vm449, %v7472, %v7923
      %v8210 = vsel %vm449, %v7473, %v7925
      %v8211 = vsel %vm449, %v7474, %v7927
      %v8212 = vsel %vm449, %v7475, %v7929
      %v8213 = vsel %vm449, %v7476, %v7931
      %v8214 = vsel %vm449, %v7477, %v7933
      %v8215 = vsel %vm449, %v7478, %v7935
      %v8216 = vsel %vm449, %v7479, %v7937
      %v8217 = vsel %vm449, %v7480, %v7939
      %v8218 = vsel %vm449, %v7481, %v7941
      %v8219 = vsel %vm449, %v7482, %v7943
      %v8220 = vsel %vm449, %v7483, %v7945
      %v8221 = vsel %vm449, %v7484, %v7947
      %v8222 = vsel %vm449, %v7485, %v7949
      %v8223 = vsel %vm449, %v7486, %v7951
      %v8224 = vsel %vm449, %v7487, %v7953
      %v8225 = vsel %vm449, %v7488, %v7955
      %v8226 = vsel %vm449, %v7489, %v7957
      %v8227 = vsel %vm449, %v7490, %v7959
      %v8228 = vsel %vm449, %v7491, %v7961
      %v8229 = vsel %vm449, %v7492, %v7963
      %v8230 = vsel %vm449, %v7493, %v7965
      %v8231 = vsel %vm449, %v7494, %v7967
      %v8232 = vsel %vm449, %v7495, %v7969
      %v8233 = vsel %vm449, %v7496, %v7971
      %v8234 = vsel %vm449, %v7497, %v7973
      %v8235 = vsel %vm449, %v7498, %v7975
      %v8236 = vsel %vm449, %v7499, %v7977
      %v8237 = vsel %vm449, %v7500, %v7979
      %v8238 = vsel %vm449, %v7501, %v7981
      %v8239 = vsel %vm449, %v7502, %v7983
      %v8240 = vsel %vm449, %v7536, %v8049
      %v8241 = vsel %vm449, %v7537, %v8051
      %v8242 = vsel %vm449, %v7538, %v8053
      %v8243 = vsel %vm449, %v7539, %v8055
      %v8244 = vsel %vm449, %v7540, %v8057
      %v8245 = vsel %vm449, %v7541, %v8059
      %v8246 = vsel %vm449, %v7542, %v8061
      %v8247 = vsel %vm449, %v7543, %v8063
      %v8248 = vsel %vm449, %v7544, %v8065
      %v8249 = vsel %vm449, %v7545, %v8067
      %v8250 = vsel %vm449, %v7546, %v8069
      %v8251 = vsel %vm449, %v7547, %v8071
      %v8252 = vsel %vm449, %v7548, %v8073
      %v8253 = vsel %vm449, %v7549, %v8075
      %v8254 = vsel %vm449, %v7550, %v8077
      %v8255 = vsel %vm449, %v7551, %v8079
      %v8256 = vsel %vm449, %v7552, %v8081
      %v8257 = vsel %vm449, %v7553, %v8083
      %v8258 = vsel %vm449, %v7554, %v8085
      %v8259 = vsel %vm449, %v7555, %v8087
      %v8260 = vsel %vm449, %v7556, %v8089
      %v8261 = vsel %vm449, %v7557, %v8091
      %v8262 = vsel %vm449, %v7558, %v8093
      %v8263 = vsel %vm449, %v7559, %v8095
      %v8264 = vsel %vm449, %v7560, %v8097
      %v8265 = vsel %vm449, %v7561, %v8099
      %v8266 = vsel %vm449, %v7562, %v8101
      %v8267 = vsel %vm449, %v7563, %v8103
      %v8268 = vsel %vm449, %v7564, %v8105
      %v8269 = vsel %vm449, %v7565, %v8107
      %v8270 = vsel %vm449, %v7566, %v8109
      %v8271 = vsel %vm449, %v7567, %v8111
      %v8272 = vld [vmem:[%s5] sm:$0xff]
      %v8273 = vld [vmem:[%s5 + $0x8] sm:$0xff]
      %v8274 = vld [vmem:[%s5 + $0x10] sm:$0xff]
      %v8275 = vld [vmem:[%s5 + $0x18] sm:$0xff]
      %v8276 = vld [vmem:[%s5 + $0x20] sm:$0xff]
      %v8277 = vld [vmem:[%s5 + $0x28] sm:$0xff]
      %v8278 = vld [vmem:[%s5 + $0x30] sm:$0xff]
      %v8279 = vld [vmem:[%s5 + $0x38] sm:$0xff]
      %v8280 = vld [vmem:[%s5 + $0x40] sm:$0xff]
      %v8281 = vld [vmem:[%s5 + $0x48] sm:$0xff]
      %v8282 = vld [vmem:[%s5 + $0x50] sm:$0xff]
      %v8283 = vld [vmem:[%s5 + $0x58] sm:$0xff]
      %v8284 = vld [vmem:[%s5 + $0x60] sm:$0xff]
      %v8285 = vld [vmem:[%s5 + $0x68] sm:$0xff]
      %v8286 = vld [vmem:[%s5 + $0x70] sm:$0xff]
      %v8287 = vld [vmem:[%s5 + $0x78] sm:$0xff]
      %v8288 = vld [vmem:[%s5 + $0x80] sm:$0xff]
      %v8289 = vld [vmem:[%s5 + $0x88] sm:$0xff]
      %v8290 = vld [vmem:[%s5 + $0x90] sm:$0xff]
      %v8291 = vld [vmem:[%s5 + $0x98] sm:$0xff]
      %v8292 = vld [vmem:[%s5 + $0xa0] sm:$0xff]
      %v8293 = vld [vmem:[%s5 + $0xa8] sm:$0xff]
      %v8294 = vld [vmem:[%s5 + $0xb0] sm:$0xff]
      %v8295 = vld [vmem:[%s5 + $0xb8] sm:$0xff]
      %v8296 = vld [vmem:[%s5 + $0xc0] sm:$0xff]
      %v8297 = vld [vmem:[%s5 + $0xc8] sm:$0xff]
      %v8298 = vld [vmem:[%s5 + $0xd0] sm:$0xff]
      %v8299 = vld [vmem:[%s5 + $0xd8] sm:$0xff]
      %v8300 = vld [vmem:[%s5 + $0xe0] sm:$0xff]
      %v8301 = vld [vmem:[%s5 + $0xe8] sm:$0xff]
      %v8302 = vld [vmem:[%s5 + $0xf0] sm:$0xff]
      %v8303 = vld [vmem:[%s5 + $0xf8] sm:$0xff]
      %v8304 = vld [vmem:[%s5 + $0x100] sm:$0xff]
      %v8305 = vld [vmem:[%s5 + $0x108] sm:$0xff]
      %v8306 = vld [vmem:[%s5 + $0x110] sm:$0xff]
      %v8307 = vld [vmem:[%s5 + $0x118] sm:$0xff]
      %v8308 = vld [vmem:[%s5 + $0x120] sm:$0xff]
      %v8309 = vld [vmem:[%s5 + $0x128] sm:$0xff]
      %v8310 = vld [vmem:[%s5 + $0x130] sm:$0xff]
      %v8311 = vld [vmem:[%s5 + $0x138] sm:$0xff]
      %v8312 = vld [vmem:[%s5 + $0x140] sm:$0xff]
      %v8313 = vld [vmem:[%s5 + $0x148] sm:$0xff]
      %v8314 = vld [vmem:[%s5 + $0x150] sm:$0xff]
      %v8315 = vld [vmem:[%s5 + $0x158] sm:$0xff]
      %v8316 = vld [vmem:[%s5 + $0x160] sm:$0xff]
      %v8317 = vld [vmem:[%s5 + $0x168] sm:$0xff]
      %v8318 = vld [vmem:[%s5 + $0x170] sm:$0xff]
      %v8319 = vld [vmem:[%s5 + $0x178] sm:$0xff]
      %v8320 = vld [vmem:[%s5 + $0x180] sm:$0xff]
      %v8321 = vld [vmem:[%s5 + $0x188] sm:$0xff]
      %v8322 = vld [vmem:[%s5 + $0x190] sm:$0xff]
      %v8323 = vld [vmem:[%s5 + $0x198] sm:$0xff]
      %v8324 = vld [vmem:[%s5 + $0x1a0] sm:$0xff]
      %v8325 = vld [vmem:[%s5 + $0x1a8] sm:$0xff]
      %v8326 = vld [vmem:[%s5 + $0x1b0] sm:$0xff]
      %v8327 = vld [vmem:[%s5 + $0x1b8] sm:$0xff]
      %v8328 = vld [vmem:[%s5 + $0x1c0] sm:$0xff]
      %v8329 = vld [vmem:[%s5 + $0x1c8] sm:$0xff]
      %v8330 = vld [vmem:[%s5 + $0x1d0] sm:$0xff]
      %v8331 = vld [vmem:[%s5 + $0x1d8] sm:$0xff]
      %v8332 = vld [vmem:[%s5 + $0x1e0] sm:$0xff]
      %v8333 = vld [vmem:[%s5 + $0x1e8] sm:$0xff]
      %v8334 = vld [vmem:[%s5 + $0x1f0] sm:$0xff]
      %v8335 = vld [vmem:[%s5 + $0x1f8] sm:$0xff]
      %v8336 = vld [vmem:[%s5 + $0x200] sm:$0xff]
      %v8337 = vld [vmem:[%s5 + $0x208] sm:$0xff]
      %v8338 = vld [vmem:[%s5 + $0x210] sm:$0xff]
      %v8339 = vld [vmem:[%s5 + $0x218] sm:$0xff]
      %v8340 = vld [vmem:[%s5 + $0x220] sm:$0xff]
      %v8341 = vld [vmem:[%s5 + $0x228] sm:$0xff]
      %v8342 = vld [vmem:[%s5 + $0x230] sm:$0xff]
      %v8343 = vld [vmem:[%s5 + $0x238] sm:$0xff]
      %v8344 = vld [vmem:[%s6] sm:$0x1]
      %v8346 = vlaneseq
      %v8347 = vshrl.u32 %v8346, 7
      %v8348 = vsub.s32 0, %v8347
      %v8349 = vrot.slane %v8344, %v8348
      %v8352 = vsel %vm449, %v7600, 0
      %v8355 = vsel %vm449, %v7601, 0
      %v8358 = vsel %vm449, %v7602, 0
      %v8361 = vsel %vm449, %v7603, 0
      %v8364 = vsel %vm449, %v7604, 0
      %v8367 = vsel %vm449, %v7605, 0
      %v8370 = vsel %vm449, %v7606, 0
      %v8373 = vsel %vm449, %v7607, 0
      %v8376 = vsel %vm449, %v7608, 0
      %v8379 = vsel %vm449, %v7609, 0
      %v8382 = vsel %vm449, %v7610, 0
      %v8385 = vsel %vm449, %v7611, 0
      %v8388 = vsel %vm449, %v7612, 0
      %v8391 = vsel %vm449, %v7613, 0
      %v8394 = vsel %vm449, %v7614, 0
      %v8397 = vsel %vm449, %v7615, 0
      %v8400 = vsel %vm449, %v7616, 0
      %v8403 = vsel %vm449, %v7617, 0
      %v8406 = vsel %vm449, %v7618, 0
      %v8409 = vsel %vm449, %v7619, 0
      %v8412 = vsel %vm449, %v7620, 0
      %v8415 = vsel %vm449, %v7621, 0
      %v8418 = vsel %vm449, %v7622, 0
      %v8421 = vsel %vm449, %v7623, 0
      %v8424 = vsel %vm449, %v7624, 0
      %v8427 = vsel %vm449, %v7625, 0
      %v8430 = vsel %vm449, %v7626, 0
      %v8433 = vsel %vm449, %v7627, 0
      %v8436 = vsel %vm449, %v7628, 0
      %v8439 = vsel %vm449, %v7629, 0
      %v8442 = vsel %vm449, %v7630, 0
      %v8445 = vsel %vm449, %v7631, 0
      %8447 = vmatprep.subr.mxu0 0.0
      %8448 = vmatpush1.msra.mxu0 %v8287
      %8449 = vmatprep.subr.mxu0 0.0
      %8450 = vmatpush1.msra.mxu0 %v8286
      %8451 = vmatprep.subr.mxu0 0.0
      %8452 = vmatpush1.msra.mxu0 %v8285
      %8453 = vmatprep.subr.mxu0 0.0
      %8454 = vmatpush1.msra.mxu0 %v8284
      %8455 = vmatprep.subr.mxu0 0.0
      %8456 = vmatpush1.msra.mxu0 %v8283
      %8457 = vmatprep.subr.mxu0 0.0
      %8458 = vmatpush1.msra.mxu0 %v8282
      %8459 = vmatprep.subr.mxu0 0.0
      %8460 = vmatpush1.msra.mxu0 %v8281
      %8461 = vmatprep.subr.mxu0 0.0
      %8462 = vmatpush1.msra.mxu0 %v8280
      %8463 = vmatprep.subr.mxu0 0.0
      %8464 = vmatpush1.msra.mxu0 %v8279
      %8465 = vmatprep.subr.mxu0 0.0
      %8466 = vmatpush1.msra.mxu0 %v8278
      %8467 = vmatprep.subr.mxu0 0.0
      %8468 = vmatpush1.msra.mxu0 %v8277
      %8469 = vmatprep.subr.mxu0 0.0
      %8470 = vmatpush1.msra.mxu0 %v8276
      %8471 = vmatprep.subr.mxu0 0.0
      %8472 = vmatpush1.msra.mxu0 %v8275
      %8473 = vmatprep.subr.mxu0 0.0
      %8474 = vmatpush1.msra.mxu0 %v8274
      %8475 = vmatprep.subr.mxu0 0.0
      %8476 = vmatpush1.msra.mxu0 %v8273
      %8477 = vmatprep.subr.mxu0 0.0
      %8478 = vmatpush1.msra.mxu0 %v8272
      %8479 = vmatprep.subr.mxu0 0.0
      %8480 = vmatpush2.msra.mxu0 %v8303
      %8481 = vmatprep.subr.mxu0 0.0
      %8482 = vmatpush2.msra.mxu0 %v8302
      %8483 = vmatprep.subr.mxu0 0.0
      %8484 = vmatpush2.msra.mxu0 %v8301
      %8485 = vmatprep.subr.mxu0 0.0
      %8486 = vmatpush2.msra.mxu0 %v8300
      %8487 = vmatprep.subr.mxu0 0.0
      %8488 = vmatpush2.msra.mxu0 %v8299
      %8489 = vmatprep.subr.mxu0 0.0
      %8490 = vmatpush2.msra.mxu0 %v8298
      %8491 = vmatprep.subr.mxu0 0.0
      %8492 = vmatpush2.msra.mxu0 %v8297
      %8493 = vmatprep.subr.mxu0 0.0
      %8494 = vmatpush2.msra.mxu0 %v8296
      %8495 = vmatprep.subr.mxu0 0.0
      %8496 = vmatpush2.msra.mxu0 %v8295
      %8497 = vmatprep.subr.mxu0 0.0
      %8498 = vmatpush2.msra.mxu0 %v8294
      %8499 = vmatprep.subr.mxu0 0.0
      %8500 = vmatpush2.msra.mxu0 %v8293
      %8501 = vmatprep.subr.mxu0 0.0
      %8502 = vmatpush2.msra.mxu0 %v8292
      %8503 = vmatprep.subr.mxu0 0.0
      %8504 = vmatpush2.msra.mxu0 %v8291
      %8505 = vmatprep.subr.mxu0 0.0
      %8506 = vmatpush2.msra.mxu0 %v8290
      %8507 = vmatprep.subr.mxu0 0.0
      %8508 = vmatpush2.msra.mxu0 %v8289
      %8509 = vmatprep.subr.mxu0 0.0
      %8510 = vmatpush2.msra.mxu0 %v8288
      %8511 = vmatprep.mubr.f32.mxu0 %v8176
      %8512 = vmatmul.mubr.f32.gmra.mxu0 %v8144
      %v8513 = vpop.f32.mrf.mxu0
      %v8514 = vadd.f32 %v8349, %v8513
      %v8515 = vpop.f32.mrf.mxu0
      %8516 = vmatprep.mubr.f32.mxu0 %v8177
      %8517 = vmatmul.mubr.f32.gmra.mxu0 %v8145
      %v8518 = vpop.f32.mrf.mxu0
      %v8519 = vadd.f32 %v8349, %v8518
      %v8520 = vpop.f32.mrf.mxu0
      %8521 = vmatprep.mubr.f32.mxu0 %v8178
      %8522 = vmatmul.mubr.f32.gmra.mxu0 %v8146
      %v8523 = vpop.f32.mrf.mxu0
      %v8524 = vadd.f32 %v8349, %v8523
      %v8525 = vpop.f32.mrf.mxu0
      %8526 = vmatprep.mubr.f32.mxu0 %v8179
      %8527 = vmatmul.mubr.f32.gmra.mxu0 %v8147
      %v8528 = vpop.f32.mrf.mxu0
      %v8529 = vadd.f32 %v8349, %v8528
      %v8530 = vpop.f32.mrf.mxu0
      %8531 = vmatprep.mubr.f32.mxu0 %v8180
      %8532 = vmatmul.mubr.f32.gmra.mxu0 %v8148
      %v8533 = vpop.f32.mrf.mxu0
      %v8534 = vadd.f32 %v8349, %v8533
      %v8535 = vpop.f32.mrf.mxu0
      %8536 = vmatprep.mubr.f32.mxu0 %v8181
      %8537 = vmatmul.mubr.f32.gmra.mxu0 %v8149
      %v8538 = vpop.f32.mrf.mxu0
      %v8539 = vadd.f32 %v8349, %v8538
      %v8540 = vpop.f32.mrf.mxu0
      %8541 = vmatprep.mubr.f32.mxu0 %v8182
      %8542 = vmatmul.mubr.f32.gmra.mxu0 %v8150
      %v8543 = vpop.f32.mrf.mxu0
      %v8544 = vadd.f32 %v8349, %v8543
      %v8545 = vpop.f32.mrf.mxu0
      %8546 = vmatprep.mubr.f32.mxu0 %v8183
      %8547 = vmatmul.mubr.f32.gmra.mxu0 %v8151
      %v8548 = vpop.f32.mrf.mxu0
      %v8549 = vadd.f32 %v8349, %v8548
      %v8550 = vpop.f32.mrf.mxu0
      %8551 = vmatprep.mubr.f32.mxu0 %v8184
      %8552 = vmatmul.mubr.f32.gmra.mxu0 %v8152
      %v8553 = vpop.f32.mrf.mxu0
      %v8554 = vadd.f32 %v8349, %v8553
      %v8555 = vpop.f32.mrf.mxu0
      %8556 = vmatprep.mubr.f32.mxu0 %v8185
      %8557 = vmatmul.mubr.f32.gmra.mxu0 %v8153
      %v8558 = vpop.f32.mrf.mxu0
      %v8559 = vadd.f32 %v8349, %v8558
      %v8560 = vpop.f32.mrf.mxu0
      %8561 = vmatprep.mubr.f32.mxu0 %v8186
      %8562 = vmatmul.mubr.f32.gmra.mxu0 %v8154
      %v8563 = vpop.f32.mrf.mxu0
      %v8564 = vadd.f32 %v8349, %v8563
      %v8565 = vpop.f32.mrf.mxu0
      %8566 = vmatprep.mubr.f32.mxu0 %v8187
      %8567 = vmatmul.mubr.f32.gmra.mxu0 %v8155
      %v8568 = vpop.f32.mrf.mxu0
      %v8569 = vadd.f32 %v8349, %v8568
      %v8570 = vpop.f32.mrf.mxu0
      %8571 = vmatprep.mubr.f32.mxu0 %v8188
      %8572 = vmatmul.mubr.f32.gmra.mxu0 %v8156
      %v8573 = vpop.f32.mrf.mxu0
      %v8574 = vadd.f32 %v8349, %v8573
      %v8575 = vpop.f32.mrf.mxu0
      %8576 = vmatprep.mubr.f32.mxu0 %v8189
      %8577 = vmatmul.mubr.f32.gmra.mxu0 %v8157
      %v8578 = vpop.f32.mrf.mxu0
      %v8579 = vadd.f32 %v8349, %v8578
      %v8580 = vpop.f32.mrf.mxu0
      %8581 = vmatprep.mubr.f32.mxu0 %v8190
      %8582 = vmatmul.mubr.f32.gmra.mxu0 %v8158
      %v8583 = vpop.f32.mrf.mxu0
      %v8584 = vadd.f32 %v8349, %v8583
      %v8585 = vpop.f32.mrf.mxu0
      %8586 = vmatprep.mubr.f32.mxu0 %v8191
      %8587 = vmatmul.mubr.f32.gmra.mxu0 %v8159
      %v8588 = vpop.f32.mrf.mxu0
      %v8589 = vadd.f32 %v8349, %v8588
      %v8590 = vpop.f32.mrf.mxu0
      %8591 = vmatprep.mubr.f32.mxu0 %v8192
      %8592 = vmatmul.mubr.f32.gmra.mxu0 %v8160
      %v8593 = vpop.f32.mrf.mxu0
      %v8594 = vadd.f32 %v8349, %v8593
      %v8595 = vpop.f32.mrf.mxu0
      %8596 = vmatprep.mubr.f32.mxu0 %v8193
      %8597 = vmatmul.mubr.f32.gmra.mxu0 %v8161
      %v8598 = vpop.f32.mrf.mxu0
      %v8599 = vadd.f32 %v8349, %v8598
      %v8600 = vpop.f32.mrf.mxu0
      %8601 = vmatprep.mubr.f32.mxu0 %v8194
      %8602 = vmatmul.mubr.f32.gmra.mxu0 %v8162
      %v8603 = vpop.f32.mrf.mxu0
      %v8604 = vadd.f32 %v8349, %v8603
      %v8605 = vpop.f32.mrf.mxu0
      %8606 = vmatprep.mubr.f32.mxu0 %v8195
      %8607 = vmatmul.mubr.f32.gmra.mxu0 %v8163
      %v8608 = vpop.f32.mrf.mxu0
      %v8609 = vadd.f32 %v8349, %v8608
      %v8610 = vpop.f32.mrf.mxu0
      %8611 = vmatprep.mubr.f32.mxu0 %v8196
      %8612 = vmatmul.mubr.f32.gmra.mxu0 %v8164
      %v8613 = vpop.f32.mrf.mxu0
      %v8614 = vadd.f32 %v8349, %v8613
      %v8615 = vpop.f32.mrf.mxu0
      %8616 = vmatprep.mubr.f32.mxu0 %v8197
      %8617 = vmatmul.mubr.f32.gmra.mxu0 %v8165
      %v8618 = vpop.f32.mrf.mxu0
      %v8619 = vadd.f32 %v8349, %v8618
      %v8620 = vpop.f32.mrf.mxu0
      %8621 = vmatprep.mubr.f32.mxu0 %v8198
      %8622 = vmatmul.mubr.f32.gmra.mxu0 %v8166
      %v8623 = vpop.f32.mrf.mxu0
      %v8624 = vadd.f32 %v8349, %v8623
      %v8625 = vpop.f32.mrf.mxu0
      %8626 = vmatprep.mubr.f32.mxu0 %v8199
      %8627 = vmatmul.mubr.f32.gmra.mxu0 %v8167
      %v8628 = vpop.f32.mrf.mxu0
      %v8629 = vadd.f32 %v8349, %v8628
      %v8630 = vpop.f32.mrf.mxu0
      %8631 = vmatprep.mubr.f32.mxu0 %v8200
      %8632 = vmatmul.mubr.f32.gmra.mxu0 %v8168
      %v8633 = vpop.f32.mrf.mxu0
      %v8634 = vadd.f32 %v8349, %v8633
      %v8635 = vpop.f32.mrf.mxu0
      %8636 = vmatprep.mubr.f32.mxu0 %v8201
      %8637 = vmatmul.mubr.f32.gmra.mxu0 %v8169
      %v8638 = vpop.f32.mrf.mxu0
      %v8639 = vadd.f32 %v8349, %v8638
      %v8640 = vpop.f32.mrf.mxu0
      %8641 = vmatprep.mubr.f32.mxu0 %v8202
      %8642 = vmatmul.mubr.f32.gmra.mxu0 %v8170
      %v8643 = vpop.f32.mrf.mxu0
      %v8644 = vadd.f32 %v8349, %v8643
      %v8645 = vpop.f32.mrf.mxu0
      %8646 = vmatprep.mubr.f32.mxu0 %v8203
      %8647 = vmatmul.mubr.f32.gmra.mxu0 %v8171
      %v8648 = vpop.f32.mrf.mxu0
      %v8649 = vadd.f32 %v8349, %v8648
      %v8650 = vpop.f32.mrf.mxu0
      %8651 = vmatprep.mubr.f32.mxu0 %v8204
      %8652 = vmatmul.mubr.f32.gmra.mxu0 %v8172
      %v8653 = vpop.f32.mrf.mxu0
      %v8654 = vadd.f32 %v8349, %v8653
      %v8655 = vpop.f32.mrf.mxu0
      %8656 = vmatprep.mubr.f32.mxu0 %v8205
      %8657 = vmatmul.mubr.f32.gmra.mxu0 %v8173
      %v8658 = vpop.f32.mrf.mxu0
      %v8659 = vadd.f32 %v8349, %v8658
      %v8660 = vpop.f32.mrf.mxu0
      %8661 = vmatprep.mubr.f32.mxu0 %v8206
      %8662 = vmatmul.mubr.f32.gmra.mxu0 %v8174
      %v8663 = vpop.f32.mrf.mxu0
      %v8664 = vadd.f32 %v8349, %v8663
      %v8665 = vpop.f32.mrf.mxu0
      %8666 = vmatprep.mubr.f32.mxu0 %v8207
      %8667 = vmatmul.mubr.f32.gmra.mxu0 %v8175
      %v8668 = vpop.f32.mrf.mxu0
      %v8669 = vadd.f32 %v8349, %v8668
      %v8670 = vpop.f32.mrf.mxu0
      %8671 = vdwg.mxu0
      %8672 = vmatprep.subr.mxu0 0.0
      %8673 = vmatpush1.msra.mxu0 %v8319
      %8674 = vmatprep.subr.mxu0 0.0
      %8675 = vmatpush1.msra.mxu0 %v8318
      %8676 = vmatprep.subr.mxu0 0.0
      %8677 = vmatpush1.msra.mxu0 %v8317
      %8678 = vmatprep.subr.mxu0 0.0
      %8679 = vmatpush1.msra.mxu0 %v8316
      %8680 = vmatprep.subr.mxu0 0.0
      %8681 = vmatpush1.msra.mxu0 %v8315
      %8682 = vmatprep.subr.mxu0 0.0
      %8683 = vmatpush1.msra.mxu0 %v8314
      %8684 = vmatprep.subr.mxu0 0.0
      %8685 = vmatpush1.msra.mxu0 %v8313
      %8686 = vmatprep.subr.mxu0 0.0
      %8687 = vmatpush1.msra.mxu0 %v8312
      %8688 = vmatprep.subr.mxu0 0.0
      %8689 = vmatpush1.msra.mxu0 %v8311
      %8690 = vmatprep.subr.mxu0 0.0
      %8691 = vmatpush1.msra.mxu0 %v8310
      %8692 = vmatprep.subr.mxu0 0.0
      %8693 = vmatpush1.msra.mxu0 %v8309
      %8694 = vmatprep.subr.mxu0 0.0
      %8695 = vmatpush1.msra.mxu0 %v8308
      %8696 = vmatprep.subr.mxu0 0.0
      %8697 = vmatpush1.msra.mxu0 %v8307
      %8698 = vmatprep.subr.mxu0 0.0
      %8699 = vmatpush1.msra.mxu0 %v8306
      %8700 = vmatprep.subr.mxu0 0.0
      %8701 = vmatpush1.msra.mxu0 %v8305
      %8702 = vmatprep.subr.mxu0 0.0
      %8703 = vmatpush1.msra.mxu0 %v8304
      %8704 = vmatprep.subr.mxu0 0.0
      %8705 = vmatpush2.msra.mxu0 %v8335
      %8706 = vmatprep.subr.mxu0 0.0
      %8707 = vmatpush2.msra.mxu0 %v8334
      %8708 = vmatprep.subr.mxu0 0.0
      %8709 = vmatpush2.msra.mxu0 %v8333
      %8710 = vmatprep.subr.mxu0 0.0
      %8711 = vmatpush2.msra.mxu0 %v8332
      %8712 = vmatprep.subr.mxu0 0.0
      %8713 = vmatpush2.msra.mxu0 %v8331
      %8714 = vmatprep.subr.mxu0 0.0
      %8715 = vmatpush2.msra.mxu0 %v8330
      %8716 = vmatprep.subr.mxu0 0.0
      %8717 = vmatpush2.msra.mxu0 %v8329
      %8718 = vmatprep.subr.mxu0 0.0
      %8719 = vmatpush2.msra.mxu0 %v8328
      %8720 = vmatprep.subr.mxu0 0.0
      %8721 = vmatpush2.msra.mxu0 %v8327
      %8722 = vmatprep.subr.mxu0 0.0
      %8723 = vmatpush2.msra.mxu0 %v8326
      %8724 = vmatprep.subr.mxu0 0.0
      %8725 = vmatpush2.msra.mxu0 %v8325
      %8726 = vmatprep.subr.mxu0 0.0
      %8727 = vmatpush2.msra.mxu0 %v8324
      %8728 = vmatprep.subr.mxu0 0.0
      %8729 = vmatpush2.msra.mxu0 %v8323
      %8730 = vmatprep.subr.mxu0 0.0
      %8731 = vmatpush2.msra.mxu0 %v8322
      %8732 = vmatprep.subr.mxu0 0.0
      %8733 = vmatpush2.msra.mxu0 %v8321
      %8734 = vmatprep.subr.mxu0 0.0
      %8735 = vmatpush2.msra.mxu0 %v8320
      %8736 = vmatprep.mubr.f32.mxu0 %v8240
      %8737 = vmatmul.mubr.f32.gmra.mxu0 %v8208
      %v8738 = vpop.f32.mrf.mxu0
      %v8739 = vadd.f32 %v8514, %v8738
      %v8740 = vpop.f32.mrf.mxu0
      %8741 = vmatprep.mubr.f32.mxu0 %v8241
      %8742 = vmatmul.mubr.f32.gmra.mxu0 %v8209
      %v8743 = vpop.f32.mrf.mxu0
      %v8744 = vadd.f32 %v8519, %v8743
      %v8745 = vpop.f32.mrf.mxu0
      %8746 = vmatprep.mubr.f32.mxu0 %v8242
      %8747 = vmatmul.mubr.f32.gmra.mxu0 %v8210
      %v8748 = vpop.f32.mrf.mxu0
      %v8749 = vadd.f32 %v8524, %v8748
      %v8750 = vpop.f32.mrf.mxu0
      %8751 = vmatprep.mubr.f32.mxu0 %v8243
      %8752 = vmatmul.mubr.f32.gmra.mxu0 %v8211
      %v8753 = vpop.f32.mrf.mxu0
      %v8754 = vadd.f32 %v8529, %v8753
      %v8755 = vpop.f32.mrf.mxu0
      %8756 = vmatprep.mubr.f32.mxu0 %v8244
      %8757 = vmatmul.mubr.f32.gmra.mxu0 %v8212
      %v8758 = vpop.f32.mrf.mxu0
      %v8759 = vadd.f32 %v8534, %v8758
      %v8760 = vpop.f32.mrf.mxu0
      %8761 = vmatprep.mubr.f32.mxu0 %v8245
      %8762 = vmatmul.mubr.f32.gmra.mxu0 %v8213
      %v8763 = vpop.f32.mrf.mxu0
      %v8764 = vadd.f32 %v8539, %v8763
      %v8765 = vpop.f32.mrf.mxu0
      %8766 = vmatprep.mubr.f32.mxu0 %v8246
      %8767 = vmatmul.mubr.f32.gmra.mxu0 %v8214
      %v8768 = vpop.f32.mrf.mxu0
      %v8769 = vadd.f32 %v8544, %v8768
      %v8770 = vpop.f32.mrf.mxu0
      %8771 = vmatprep.mubr.f32.mxu0 %v8247
      %8772 = vmatmul.mubr.f32.gmra.mxu0 %v8215
      %v8773 = vpop.f32.mrf.mxu0
      %v8774 = vadd.f32 %v8549, %v8773
      %v8775 = vpop.f32.mrf.mxu0
      %8776 = vmatprep.mubr.f32.mxu0 %v8248
      %8777 = vmatmul.mubr.f32.gmra.mxu0 %v8216
      %v8778 = vpop.f32.mrf.mxu0
      %v8779 = vadd.f32 %v8554, %v8778
      %v8780 = vpop.f32.mrf.mxu0
      %8781 = vmatprep.mubr.f32.mxu0 %v8249
      %8782 = vmatmul.mubr.f32.gmra.mxu0 %v8217
      %v8783 = vpop.f32.mrf.mxu0
      %v8784 = vadd.f32 %v8559, %v8783
      %v8785 = vpop.f32.mrf.mxu0
      %8786 = vmatprep.mubr.f32.mxu0 %v8250
      %8787 = vmatmul.mubr.f32.gmra.mxu0 %v8218
      %v8788 = vpop.f32.mrf.mxu0
      %v8789 = vadd.f32 %v8564, %v8788
      %v8790 = vpop.f32.mrf.mxu0
      %8791 = vmatprep.mubr.f32.mxu0 %v8251
      %8792 = vmatmul.mubr.f32.gmra.mxu0 %v8219
      %v8793 = vpop.f32.mrf.mxu0
      %v8794 = vadd.f32 %v8569, %v8793
      %v8795 = vpop.f32.mrf.mxu0
      %8796 = vmatprep.mubr.f32.mxu0 %v8252
      %8797 = vmatmul.mubr.f32.gmra.mxu0 %v8220
      %v8798 = vpop.f32.mrf.mxu0
      %v8799 = vadd.f32 %v8574, %v8798
      %v8800 = vpop.f32.mrf.mxu0
      %8801 = vmatprep.mubr.f32.mxu0 %v8253
      %8802 = vmatmul.mubr.f32.gmra.mxu0 %v8221
      %v8803 = vpop.f32.mrf.mxu0
      %v8804 = vadd.f32 %v8579, %v8803
      %v8805 = vpop.f32.mrf.mxu0
      %8806 = vmatprep.mubr.f32.mxu0 %v8254
      %8807 = vmatmul.mubr.f32.gmra.mxu0 %v8222
      %v8808 = vpop.f32.mrf.mxu0
      %v8809 = vadd.f32 %v8584, %v8808
      %v8810 = vpop.f32.mrf.mxu0
      %8811 = vmatprep.mubr.f32.mxu0 %v8255
      %8812 = vmatmul.mubr.f32.gmra.mxu0 %v8223
      %v8813 = vpop.f32.mrf.mxu0
      %v8814 = vadd.f32 %v8589, %v8813
      %v8815 = vpop.f32.mrf.mxu0
      %8816 = vmatprep.mubr.f32.mxu0 %v8256
      %8817 = vmatmul.mubr.f32.gmra.mxu0 %v8224
      %v8818 = vpop.f32.mrf.mxu0
      %v8819 = vadd.f32 %v8594, %v8818
      %v8820 = vpop.f32.mrf.mxu0
      %8821 = vmatprep.mubr.f32.mxu0 %v8257
      %8822 = vmatmul.mubr.f32.gmra.mxu0 %v8225
      %v8823 = vpop.f32.mrf.mxu0
      %v8824 = vadd.f32 %v8599, %v8823
      %v8825 = vpop.f32.mrf.mxu0
      %8826 = vmatprep.mubr.f32.mxu0 %v8258
      %8827 = vmatmul.mubr.f32.gmra.mxu0 %v8226
      %v8828 = vpop.f32.mrf.mxu0
      %v8829 = vadd.f32 %v8604, %v8828
      %v8830 = vpop.f32.mrf.mxu0
      %8831 = vmatprep.mubr.f32.mxu0 %v8259
      %8832 = vmatmul.mubr.f32.gmra.mxu0 %v8227
      %v8833 = vpop.f32.mrf.mxu0
      %v8834 = vadd.f32 %v8609, %v8833
      %v8835 = vpop.f32.mrf.mxu0
      %8836 = vmatprep.mubr.f32.mxu0 %v8260
      %8837 = vmatmul.mubr.f32.gmra.mxu0 %v8228
      %v8838 = vpop.f32.mrf.mxu0
      %v8839 = vadd.f32 %v8614, %v8838
      %v8840 = vpop.f32.mrf.mxu0
      %8841 = vmatprep.mubr.f32.mxu0 %v8261
      %8842 = vmatmul.mubr.f32.gmra.mxu0 %v8229
      %v8843 = vpop.f32.mrf.mxu0
      %v8844 = vadd.f32 %v8619, %v8843
      %v8845 = vpop.f32.mrf.mxu0
      %8846 = vmatprep.mubr.f32.mxu0 %v8262
      %8847 = vmatmul.mubr.f32.gmra.mxu0 %v8230
      %v8848 = vpop.f32.mrf.mxu0
      %v8849 = vadd.f32 %v8624, %v8848
      %v8850 = vpop.f32.mrf.mxu0
      %8851 = vmatprep.mubr.f32.mxu0 %v8263
      %8852 = vmatmul.mubr.f32.gmra.mxu0 %v8231
      %v8853 = vpop.f32.mrf.mxu0
      %v8854 = vadd.f32 %v8629, %v8853
      %v8855 = vpop.f32.mrf.mxu0
      %8856 = vmatprep.mubr.f32.mxu0 %v8264
      %8857 = vmatmul.mubr.f32.gmra.mxu0 %v8232
      %v8858 = vpop.f32.mrf.mxu0
      %v8859 = vadd.f32 %v8634, %v8858
      %v8860 = vpop.f32.mrf.mxu0
      %8861 = vmatprep.mubr.f32.mxu0 %v8265
      %8862 = vmatmul.mubr.f32.gmra.mxu0 %v8233
      %v8863 = vpop.f32.mrf.mxu0
      %v8864 = vadd.f32 %v8639, %v8863
      %v8865 = vpop.f32.mrf.mxu0
      %8866 = vmatprep.mubr.f32.mxu0 %v8266
      %8867 = vmatmul.mubr.f32.gmra.mxu0 %v8234
      %v8868 = vpop.f32.mrf.mxu0
      %v8869 = vadd.f32 %v8644, %v8868
      %v8870 = vpop.f32.mrf.mxu0
      %8871 = vmatprep.mubr.f32.mxu0 %v8267
      %8872 = vmatmul.mubr.f32.gmra.mxu0 %v8235
      %v8873 = vpop.f32.mrf.mxu0
      %v8874 = vadd.f32 %v8649, %v8873
      %v8875 = vpop.f32.mrf.mxu0
      %8876 = vmatprep.mubr.f32.mxu0 %v8268
      %8877 = vmatmul.mubr.f32.gmra.mxu0 %v8236
      %v8878 = vpop.f32.mrf.mxu0
      %v8879 = vadd.f32 %v8654, %v8878
      %v8880 = vpop.f32.mrf.mxu0
      %8881 = vmatprep.mubr.f32.mxu0 %v8269
      %8882 = vmatmul.mubr.f32.gmra.mxu0 %v8237
      %v8883 = vpop.f32.mrf.mxu0
      %v8884 = vadd.f32 %v8659, %v8883
      %v8885 = vpop.f32.mrf.mxu0
      %8886 = vmatprep.mubr.f32.mxu0 %v8270
      %8887 = vmatmul.mubr.f32.gmra.mxu0 %v8238
      %v8888 = vpop.f32.mrf.mxu0
      %v8889 = vadd.f32 %v8664, %v8888
      %v8890 = vpop.f32.mrf.mxu0
      %8891 = vmatprep.mubr.f32.mxu0 %v8271
      %8892 = vmatmul.mubr.f32.gmra.mxu0 %v8239
      %v8893 = vpop.f32.mrf.mxu0
      %v8894 = vadd.f32 %v8669, %v8893
      %v8895 = vpop.f32.mrf.mxu0
      %8896 = vdwg.mxu0
      %8897 = vmatprep.subr.mxu0 0.0
      %8898 = vmatpush1.msra.mxu0 0.0
      %8899 = vmatprep.subr.mxu0 0.0
      %8900 = vmatpush1.msra.mxu0 0.0
      %8901 = vmatprep.subr.mxu0 0.0
      %8902 = vmatpush1.msra.mxu0 0.0
      %8903 = vmatprep.subr.mxu0 0.0
      %8904 = vmatpush1.msra.mxu0 0.0
      %8905 = vmatprep.subr.mxu0 0.0
      %8906 = vmatpush1.msra.mxu0 0.0
      %8907 = vmatprep.subr.mxu0 0.0
      %8908 = vmatpush1.msra.mxu0 0.0
      %8909 = vmatprep.subr.mxu0 0.0
      %8910 = vmatpush1.msra.mxu0 0.0
      %8911 = vmatprep.subr.mxu0 0.0
      %8912 = vmatpush1.msra.mxu0 0.0
      %8913 = vmatprep.subr.mxu0 0.0
      %8914 = vmatpush1.msra.mxu0 %v8343
      %8915 = vmatprep.subr.mxu0 0.0
      %8916 = vmatpush1.msra.mxu0 %v8342
      %8917 = vmatprep.subr.mxu0 0.0
      %8918 = vmatpush1.msra.mxu0 %v8341
      %8919 = vmatprep.subr.mxu0 0.0
      %8920 = vmatpush1.msra.mxu0 %v8340
      %8921 = vmatprep.subr.mxu0 0.0
      %8922 = vmatpush1.msra.mxu0 %v8339
      %8923 = vmatprep.subr.mxu0 0.0
      %8924 = vmatpush1.msra.mxu0 %v8338
      %8925 = vmatprep.subr.mxu0 0.0
      %8926 = vmatpush1.msra.mxu0 %v8337
      %8927 = vmatprep.subr.mxu0 0.0
      %8928 = vmatpush1.msra.mxu0 %v8336
      %8929 = vmatprep.subr.mxu0 0.0
      %8930 = vmatpush2.msra.mxu0 0.0
      %8931 = vmatprep.subr.mxu0 0.0
      %8932 = vmatpush2.msra.mxu0 0.0
      %8933 = vmatprep.subr.mxu0 0.0
      %8934 = vmatpush2.msra.mxu0 0.0
      %8935 = vmatprep.subr.mxu0 0.0
      %8936 = vmatpush2.msra.mxu0 0.0
      %8937 = vmatprep.subr.mxu0 0.0
      %8938 = vmatpush2.msra.mxu0 0.0
      %8939 = vmatprep.subr.mxu0 0.0
      %8940 = vmatpush2.msra.mxu0 0.0
      %8941 = vmatprep.subr.mxu0 0.0
      %8942 = vmatpush2.msra.mxu0 0.0
      %8943 = vmatprep.subr.mxu0 0.0
      %8944 = vmatpush2.msra.mxu0 0.0
      %8945 = vmatprep.subr.mxu0 0.0
      %8946 = vmatpush2.msra.mxu0 0.0
      %8947 = vmatprep.subr.mxu0 0.0
      %8948 = vmatpush2.msra.mxu0 0.0
      %8949 = vmatprep.subr.mxu0 0.0
      %8950 = vmatpush2.msra.mxu0 0.0
      %8951 = vmatprep.subr.mxu0 0.0
      %8952 = vmatpush2.msra.mxu0 0.0
      %8953 = vmatprep.subr.mxu0 0.0
      %8954 = vmatpush2.msra.mxu0 0.0
      %8955 = vmatprep.subr.mxu0 0.0
      %8956 = vmatpush2.msra.mxu0 0.0
      %8957 = vmatprep.subr.mxu0 0.0
      %8958 = vmatpush2.msra.mxu0 0.0
      %8959 = vmatprep.subr.mxu0 0.0
      %8960 = vmatpush2.msra.mxu0 0.0
      %8961 = vmatprep.mubr.f32.mxu0 0.0
      %8962 = vmatmul.mubr.f32.gmra.mxu0 %v8352
      %v8963 = vpop.f32.mrf.mxu0
      %v8964 = vadd.f32 %v8739, %v8963
      %v8965 = vpop.f32.mrf.mxu0
      %8966 = vmatprep.mubr.f32.mxu0 0.0
      %8967 = vmatmul.mubr.f32.gmra.mxu0 %v8355
      %v8968 = vpop.f32.mrf.mxu0
      %v8969 = vadd.f32 %v8744, %v8968
      %v8970 = vpop.f32.mrf.mxu0
      %8971 = vmatprep.mubr.f32.mxu0 0.0
      %8972 = vmatmul.mubr.f32.gmra.mxu0 %v8358
      %v8973 = vpop.f32.mrf.mxu0
      %v8974 = vadd.f32 %v8749, %v8973
      %v8975 = vpop.f32.mrf.mxu0
      %8976 = vmatprep.mubr.f32.mxu0 0.0
      %8977 = vmatmul.mubr.f32.gmra.mxu0 %v8361
      %v8978 = vpop.f32.mrf.mxu0
      %v8979 = vadd.f32 %v8754, %v8978
      %v8980 = vpop.f32.mrf.mxu0
      %8981 = vmatprep.mubr.f32.mxu0 0.0
      %8982 = vmatmul.mubr.f32.gmra.mxu0 %v8364
      %v8983 = vpop.f32.mrf.mxu0
      %v8984 = vadd.f32 %v8759, %v8983
      %v8985 = vpop.f32.mrf.mxu0
      %8986 = vmatprep.mubr.f32.mxu0 0.0
      %8987 = vmatmul.mubr.f32.gmra.mxu0 %v8367
      %v8988 = vpop.f32.mrf.mxu0
      %v8989 = vadd.f32 %v8764, %v8988
      %v8990 = vpop.f32.mrf.mxu0
      %8991 = vmatprep.mubr.f32.mxu0 0.0
      %8992 = vmatmul.mubr.f32.gmra.mxu0 %v8370
      %v8993 = vpop.f32.mrf.mxu0
      %v8994 = vadd.f32 %v8769, %v8993
      %v8995 = vpop.f32.mrf.mxu0
      %8996 = vmatprep.mubr.f32.mxu0 0.0
      %8997 = vmatmul.mubr.f32.gmra.mxu0 %v8373
      %v8998 = vpop.f32.mrf.mxu0
      %v8999 = vadd.f32 %v8774, %v8998
      %v9000 = vpop.f32.mrf.mxu0
      %9001 = vmatprep.mubr.f32.mxu0 0.0
      %9002 = vmatmul.mubr.f32.gmra.mxu0 %v8376
      %v9003 = vpop.f32.mrf.mxu0
      %v9004 = vadd.f32 %v8779, %v9003
      %v9005 = vpop.f32.mrf.mxu0
      %9006 = vmatprep.mubr.f32.mxu0 0.0
      %9007 = vmatmul.mubr.f32.gmra.mxu0 %v8379
      %v9008 = vpop.f32.mrf.mxu0
      %v9009 = vadd.f32 %v8784, %v9008
      %v9010 = vpop.f32.mrf.mxu0
      %9011 = vmatprep.mubr.f32.mxu0 0.0
      %9012 = vmatmul.mubr.f32.gmra.mxu0 %v8382
      %v9013 = vpop.f32.mrf.mxu0
      %v9014 = vadd.f32 %v8789, %v9013
      %v9015 = vpop.f32.mrf.mxu0
      %9016 = vmatprep.mubr.f32.mxu0 0.0
      %9017 = vmatmul.mubr.f32.gmra.mxu0 %v8385
      %v9018 = vpop.f32.mrf.mxu0
      %v9019 = vadd.f32 %v8794, %v9018
      %v9020 = vpop.f32.mrf.mxu0
      %9021 = vmatprep.mubr.f32.mxu0 0.0
      %9022 = vmatmul.mubr.f32.gmra.mxu0 %v8388
      %v9023 = vpop.f32.mrf.mxu0
      %v9024 = vadd.f32 %v8799, %v9023
      %v9025 = vpop.f32.mrf.mxu0
      %9026 = vmatprep.mubr.f32.mxu0 0.0
      %9027 = vmatmul.mubr.f32.gmra.mxu0 %v8391
      %v9028 = vpop.f32.mrf.mxu0
      %v9029 = vadd.f32 %v8804, %v9028
      %v9030 = vpop.f32.mrf.mxu0
      %9031 = vmatprep.mubr.f32.mxu0 0.0
      %9032 = vmatmul.mubr.f32.gmra.mxu0 %v8394
      %v9033 = vpop.f32.mrf.mxu0
      %v9034 = vadd.f32 %v8809, %v9033
      %v9035 = vpop.f32.mrf.mxu0
      %9036 = vmatprep.mubr.f32.mxu0 0.0
      %9037 = vmatmul.mubr.f32.gmra.mxu0 %v8397
      %v9038 = vpop.f32.mrf.mxu0
      %v9039 = vadd.f32 %v8814, %v9038
      %v9040 = vpop.f32.mrf.mxu0
      %9041 = vmatprep.mubr.f32.mxu0 0.0
      %9042 = vmatmul.mubr.f32.gmra.mxu0 %v8400
      %v9043 = vpop.f32.mrf.mxu0
      %v9044 = vadd.f32 %v8819, %v9043
      %v9045 = vpop.f32.mrf.mxu0
      %9046 = vmatprep.mubr.f32.mxu0 0.0
      %9047 = vmatmul.mubr.f32.gmra.mxu0 %v8403
      %v9048 = vpop.f32.mrf.mxu0
      %v9049 = vadd.f32 %v8824, %v9048
      %v9050 = vpop.f32.mrf.mxu0
      %9051 = vmatprep.mubr.f32.mxu0 0.0
      %9052 = vmatmul.mubr.f32.gmra.mxu0 %v8406
      %v9053 = vpop.f32.mrf.mxu0
      %v9054 = vadd.f32 %v8829, %v9053
      %v9055 = vpop.f32.mrf.mxu0
      %9056 = vmatprep.mubr.f32.mxu0 0.0
      %9057 = vmatmul.mubr.f32.gmra.mxu0 %v8409
      %v9058 = vpop.f32.mrf.mxu0
      %v9059 = vadd.f32 %v8834, %v9058
      %v9060 = vpop.f32.mrf.mxu0
      %9061 = vmatprep.mubr.f32.mxu0 0.0
      %9062 = vmatmul.mubr.f32.gmra.mxu0 %v8412
      %v9063 = vpop.f32.mrf.mxu0
      %v9064 = vadd.f32 %v8839, %v9063
      %v9065 = vpop.f32.mrf.mxu0
      %9066 = vmatprep.mubr.f32.mxu0 0.0
      %9067 = vmatmul.mubr.f32.gmra.mxu0 %v8415
      %v9068 = vpop.f32.mrf.mxu0
      %v9069 = vadd.f32 %v8844, %v9068
      %v9070 = vpop.f32.mrf.mxu0
      %9071 = vmatprep.mubr.f32.mxu0 0.0
      %9072 = vmatmul.mubr.f32.gmra.mxu0 %v8418
      %v9073 = vpop.f32.mrf.mxu0
      %v9074 = vadd.f32 %v8849, %v9073
      %v9075 = vpop.f32.mrf.mxu0
      %9076 = vmatprep.mubr.f32.mxu0 0.0
      %9077 = vmatmul.mubr.f32.gmra.mxu0 %v8421
      %v9078 = vpop.f32.mrf.mxu0
      %v9079 = vadd.f32 %v8854, %v9078
      %v9080 = vpop.f32.mrf.mxu0
      %9081 = vmatprep.mubr.f32.mxu0 0.0
      %9082 = vmatmul.mubr.f32.gmra.mxu0 %v8424
      %v9083 = vpop.f32.mrf.mxu0
      %v9084 = vadd.f32 %v8859, %v9083
      %v9085 = vpop.f32.mrf.mxu0
      %9086 = vmatprep.mubr.f32.mxu0 0.0
      %9087 = vmatmul.mubr.f32.gmra.mxu0 %v8427
      %v9088 = vpop.f32.mrf.mxu0
      %v9089 = vadd.f32 %v8864, %v9088
      %v9090 = vpop.f32.mrf.mxu0
      %9091 = vmatprep.mubr.f32.mxu0 0.0
      %9092 = vmatmul.mubr.f32.gmra.mxu0 %v8430
      %v9093 = vpop.f32.mrf.mxu0
      %v9094 = vadd.f32 %v8869, %v9093
      %v9095 = vpop.f32.mrf.mxu0
      %9096 = vmatprep.mubr.f32.mxu0 0.0
      %9097 = vmatmul.mubr.f32.gmra.mxu0 %v8433
      %v9098 = vpop.f32.mrf.mxu0
      %v9099 = vadd.f32 %v8874, %v9098
      %v9100 = vpop.f32.mrf.mxu0
      %9101 = vmatprep.mubr.f32.mxu0 0.0
      %9102 = vmatmul.mubr.f32.gmra.mxu0 %v8436
      %v9103 = vpop.f32.mrf.mxu0
      %v9104 = vadd.f32 %v8879, %v9103
      %v9105 = vpop.f32.mrf.mxu0
      %9106 = vmatprep.mubr.f32.mxu0 0.0
      %9107 = vmatmul.mubr.f32.gmra.mxu0 %v8439
      %v9108 = vpop.f32.mrf.mxu0
      %v9109 = vadd.f32 %v8884, %v9108
      %v9110 = vpop.f32.mrf.mxu0
      %9111 = vmatprep.mubr.f32.mxu0 0.0
      %9112 = vmatmul.mubr.f32.gmra.mxu0 %v8442
      %v9113 = vpop.f32.mrf.mxu0
      %v9114 = vadd.f32 %v8889, %v9113
      %v9115 = vpop.f32.mrf.mxu0
      %9116 = vmatprep.mubr.f32.mxu0 0.0
      %9117 = vmatmul.mubr.f32.gmra.mxu0 %v8445
      %v9118 = vpop.f32.mrf.mxu0
      %v9119 = vadd.f32 %v8894, %v9118
      %v9120 = vpop.f32.mrf.mxu0
      %9121 = vdwg.mxu0
      %v9122 = vmax.f32 %v8964, 0.0
      %v9123 = vmax.f32 %v8969, 0.0
      %v9124 = vmax.f32 %v8974, 0.0
      %v9125 = vmax.f32 %v8979, 0.0
      %v9126 = vmax.f32 %v8984, 0.0
      %v9127 = vmax.f32 %v8989, 0.0
      %v9128 = vmax.f32 %v8994, 0.0
      %v9129 = vmax.f32 %v8999, 0.0
      %v9130 = vmax.f32 %v9004, 0.0
      %v9131 = vmax.f32 %v9009, 0.0
      %v9132 = vmax.f32 %v9014, 0.0
      %v9133 = vmax.f32 %v9019, 0.0
      %v9134 = vmax.f32 %v9024, 0.0
      %v9135 = vmax.f32 %v9029, 0.0
      %v9136 = vmax.f32 %v9034, 0.0
      %v9137 = vmax.f32 %v9039, 0.0
      %v9138 = vmax.f32 %v9044, 0.0
      %v9139 = vmax.f32 %v9049, 0.0
      %v9140 = vmax.f32 %v9054, 0.0
      %v9141 = vmax.f32 %v9059, 0.0
      %v9142 = vmax.f32 %v9064, 0.0
      %v9143 = vmax.f32 %v9069, 0.0
      %v9144 = vmax.f32 %v9074, 0.0
      %v9145 = vmax.f32 %v9079, 0.0
      %v9146 = vmax.f32 %v9084, 0.0
      %v9147 = vmax.f32 %v9089, 0.0
      %v9148 = vmax.f32 %v9094, 0.0
      %v9149 = vmax.f32 %v9099, 0.0
      %v9150 = vmax.f32 %v9104, 0.0
      %v9151 = vmax.f32 %v9109, 0.0
      %v9152 = vmax.f32 %v9114, 0.0
      %v9153 = vmax.f32 %v9119, 0.0
      %s9154 = scalar_lea.vmem [#allocation5], 24
      %9155 = vst.msk [vmem:[%s9154 + $0x1] sm:$0xff] %vm505, %v9122
      %9156 = vst.msk [vmem:[%s9154 + $0x9] sm:$0xff] %vm505, %v9123
      %9157 = vst.msk [vmem:[%s9154 + $0x19] sm:$0xff] %vm505, %v9124
      %9158 = vst.msk [vmem:[%s9154 + $0x21] sm:$0xff] %vm505, %v9125
      %9159 = vst.msk [vmem:[%s9154 + $0x31] sm:$0xff] %vm505, %v9126
      %9160 = vst.msk [vmem:[%s9154 + $0x39] sm:$0xff] %vm505, %v9127
      %9161 = vst.msk [vmem:[%s9154 + $0x49] sm:$0xff] %vm505, %v9128
      %9162 = vst.msk [vmem:[%s9154 + $0x51] sm:$0xff] %vm505, %v9129
      %9163 = vst.msk [vmem:[%s9154 + $0x61] sm:$0xff] %vm505, %v9130
      %9164 = vst.msk [vmem:[%s9154 + $0x69] sm:$0xff] %vm505, %v9131
      %9165 = vst.msk [vmem:[%s9154 + $0x79] sm:$0xff] %vm505, %v9132
      %9166 = vst.msk [vmem:[%s9154 + $0x81] sm:$0xff] %vm505, %v9133
      %9167 = vst.msk [vmem:[%s9154 + $0x91] sm:$0xff] %vm505, %v9134
      %9168 = vst.msk [vmem:[%s9154 + $0x99] sm:$0xff] %vm505, %v9135
      %9169 = vst.msk [vmem:[%s9154 + $0xa9] sm:$0xff] %vm505, %v9136
      %9170 = vst.msk [vmem:[%s9154 + $0xb1] sm:$0xff] %vm505, %v9137
      %9171 = vst.msk [vmem:[%s9154 + $0xc1] sm:$0xff] %vm505, %v9138
      %9172 = vst.msk [vmem:[%s9154 + $0xc9] sm:$0xff] %vm505, %v9139
      %9173 = vst.msk [vmem:[%s9154 + $0xd9] sm:$0xff] %vm505, %v9140
      %9174 = vst.msk [vmem:[%s9154 + $0xe1] sm:$0xff] %vm505, %v9141
      %9175 = vst.msk [vmem:[%s9154 + $0xf1] sm:$0xff] %vm505, %v9142
      %9176 = vst.msk [vmem:[%s9154 + $0xf9] sm:$0xff] %vm505, %v9143
      %9177 = vst.msk [vmem:[%s9154 + $0x109] sm:$0xff] %vm505, %v9144
      %9178 = vst.msk [vmem:[%s9154 + $0x111] sm:$0xff] %vm505, %v9145
      %9179 = vst.msk [vmem:[%s9154 + $0x121] sm:$0xff] %vm505, %v9146
      %9180 = vst.msk [vmem:[%s9154 + $0x129] sm:$0xff] %vm505, %v9147
      %9181 = vst.msk [vmem:[%s9154 + $0x139] sm:$0xff] %vm505, %v9148
      %9182 = vst.msk [vmem:[%s9154 + $0x141] sm:$0xff] %vm505, %v9149
      %9183 = vst.msk [vmem:[%s9154 + $0x151] sm:$0xff] %vm505, %v9150
      %9184 = vst.msk [vmem:[%s9154 + $0x159] sm:$0xff] %vm505, %v9151
      %9185 = vst.msk [vmem:[%s9154 + $0x169] sm:$0xff] %vm505, %v9152
      %9186 = vst.msk [vmem:[%s9154 + $0x171] sm:$0xff] %vm505, %v9153
      %v9187 = vld [vmem:[#allocation5] sm:$0xff]
      %v9188 = vld [vmem:[#allocation5 + $0x8] sm:$0xff]
      %v9189 = vld [vmem:[#allocation5 + $0x18] sm:$0xff]
      %v9190 = vld [vmem:[#allocation5 + $0x20] sm:$0xff]
      %v9191 = vld [vmem:[#allocation5 + $0x30] sm:$0xff]
      %v9192 = vld [vmem:[#allocation5 + $0x38] sm:$0xff]
      %v9193 = vld [vmem:[#allocation5 + $0x48] sm:$0xff]
      %v9194 = vld [vmem:[#allocation5 + $0x50] sm:$0xff]
      %v9195 = vld [vmem:[#allocation5 + $0x60] sm:$0xff]
      %v9196 = vld [vmem:[#allocation5 + $0x68] sm:$0xff]
      %v9197 = vld [vmem:[#allocation5 + $0x78] sm:$0xff]
      %v9198 = vld [vmem:[#allocation5 + $0x80] sm:$0xff]
      %v9199 = vld [vmem:[#allocation5 + $0x90] sm:$0xff]
      %v9200 = vld [vmem:[#allocation5 + $0x98] sm:$0xff]
      %v9201 = vld [vmem:[#allocation5 + $0xa8] sm:$0xff]
      %v9202 = vld [vmem:[#allocation5 + $0xb0] sm:$0xff]
      %v9203 = vld [vmem:[#allocation5 + $0xc0] sm:$0xff]
      %v9204 = vld [vmem:[#allocation5 + $0xc8] sm:$0xff]
      %v9205 = vld [vmem:[#allocation5 + $0xd8] sm:$0xff]
      %v9206 = vld [vmem:[#allocation5 + $0xe0] sm:$0xff]
      %v9207 = vld [vmem:[#allocation5 + $0xf0] sm:$0xff]
      %v9208 = vld [vmem:[#allocation5 + $0xf8] sm:$0xff]
      %v9209 = vld [vmem:[#allocation5 + $0x108] sm:$0xff]
      %v9210 = vld [vmem:[#allocation5 + $0x110] sm:$0xff]
      %v9211 = vld [vmem:[#allocation5 + $0x120] sm:$0xff]
      %v9212 = vld [vmem:[#allocation5 + $0x128] sm:$0xff]
      %v9213 = vld [vmem:[#allocation5 + $0x138] sm:$0xff]
      %v9214 = vld [vmem:[#allocation5 + $0x140] sm:$0xff]
      %v9215 = vld [vmem:[#allocation5 + $0x150] sm:$0xff]
      %v9216 = vld [vmem:[#allocation5 + $0x158] sm:$0xff]
      %v9217 = vld [vmem:[#allocation5 + $0x168] sm:$0xff]
      %v9218 = vld [vmem:[#allocation5 + $0x170] sm:$0xff]
      %v9219 = vld [vmem:[#allocation5 + $0x1] sm:$0xff]
      %v9220 = vld [vmem:[#allocation5 + $0x9] sm:$0xff]
      %v9221 = vld [vmem:[#allocation5 + $0x19] sm:$0xff]
      %v9222 = vld [vmem:[#allocation5 + $0x21] sm:$0xff]
      %v9223 = vld [vmem:[#allocation5 + $0x31] sm:$0xff]
      %v9224 = vld [vmem:[#allocation5 + $0x39] sm:$0xff]
      %v9225 = vld [vmem:[#allocation5 + $0x49] sm:$0xff]
      %v9226 = vld [vmem:[#allocation5 + $0x51] sm:$0xff]
      %v9227 = vld [vmem:[#allocation5 + $0x61] sm:$0xff]
      %v9228 = vld [vmem:[#allocation5 + $0x69] sm:$0xff]
      %v9229 = vld [vmem:[#allocation5 + $0x79] sm:$0xff]
      %v9230 = vld [vmem:[#allocation5 + $0x81] sm:$0xff]
      %v9231 = vld [vmem:[#allocation5 + $0x91] sm:$0xff]
      %v9232 = vld [vmem:[#allocation5 + $0x99] sm:$0xff]
      %v9233 = vld [vmem:[#allocation5 + $0xa9] sm:$0xff]
      %v9234 = vld [vmem:[#allocation5 + $0xb1] sm:$0xff]
      %v9235 = vld [vmem:[#allocation5 + $0xc1] sm:$0xff]
      %v9236 = vld [vmem:[#allocation5 + $0xc9] sm:$0xff]
      %v9237 = vld [vmem:[#allocation5 + $0xd9] sm:$0xff]
      %v9238 = vld [vmem:[#allocation5 + $0xe1] sm:$0xff]
      %v9239 = vld [vmem:[#allocation5 + $0xf1] sm:$0xff]
      %v9240 = vld [vmem:[#allocation5 + $0xf9] sm:$0xff]
      %v9241 = vld [vmem:[#allocation5 + $0x109] sm:$0xff]
      %v9242 = vld [vmem:[#allocation5 + $0x111] sm:$0xff]
      %v9243 = vld [vmem:[#allocation5 + $0x121] sm:$0xff]
      %v9244 = vld [vmem:[#allocation5 + $0x129] sm:$0xff]
      %v9245 = vld [vmem:[#allocation5 + $0x139] sm:$0xff]
      %v9246 = vld [vmem:[#allocation5 + $0x141] sm:$0xff]
      %v9247 = vld [vmem:[#allocation5 + $0x151] sm:$0xff]
      %v9248 = vld [vmem:[#allocation5 + $0x159] sm:$0xff]
      %v9249 = vld [vmem:[#allocation5 + $0x169] sm:$0xff]
      %v9250 = vld [vmem:[#allocation5 + $0x171] sm:$0xff]
      %v9251 = vld [vmem:[#allocation5 + $0x2] sm:$0xff]
      %v9252 = vld [vmem:[#allocation5 + $0xa] sm:$0xff]
      %v9253 = vld [vmem:[#allocation5 + $0x1a] sm:$0xff]
      %v9254 = vld [vmem:[#allocation5 + $0x22] sm:$0xff]
      %v9255 = vld [vmem:[#allocation5 + $0x32] sm:$0xff]
      %v9256 = vld [vmem:[#allocation5 + $0x3a] sm:$0xff]
      %v9257 = vld [vmem:[#allocation5 + $0x4a] sm:$0xff]
      %v9258 = vld [vmem:[#allocation5 + $0x52] sm:$0xff]
      %v9259 = vld [vmem:[#allocation5 + $0x62] sm:$0xff]
      %v9260 = vld [vmem:[#allocation5 + $0x6a] sm:$0xff]
      %v9261 = vld [vmem:[#allocation5 + $0x7a] sm:$0xff]
      %v9262 = vld [vmem:[#allocation5 + $0x82] sm:$0xff]
      %v9263 = vld [vmem:[#allocation5 + $0x92] sm:$0xff]
      %v9264 = vld [vmem:[#allocation5 + $0x9a] sm:$0xff]
      %v9265 = vld [vmem:[#allocation5 + $0xaa] sm:$0xff]
      %v9266 = vld [vmem:[#allocation5 + $0xb2] sm:$0xff]
      %v9267 = vld [vmem:[#allocation5 + $0xc2] sm:$0xff]
      %v9268 = vld [vmem:[#allocation5 + $0xca] sm:$0xff]
      %v9269 = vld [vmem:[#allocation5 + $0xda] sm:$0xff]
      %v9270 = vld [vmem:[#allocation5 + $0xe2] sm:$0xff]
      %v9271 = vld [vmem:[#allocation5 + $0xf2] sm:$0xff]
      %v9272 = vld [vmem:[#allocation5 + $0xfa] sm:$0xff]
      %v9273 = vld [vmem:[#allocation5 + $0x10a] sm:$0xff]
      %v9274 = vld [vmem:[#allocation5 + $0x112] sm:$0xff]
      %v9275 = vld [vmem:[#allocation5 + $0x122] sm:$0xff]
      %v9276 = vld [vmem:[#allocation5 + $0x12a] sm:$0xff]
      %v9277 = vld [vmem:[#allocation5 + $0x13a] sm:$0xff]
      %v9278 = vld [vmem:[#allocation5 + $0x142] sm:$0xff]
      %v9279 = vld [vmem:[#allocation5 + $0x152] sm:$0xff]
      %v9280 = vld [vmem:[#allocation5 + $0x15a] sm:$0xff]
      %v9281 = vld [vmem:[#allocation5 + $0x16a] sm:$0xff]
      %v9282 = vld [vmem:[#allocation5 + $0x172] sm:$0xff]
      %v9283 = vld [vmem:[%s9154] sm:$0xff]
      %v9284 = vld [vmem:[%s9154 + $0x8] sm:$0xff]
      %v9285 = vld [vmem:[%s9154 + $0x18] sm:$0xff]
      %v9286 = vld [vmem:[%s9154 + $0x20] sm:$0xff]
      %v9287 = vld [vmem:[%s9154 + $0x30] sm:$0xff]
      %v9288 = vld [vmem:[%s9154 + $0x38] sm:$0xff]
      %v9289 = vld [vmem:[%s9154 + $0x48] sm:$0xff]
      %v9290 = vld [vmem:[%s9154 + $0x50] sm:$0xff]
      %v9291 = vld [vmem:[%s9154 + $0x60] sm:$0xff]
      %v9292 = vld [vmem:[%s9154 + $0x68] sm:$0xff]
      %v9293 = vld [vmem:[%s9154 + $0x78] sm:$0xff]
      %v9294 = vld [vmem:[%s9154 + $0x80] sm:$0xff]
      %v9295 = vld [vmem:[%s9154 + $0x90] sm:$0xff]
      %v9296 = vld [vmem:[%s9154 + $0x98] sm:$0xff]
      %v9297 = vld [vmem:[%s9154 + $0xa8] sm:$0xff]
      %v9298 = vld [vmem:[%s9154 + $0xb0] sm:$0xff]
      %v9299 = vld [vmem:[%s9154 + $0xc0] sm:$0xff]
      %v9300 = vld [vmem:[%s9154 + $0xc8] sm:$0xff]
      %v9301 = vld [vmem:[%s9154 + $0xd8] sm:$0xff]
      %v9302 = vld [vmem:[%s9154 + $0xe0] sm:$0xff]
      %v9303 = vld [vmem:[%s9154 + $0xf0] sm:$0xff]
      %v9304 = vld [vmem:[%s9154 + $0xf8] sm:$0xff]
      %v9305 = vld [vmem:[%s9154 + $0x108] sm:$0xff]
      %v9306 = vld [vmem:[%s9154 + $0x110] sm:$0xff]
      %v9307 = vld [vmem:[%s9154 + $0x120] sm:$0xff]
      %v9308 = vld [vmem:[%s9154 + $0x128] sm:$0xff]
      %v9309 = vld [vmem:[%s9154 + $0x138] sm:$0xff]
      %v9310 = vld [vmem:[%s9154 + $0x140] sm:$0xff]
      %v9311 = vld [vmem:[%s9154 + $0x150] sm:$0xff]
      %v9312 = vld [vmem:[%s9154 + $0x158] sm:$0xff]
      %v9313 = vld [vmem:[%s9154 + $0x168] sm:$0xff]
      %v9314 = vld [vmem:[%s9154 + $0x170] sm:$0xff]
      %v9315 = vld [vmem:[%s9154 + $0x1] sm:$0xff]
      %v9316 = vld [vmem:[%s9154 + $0x9] sm:$0xff]
      %v9317 = vld [vmem:[%s9154 + $0x19] sm:$0xff]
      %v9318 = vld [vmem:[%s9154 + $0x21] sm:$0xff]
      %v9319 = vld [vmem:[%s9154 + $0x31] sm:$0xff]
      %v9320 = vld [vmem:[%s9154 + $0x39] sm:$0xff]
      %v9321 = vld [vmem:[%s9154 + $0x49] sm:$0xff]
      %v9322 = vld [vmem:[%s9154 + $0x51] sm:$0xff]
      %v9323 = vld [vmem:[%s9154 + $0x61] sm:$0xff]
      %v9324 = vld [vmem:[%s9154 + $0x69] sm:$0xff]
      %v9325 = vld [vmem:[%s9154 + $0x79] sm:$0xff]
      %v9326 = vld [vmem:[%s9154 + $0x81] sm:$0xff]
      %v9327 = vld [vmem:[%s9154 + $0x91] sm:$0xff]
      %v9328 = vld [vmem:[%s9154 + $0x99] sm:$0xff]
      %v9329 = vld [vmem:[%s9154 + $0xa9] sm:$0xff]
      %v9330 = vld [vmem:[%s9154 + $0xb1] sm:$0xff]
      %v9331 = vld [vmem:[%s9154 + $0xc1] sm:$0xff]
      %v9332 = vld [vmem:[%s9154 + $0xc9] sm:$0xff]
      %v9333 = vld [vmem:[%s9154 + $0xd9] sm:$0xff]
      %v9334 = vld [vmem:[%s9154 + $0xe1] sm:$0xff]
      %v9335 = vld [vmem:[%s9154 + $0xf1] sm:$0xff]
      %v9336 = vld [vmem:[%s9154 + $0xf9] sm:$0xff]
      %v9337 = vld [vmem:[%s9154 + $0x109] sm:$0xff]
      %v9338 = vld [vmem:[%s9154 + $0x111] sm:$0xff]
      %v9339 = vld [vmem:[%s9154 + $0x121] sm:$0xff]
      %v9340 = vld [vmem:[%s9154 + $0x129] sm:$0xff]
      %v9341 = vld [vmem:[%s9154 + $0x139] sm:$0xff]
      %v9342 = vld [vmem:[%s9154 + $0x141] sm:$0xff]
      %v9343 = vld [vmem:[%s9154 + $0x151] sm:$0xff]
      %v9344 = vld [vmem:[%s9154 + $0x159] sm:$0xff]
      %v9345 = vld [vmem:[%s9154 + $0x169] sm:$0xff]
      %v9346 = vld [vmem:[%s9154 + $0x171] sm:$0xff]
      %v9347 = vld [vmem:[%s9154 + $0x2] sm:$0xff]
      %v9348 = vld [vmem:[%s9154 + $0xa] sm:$0xff]
      %v9349 = vld [vmem:[%s9154 + $0x1a] sm:$0xff]
      %v9350 = vld [vmem:[%s9154 + $0x22] sm:$0xff]
      %v9351 = vld [vmem:[%s9154 + $0x32] sm:$0xff]
      %v9352 = vld [vmem:[%s9154 + $0x3a] sm:$0xff]
      %v9353 = vld [vmem:[%s9154 + $0x4a] sm:$0xff]
      %v9354 = vld [vmem:[%s9154 + $0x52] sm:$0xff]
      %v9355 = vld [vmem:[%s9154 + $0x62] sm:$0xff]
      %v9356 = vld [vmem:[%s9154 + $0x6a] sm:$0xff]
      %v9357 = vld [vmem:[%s9154 + $0x7a] sm:$0xff]
      %v9358 = vld [vmem:[%s9154 + $0x82] sm:$0xff]
      %v9359 = vld [vmem:[%s9154 + $0x92] sm:$0xff]
      %v9360 = vld [vmem:[%s9154 + $0x9a] sm:$0xff]
      %v9361 = vld [vmem:[%s9154 + $0xaa] sm:$0xff]
      %v9362 = vld [vmem:[%s9154 + $0xb2] sm:$0xff]
      %v9363 = vld [vmem:[%s9154 + $0xc2] sm:$0xff]
      %v9364 = vld [vmem:[%s9154 + $0xca] sm:$0xff]
      %v9365 = vld [vmem:[%s9154 + $0xda] sm:$0xff]
      %v9366 = vld [vmem:[%s9154 + $0xe2] sm:$0xff]
      %v9367 = vld [vmem:[%s9154 + $0xf2] sm:$0xff]
      %v9368 = vld [vmem:[%s9154 + $0xfa] sm:$0xff]
      %v9369 = vld [vmem:[%s9154 + $0x10a] sm:$0xff]
      %v9370 = vld [vmem:[%s9154 + $0x112] sm:$0xff]
      %v9371 = vld [vmem:[%s9154 + $0x122] sm:$0xff]
      %v9372 = vld [vmem:[%s9154 + $0x12a] sm:$0xff]
      %v9373 = vld [vmem:[%s9154 + $0x13a] sm:$0xff]
      %v9374 = vld [vmem:[%s9154 + $0x142] sm:$0xff]
      %v9375 = vld [vmem:[%s9154 + $0x152] sm:$0xff]
      %v9376 = vld [vmem:[%s9154 + $0x15a] sm:$0xff]
      %v9377 = vld [vmem:[%s9154 + $0x16a] sm:$0xff]
      %v9378 = vld [vmem:[%s9154 + $0x172] sm:$0xff]
      %s9379 = scalar_lea.vmem [#allocation5], 48
      %v9380 = vld [vmem:[%s9379] sm:$0xff]
      %v9381 = vld [vmem:[%s9379 + $0x8] sm:$0xff]
      %v9382 = vld [vmem:[%s9379 + $0x18] sm:$0xff]
      %v9383 = vld [vmem:[%s9379 + $0x20] sm:$0xff]
      %v9384 = vld [vmem:[%s9379 + $0x30] sm:$0xff]
      %v9385 = vld [vmem:[%s9379 + $0x38] sm:$0xff]
      %v9386 = vld [vmem:[%s9379 + $0x48] sm:$0xff]
      %v9387 = vld [vmem:[%s9379 + $0x50] sm:$0xff]
      %v9388 = vld [vmem:[%s9379 + $0x60] sm:$0xff]
      %v9389 = vld [vmem:[%s9379 + $0x68] sm:$0xff]
      %v9390 = vld [vmem:[%s9379 + $0x78] sm:$0xff]
      %v9391 = vld [vmem:[%s9379 + $0x80] sm:$0xff]
      %v9392 = vld [vmem:[%s9379 + $0x90] sm:$0xff]
      %v9393 = vld [vmem:[%s9379 + $0x98] sm:$0xff]
      %v9394 = vld [vmem:[%s9379 + $0xa8] sm:$0xff]
      %v9395 = vld [vmem:[%s9379 + $0xb0] sm:$0xff]
      %v9396 = vld [vmem:[%s9379 + $0xc0] sm:$0xff]
      %v9397 = vld [vmem:[%s9379 + $0xc8] sm:$0xff]
      %v9398 = vld [vmem:[%s9379 + $0xd8] sm:$0xff]
      %v9399 = vld [vmem:[%s9379 + $0xe0] sm:$0xff]
      %v9400 = vld [vmem:[%s9379 + $0xf0] sm:$0xff]
      %v9401 = vld [vmem:[%s9379 + $0xf8] sm:$0xff]
      %v9402 = vld [vmem:[%s9379 + $0x108] sm:$0xff]
      %v9403 = vld [vmem:[%s9379 + $0x110] sm:$0xff]
      %v9404 = vld [vmem:[%s9379 + $0x120] sm:$0xff]
      %v9405 = vld [vmem:[%s9379 + $0x128] sm:$0xff]
      %v9406 = vld [vmem:[%s9379 + $0x138] sm:$0xff]
      %v9407 = vld [vmem:[%s9379 + $0x140] sm:$0xff]
      %v9408 = vld [vmem:[%s9379 + $0x150] sm:$0xff]
      %v9409 = vld [vmem:[%s9379 + $0x158] sm:$0xff]
      %v9410 = vld [vmem:[%s9379 + $0x168] sm:$0xff]
      %v9411 = vld [vmem:[%s9379 + $0x170] sm:$0xff]
      %v9412 = vld [vmem:[%s9379 + $0x1] sm:$0xff]
      %v9413 = vld [vmem:[%s9379 + $0x9] sm:$0xff]
      %v9414 = vld [vmem:[%s9379 + $0x19] sm:$0xff]
      %v9415 = vld [vmem:[%s9379 + $0x21] sm:$0xff]
      %v9416 = vld [vmem:[%s9379 + $0x31] sm:$0xff]
      %v9417 = vld [vmem:[%s9379 + $0x39] sm:$0xff]
      %v9418 = vld [vmem:[%s9379 + $0x49] sm:$0xff]
      %v9419 = vld [vmem:[%s9379 + $0x51] sm:$0xff]
      %v9420 = vld [vmem:[%s9379 + $0x61] sm:$0xff]
      %v9421 = vld [vmem:[%s9379 + $0x69] sm:$0xff]
      %v9422 = vld [vmem:[%s9379 + $0x79] sm:$0xff]
      %v9423 = vld [vmem:[%s9379 + $0x81] sm:$0xff]
      %v9424 = vld [vmem:[%s9379 + $0x91] sm:$0xff]
      %v9425 = vld [vmem:[%s9379 + $0x99] sm:$0xff]
      %v9426 = vld [vmem:[%s9379 + $0xa9] sm:$0xff]
      %v9427 = vld [vmem:[%s9379 + $0xb1] sm:$0xff]
      %v9428 = vld [vmem:[%s9379 + $0xc1] sm:$0xff]
      %v9429 = vld [vmem:[%s9379 + $0xc9] sm:$0xff]
      %v9430 = vld [vmem:[%s9379 + $0xd9] sm:$0xff]
      %v9431 = vld [vmem:[%s9379 + $0xe1] sm:$0xff]
      %v9432 = vld [vmem:[%s9379 + $0xf1] sm:$0xff]
      %v9433 = vld [vmem:[%s9379 + $0xf9] sm:$0xff]
      %v9434 = vld [vmem:[%s9379 + $0x109] sm:$0xff]
      %v9435 = vld [vmem:[%s9379 + $0x111] sm:$0xff]
      %v9436 = vld [vmem:[%s9379 + $0x121] sm:$0xff]
      %v9437 = vld [vmem:[%s9379 + $0x129] sm:$0xff]
      %v9438 = vld [vmem:[%s9379 + $0x139] sm:$0xff]
      %v9439 = vld [vmem:[%s9379 + $0x141] sm:$0xff]
      %v9440 = vld [vmem:[%s9379 + $0x151] sm:$0xff]
      %v9441 = vld [vmem:[%s9379 + $0x159] sm:$0xff]
      %v9442 = vld [vmem:[%s9379 + $0x169] sm:$0xff]
      %v9443 = vld [vmem:[%s9379 + $0x171] sm:$0xff]
      %v9444 = vld [vmem:[%s9379 + $0x2] sm:$0xff]
      %v9445 = vld [vmem:[%s9379 + $0xa] sm:$0xff]
      %v9446 = vld [vmem:[%s9379 + $0x1a] sm:$0xff]
      %v9447 = vld [vmem:[%s9379 + $0x22] sm:$0xff]
      %v9448 = vld [vmem:[%s9379 + $0x32] sm:$0xff]
      %v9449 = vld [vmem:[%s9379 + $0x3a] sm:$0xff]
      %v9450 = vld [vmem:[%s9379 + $0x4a] sm:$0xff]
      %v9451 = vld [vmem:[%s9379 + $0x52] sm:$0xff]
      %v9452 = vld [vmem:[%s9379 + $0x62] sm:$0xff]
      %v9453 = vld [vmem:[%s9379 + $0x6a] sm:$0xff]
      %v9454 = vld [vmem:[%s9379 + $0x7a] sm:$0xff]
      %v9455 = vld [vmem:[%s9379 + $0x82] sm:$0xff]
      %v9456 = vld [vmem:[%s9379 + $0x92] sm:$0xff]
      %v9457 = vld [vmem:[%s9379 + $0x9a] sm:$0xff]
      %v9458 = vld [vmem:[%s9379 + $0xaa] sm:$0xff]
      %v9459 = vld [vmem:[%s9379 + $0xb2] sm:$0xff]
      %v9460 = vld [vmem:[%s9379 + $0xc2] sm:$0xff]
      %v9461 = vld [vmem:[%s9379 + $0xca] sm:$0xff]
      %v9462 = vld [vmem:[%s9379 + $0xda] sm:$0xff]
      %v9463 = vld [vmem:[%s9379 + $0xe2] sm:$0xff]
      %v9464 = vld [vmem:[%s9379 + $0xf2] sm:$0xff]
      %v9465 = vld [vmem:[%s9379 + $0xfa] sm:$0xff]
      %v9466 = vld [vmem:[%s9379 + $0x10a] sm:$0xff]
      %v9467 = vld [vmem:[%s9379 + $0x112] sm:$0xff]
      %v9468 = vld [vmem:[%s9379 + $0x122] sm:$0xff]
      %v9469 = vld [vmem:[%s9379 + $0x12a] sm:$0xff]
      %v9470 = vld [vmem:[%s9379 + $0x13a] sm:$0xff]
      %v9471 = vld [vmem:[%s9379 + $0x142] sm:$0xff]
      %v9472 = vld [vmem:[%s9379 + $0x152] sm:$0xff]
      %v9473 = vld [vmem:[%s9379 + $0x15a] sm:$0xff]
      %v9474 = vld [vmem:[%s9379 + $0x16a] sm:$0xff]
      %v9475 = vld [vmem:[%s9379 + $0x172] sm:$0xff]
      %9508 = vrot.lane.b32.xlu0 %v9219, 32
      %v9509 = vpop.permute.xlu0 %9508
      %9510 = vrot.lane.b32.xlu0 %v9220, 32
      %v9511 = vpop.permute.xlu0 %9510
      %9512 = vrot.lane.b32.xlu0 %v9221, 32
      %v9513 = vpop.permute.xlu0 %9512
      %9514 = vrot.lane.b32.xlu0 %v9222, 32
      %v9515 = vpop.permute.xlu0 %9514
      %9516 = vrot.lane.b32.xlu0 %v9223, 32
      %v9517 = vpop.permute.xlu0 %9516
      %9518 = vrot.lane.b32.xlu0 %v9224, 32
      %v9519 = vpop.permute.xlu0 %9518
      %9520 = vrot.lane.b32.xlu0 %v9225, 32
      %v9521 = vpop.permute.xlu0 %9520
      %9522 = vrot.lane.b32.xlu0 %v9226, 32
      %v9523 = vpop.permute.xlu0 %9522
      %9524 = vrot.lane.b32.xlu0 %v9227, 32
      %v9525 = vpop.permute.xlu0 %9524
      %9526 = vrot.lane.b32.xlu0 %v9228, 32
      %v9527 = vpop.permute.xlu0 %9526
      %9528 = vrot.lane.b32.xlu0 %v9229, 32
      %v9529 = vpop.permute.xlu0 %9528
      %9530 = vrot.lane.b32.xlu0 %v9230, 32
      %v9531 = vpop.permute.xlu0 %9530
      %9532 = vrot.lane.b32.xlu0 %v9231, 32
      %v9533 = vpop.permute.xlu0 %9532
      %9534 = vrot.lane.b32.xlu0 %v9232, 32
      %v9535 = vpop.permute.xlu0 %9534
      %9536 = vrot.lane.b32.xlu0 %v9233, 32
      %v9537 = vpop.permute.xlu0 %9536
      %9538 = vrot.lane.b32.xlu0 %v9234, 32
      %v9539 = vpop.permute.xlu0 %9538
      %9540 = vrot.lane.b32.xlu0 %v9235, 32
      %v9541 = vpop.permute.xlu0 %9540
      %9542 = vrot.lane.b32.xlu0 %v9236, 32
      %v9543 = vpop.permute.xlu0 %9542
      %9544 = vrot.lane.b32.xlu0 %v9237, 32
      %v9545 = vpop.permute.xlu0 %9544
      %9546 = vrot.lane.b32.xlu0 %v9238, 32
      %v9547 = vpop.permute.xlu0 %9546
      %9548 = vrot.lane.b32.xlu0 %v9239, 32
      %v9549 = vpop.permute.xlu0 %9548
      %9550 = vrot.lane.b32.xlu0 %v9240, 32
      %v9551 = vpop.permute.xlu0 %9550
      %9552 = vrot.lane.b32.xlu0 %v9241, 32
      %v9553 = vpop.permute.xlu0 %9552
      %9554 = vrot.lane.b32.xlu0 %v9242, 32
      %v9555 = vpop.permute.xlu0 %9554
      %9556 = vrot.lane.b32.xlu0 %v9243, 32
      %v9557 = vpop.permute.xlu0 %9556
      %9558 = vrot.lane.b32.xlu0 %v9244, 32
      %v9559 = vpop.permute.xlu0 %9558
      %9560 = vrot.lane.b32.xlu0 %v9245, 32
      %v9561 = vpop.permute.xlu0 %9560
      %9562 = vrot.lane.b32.xlu0 %v9246, 32
      %v9563 = vpop.permute.xlu0 %9562
      %9564 = vrot.lane.b32.xlu0 %v9247, 32
      %v9565 = vpop.permute.xlu0 %9564
      %9566 = vrot.lane.b32.xlu0 %v9248, 32
      %v9567 = vpop.permute.xlu0 %9566
      %9568 = vrot.lane.b32.xlu0 %v9249, 32
      %v9569 = vpop.permute.xlu0 %9568
      %9570 = vrot.lane.b32.xlu0 %v9250, 32
      %v9571 = vpop.permute.xlu0 %9570
      %9636 = vrot.lane.b32.xlu0 %v9251, 64
      %v9637 = vpop.permute.xlu0 %9636
      %9638 = vrot.lane.b32.xlu0 %v9252, 64
      %v9639 = vpop.permute.xlu0 %9638
      %9640 = vrot.lane.b32.xlu0 %v9253, 64
      %v9641 = vpop.permute.xlu0 %9640
      %9642 = vrot.lane.b32.xlu0 %v9254, 64
      %v9643 = vpop.permute.xlu0 %9642
      %9644 = vrot.lane.b32.xlu0 %v9255, 64
      %v9645 = vpop.permute.xlu0 %9644
      %9646 = vrot.lane.b32.xlu0 %v9256, 64
      %v9647 = vpop.permute.xlu0 %9646
      %9648 = vrot.lane.b32.xlu0 %v9257, 64
      %v9649 = vpop.permute.xlu0 %9648
      %9650 = vrot.lane.b32.xlu0 %v9258, 64
      %v9651 = vpop.permute.xlu0 %9650
      %9652 = vrot.lane.b32.xlu0 %v9259, 64
      %v9653 = vpop.permute.xlu0 %9652
      %9654 = vrot.lane.b32.xlu0 %v9260, 64
      %v9655 = vpop.permute.xlu0 %9654
      %9656 = vrot.lane.b32.xlu0 %v9261, 64
      %v9657 = vpop.permute.xlu0 %9656
      %9658 = vrot.lane.b32.xlu0 %v9262, 64
      %v9659 = vpop.permute.xlu0 %9658
      %9660 = vrot.lane.b32.xlu0 %v9263, 64
      %v9661 = vpop.permute.xlu0 %9660
      %9662 = vrot.lane.b32.xlu0 %v9264, 64
      %v9663 = vpop.permute.xlu0 %9662
      %9664 = vrot.lane.b32.xlu0 %v9265, 64
      %v9665 = vpop.permute.xlu0 %9664
      %9666 = vrot.lane.b32.xlu0 %v9266, 64
      %v9667 = vpop.permute.xlu0 %9666
      %9668 = vrot.lane.b32.xlu0 %v9267, 64
      %v9669 = vpop.permute.xlu0 %9668
      %9670 = vrot.lane.b32.xlu0 %v9268, 64
      %v9671 = vpop.permute.xlu0 %9670
      %9672 = vrot.lane.b32.xlu0 %v9269, 64
      %v9673 = vpop.permute.xlu0 %9672
      %9674 = vrot.lane.b32.xlu0 %v9270, 64
      %v9675 = vpop.permute.xlu0 %9674
      %9676 = vrot.lane.b32.xlu0 %v9271, 64
      %v9677 = vpop.permute.xlu0 %9676
      %9678 = vrot.lane.b32.xlu0 %v9272, 64
      %v9679 = vpop.permute.xlu0 %9678
      %9680 = vrot.lane.b32.xlu0 %v9273, 64
      %v9681 = vpop.permute.xlu0 %9680
      %9682 = vrot.lane.b32.xlu0 %v9274, 64
      %v9683 = vpop.permute.xlu0 %9682
      %9684 = vrot.lane.b32.xlu0 %v9275, 64
      %v9685 = vpop.permute.xlu0 %9684
      %9686 = vrot.lane.b32.xlu0 %v9276, 64
      %v9687 = vpop.permute.xlu0 %9686
      %9688 = vrot.lane.b32.xlu0 %v9277, 64
      %v9689 = vpop.permute.xlu0 %9688
      %9690 = vrot.lane.b32.xlu0 %v9278, 64
      %v9691 = vpop.permute.xlu0 %9690
      %9692 = vrot.lane.b32.xlu0 %v9279, 64
      %v9693 = vpop.permute.xlu0 %9692
      %9694 = vrot.lane.b32.xlu0 %v9280, 64
      %v9695 = vpop.permute.xlu0 %9694
      %9696 = vrot.lane.b32.xlu0 %v9281, 64
      %v9697 = vpop.permute.xlu0 %9696
      %9698 = vrot.lane.b32.xlu0 %v9282, 64
      %v9699 = vpop.permute.xlu0 %9698
      %9764 = vrot.lane.b32.xlu0 %v9283, 96
      %v9765 = vpop.permute.xlu0 %9764
      %9766 = vrot.lane.b32.xlu0 %v9284, 96
      %v9767 = vpop.permute.xlu0 %9766
      %9768 = vrot.lane.b32.xlu0 %v9285, 96
      %v9769 = vpop.permute.xlu0 %9768
      %9770 = vrot.lane.b32.xlu0 %v9286, 96
      %v9771 = vpop.permute.xlu0 %9770
      %9772 = vrot.lane.b32.xlu0 %v9287, 96
      %v9773 = vpop.permute.xlu0 %9772
      %9774 = vrot.lane.b32.xlu0 %v9288, 96
      %v9775 = vpop.permute.xlu0 %9774
      %9776 = vrot.lane.b32.xlu0 %v9289, 96
      %v9777 = vpop.permute.xlu0 %9776
      %9778 = vrot.lane.b32.xlu0 %v9290, 96
      %v9779 = vpop.permute.xlu0 %9778
      %9780 = vrot.lane.b32.xlu0 %v9291, 96
      %v9781 = vpop.permute.xlu0 %9780
      %9782 = vrot.lane.b32.xlu0 %v9292, 96
      %v9783 = vpop.permute.xlu0 %9782
      %9784 = vrot.lane.b32.xlu0 %v9293, 96
      %v9785 = vpop.permute.xlu0 %9784
      %9786 = vrot.lane.b32.xlu0 %v9294, 96
      %v9787 = vpop.permute.xlu0 %9786
      %9788 = vrot.lane.b32.xlu0 %v9295, 96
      %v9789 = vpop.permute.xlu0 %9788
      %9790 = vrot.lane.b32.xlu0 %v9296, 96
      %v9791 = vpop.permute.xlu0 %9790
      %9792 = vrot.lane.b32.xlu0 %v9297, 96
      %v9793 = vpop.permute.xlu0 %9792
      %9794 = vrot.lane.b32.xlu0 %v9298, 96
      %v9795 = vpop.permute.xlu0 %9794
      %9796 = vrot.lane.b32.xlu0 %v9299, 96
      %v9797 = vpop.permute.xlu0 %9796
      %9798 = vrot.lane.b32.xlu0 %v9300, 96
      %v9799 = vpop.permute.xlu0 %9798
      %9800 = vrot.lane.b32.xlu0 %v9301, 96
      %v9801 = vpop.permute.xlu0 %9800
      %9802 = vrot.lane.b32.xlu0 %v9302, 96
      %v9803 = vpop.permute.xlu0 %9802
      %9804 = vrot.lane.b32.xlu0 %v9303, 96
      %v9805 = vpop.permute.xlu0 %9804
      %9806 = vrot.lane.b32.xlu0 %v9304, 96
      %v9807 = vpop.permute.xlu0 %9806
      %9808 = vrot.lane.b32.xlu0 %v9305, 96
      %v9809 = vpop.permute.xlu0 %9808
      %9810 = vrot.lane.b32.xlu0 %v9306, 96
      %v9811 = vpop.permute.xlu0 %9810
      %9812 = vrot.lane.b32.xlu0 %v9307, 96
      %v9813 = vpop.permute.xlu0 %9812
      %9814 = vrot.lane.b32.xlu0 %v9308, 96
      %v9815 = vpop.permute.xlu0 %9814
      %9816 = vrot.lane.b32.xlu0 %v9309, 96
      %v9817 = vpop.permute.xlu0 %9816
      %9818 = vrot.lane.b32.xlu0 %v9310, 96
      %v9819 = vpop.permute.xlu0 %9818
      %9820 = vrot.lane.b32.xlu0 %v9311, 96
      %v9821 = vpop.permute.xlu0 %9820
      %9822 = vrot.lane.b32.xlu0 %v9312, 96
      %v9823 = vpop.permute.xlu0 %9822
      %9824 = vrot.lane.b32.xlu0 %v9313, 96
      %v9825 = vpop.permute.xlu0 %9824
      %9826 = vrot.lane.b32.xlu0 %v9314, 96
      %v9827 = vpop.permute.xlu0 %9826
      %9892 = vrot.lane.b32.xlu0 %v9347, 32
      %v9893 = vpop.permute.xlu0 %9892
      %9894 = vrot.lane.b32.xlu0 %v9348, 32
      %v9895 = vpop.permute.xlu0 %9894
      %9896 = vrot.lane.b32.xlu0 %v9349, 32
      %v9897 = vpop.permute.xlu0 %9896
      %9898 = vrot.lane.b32.xlu0 %v9350, 32
      %v9899 = vpop.permute.xlu0 %9898
      %9900 = vrot.lane.b32.xlu0 %v9351, 32
      %v9901 = vpop.permute.xlu0 %9900
      %9902 = vrot.lane.b32.xlu0 %v9352, 32
      %v9903 = vpop.permute.xlu0 %9902
      %9904 = vrot.lane.b32.xlu0 %v9353, 32
      %v9905 = vpop.permute.xlu0 %9904
      %9906 = vrot.lane.b32.xlu0 %v9354, 32
      %v9907 = vpop.permute.xlu0 %9906
      %9908 = vrot.lane.b32.xlu0 %v9355, 32
      %v9909 = vpop.permute.xlu0 %9908
      %9910 = vrot.lane.b32.xlu0 %v9356, 32
      %v9911 = vpop.permute.xlu0 %9910
      %9912 = vrot.lane.b32.xlu0 %v9357, 32
      %v9913 = vpop.permute.xlu0 %9912
      %9914 = vrot.lane.b32.xlu0 %v9358, 32
      %v9915 = vpop.permute.xlu0 %9914
      %9916 = vrot.lane.b32.xlu0 %v9359, 32
      %v9917 = vpop.permute.xlu0 %9916
      %9918 = vrot.lane.b32.xlu0 %v9360, 32
      %v9919 = vpop.permute.xlu0 %9918
      %9920 = vrot.lane.b32.xlu0 %v9361, 32
      %v9921 = vpop.permute.xlu0 %9920
      %9922 = vrot.lane.b32.xlu0 %v9362, 32
      %v9923 = vpop.permute.xlu0 %9922
      %9924 = vrot.lane.b32.xlu0 %v9363, 32
      %v9925 = vpop.permute.xlu0 %9924
      %9926 = vrot.lane.b32.xlu0 %v9364, 32
      %v9927 = vpop.permute.xlu0 %9926
      %9928 = vrot.lane.b32.xlu0 %v9365, 32
      %v9929 = vpop.permute.xlu0 %9928
      %9930 = vrot.lane.b32.xlu0 %v9366, 32
      %v9931 = vpop.permute.xlu0 %9930
      %9932 = vrot.lane.b32.xlu0 %v9367, 32
      %v9933 = vpop.permute.xlu0 %9932
      %9934 = vrot.lane.b32.xlu0 %v9368, 32
      %v9935 = vpop.permute.xlu0 %9934
      %9936 = vrot.lane.b32.xlu0 %v9369, 32
      %v9937 = vpop.permute.xlu0 %9936
      %9938 = vrot.lane.b32.xlu0 %v9370, 32
      %v9939 = vpop.permute.xlu0 %9938
      %9940 = vrot.lane.b32.xlu0 %v9371, 32
      %v9941 = vpop.permute.xlu0 %9940
      %9942 = vrot.lane.b32.xlu0 %v9372, 32
      %v9943 = vpop.permute.xlu0 %9942
      %9944 = vrot.lane.b32.xlu0 %v9373, 32
      %v9945 = vpop.permute.xlu0 %9944
      %9946 = vrot.lane.b32.xlu0 %v9374, 32
      %v9947 = vpop.permute.xlu0 %9946
      %9948 = vrot.lane.b32.xlu0 %v9375, 32
      %v9949 = vpop.permute.xlu0 %9948
      %9950 = vrot.lane.b32.xlu0 %v9376, 32
      %v9951 = vpop.permute.xlu0 %9950
      %9952 = vrot.lane.b32.xlu0 %v9377, 32
      %v9953 = vpop.permute.xlu0 %9952
      %9954 = vrot.lane.b32.xlu0 %v9378, 32
      %v9955 = vpop.permute.xlu0 %9954
      %10020 = vrot.lane.b32.xlu0 %v9380, 64
      %v10021 = vpop.permute.xlu0 %10020
      %10022 = vrot.lane.b32.xlu0 %v9381, 64
      %v10023 = vpop.permute.xlu0 %10022
      %10024 = vrot.lane.b32.xlu0 %v9382, 64
      %v10025 = vpop.permute.xlu0 %10024
      %10026 = vrot.lane.b32.xlu0 %v9383, 64
      %v10027 = vpop.permute.xlu0 %10026
      %10028 = vrot.lane.b32.xlu0 %v9384, 64
      %v10029 = vpop.permute.xlu0 %10028
      %10030 = vrot.lane.b32.xlu0 %v9385, 64
      %v10031 = vpop.permute.xlu0 %10030
      %10032 = vrot.lane.b32.xlu0 %v9386, 64
      %v10033 = vpop.permute.xlu0 %10032
      %10034 = vrot.lane.b32.xlu0 %v9387, 64
      %v10035 = vpop.permute.xlu0 %10034
      %10036 = vrot.lane.b32.xlu0 %v9388, 64
      %v10037 = vpop.permute.xlu0 %10036
      %10038 = vrot.lane.b32.xlu0 %v9389, 64
      %v10039 = vpop.permute.xlu0 %10038
      %10040 = vrot.lane.b32.xlu0 %v9390, 64
      %v10041 = vpop.permute.xlu0 %10040
      %10042 = vrot.lane.b32.xlu0 %v9391, 64
      %v10043 = vpop.permute.xlu0 %10042
      %10044 = vrot.lane.b32.xlu0 %v9392, 64
      %v10045 = vpop.permute.xlu0 %10044
      %10046 = vrot.lane.b32.xlu0 %v9393, 64
      %v10047 = vpop.permute.xlu0 %10046
      %10048 = vrot.lane.b32.xlu0 %v9394, 64
      %v10049 = vpop.permute.xlu0 %10048
      %10050 = vrot.lane.b32.xlu0 %v9395, 64
      %v10051 = vpop.permute.xlu0 %10050
      %10052 = vrot.lane.b32.xlu0 %v9396, 64
      %v10053 = vpop.permute.xlu0 %10052
      %10054 = vrot.lane.b32.xlu0 %v9397, 64
      %v10055 = vpop.permute.xlu0 %10054
      %10056 = vrot.lane.b32.xlu0 %v9398, 64
      %v10057 = vpop.permute.xlu0 %10056
      %10058 = vrot.lane.b32.xlu0 %v9399, 64
      %v10059 = vpop.permute.xlu0 %10058
      %10060 = vrot.lane.b32.xlu0 %v9400, 64
      %v10061 = vpop.permute.xlu0 %10060
      %10062 = vrot.lane.b32.xlu0 %v9401, 64
      %v10063 = vpop.permute.xlu0 %10062
      %10064 = vrot.lane.b32.xlu0 %v9402, 64
      %v10065 = vpop.permute.xlu0 %10064
      %10066 = vrot.lane.b32.xlu0 %v9403, 64
      %v10067 = vpop.permute.xlu0 %10066
      %10068 = vrot.lane.b32.xlu0 %v9404, 64
      %v10069 = vpop.permute.xlu0 %10068
      %10070 = vrot.lane.b32.xlu0 %v9405, 64
      %v10071 = vpop.permute.xlu0 %10070
      %10072 = vrot.lane.b32.xlu0 %v9406, 64
      %v10073 = vpop.permute.xlu0 %10072
      %10074 = vrot.lane.b32.xlu0 %v9407, 64
      %v10075 = vpop.permute.xlu0 %10074
      %10076 = vrot.lane.b32.xlu0 %v9408, 64
      %v10077 = vpop.permute.xlu0 %10076
      %10078 = vrot.lane.b32.xlu0 %v9409, 64
      %v10079 = vpop.permute.xlu0 %10078
      %10080 = vrot.lane.b32.xlu0 %v9410, 64
      %v10081 = vpop.permute.xlu0 %10080
      %10082 = vrot.lane.b32.xlu0 %v9411, 64
      %v10083 = vpop.permute.xlu0 %10082
      %10148 = vrot.lane.b32.xlu0 %v9412, 96
      %v10149 = vpop.permute.xlu0 %10148
      %10150 = vrot.lane.b32.xlu0 %v9413, 96
      %v10151 = vpop.permute.xlu0 %10150
      %10152 = vrot.lane.b32.xlu0 %v9414, 96
      %v10153 = vpop.permute.xlu0 %10152
      %10154 = vrot.lane.b32.xlu0 %v9415, 96
      %v10155 = vpop.permute.xlu0 %10154
      %10156 = vrot.lane.b32.xlu0 %v9416, 96
      %v10157 = vpop.permute.xlu0 %10156
      %10158 = vrot.lane.b32.xlu0 %v9417, 96
      %v10159 = vpop.permute.xlu0 %10158
      %10160 = vrot.lane.b32.xlu0 %v9418, 96
      %v10161 = vpop.permute.xlu0 %10160
      %10162 = vrot.lane.b32.xlu0 %v9419, 96
      %v10163 = vpop.permute.xlu0 %10162
      %10164 = vrot.lane.b32.xlu0 %v9420, 96
      %v10165 = vpop.permute.xlu0 %10164
      %10166 = vrot.lane.b32.xlu0 %v9421, 96
      %v10167 = vpop.permute.xlu0 %10166
      %10168 = vrot.lane.b32.xlu0 %v9422, 96
      %v10169 = vpop.permute.xlu0 %10168
      %10170 = vrot.lane.b32.xlu0 %v9423, 96
      %v10171 = vpop.permute.xlu0 %10170
      %10172 = vrot.lane.b32.xlu0 %v9424, 96
      %v10173 = vpop.permute.xlu0 %10172
      %10174 = vrot.lane.b32.xlu0 %v9425, 96
      %v10175 = vpop.permute.xlu0 %10174
      %10176 = vrot.lane.b32.xlu0 %v9426, 96
      %v10177 = vpop.permute.xlu0 %10176
      %10178 = vrot.lane.b32.xlu0 %v9427, 96
      %v10179 = vpop.permute.xlu0 %10178
      %10180 = vrot.lane.b32.xlu0 %v9428, 96
      %v10181 = vpop.permute.xlu0 %10180
      %10182 = vrot.lane.b32.xlu0 %v9429, 96
      %v10183 = vpop.permute.xlu0 %10182
      %10184 = vrot.lane.b32.xlu0 %v9430, 96
      %v10185 = vpop.permute.xlu0 %10184
      %10186 = vrot.lane.b32.xlu0 %v9431, 96
      %v10187 = vpop.permute.xlu0 %10186
      %10188 = vrot.lane.b32.xlu0 %v9432, 96
      %v10189 = vpop.permute.xlu0 %10188
      %10190 = vrot.lane.b32.xlu0 %v9433, 96
      %v10191 = vpop.permute.xlu0 %10190
      %10192 = vrot.lane.b32.xlu0 %v9434, 96
      %v10193 = vpop.permute.xlu0 %10192
      %10194 = vrot.lane.b32.xlu0 %v9435, 96
      %v10195 = vpop.permute.xlu0 %10194
      %10196 = vrot.lane.b32.xlu0 %v9436, 96
      %v10197 = vpop.permute.xlu0 %10196
      %10198 = vrot.lane.b32.xlu0 %v9437, 96
      %v10199 = vpop.permute.xlu0 %10198
      %10200 = vrot.lane.b32.xlu0 %v9438, 96
      %v10201 = vpop.permute.xlu0 %10200
      %10202 = vrot.lane.b32.xlu0 %v9439, 96
      %v10203 = vpop.permute.xlu0 %10202
      %10204 = vrot.lane.b32.xlu0 %v9440, 96
      %v10205 = vpop.permute.xlu0 %10204
      %10206 = vrot.lane.b32.xlu0 %v9441, 96
      %v10207 = vpop.permute.xlu0 %10206
      %10208 = vrot.lane.b32.xlu0 %v9442, 96
      %v10209 = vpop.permute.xlu0 %10208
      %10210 = vrot.lane.b32.xlu0 %v9443, 96
      %v10211 = vpop.permute.xlu0 %10210
      %v10244 = vsel %vm505, %v9187, %v9509
      %v10245 = vsel %vm505, %v9188, %v9511
      %v10246 = vsel %vm505, %v9189, %v9513
      %v10247 = vsel %vm505, %v9190, %v9515
      %v10248 = vsel %vm505, %v9191, %v9517
      %v10249 = vsel %vm505, %v9192, %v9519
      %v10250 = vsel %vm505, %v9193, %v9521
      %v10251 = vsel %vm505, %v9194, %v9523
      %v10252 = vsel %vm505, %v9195, %v9525
      %v10253 = vsel %vm505, %v9196, %v9527
      %v10254 = vsel %vm505, %v9197, %v9529
      %v10255 = vsel %vm505, %v9198, %v9531
      %v10256 = vsel %vm505, %v9199, %v9533
      %v10257 = vsel %vm505, %v9200, %v9535
      %v10258 = vsel %vm505, %v9201, %v9537
      %v10259 = vsel %vm505, %v9202, %v9539
      %v10260 = vsel %vm505, %v9203, %v9541
      %v10261 = vsel %vm505, %v9204, %v9543
      %v10262 = vsel %vm505, %v9205, %v9545
      %v10263 = vsel %vm505, %v9206, %v9547
      %v10264 = vsel %vm505, %v9207, %v9549
      %v10265 = vsel %vm505, %v9208, %v9551
      %v10266 = vsel %vm505, %v9209, %v9553
      %v10267 = vsel %vm505, %v9210, %v9555
      %v10268 = vsel %vm505, %v9211, %v9557
      %v10269 = vsel %vm505, %v9212, %v9559
      %v10270 = vsel %vm505, %v9213, %v9561
      %v10271 = vsel %vm505, %v9214, %v9563
      %v10272 = vsel %vm505, %v9215, %v9565
      %v10273 = vsel %vm505, %v9216, %v9567
      %v10274 = vsel %vm505, %v9217, %v9569
      %v10275 = vsel %vm505, %v9218, %v9571
      %v10276 = vsel %vm449, %v10244, %v9637
      %v10277 = vsel %vm449, %v10245, %v9639
      %v10278 = vsel %vm449, %v10246, %v9641
      %v10279 = vsel %vm449, %v10247, %v9643
      %v10280 = vsel %vm449, %v10248, %v9645
      %v10281 = vsel %vm449, %v10249, %v9647
      %v10282 = vsel %vm449, %v10250, %v9649
      %v10283 = vsel %vm449, %v10251, %v9651
      %v10284 = vsel %vm449, %v10252, %v9653
      %v10285 = vsel %vm449, %v10253, %v9655
      %v10286 = vsel %vm449, %v10254, %v9657
      %v10287 = vsel %vm449, %v10255, %v9659
      %v10288 = vsel %vm449, %v10256, %v9661
      %v10289 = vsel %vm449, %v10257, %v9663
      %v10290 = vsel %vm449, %v10258, %v9665
      %v10291 = vsel %vm449, %v10259, %v9667
      %v10292 = vsel %vm449, %v10260, %v9669
      %v10293 = vsel %vm449, %v10261, %v9671
      %v10294 = vsel %vm449, %v10262, %v9673
      %v10295 = vsel %vm449, %v10263, %v9675
      %v10296 = vsel %vm449, %v10264, %v9677
      %v10297 = vsel %vm449, %v10265, %v9679
      %v10298 = vsel %vm449, %v10266, %v9681
      %v10299 = vsel %vm449, %v10267, %v9683
      %v10300 = vsel %vm449, %v10268, %v9685
      %v10301 = vsel %vm449, %v10269, %v9687
      %v10302 = vsel %vm449, %v10270, %v9689
      %v10303 = vsel %vm449, %v10271, %v9691
      %v10304 = vsel %vm449, %v10272, %v9693
      %v10305 = vsel %vm449, %v10273, %v9695
      %v10306 = vsel %vm449, %v10274, %v9697
      %v10307 = vsel %vm449, %v10275, %v9699
      %vm10308 = vcmask 785408
      %v10309 = vsel %vm10308, %v10276, %v9765
      %v10310 = vsel %vm10308, %v10277, %v9767
      %v10311 = vsel %vm10308, %v10278, %v9769
      %v10312 = vsel %vm10308, %v10279, %v9771
      %v10313 = vsel %vm10308, %v10280, %v9773
      %v10314 = vsel %vm10308, %v10281, %v9775
      %v10315 = vsel %vm10308, %v10282, %v9777
      %v10316 = vsel %vm10308, %v10283, %v9779
      %v10317 = vsel %vm10308, %v10284, %v9781
      %v10318 = vsel %vm10308, %v10285, %v9783
      %v10319 = vsel %vm10308, %v10286, %v9785
      %v10320 = vsel %vm10308, %v10287, %v9787
      %v10321 = vsel %vm10308, %v10288, %v9789
      %v10322 = vsel %vm10308, %v10289, %v9791
      %v10323 = vsel %vm10308, %v10290, %v9793
      %v10324 = vsel %vm10308, %v10291, %v9795
      %v10325 = vsel %vm10308, %v10292, %v9797
      %v10326 = vsel %vm10308, %v10293, %v9799
      %v10327 = vsel %vm10308, %v10294, %v9801
      %v10328 = vsel %vm10308, %v10295, %v9803
      %v10329 = vsel %vm10308, %v10296, %v9805
      %v10330 = vsel %vm10308, %v10297, %v9807
      %v10331 = vsel %vm10308, %v10298, %v9809
      %v10332 = vsel %vm10308, %v10299, %v9811
      %v10333 = vsel %vm10308, %v10300, %v9813
      %v10334 = vsel %vm10308, %v10301, %v9815
      %v10335 = vsel %vm10308, %v10302, %v9817
      %v10336 = vsel %vm10308, %v10303, %v9819
      %v10337 = vsel %vm10308, %v10304, %v9821
      %v10338 = vsel %vm10308, %v10305, %v9823
      %v10339 = vsel %vm10308, %v10306, %v9825
      %v10340 = vsel %vm10308, %v10307, %v9827
      %v10341 = vsel %vm505, %v9315, %v9893
      %v10342 = vsel %vm505, %v9316, %v9895
      %v10343 = vsel %vm505, %v9317, %v9897
      %v10344 = vsel %vm505, %v9318, %v9899
      %v10345 = vsel %vm505, %v9319, %v9901
      %v10346 = vsel %vm505, %v9320, %v9903
      %v10347 = vsel %vm505, %v9321, %v9905
      %v10348 = vsel %vm505, %v9322, %v9907
      %v10349 = vsel %vm505, %v9323, %v9909
      %v10350 = vsel %vm505, %v9324, %v9911
      %v10351 = vsel %vm505, %v9325, %v9913
      %v10352 = vsel %vm505, %v9326, %v9915
      %v10353 = vsel %vm505, %v9327, %v9917
      %v10354 = vsel %vm505, %v9328, %v9919
      %v10355 = vsel %vm505, %v9329, %v9921
      %v10356 = vsel %vm505, %v9330, %v9923
      %v10357 = vsel %vm505, %v9331, %v9925
      %v10358 = vsel %vm505, %v9332, %v9927
      %v10359 = vsel %vm505, %v9333, %v9929
      %v10360 = vsel %vm505, %v9334, %v9931
      %v10361 = vsel %vm505, %v9335, %v9933
      %v10362 = vsel %vm505, %v9336, %v9935
      %v10363 = vsel %vm505, %v9337, %v9937
      %v10364 = vsel %vm505, %v9338, %v9939
      %v10365 = vsel %vm505, %v9339, %v9941
      %v10366 = vsel %vm505, %v9340, %v9943
      %v10367 = vsel %vm505, %v9341, %v9945
      %v10368 = vsel %vm505, %v9342, %v9947
      %v10369 = vsel %vm505, %v9343, %v9949
      %v10370 = vsel %vm505, %v9344, %v9951
      %v10371 = vsel %vm505, %v9345, %v9953
      %v10372 = vsel %vm505, %v9346, %v9955
      %v10373 = vsel %vm449, %v10341, %v10021
      %v10374 = vsel %vm449, %v10342, %v10023
      %v10375 = vsel %vm449, %v10343, %v10025
      %v10376 = vsel %vm449, %v10344, %v10027
      %v10377 = vsel %vm449, %v10345, %v10029
      %v10378 = vsel %vm449, %v10346, %v10031
      %v10379 = vsel %vm449, %v10347, %v10033
      %v10380 = vsel %vm449, %v10348, %v10035
      %v10381 = vsel %vm449, %v10349, %v10037
      %v10382 = vsel %vm449, %v10350, %v10039
      %v10383 = vsel %vm449, %v10351, %v10041
      %v10384 = vsel %vm449, %v10352, %v10043
      %v10385 = vsel %vm449, %v10353, %v10045
      %v10386 = vsel %vm449, %v10354, %v10047
      %v10387 = vsel %vm449, %v10355, %v10049
      %v10388 = vsel %vm449, %v10356, %v10051
      %v10389 = vsel %vm449, %v10357, %v10053
      %v10390 = vsel %vm449, %v10358, %v10055
      %v10391 = vsel %vm449, %v10359, %v10057
      %v10392 = vsel %vm449, %v10360, %v10059
      %v10393 = vsel %vm449, %v10361, %v10061
      %v10394 = vsel %vm449, %v10362, %v10063
      %v10395 = vsel %vm449, %v10363, %v10065
      %v10396 = vsel %vm449, %v10364, %v10067
      %v10397 = vsel %vm449, %v10365, %v10069
      %v10398 = vsel %vm449, %v10366, %v10071
      %v10399 = vsel %vm449, %v10367, %v10073
      %v10400 = vsel %vm449, %v10368, %v10075
      %v10401 = vsel %vm449, %v10369, %v10077
      %v10402 = vsel %vm449, %v10370, %v10079
      %v10403 = vsel %vm449, %v10371, %v10081
      %v10404 = vsel %vm449, %v10372, %v10083
      %v10405 = vsel %vm10308, %v10373, %v10149
      %v10406 = vsel %vm10308, %v10374, %v10151
      %v10407 = vsel %vm10308, %v10375, %v10153
      %v10408 = vsel %vm10308, %v10376, %v10155
      %v10409 = vsel %vm10308, %v10377, %v10157
      %v10410 = vsel %vm10308, %v10378, %v10159
      %v10411 = vsel %vm10308, %v10379, %v10161
      %v10412 = vsel %vm10308, %v10380, %v10163
      %v10413 = vsel %vm10308, %v10381, %v10165
      %v10414 = vsel %vm10308, %v10382, %v10167
      %v10415 = vsel %vm10308, %v10383, %v10169
      %v10416 = vsel %vm10308, %v10384, %v10171
      %v10417 = vsel %vm10308, %v10385, %v10173
      %v10418 = vsel %vm10308, %v10386, %v10175
      %v10419 = vsel %vm10308, %v10387, %v10177
      %v10420 = vsel %vm10308, %v10388, %v10179
      %v10421 = vsel %vm10308, %v10389, %v10181
      %v10422 = vsel %vm10308, %v10390, %v10183
      %v10423 = vsel %vm10308, %v10391, %v10185
      %v10424 = vsel %vm10308, %v10392, %v10187
      %v10425 = vsel %vm10308, %v10393, %v10189
      %v10426 = vsel %vm10308, %v10394, %v10191
      %v10427 = vsel %vm10308, %v10395, %v10193
      %v10428 = vsel %vm10308, %v10396, %v10195
      %v10429 = vsel %vm10308, %v10397, %v10197
      %v10430 = vsel %vm10308, %v10398, %v10199
      %v10431 = vsel %vm10308, %v10399, %v10201
      %v10432 = vsel %vm10308, %v10400, %v10203
      %v10433 = vsel %vm10308, %v10401, %v10205
      %v10434 = vsel %vm10308, %v10402, %v10207
      %v10435 = vsel %vm10308, %v10403, %v10209
      %v10436 = vsel %vm10308, %v10404, %v10211
      %v10437 = vld [vmem:[%s7] sm:$0xff]
      %v10438 = vld [vmem:[%s7 + $0x8] sm:$0xff]
      %v10439 = vld [vmem:[%s7 + $0x10] sm:$0xff]
      %v10440 = vld [vmem:[%s7 + $0x18] sm:$0xff]
      %v10441 = vld [vmem:[%s7 + $0x20] sm:$0xff]
      %v10442 = vld [vmem:[%s7 + $0x28] sm:$0xff]
      %v10443 = vld [vmem:[%s7 + $0x30] sm:$0xff]
      %v10444 = vld [vmem:[%s7 + $0x38] sm:$0xff]
      %v10445 = vld [vmem:[%s7 + $0x40] sm:$0xff]
      %v10446 = vld [vmem:[%s7 + $0x48] sm:$0xff]
      %v10447 = vld [vmem:[%s7 + $0x50] sm:$0xff]
      %v10448 = vld [vmem:[%s7 + $0x58] sm:$0xff]
      %v10449 = vld [vmem:[%s7 + $0x60] sm:$0xff]
      %v10450 = vld [vmem:[%s7 + $0x68] sm:$0xff]
      %v10451 = vld [vmem:[%s7 + $0x70] sm:$0xff]
      %v10452 = vld [vmem:[%s7 + $0x78] sm:$0xff]
      %v10453 = vld [vmem:[%s7 + $0x80] sm:$0xff]
      %v10454 = vld [vmem:[%s7 + $0x88] sm:$0xff]
      %v10455 = vld [vmem:[%s7 + $0x90] sm:$0xff]
      %v10456 = vld [vmem:[%s7 + $0x98] sm:$0xff]
      %v10457 = vld [vmem:[%s7 + $0xa0] sm:$0xff]
      %v10458 = vld [vmem:[%s7 + $0xa8] sm:$0xff]
      %v10459 = vld [vmem:[%s7 + $0xb0] sm:$0xff]
      %v10460 = vld [vmem:[%s7 + $0xb8] sm:$0xff]
      %v10461 = vld [vmem:[%s7 + $0xc0] sm:$0xff]
      %v10462 = vld [vmem:[%s7 + $0xc8] sm:$0xff]
      %v10463 = vld [vmem:[%s7 + $0xd0] sm:$0xff]
      %v10464 = vld [vmem:[%s7 + $0xd8] sm:$0xff]
      %v10465 = vld [vmem:[%s7 + $0xe0] sm:$0xff]
      %v10466 = vld [vmem:[%s7 + $0xe8] sm:$0xff]
      %v10467 = vld [vmem:[%s7 + $0xf0] sm:$0xff]
      %v10468 = vld [vmem:[%s7 + $0xf8] sm:$0xff]
      %v10469 = vld [vmem:[%s7 + $0x100] sm:$0xff]
      %v10470 = vld [vmem:[%s7 + $0x108] sm:$0xff]
      %v10471 = vld [vmem:[%s7 + $0x110] sm:$0xff]
      %v10472 = vld [vmem:[%s7 + $0x118] sm:$0xff]
      %v10473 = vld [vmem:[%s8] sm:$0x1]
      %v10475 = vlaneseq
      %v10476 = vshrl.u32 %v10475, 7
      %v10477 = vsub.s32 0, %v10476
      %v10478 = vrot.slane %v10473, %v10477
      %v10481 = vsel %vm505, %v9444, 0
      %v10484 = vsel %vm505, %v9445, 0
      %v10487 = vsel %vm505, %v9446, 0
      %v10490 = vsel %vm505, %v9447, 0
      %v10493 = vsel %vm505, %v9448, 0
      %v10496 = vsel %vm505, %v9449, 0
      %v10499 = vsel %vm505, %v9450, 0
      %v10502 = vsel %vm505, %v9451, 0
      %v10505 = vsel %vm505, %v9452, 0
      %v10508 = vsel %vm505, %v9453, 0
      %v10511 = vsel %vm505, %v9454, 0
      %v10514 = vsel %vm505, %v9455, 0
      %v10517 = vsel %vm505, %v9456, 0
      %v10520 = vsel %vm505, %v9457, 0
      %v10523 = vsel %vm505, %v9458, 0
      %v10526 = vsel %vm505, %v9459, 0
      %v10529 = vsel %vm505, %v9460, 0
      %v10532 = vsel %vm505, %v9461, 0
      %v10535 = vsel %vm505, %v9462, 0
      %v10538 = vsel %vm505, %v9463, 0
      %v10541 = vsel %vm505, %v9464, 0
      %v10544 = vsel %vm505, %v9465, 0
      %v10547 = vsel %vm505, %v9466, 0
      %v10550 = vsel %vm505, %v9467, 0
      %v10553 = vsel %vm505, %v9468, 0
      %v10556 = vsel %vm505, %v9469, 0
      %v10559 = vsel %vm505, %v9470, 0
      %v10562 = vsel %vm505, %v9471, 0
      %v10565 = vsel %vm505, %v9472, 0
      %v10568 = vsel %vm505, %v9473, 0
      %v10571 = vsel %vm505, %v9474, 0
      %v10574 = vsel %vm505, %v9475, 0
      %10576 = vmatprep.subr.mxu0 0.0
      %10577 = vmatpush1.msra.mxu0 %v10452
      %10578 = vmatprep.subr.mxu0 0.0
      %10579 = vmatpush1.msra.mxu0 %v10451
      %10580 = vmatprep.subr.mxu0 0.0
      %10581 = vmatpush1.msra.mxu0 %v10450
      %10582 = vmatprep.subr.mxu0 0.0
      %10583 = vmatpush1.msra.mxu0 %v10449
      %10584 = vmatprep.subr.mxu0 0.0
      %10585 = vmatpush1.msra.mxu0 %v10448
      %10586 = vmatprep.subr.mxu0 0.0
      %10587 = vmatpush1.msra.mxu0 %v10447
      %10588 = vmatprep.subr.mxu0 0.0
      %10589 = vmatpush1.msra.mxu0 %v10446
      %10590 = vmatprep.subr.mxu0 0.0
      %10591 = vmatpush1.msra.mxu0 %v10445
      %10592 = vmatprep.subr.mxu0 0.0
      %10593 = vmatpush1.msra.mxu0 %v10444
      %10594 = vmatprep.subr.mxu0 0.0
      %10595 = vmatpush1.msra.mxu0 %v10443
      %10596 = vmatprep.subr.mxu0 0.0
      %10597 = vmatpush1.msra.mxu0 %v10442
      %10598 = vmatprep.subr.mxu0 0.0
      %10599 = vmatpush1.msra.mxu0 %v10441
      %10600 = vmatprep.subr.mxu0 0.0
      %10601 = vmatpush1.msra.mxu0 %v10440
      %10602 = vmatprep.subr.mxu0 0.0
      %10603 = vmatpush1.msra.mxu0 %v10439
      %10604 = vmatprep.subr.mxu0 0.0
      %10605 = vmatpush1.msra.mxu0 %v10438
      %10606 = vmatprep.subr.mxu0 0.0
      %10607 = vmatpush1.msra.mxu0 %v10437
      %10608 = vmatprep.subr.mxu0 0.0
      %10609 = vmatpush2.msra.mxu0 %v10468
      %10610 = vmatprep.subr.mxu0 0.0
      %10611 = vmatpush2.msra.mxu0 %v10467
      %10612 = vmatprep.subr.mxu0 0.0
      %10613 = vmatpush2.msra.mxu0 %v10466
      %10614 = vmatprep.subr.mxu0 0.0
      %10615 = vmatpush2.msra.mxu0 %v10465
      %10616 = vmatprep.subr.mxu0 0.0
      %10617 = vmatpush2.msra.mxu0 %v10464
      %10618 = vmatprep.subr.mxu0 0.0
      %10619 = vmatpush2.msra.mxu0 %v10463
      %10620 = vmatprep.subr.mxu0 0.0
      %10621 = vmatpush2.msra.mxu0 %v10462
      %10622 = vmatprep.subr.mxu0 0.0
      %10623 = vmatpush2.msra.mxu0 %v10461
      %10624 = vmatprep.subr.mxu0 0.0
      %10625 = vmatpush2.msra.mxu0 %v10460
      %10626 = vmatprep.subr.mxu0 0.0
      %10627 = vmatpush2.msra.mxu0 %v10459
      %10628 = vmatprep.subr.mxu0 0.0
      %10629 = vmatpush2.msra.mxu0 %v10458
      %10630 = vmatprep.subr.mxu0 0.0
      %10631 = vmatpush2.msra.mxu0 %v10457
      %10632 = vmatprep.subr.mxu0 0.0
      %10633 = vmatpush2.msra.mxu0 %v10456
      %10634 = vmatprep.subr.mxu0 0.0
      %10635 = vmatpush2.msra.mxu0 %v10455
      %10636 = vmatprep.subr.mxu0 0.0
      %10637 = vmatpush2.msra.mxu0 %v10454
      %10638 = vmatprep.subr.mxu0 0.0
      %10639 = vmatpush2.msra.mxu0 %v10453
      %10640 = vmatprep.mubr.f32.mxu0 %v10405
      %10641 = vmatmul.mubr.f32.gmra.mxu0 %v10309
      %v10642 = vpop.f32.mrf.mxu0
      %v10643 = vadd.f32 %v10478, %v10642
      %v10644 = vpop.f32.mrf.mxu0
      %10645 = vmatprep.mubr.f32.mxu0 %v10406
      %10646 = vmatmul.mubr.f32.gmra.mxu0 %v10310
      %v10647 = vpop.f32.mrf.mxu0
      %v10648 = vadd.f32 %v10478, %v10647
      %v10649 = vpop.f32.mrf.mxu0
      %10650 = vmatprep.mubr.f32.mxu0 %v10407
      %10651 = vmatmul.mubr.f32.gmra.mxu0 %v10311
      %v10652 = vpop.f32.mrf.mxu0
      %v10653 = vadd.f32 %v10478, %v10652
      %v10654 = vpop.f32.mrf.mxu0
      %10655 = vmatprep.mubr.f32.mxu0 %v10408
      %10656 = vmatmul.mubr.f32.gmra.mxu0 %v10312
      %v10657 = vpop.f32.mrf.mxu0
      %v10658 = vadd.f32 %v10478, %v10657
      %v10659 = vpop.f32.mrf.mxu0
      %10660 = vmatprep.mubr.f32.mxu0 %v10409
      %10661 = vmatmul.mubr.f32.gmra.mxu0 %v10313
      %v10662 = vpop.f32.mrf.mxu0
      %v10663 = vadd.f32 %v10478, %v10662
      %v10664 = vpop.f32.mrf.mxu0
      %10665 = vmatprep.mubr.f32.mxu0 %v10410
      %10666 = vmatmul.mubr.f32.gmra.mxu0 %v10314
      %v10667 = vpop.f32.mrf.mxu0
      %v10668 = vadd.f32 %v10478, %v10667
      %v10669 = vpop.f32.mrf.mxu0
      %10670 = vmatprep.mubr.f32.mxu0 %v10411
      %10671 = vmatmul.mubr.f32.gmra.mxu0 %v10315
      %v10672 = vpop.f32.mrf.mxu0
      %v10673 = vadd.f32 %v10478, %v10672
      %v10674 = vpop.f32.mrf.mxu0
      %10675 = vmatprep.mubr.f32.mxu0 %v10412
      %10676 = vmatmul.mubr.f32.gmra.mxu0 %v10316
      %v10677 = vpop.f32.mrf.mxu0
      %v10678 = vadd.f32 %v10478, %v10677
      %v10679 = vpop.f32.mrf.mxu0
      %10680 = vmatprep.mubr.f32.mxu0 %v10413
      %10681 = vmatmul.mubr.f32.gmra.mxu0 %v10317
      %v10682 = vpop.f32.mrf.mxu0
      %v10683 = vadd.f32 %v10478, %v10682
      %v10684 = vpop.f32.mrf.mxu0
      %10685 = vmatprep.mubr.f32.mxu0 %v10414
      %10686 = vmatmul.mubr.f32.gmra.mxu0 %v10318
      %v10687 = vpop.f32.mrf.mxu0
      %v10688 = vadd.f32 %v10478, %v10687
      %v10689 = vpop.f32.mrf.mxu0
      %10690 = vmatprep.mubr.f32.mxu0 %v10415
      %10691 = vmatmul.mubr.f32.gmra.mxu0 %v10319
      %v10692 = vpop.f32.mrf.mxu0
      %v10693 = vadd.f32 %v10478, %v10692
      %v10694 = vpop.f32.mrf.mxu0
      %10695 = vmatprep.mubr.f32.mxu0 %v10416
      %10696 = vmatmul.mubr.f32.gmra.mxu0 %v10320
      %v10697 = vpop.f32.mrf.mxu0
      %v10698 = vadd.f32 %v10478, %v10697
      %v10699 = vpop.f32.mrf.mxu0
      %10700 = vmatprep.mubr.f32.mxu0 %v10417
      %10701 = vmatmul.mubr.f32.gmra.mxu0 %v10321
      %v10702 = vpop.f32.mrf.mxu0
      %v10703 = vadd.f32 %v10478, %v10702
      %v10704 = vpop.f32.mrf.mxu0
      %10705 = vmatprep.mubr.f32.mxu0 %v10418
      %10706 = vmatmul.mubr.f32.gmra.mxu0 %v10322
      %v10707 = vpop.f32.mrf.mxu0
      %v10708 = vadd.f32 %v10478, %v10707
      %v10709 = vpop.f32.mrf.mxu0
      %10710 = vmatprep.mubr.f32.mxu0 %v10419
      %10711 = vmatmul.mubr.f32.gmra.mxu0 %v10323
      %v10712 = vpop.f32.mrf.mxu0
      %v10713 = vadd.f32 %v10478, %v10712
      %v10714 = vpop.f32.mrf.mxu0
      %10715 = vmatprep.mubr.f32.mxu0 %v10420
      %10716 = vmatmul.mubr.f32.gmra.mxu0 %v10324
      %v10717 = vpop.f32.mrf.mxu0
      %v10718 = vadd.f32 %v10478, %v10717
      %v10719 = vpop.f32.mrf.mxu0
      %10720 = vmatprep.mubr.f32.mxu0 %v10421
      %10721 = vmatmul.mubr.f32.gmra.mxu0 %v10325
      %v10722 = vpop.f32.mrf.mxu0
      %v10723 = vadd.f32 %v10478, %v10722
      %v10724 = vpop.f32.mrf.mxu0
      %10725 = vmatprep.mubr.f32.mxu0 %v10422
      %10726 = vmatmul.mubr.f32.gmra.mxu0 %v10326
      %v10727 = vpop.f32.mrf.mxu0
      %v10728 = vadd.f32 %v10478, %v10727
      %v10729 = vpop.f32.mrf.mxu0
      %10730 = vmatprep.mubr.f32.mxu0 %v10423
      %10731 = vmatmul.mubr.f32.gmra.mxu0 %v10327
      %v10732 = vpop.f32.mrf.mxu0
      %v10733 = vadd.f32 %v10478, %v10732
      %v10734 = vpop.f32.mrf.mxu0
      %10735 = vmatprep.mubr.f32.mxu0 %v10424
      %10736 = vmatmul.mubr.f32.gmra.mxu0 %v10328
      %v10737 = vpop.f32.mrf.mxu0
      %v10738 = vadd.f32 %v10478, %v10737
      %v10739 = vpop.f32.mrf.mxu0
      %10740 = vmatprep.mubr.f32.mxu0 %v10425
      %10741 = vmatmul.mubr.f32.gmra.mxu0 %v10329
      %v10742 = vpop.f32.mrf.mxu0
      %v10743 = vadd.f32 %v10478, %v10742
      %v10744 = vpop.f32.mrf.mxu0
      %10745 = vmatprep.mubr.f32.mxu0 %v10426
      %10746 = vmatmul.mubr.f32.gmra.mxu0 %v10330
      %v10747 = vpop.f32.mrf.mxu0
      %v10748 = vadd.f32 %v10478, %v10747
      %v10749 = vpop.f32.mrf.mxu0
      %10750 = vmatprep.mubr.f32.mxu0 %v10427
      %10751 = vmatmul.mubr.f32.gmra.mxu0 %v10331
      %v10752 = vpop.f32.mrf.mxu0
      %v10753 = vadd.f32 %v10478, %v10752
      %v10754 = vpop.f32.mrf.mxu0
      %10755 = vmatprep.mubr.f32.mxu0 %v10428
      %10756 = vmatmul.mubr.f32.gmra.mxu0 %v10332
      %v10757 = vpop.f32.mrf.mxu0
      %v10758 = vadd.f32 %v10478, %v10757
      %v10759 = vpop.f32.mrf.mxu0
      %10760 = vmatprep.mubr.f32.mxu0 %v10429
      %10761 = vmatmul.mubr.f32.gmra.mxu0 %v10333
      %v10762 = vpop.f32.mrf.mxu0
      %v10763 = vadd.f32 %v10478, %v10762
      %v10764 = vpop.f32.mrf.mxu0
      %10765 = vmatprep.mubr.f32.mxu0 %v10430
      %10766 = vmatmul.mubr.f32.gmra.mxu0 %v10334
      %v10767 = vpop.f32.mrf.mxu0
      %v10768 = vadd.f32 %v10478, %v10767
      %v10769 = vpop.f32.mrf.mxu0
      %10770 = vmatprep.mubr.f32.mxu0 %v10431
      %10771 = vmatmul.mubr.f32.gmra.mxu0 %v10335
      %v10772 = vpop.f32.mrf.mxu0
      %v10773 = vadd.f32 %v10478, %v10772
      %v10774 = vpop.f32.mrf.mxu0
      %10775 = vmatprep.mubr.f32.mxu0 %v10432
      %10776 = vmatmul.mubr.f32.gmra.mxu0 %v10336
      %v10777 = vpop.f32.mrf.mxu0
      %v10778 = vadd.f32 %v10478, %v10777
      %v10779 = vpop.f32.mrf.mxu0
      %10780 = vmatprep.mubr.f32.mxu0 %v10433
      %10781 = vmatmul.mubr.f32.gmra.mxu0 %v10337
      %v10782 = vpop.f32.mrf.mxu0
      %v10783 = vadd.f32 %v10478, %v10782
      %v10784 = vpop.f32.mrf.mxu0
      %10785 = vmatprep.mubr.f32.mxu0 %v10434
      %10786 = vmatmul.mubr.f32.gmra.mxu0 %v10338
      %v10787 = vpop.f32.mrf.mxu0
      %v10788 = vadd.f32 %v10478, %v10787
      %v10789 = vpop.f32.mrf.mxu0
      %10790 = vmatprep.mubr.f32.mxu0 %v10435
      %10791 = vmatmul.mubr.f32.gmra.mxu0 %v10339
      %v10792 = vpop.f32.mrf.mxu0
      %v10793 = vadd.f32 %v10478, %v10792
      %v10794 = vpop.f32.mrf.mxu0
      %10795 = vmatprep.mubr.f32.mxu0 %v10436
      %10796 = vmatmul.mubr.f32.gmra.mxu0 %v10340
      %v10797 = vpop.f32.mrf.mxu0
      %v10798 = vadd.f32 %v10478, %v10797
      %v10799 = vpop.f32.mrf.mxu0
      %10800 = vdwg.mxu0
      %10801 = vmatprep.subr.mxu0 0.0
      %10802 = vmatpush1.msra.mxu0 0.0
      %10803 = vmatprep.subr.mxu0 0.0
      %10804 = vmatpush1.msra.mxu0 0.0
      %10805 = vmatprep.subr.mxu0 0.0
      %10806 = vmatpush1.msra.mxu0 0.0
      %10807 = vmatprep.subr.mxu0 0.0
      %10808 = vmatpush1.msra.mxu0 0.0
      %10809 = vmatprep.subr.mxu0 0.0
      %10810 = vmatpush1.msra.mxu0 0.0
      %10811 = vmatprep.subr.mxu0 0.0
      %10812 = vmatpush1.msra.mxu0 0.0
      %10813 = vmatprep.subr.mxu0 0.0
      %10814 = vmatpush1.msra.mxu0 0.0
      %10815 = vmatprep.subr.mxu0 0.0
      %10816 = vmatpush1.msra.mxu0 0.0
      %10817 = vmatprep.subr.mxu0 0.0
      %10818 = vmatpush1.msra.mxu0 0.0
      %10819 = vmatprep.subr.mxu0 0.0
      %10820 = vmatpush1.msra.mxu0 0.0
      %10821 = vmatprep.subr.mxu0 0.0
      %10822 = vmatpush1.msra.mxu0 0.0
      %10823 = vmatprep.subr.mxu0 0.0
      %10824 = vmatpush1.msra.mxu0 0.0
      %10825 = vmatprep.subr.mxu0 0.0
      %10826 = vmatpush1.msra.mxu0 %v10472
      %10827 = vmatprep.subr.mxu0 0.0
      %10828 = vmatpush1.msra.mxu0 %v10471
      %10829 = vmatprep.subr.mxu0 0.0
      %10830 = vmatpush1.msra.mxu0 %v10470
      %10831 = vmatprep.subr.mxu0 0.0
      %10832 = vmatpush1.msra.mxu0 %v10469
      %10833 = vmatprep.subr.mxu0 0.0
      %10834 = vmatpush2.msra.mxu0 0.0
      %10835 = vmatprep.subr.mxu0 0.0
      %10836 = vmatpush2.msra.mxu0 0.0
      %10837 = vmatprep.subr.mxu0 0.0
      %10838 = vmatpush2.msra.mxu0 0.0
      %10839 = vmatprep.subr.mxu0 0.0
      %10840 = vmatpush2.msra.mxu0 0.0
      %10841 = vmatprep.subr.mxu0 0.0
      %10842 = vmatpush2.msra.mxu0 0.0
      %10843 = vmatprep.subr.mxu0 0.0
      %10844 = vmatpush2.msra.mxu0 0.0
      %10845 = vmatprep.subr.mxu0 0.0
      %10846 = vmatpush2.msra.mxu0 0.0
      %10847 = vmatprep.subr.mxu0 0.0
      %10848 = vmatpush2.msra.mxu0 0.0
      %10849 = vmatprep.subr.mxu0 0.0
      %10850 = vmatpush2.msra.mxu0 0.0
      %10851 = vmatprep.subr.mxu0 0.0
      %10852 = vmatpush2.msra.mxu0 0.0
      %10853 = vmatprep.subr.mxu0 0.0
      %10854 = vmatpush2.msra.mxu0 0.0
      %10855 = vmatprep.subr.mxu0 0.0
      %10856 = vmatpush2.msra.mxu0 0.0
      %10857 = vmatprep.subr.mxu0 0.0
      %10858 = vmatpush2.msra.mxu0 0.0
      %10859 = vmatprep.subr.mxu0 0.0
      %10860 = vmatpush2.msra.mxu0 0.0
      %10861 = vmatprep.subr.mxu0 0.0
      %10862 = vmatpush2.msra.mxu0 0.0
      %10863 = vmatprep.subr.mxu0 0.0
      %10864 = vmatpush2.msra.mxu0 0.0
      %10865 = vmatprep.mubr.f32.mxu0 0.0
      %10866 = vmatmul.mubr.f32.gmra.mxu0 %v10481
      %v10867 = vpop.f32.mrf.mxu0
      %v10868 = vadd.f32 %v10643, %v10867
      %v10869 = vpop.f32.mrf.mxu0
      %10870 = vmatprep.mubr.f32.mxu0 0.0
      %10871 = vmatmul.mubr.f32.gmra.mxu0 %v10484
      %v10872 = vpop.f32.mrf.mxu0
      %v10873 = vadd.f32 %v10648, %v10872
      %v10874 = vpop.f32.mrf.mxu0
      %10875 = vmatprep.mubr.f32.mxu0 0.0
      %10876 = vmatmul.mubr.f32.gmra.mxu0 %v10487
      %v10877 = vpop.f32.mrf.mxu0
      %v10878 = vadd.f32 %v10653, %v10877
      %v10879 = vpop.f32.mrf.mxu0
      %10880 = vmatprep.mubr.f32.mxu0 0.0
      %10881 = vmatmul.mubr.f32.gmra.mxu0 %v10490
      %v10882 = vpop.f32.mrf.mxu0
      %v10883 = vadd.f32 %v10658, %v10882
      %v10884 = vpop.f32.mrf.mxu0
      %10885 = vmatprep.mubr.f32.mxu0 0.0
      %10886 = vmatmul.mubr.f32.gmra.mxu0 %v10493
      %v10887 = vpop.f32.mrf.mxu0
      %v10888 = vadd.f32 %v10663, %v10887
      %v10889 = vpop.f32.mrf.mxu0
      %10890 = vmatprep.mubr.f32.mxu0 0.0
      %10891 = vmatmul.mubr.f32.gmra.mxu0 %v10496
      %v10892 = vpop.f32.mrf.mxu0
      %v10893 = vadd.f32 %v10668, %v10892
      %v10894 = vpop.f32.mrf.mxu0
      %10895 = vmatprep.mubr.f32.mxu0 0.0
      %10896 = vmatmul.mubr.f32.gmra.mxu0 %v10499
      %v10897 = vpop.f32.mrf.mxu0
      %v10898 = vadd.f32 %v10673, %v10897
      %v10899 = vpop.f32.mrf.mxu0
      %10900 = vmatprep.mubr.f32.mxu0 0.0
      %10901 = vmatmul.mubr.f32.gmra.mxu0 %v10502
      %v10902 = vpop.f32.mrf.mxu0
      %v10903 = vadd.f32 %v10678, %v10902
      %v10904 = vpop.f32.mrf.mxu0
      %10905 = vmatprep.mubr.f32.mxu0 0.0
      %10906 = vmatmul.mubr.f32.gmra.mxu0 %v10505
      %v10907 = vpop.f32.mrf.mxu0
      %v10908 = vadd.f32 %v10683, %v10907
      %v10909 = vpop.f32.mrf.mxu0
      %10910 = vmatprep.mubr.f32.mxu0 0.0
      %10911 = vmatmul.mubr.f32.gmra.mxu0 %v10508
      %v10912 = vpop.f32.mrf.mxu0
      %v10913 = vadd.f32 %v10688, %v10912
      %v10914 = vpop.f32.mrf.mxu0
      %10915 = vmatprep.mubr.f32.mxu0 0.0
      %10916 = vmatmul.mubr.f32.gmra.mxu0 %v10511
      %v10917 = vpop.f32.mrf.mxu0
      %v10918 = vadd.f32 %v10693, %v10917
      %v10919 = vpop.f32.mrf.mxu0
      %10920 = vmatprep.mubr.f32.mxu0 0.0
      %10921 = vmatmul.mubr.f32.gmra.mxu0 %v10514
      %v10922 = vpop.f32.mrf.mxu0
      %v10923 = vadd.f32 %v10698, %v10922
      %v10924 = vpop.f32.mrf.mxu0
      %10925 = vmatprep.mubr.f32.mxu0 0.0
      %10926 = vmatmul.mubr.f32.gmra.mxu0 %v10517
      %v10927 = vpop.f32.mrf.mxu0
      %v10928 = vadd.f32 %v10703, %v10927
      %v10929 = vpop.f32.mrf.mxu0
      %10930 = vmatprep.mubr.f32.mxu0 0.0
      %10931 = vmatmul.mubr.f32.gmra.mxu0 %v10520
      %v10932 = vpop.f32.mrf.mxu0
      %v10933 = vadd.f32 %v10708, %v10932
      %v10934 = vpop.f32.mrf.mxu0
      %10935 = vmatprep.mubr.f32.mxu0 0.0
      %10936 = vmatmul.mubr.f32.gmra.mxu0 %v10523
      %v10937 = vpop.f32.mrf.mxu0
      %v10938 = vadd.f32 %v10713, %v10937
      %v10939 = vpop.f32.mrf.mxu0
      %10940 = vmatprep.mubr.f32.mxu0 0.0
      %10941 = vmatmul.mubr.f32.gmra.mxu0 %v10526
      %v10942 = vpop.f32.mrf.mxu0
      %v10943 = vadd.f32 %v10718, %v10942
      %v10944 = vpop.f32.mrf.mxu0
      %10945 = vmatprep.mubr.f32.mxu0 0.0
      %10946 = vmatmul.mubr.f32.gmra.mxu0 %v10529
      %v10947 = vpop.f32.mrf.mxu0
      %v10948 = vadd.f32 %v10723, %v10947
      %v10949 = vpop.f32.mrf.mxu0
      %10950 = vmatprep.mubr.f32.mxu0 0.0
      %10951 = vmatmul.mubr.f32.gmra.mxu0 %v10532
      %v10952 = vpop.f32.mrf.mxu0
      %v10953 = vadd.f32 %v10728, %v10952
      %v10954 = vpop.f32.mrf.mxu0
      %10955 = vmatprep.mubr.f32.mxu0 0.0
      %10956 = vmatmul.mubr.f32.gmra.mxu0 %v10535
      %v10957 = vpop.f32.mrf.mxu0
      %v10958 = vadd.f32 %v10733, %v10957
      %v10959 = vpop.f32.mrf.mxu0
      %10960 = vmatprep.mubr.f32.mxu0 0.0
      %10961 = vmatmul.mubr.f32.gmra.mxu0 %v10538
      %v10962 = vpop.f32.mrf.mxu0
      %v10963 = vadd.f32 %v10738, %v10962
      %v10964 = vpop.f32.mrf.mxu0
      %10965 = vmatprep.mubr.f32.mxu0 0.0
      %10966 = vmatmul.mubr.f32.gmra.mxu0 %v10541
      %v10967 = vpop.f32.mrf.mxu0
      %v10968 = vadd.f32 %v10743, %v10967
      %v10969 = vpop.f32.mrf.mxu0
      %10970 = vmatprep.mubr.f32.mxu0 0.0
      %10971 = vmatmul.mubr.f32.gmra.mxu0 %v10544
      %v10972 = vpop.f32.mrf.mxu0
      %v10973 = vadd.f32 %v10748, %v10972
      %v10974 = vpop.f32.mrf.mxu0
      %10975 = vmatprep.mubr.f32.mxu0 0.0
      %10976 = vmatmul.mubr.f32.gmra.mxu0 %v10547
      %v10977 = vpop.f32.mrf.mxu0
      %v10978 = vadd.f32 %v10753, %v10977
      %v10979 = vpop.f32.mrf.mxu0
      %10980 = vmatprep.mubr.f32.mxu0 0.0
      %10981 = vmatmul.mubr.f32.gmra.mxu0 %v10550
      %v10982 = vpop.f32.mrf.mxu0
      %v10983 = vadd.f32 %v10758, %v10982
      %v10984 = vpop.f32.mrf.mxu0
      %10985 = vmatprep.mubr.f32.mxu0 0.0
      %10986 = vmatmul.mubr.f32.gmra.mxu0 %v10553
      %v10987 = vpop.f32.mrf.mxu0
      %v10988 = vadd.f32 %v10763, %v10987
      %v10989 = vpop.f32.mrf.mxu0
      %10990 = vmatprep.mubr.f32.mxu0 0.0
      %10991 = vmatmul.mubr.f32.gmra.mxu0 %v10556
      %v10992 = vpop.f32.mrf.mxu0
      %v10993 = vadd.f32 %v10768, %v10992
      %v10994 = vpop.f32.mrf.mxu0
      %10995 = vmatprep.mubr.f32.mxu0 0.0
      %10996 = vmatmul.mubr.f32.gmra.mxu0 %v10559
      %v10997 = vpop.f32.mrf.mxu0
      %v10998 = vadd.f32 %v10773, %v10997
      %v10999 = vpop.f32.mrf.mxu0
      %11000 = vmatprep.mubr.f32.mxu0 0.0
      %11001 = vmatmul.mubr.f32.gmra.mxu0 %v10562
      %v11002 = vpop.f32.mrf.mxu0
      %v11003 = vadd.f32 %v10778, %v11002
      %v11004 = vpop.f32.mrf.mxu0
      %11005 = vmatprep.mubr.f32.mxu0 0.0
      %11006 = vmatmul.mubr.f32.gmra.mxu0 %v10565
      %v11007 = vpop.f32.mrf.mxu0
      %v11008 = vadd.f32 %v10783, %v11007
      %v11009 = vpop.f32.mrf.mxu0
      %11010 = vmatprep.mubr.f32.mxu0 0.0
      %11011 = vmatmul.mubr.f32.gmra.mxu0 %v10568
      %v11012 = vpop.f32.mrf.mxu0
      %v11013 = vadd.f32 %v10788, %v11012
      %v11014 = vpop.f32.mrf.mxu0
      %11015 = vmatprep.mubr.f32.mxu0 0.0
      %11016 = vmatmul.mubr.f32.gmra.mxu0 %v10571
      %v11017 = vpop.f32.mrf.mxu0
      %v11018 = vadd.f32 %v10793, %v11017
      %v11019 = vpop.f32.mrf.mxu0
      %11020 = vmatprep.mubr.f32.mxu0 0.0
      %11021 = vmatmul.mubr.f32.gmra.mxu0 %v10574
      %v11022 = vpop.f32.mrf.mxu0
      %v11023 = vadd.f32 %v10798, %v11022
      %v11024 = vpop.f32.mrf.mxu0
      %11025 = vdwg.mxu0
      %11026 = vst.msk [vmem:[%s332] sm:$0xff] %vm3447, %v10868
      %11027 = vst.msk [vmem:[%s332 + $0x8] sm:$0xff] %vm3447, %v10873
      %11028 = vst.msk [vmem:[%s332 + $0x10] sm:$0xff] %vm3447, %v10878
      %11029 = vst.msk [vmem:[%s332 + $0x18] sm:$0xff] %vm3447, %v10883
      %11030 = vst.msk [vmem:[%s332 + $0x20] sm:$0xff] %vm3447, %v10888
      %11031 = vst.msk [vmem:[%s332 + $0x28] sm:$0xff] %vm3447, %v10893
      %11032 = vst.msk [vmem:[%s332 + $0x30] sm:$0xff] %vm3447, %v10898
      %11033 = vst.msk [vmem:[%s332 + $0x38] sm:$0xff] %vm3447, %v10903
      %11034 = vst.msk [vmem:[%s332 + $0x40] sm:$0xff] %vm3447, %v10908
      %11035 = vst.msk [vmem:[%s332 + $0x48] sm:$0xff] %vm3447, %v10913
      %11036 = vst.msk [vmem:[%s332 + $0x50] sm:$0xff] %vm3447, %v10918
      %11037 = vst.msk [vmem:[%s332 + $0x58] sm:$0xff] %vm3447, %v10923
      %11038 = vst.msk [vmem:[%s332 + $0x60] sm:$0xff] %vm3447, %v10928
      %11039 = vst.msk [vmem:[%s332 + $0x68] sm:$0xff] %vm3447, %v10933
      %11040 = vst.msk [vmem:[%s332 + $0x70] sm:$0xff] %vm3447, %v10938
      %11041 = vst.msk [vmem:[%s332 + $0x78] sm:$0xff] %vm3447, %v10943
      %11042 = vst.msk [vmem:[%s332 + $0x80] sm:$0xff] %vm3447, %v10948
      %11043 = vst.msk [vmem:[%s332 + $0x88] sm:$0xff] %vm3447, %v10953
      %11044 = vst.msk [vmem:[%s332 + $0x90] sm:$0xff] %vm3447, %v10958
      %11045 = vst.msk [vmem:[%s332 + $0x98] sm:$0xff] %vm3447, %v10963
      %11046 = vst.msk [vmem:[%s332 + $0xa0] sm:$0xff] %vm3447, %v10968
      %11047 = vst.msk [vmem:[%s332 + $0xa8] sm:$0xff] %vm3447, %v10973
      %11048 = vst.msk [vmem:[%s332 + $0xb0] sm:$0xff] %vm3447, %v10978
      %11049 = vst.msk [vmem:[%s332 + $0xb8] sm:$0xff] %vm3447, %v10983
      %11050 = vst.msk [vmem:[%s332 + $0xc0] sm:$0xff] %vm3447, %v10988
      %11051 = vst.msk [vmem:[%s332 + $0xc8] sm:$0xff] %vm3447, %v10993
      %11052 = vst.msk [vmem:[%s332 + $0xd0] sm:$0xff] %vm3447, %v10998
      %11053 = vst.msk [vmem:[%s332 + $0xd8] sm:$0xff] %vm3447, %v11003
      %11054 = vst.msk [vmem:[%s332 + $0xe0] sm:$0xff] %vm3447, %v11008
      %11055 = vst.msk [vmem:[%s332 + $0xe8] sm:$0xff] %vm3447, %v11013
      %11056 = vst.msk [vmem:[%s332 + $0xf0] sm:$0xff] %vm3447, %v11018
      %11057 = vst.msk [vmem:[%s332 + $0xf8] sm:$0xff] %vm3447, %v11023
      %p11058 = scmp.lt.s32.totalorder %s20, 1
      %s11059 = scalar_select %p11058, %s20, 1
      %s11060 = smul.addr %s11059, 32
      %s11061 = smul.addr %s11060, 8
      %s11062 = scalar_lea.vmem %s9, %s11061
      // Predicated region
      $region57: #{net_forward.1} parent=55 // pred_check
        %p11063 = pneg %p232
      $region58: #{net_forward.1} parent=55 // pred_check_branch
        %11065 = sbr.rel (%p11063) target = $region60
      $region59: #{net_forward.1} parent=55 // pred_region
        _
      $region60: #{net_forward.1} parent=55 // pred_fallthru
        _
    $region56: #{net_forward.1} parent=5 // pred_fallthru
      _
    %p11066 = scmp.le.s32.totalorder 2, %s15
    // Predicated region
    $region61: #{net_forward.1} parent=5 // pred_check
      %p11067 = pneg %p11066
    $region62: #{net_forward.1} parent=5 // pred_check_branch
      %11069 = sbr.rel (%p11067) target = $region64
    $region63: #{net_forward.1} parent=5 // pred_region
      %s11070 = ssub.s32 %s15, 2
      // Predicated region
      $region65: #{net_forward.1} parent=63 // pred_check
        %p11071 = pneg %p238
      $region66: #{net_forward.1} parent=63 // pred_check_branch
        %11073 = sbr.rel (%p11071) target = $region68
      $region67: #{net_forward.1} parent=63 // pred_region
        %p11074 = scmp.lt.s32.totalorder %s21, 1
        %s11075 = scalar_select %p11074, %s21, 1
        %s11076 = smul.addr %s11075, 32
        %s11077 = smul.addr %s11076, 8
        %s11078 = scalar_lea.vmem %s9, %s11077
      $region68: #{net_forward.1} parent=63 // pred_fallthru
        _
    $region64: #{net_forward.1} parent=5 // pred_fallthru
      _
  $region6: #{net_forward.1} parent=0 // loop_footer
    %s19 = sadd.s32 1, %s15
  $region7: #{net_forward.1} parent=0 // loop_footer_branch
    %14 = sbr.rel target = $region3
  $region8: #{net_forward.1} parent=0 // loop_exit
    _

</llo_original>
